<compile_context>
chip_gen: v7x
topology: tpu7x:2x2x1
jax: 0.10.0
libtpu: 0.0.40
codegen_flags: <defaults>
</compile_context>

<pallas_src>
import functools

import jax
import jax.numpy as jnp
import numpy as np
from jax import lax
from jax.experimental import pallas as pl
from jax.experimental.pallas import tpu as pltpu

N_HEADS = 2
K = 3
NEG_SLOPE = 0.2
NEG = -1e30          # "no edge" sentinel in the dense logit tensor


# ------------------------------- helpers --------------------------------------
def _round_up(x, m):
    return ((x + m - 1) // m) * m


def _vmem_capacity_bytes():
    try:
        return int(pltpu.get_tpu_info().vmem_capacity_bytes)
    except Exception:
        return 64 << 20                       # conservative: assume v7x (64 MiB)


def _cparams(sem, need_bytes, vmem_cap):
    """Semantics + VMEM limit sized from the live (double-buffered) blocks,
    capped by the generation's physical VMEM (no fixed 48 MiB clamp)."""
    cap = max(int(vmem_cap * 0.80), 32 << 20)
    limit = min(max(int(need_bytes) + (16 << 20), 32 << 20), cap)
    return pltpu.CompilerParams(dimension_semantics=sem, vmem_limit_bytes=limit)


def _pick_attn_tile(n, H, D, a_bytes, vmem_cap):
    """Largest dst tile (multiple of 128) whose double-buffered attention
    blocks fit ~50% of this generation's VMEM (512 on 128-MiB parts, 256/128
    on 64-MiB v7x).  Returns (tile, padded_N)."""
    budget = int(vmem_cap * 0.50)
    hi = _round_up(max(n, 128), 128)
    for t in (512, 384, 256, 128):
        if t > hi:
            continue
        npad = _round_up(n, t)
        need = (2 * 4 * H * npad * t            # logit tile (f32), 2 buffers
                + 2 * a_bytes * H * npad * t    # a tile out
                + 2 * 4 * H * D * npad          # grid-invariant feat0T (2 bufs)
                + 2 * 4 * H * D * t             # hop-1 out tile
                + 2 * 4 * H * (npad + t))       # c_src / c_dst
        if need <= budget:
            return t, npad
    return 128, _round_up(n, 128)


def _pick_node_tile(npad, target=1024):
    for t in (2048, 1024, 512, 256, 128):
        if t <= min(target, npad) and npad % t == 0:
            return t
    return npad


# --------------------- Kernel 1: fused node projections ------------------------
def node_proj_kernel(x_ref, w_ref, b_ref, o_ref):
    o_ref[...] = (jnp.dot(x_ref[...], w_ref[...],
                          preferred_element_type=jnp.float32) + b_ref[...])


def run_node_proj(x, w_cat, b_cat, vmem_cap):
    Np, F = x.shape
    P = w_cat.shape[1]
    t = _pick_node_tile(Np)
    need = 2 * 4 * (t * F + F * P + P + t * P)
    return pl.pallas_call(
        node_proj_kernel,
        out_shape=jax.ShapeDtypeStruct((Np, P), jnp.float32),
        grid=(Np // t,),
        in_specs=[pl.BlockSpec((t, F), lambda i: (i, 0)),
                  pl.BlockSpec((F, P), lambda i: (0, 0)),
                  pl.BlockSpec((1, P), lambda i: (0, 0))],
        out_specs=pl.BlockSpec((t, P), lambda i: (i, 0)),
        compiler_params=_cparams(("parallel",), need, vmem_cap),
    )(x, w_cat, b_cat)


# ------------- Kernel 2: fused dual softmax + first hop propagation ------------
def attn_hop1_kernel(logit_ref, csrc_ref, cdst_ref, feat0T_ref, a_ref, f1_ref):
    # logit/a tile: [H, Np_src, T_dst]; csrc: [H, Np_src, 1]; cdst: [H, 1, T_dst]
    # a = sqrt(softmax_dst * softmax_src) = exp(logit - c_dst - c_src); the
    # exponent is <= 0 for every real edge and ~-1e30 for the background, so a
    # single exp yields the masked attention with no overflow / NaN risk.
    # NOTE: the reference clamps each softmax at 1e-9 before the sqrt; that only
    # matters for pathologically dominated edges, not for this data.
    a = jnp.exp(logit_ref[...] - csrc_ref[...] - cdst_ref[...])
    a_ref[...] = a.astype(a_ref.dtype)
    # hop 1: f1[h, f, t] = sum_s feat0T[h, f, s] * a[h, s, t]   (natural A @ B)
    f1_ref[...] = jnp.einsum("hfs,hst->hft", feat0T_ref[...], a,
                             preferred_element_type=jnp.float32)


def run_attn_hop1(logitT, c_src, c_dst, feat0T, tile, a_dtype, vmem_cap):
    H, Np, _ = logitT.shape
    D = feat0T.shape[1]
    ab = jnp.dtype(a_dtype).itemsize
    need = (2 * 4 * H * Np * tile + 2 * ab * H * Np * tile
            + 2 * 4 * H * Np + 2 * 4 * H * tile
            + 2 * 4 * H * D * Np + 2 * 4 * H * D * tile)
    return pl.pallas_call(
        attn_hop1_kernel,
        out_shape=(jax.ShapeDtypeStruct((H, Np, Np), a_dtype),
                   jax.ShapeDtypeStruct((H, D, Np), jnp.float32)),
        grid=(Np // tile,),
        in_specs=[pl.BlockSpec((H, Np, tile), lambda i: (0, 0, i)),
                  pl.BlockSpec((H, Np, 1), lambda i: (0, 0, 0)),
                  pl.BlockSpec((H, 1, tile), lambda i: (0, 0, i)),
                  pl.BlockSpec((H, D, Np), lambda i: (0, 0, 0))],
        out_specs=(pl.BlockSpec((H, Np, tile), lambda i: (0, 0, i)),
                   pl.BlockSpec((H, D, tile), lambda i: (0, 0, i))),
        compiler_params=_cparams(("parallel",), need, vmem_cap),
    )(logitT, c_src, c_dst, feat0T)


# ----------------------- Kernel 3: hop propagation ----------------------------
def hop_kernel(a_ref, featT_ref, outT_ref):
    a = a_ref[...].astype(jnp.float32)        # bf16 storage, f32 accumulation
    outT_ref[...] = jnp.einsum("hfs,hst->hft", featT_ref[...], a,
                               preferred_element_type=jnp.float32)


def run_hop(aT, featT, tile, vmem_cap):
    H, Np, _ = aT.shape
    D = featT.shape[1]
    ab = aT.dtype.itemsize
    need = 2 * (ab * H * Np * tile + 4 * H * D * Np + 4 * H * D * tile)
    return pl.pallas_call(
        hop_kernel,
        out_shape=jax.ShapeDtypeStruct((H, D, Np), jnp.float32),
        grid=(Np // tile,),
        in_specs=[pl.BlockSpec((H, Np, tile), lambda i: (0, 0, i)),
                  pl.BlockSpec((H, D, Np), lambda i: (0, 0, 0))],
        out_specs=pl.BlockSpec((H, D, tile), lambda i: (0, 0, i)),
        compiler_params=_cparams(("parallel",), need, vmem_cap),
    )(aT, featT)


# --------- Kernel 4: per-tile epilogue: feat_trans + HA mixing + residual ------
def final_kernel(n_hops, *refs):
    f_refs = refs[:n_hops + 1]                 # feats after 0..K hops, [H,D,T]
    (fdst_ref, scale_ref, offset_ref, pos_ref,
     hl_ref, hr_ref, out_ref) = refs[n_hops + 1:]

    scale = scale_ref[...]                     # [K+1, H, D]
    offset = offset_ref[...]
    pos = pos_ref[...]
    hop_l = hl_ref[...][:, :, None]            # [H, D, 1]
    hop_r = hr_ref[...][:, :, None]

    def feat_trans(h, k):                      # h: [H, D, T]
        mean = jnp.mean(h, axis=1, keepdims=True)
        var = jnp.mean(jnp.square(h - mean), axis=1, keepdims=True) + 1e-9
        h = ((h - mean) * (scale[k][:, :, None] * lax.rsqrt(var))
             + offset[k][:, :, None])
        return h + pos[k][:, :, None]

    h0 = feat_trans(f_refs[0][...], 0)
    a_l = jnp.sum(h0 * hop_l, axis=1, keepdims=True)          # [H, 1, T]

    # Online softmax over the K hop logits: only one [H,D,T] hop tensor plus
    # one accumulator live at a time -> no vreg spills at large tiles.
    m = jnp.full_like(a_l, -jnp.inf)
    denom = jnp.zeros_like(a_l)
    acc = jnp.zeros(f_refs[0].shape, jnp.float32)
    for k in range(1, n_hops + 1):
        h = feat_trans(f_refs[k][...], k)
        r = jnp.sum(h * hop_r, axis=1, keepdims=True) + a_l
        r = jnp.where(r >= 0, r, NEG_SLOPE * r)                # leaky_relu
        m_new = jnp.maximum(m, r)
        c = jnp.exp(m - m_new)
        p = jnp.exp(r - m_new)
        denom = denom * c + p
        acc = acc * c + p * h
        m = m_new

    out_ref[...] = acc * (1.0 / denom) + fdst_ref[...]         # residual (dst_fc)
    # TODO(synk): hop_attn_l_bias / hop_attn_r_bias and edge_norm exist in the
    # module __init__ but are never used in the reference forward -> omitted.


def run_final(featsT, fdstT, params, tile, n_hops, vmem_cap):
    H, D, Np = featsT[0].shape
    tile3 = pl.BlockSpec((H, D, tile), lambda i: (0, 0, i))

    def full(shape):
        return pl.BlockSpec(shape, lambda i, _s=shape: tuple(0 for _ in _s))

    args = list(featsT[:n_hops + 1]) + [
        fdstT, params["scale"], params["offset"], params["pos_emb"],
        params["hop_attn_l"], params["hop_attn_r"]]
    in_specs = ([tile3] * (n_hops + 2)
                + [full(params["scale"].shape),
                   full(params["offset"].shape),
                   full(params["pos_emb"].shape),
                   full(params["hop_attn_l"].shape),
                   full(params["hop_attn_r"].shape)])
    need = 2 * 4 * ((n_hops + 3) * H * D * tile + 3 * (n_hops + 1) * H * D
                    + 2 * H * D)
    return pl.pallas_call(
        functools.partial(final_kernel, n_hops),
        out_shape=jax.ShapeDtypeStruct((H, D, Np), jnp.float32),
        grid=(Np // tile,),
        in_specs=in_specs,
        out_specs=pl.BlockSpec((H, D, tile), lambda i: (0, 0, i)),
        compiler_params=_cparams(("parallel",), need, vmem_cap),
    )(*args)


# ------------------------------ forward wrapper --------------------------------
def agdn_conv_forward(x, feat_edge, src_idx, dst_idx, params, n_hops=K,
                      a_dtype=jnp.bfloat16):
    N, _ = x.shape
    H = params["w_attn_src"].shape[1]
    HD = params["w_src"].shape[1]
    D = HD // H

    vmem_cap = _vmem_capacity_bytes()
    tile, Np = _pick_attn_tile(N, H, D, jnp.dtype(a_dtype).itemsize, vmem_cap)

    # ---- fused node-side projections (pad N to a multiple of the tile) ----
    x_p = jnp.pad(x, ((0, Np - N), (0, 0)))
    w_cat = jnp.concatenate([params["w_src"], params["w_dst"],
                             params["w_attn_src"], params["w_attn_dst"]], axis=1)
    P = w_cat.shape[1]
    P_pad = _round_up(P, 128)
    w_cat = jnp.pad(w_cat, ((0, 0), (0, P_pad - P)))
    b_cat = jnp.zeros((1, P_pad), jnp.float32).at[:, HD:2 * HD].set(
        params["b_dst"])
    node_out = run_node_proj(x_p, w_cat, b_cat, vmem_cap)        # [Np, P_pad]
    fs = node_out[:, :HD]
    fd = node_out[:, HD:2 * HD]
    a_s = node_out[:, 2 * HD:2 * HD + H]
    a_d = node_out[:, 2 * HD + H:2 * HD + 2 * H]

    # ---- edge attention projection: tiny [E,Fe]@[Fe,H]; plain XLA ----
    a_e = feat_edge @ params["w_attn_edge"]                      # [E, H]

    # ---- per-edge logits + leaky-relu (O(E*H) glue) ----
    logit_e = a_s[src_idx] + a_d[dst_idx] + a_e
    logit_e = jnp.where(logit_e >= 0, logit_e, NEG_SLOPE * logit_e)

    # ---- dual edge-softmax statistics as O(E*H) segment reductions ----
    # c = 0.5*max + 0.5*log(sum exp(logit - max)); then
    # sqrt(softmax_dst * softmax_src) = exp(logit - c_dst - c_src).
    def seg_consts(idx):
        m = jnp.full((Np, H), NEG, jnp.float32).at[idx].max(logit_e)
        s = jnp.zeros((Np, H), jnp.float32).at[idx].add(
            jnp.exp(logit_e - m[idx]))
        ok = s > 0.0                            # guard isolated / padded nodes
        m = jnp.where(ok, m, 0.0)
        s = jnp.where(ok, s, 1.0)
        return 0.5 * m + 0.5 * jnp.log(s)

    c_dst = seg_consts(dst_idx).T.reshape(H, 1, Np)              # bcast over src
    c_src = seg_consts(src_idx).T.reshape(H, Np, 1)              # bcast over dst

    # ---- dense per-edge logits on a -1e30 background, stored [H, src, dst] so
    #      every hop matmul is a natural A@B with a lane-dense dst tile. ----
    # TODO(synk): build per-dst-tile logits in-kernel from a scalar-prefetched
    #             edge list; the dense H*N^2 tensor does not scale.
    # NOTE: duplicate (src,dst) edges collapse to one value here (reference's
    #       per-edge segment softmax counts each occurrence); inputs are assumed
    #       de-duplicated, as in the test harness.
    logitT = jnp.full((H, Np, Np), NEG, jnp.float32)
    logitT = logitT.at[:, src_idx, dst_idx].set(logit_e.T)

    # ---- lane-dense [H, D, Np] feature layout ----
    feat0T = fs.reshape(Np, H, D).transpose(1, 2, 0)
    fdstT = fd.reshape(Np, H, D).transpose(1, 2, 0)

    # ---- fused dual-softmax + hop 1, then the remaining hops ----
    aT, feat1T = run_attn_hop1(logitT, c_src, c_dst, feat0T, tile, a_dtype,
                               vmem_cap)
    featsT = [feat0T, feat1T]
    for _ in range(2, n_hops + 1):
        featsT.append(run_hop(aT, featsT[-1], tile, vmem_cap))

    # ---- per-tile epilogue: feat_trans + HA hop attention + residual ----
    outT = run_final(featsT, fdstT, params, tile, n_hops, vmem_cap)  # [H,D,Np]
    return outT[:, :, :N].transpose(2, 0, 1)                          # [N,H,D]


# -------------------------- pure-JAX reference (check) -------------------------
def reference_forward(x, feat_edge, src_idx, dst_idx, params, n_hops=K):
    N = x.shape[0]
    H = params["w_attn_src"].shape[1]
    D = params["w_src"].shape[1] // H

    def leaky(v):
        return jnp.where(v >= 0, v, NEG_SLOPE * v)

    feat_src_fc = (x @ params["w_src"]).reshape(N, H, D)
    feat_dst_fc = (x @ params["w_dst"] + params["b_dst"]).reshape(N, H, D)
    attn_src = (x @ params["w_attn_src"]).reshape(N, H, 1)
    attn_dst = (x @ params["w_attn_dst"]).reshape(N, H, 1)
    attn_edge = (feat_edge @ params["w_attn_edge"]).reshape(-1, H, 1)
    e = leaky(attn_src[src_idx] + attn_dst[dst_idx] + attn_edge)

    def seg_softmax(vals, idx):
        m = jnp.full((N, H, 1), -jnp.inf).at[idx].max(vals)
        ex = jnp.exp(vals - m[idx])
        s = jnp.zeros((N, H, 1)).at[idx].add(ex)
        return ex / s[idx]

    a = jnp.sqrt(jnp.maximum(seg_softmax(e, dst_idx), 1e-9) *
                 jnp.maximum(seg_softmax(e, src_idx), 1e-9))

    def feat_trans(h, idx):
        mean = h.mean(-1, keepdims=True)
        var = ((h - mean) ** 2).mean(-1, keepdims=True) + 1e-9
        h = (h - mean) * params["scale"][idx][None] * lax.rsqrt(var) \
            + params["offset"][idx][None]
        return h + params["pos_emb"][idx][None]

    h0 = feat_trans(feat_src_fc, 0)
    feat = feat_src_fc
    hstack = []
    for k in range(n_hops):
        msg = feat[src_idx] * a
        feat = jnp.zeros_like(feat).at[dst_idx].add(msg)
        hstack.append(feat_trans(feat, k + 1))
    hstack = jnp.stack(hstack, axis=2)                     # [N,H,K,D]
    a_l = (h0[:, :, None, :] * params["hop_attn_l"][None, :, None, :]
           ).sum(-1, keepdims=True)
    ah = (hstack * params["hop_attn_r"][None, :, None, :]
          ).sum(-1, keepdims=True) + a_l
    w = jax.nn.softmax(leaky(ah), axis=-2)
    rst = jnp.matmul(jnp.swapaxes(w, -2, -1), hstack)[:, :, 0, :]
    return rst + feat_dst_fc


if __name__ == "__main__":
    key = jax.random.PRNGKey(0)
    N, F, Fe, D, H = 64, 16, 8, 32, N_HEADS
    keys = jax.random.split(key, 16)

    # Graph: bidirectional ring (in/out degree >= 1 everywhere) + random edges.
    i = jnp.arange(N)
    mask = jnp.zeros((N, N), jnp.float32)
    mask = mask.at[(i + 1) % N, i].set(1.0)
    mask = mask.at[i, (i + 1) % N].set(1.0)
    rand_src = jax.random.randint(keys[0], (4 * N,), 0, N)
    rand_dst = jax.random.randint(keys[1], (4 * N,), 0, N)
    mask = mask.at[rand_dst, rand_src].set(1.0)
    dst_idx, src_idx = jnp.nonzero(mask)        # unique edge list (dst, src)
    E = int(dst_idx.shape[0])

    x = jax.random.normal(keys[2], (N, F), jnp.float32)
    feat_edge = jax.random.normal(keys[3], (E, Fe), jnp.float32)

    g = 0.3
    params = {
        "w_src": g * jax.random.normal(keys[4], (F, H * D), jnp.float32),
        "w_dst": g * jax.random.normal(keys[5], (F, H * D), jnp.float32),
        "b_dst": g * jax.random.normal(keys[6], (1, H * D), jnp.float32),
        "w_attn_src": g * jax.random.normal(keys[7], (F, H), jnp.float32),
        "w_attn_dst": g * jax.random.normal(keys[8], (F, H), jnp.float32),
        "w_attn_edge": g * jax.random.normal(keys[9], (Fe, H), jnp.float32),
        "scale": 1.0 + 0.1 * jax.random.normal(keys[10], (K + 1, H, D),
                                               jnp.float32),
        "offset": 0.1 * jax.random.normal(keys[11], (K + 1, H, D), jnp.float32),
        "pos_emb": g * jax.random.normal(keys[12], (K + 1, H, D), jnp.float32),
        "hop_attn_l": g * jax.random.normal(keys[13], (H, D), jnp.float32),
        "hop_attn_r": g * jax.random.normal(keys[14], (H, D), jnp.float32),
    }

    # Match matmul precision between the Pallas kernels and the XLA reference.
    with jax.default_matmul_precision("highest"):
        fwd_f32 = jax.jit(functools.partial(agdn_conv_forward,
                                            a_dtype=jnp.float32))
        fwd_bf16 = jax.jit(functools.partial(agdn_conv_forward,
                                             a_dtype=jnp.bfloat16))

        ref = reference_forward(x, feat_edge, src_idx, dst_idx, params)

        out = jax.block_until_ready(
            fwd_f32(x, feat_edge, src_idx, dst_idx, params))
        np.testing.assert_allclose(np.asarray(out), np.asarray(ref),
                                   rtol=2e-3, atol=2e-3)

        # bf16 attention storage (default production path): f32 accumulation
        # keeps the error at the bf16 representation level of `a`, compounded
        # over K hops -> validate at a correspondingly looser tolerance.
        out_bf16 = jax.block_until_ready(
            fwd_bf16(x, feat_edge, src_idx, dst_idx, params))
        np.testing.assert_allclose(np.asarray(out_bf16), np.asarray(ref),
                                   rtol=5e-2, atol=5e-2)

    print("KERNEL_OK")
</pallas_src>

<mosaic_0001>
module attributes {stable_mosaic.version = 11 : i64} {
  func.func @node_proj_kernel(%arg0: i32, %arg1: memref<128x16xf32, #tpu.memory_space<vmem>>, %arg2: memref<16x256xf32, #tpu.memory_space<vmem>>, %arg3: memref<1x256xf32, #tpu.memory_space<vmem>>, %arg4: memref<128x256xf32, #tpu.memory_space<vmem>>) attributes {dimension_semantics = [#tpu.dimension_semantics<parallel>], iteration_bounds = array<i64: 1>, scalar_prefetch = 0 : i64, scratch_operands = 0 : i64, tpu.core_type = #tpu.core_type<tc>, window_params = [{transform_indices = @transform_0, window_bounds = array<i64: 128, 16>}, {pipeline_mode = #tpu.pipeline_mode<synchronous>, transform_indices = @transform_1, window_bounds = array<i64: 16, 256>}, {pipeline_mode = #tpu.pipeline_mode<synchronous>, transform_indices = @transform_2, window_bounds = array<i64: 1, 256>}, {transform_indices = @transform_3, window_bounds = array<i64: 128, 256>}]} {
    %c0 = arith.constant 0 : index
    %c0_0 = arith.constant 0 : index
    %0 = vector.load %arg1[%c0, %c0_0] : memref<128x16xf32, #tpu.memory_space<vmem>>, vector<128x16xf32>
    %c0_1 = arith.constant 0 : index
    %c0_2 = arith.constant 0 : index
    %1 = vector.load %arg2[%c0_1, %c0_2] : memref<16x256xf32, #tpu.memory_space<vmem>>, vector<16x256xf32>
    %cst = arith.constant dense<0.000000e+00> : vector<128x256xf32>
    %2 = tpu.matmul %0, %1, %cst {dimension_numbers = #tpu.dot_dimension_numbers<[1], [0], [0], [1], [0, 0, 1, 1], [], []>, precision = #tpu.contract_precision<fp32>} : vector<128x16xf32>, vector<16x256xf32>, vector<128x256xf32> -> vector<128x256xf32>
    %c0_3 = arith.constant 0 : index
    %c0_4 = arith.constant 0 : index
    %3 = vector.load %arg3[%c0_3, %c0_4] : memref<1x256xf32, #tpu.memory_space<vmem>>, vector<1x256xf32>
    %4 = vector.broadcast %3 : vector<1x256xf32> to vector<128x256xf32>
    %5 = arith.addf %2, %4 : vector<128x256xf32>
    %c0_5 = arith.constant 0 : index
    %c0_6 = arith.constant 0 : index
    %6 = vector.load %arg4[%c0_5, %c0_6] : memref<128x256xf32, #tpu.memory_space<vmem>>, vector<128x256xf32>
    tpu.vector_store %arg4[%c0_5, %c0_6], %5 {strides = array<i32>} : memref<128x256xf32, #tpu.memory_space<vmem>>, vector<128x256xf32>,
    return
  }
  func.func @transform_0(%arg0: i32) -> (i32, i32) {
    %c0_i32 = arith.constant 0 : i32
    %c0_i32_0 = arith.constant 0 : i32
    return %arg0, %c0_i32 : i32, i32
  }
  func.func @transform_1(%arg0: i32) -> (i32, i32) {
    %c0_i32 = arith.constant 0 : i32
    %c0_i32_0 = arith.constant 0 : i32
    %c0_i32_1 = arith.constant 0 : i32
    return %c0_i32, %c0_i32_0 : i32, i32
  }
  func.func @transform_2(%arg0: i32) -> (i32, i32) {
    %c0_i32 = arith.constant 0 : i32
    %c0_i32_0 = arith.constant 0 : i32
    %c0_i32_1 = arith.constant 0 : i32
    return %c0_i32, %c0_i32_0 : i32, i32
  }
  func.func @transform_3(%arg0: i32) -> (i32, i32) {
    %c0_i32 = arith.constant 0 : i32
    %c0_i32_0 = arith.constant 0 : i32
    return %arg0, %c0_i32 : i32, i32
  }
}

module attributes {stable_mosaic.version = 11 : i64} {
  func.func @attn_hop1_kernel(%arg0: i32, %arg1: memref<2x128x128xf32, #tpu.memory_space<vmem>>, %arg2: memref<2x128x1xf32, #tpu.memory_space<vmem>>, %arg3: memref<2x1x128xf32, #tpu.memory_space<vmem>>, %arg4: memref<2x32x128xf32, #tpu.memory_space<vmem>>, %arg5: memref<2x128x128xf32, #tpu.memory_space<vmem>>, %arg6: memref<2x32x128xf32, #tpu.memory_space<vmem>>) attributes {dimension_semantics = [#tpu.dimension_semantics<parallel>], iteration_bounds = array<i64: 1>, scalar_prefetch = 0 : i64, scratch_operands = 0 : i64, tpu.core_type = #tpu.core_type<tc>, window_params = [{transform_indices = @transform_0, window_bounds = array<i64: 2, 128, 128>}, {pipeline_mode = #tpu.pipeline_mode<synchronous>, transform_indices = @transform_1, window_bounds = array<i64: 2, 128, 1>}, {transform_indices = @transform_2, window_bounds = array<i64: 2, 1, 128>}, {pipeline_mode = #tpu.pipeline_mode<synchronous>, transform_indices = @transform_3, window_bounds = array<i64: 2, 32, 128>}, {transform_indices = @transform_4, window_bounds = array<i64: 2, 128, 128>}, {transform_indices = @transform_5, window_bounds = array<i64: 2, 32, 128>}]} {
    %c0 = arith.constant 0 : index
    %c0_0 = arith.constant 0 : index
    %c0_1 = arith.constant 0 : index
    %0 = vector.load %arg1[%c0, %c0_0, %c0_1] : memref<2x128x128xf32, #tpu.memory_space<vmem>>, vector<2x128x128xf32>
    %c0_2 = arith.constant 0 : index
    %c0_3 = arith.constant 0 : index
    %c0_4 = arith.constant 0 : index
    %1 = vector.load %arg2[%c0_2, %c0_3, %c0_4] : memref<2x128x1xf32, #tpu.memory_space<vmem>>, vector<2x128x1xf32>
    %2 = vector.broadcast %1 : vector<2x128x1xf32> to vector<2x128x128xf32>
    %3 = arith.subf %0, %2 : vector<2x128x128xf32>
    %c0_5 = arith.constant 0 : index
    %c0_6 = arith.constant 0 : index
    %c0_7 = arith.constant 0 : index
    %4 = vector.load %arg3[%c0_5, %c0_6, %c0_7] : memref<2x1x128xf32, #tpu.memory_space<vmem>>, vector<2x1x128xf32>
    %5 = vector.broadcast %4 : vector<2x1x128xf32> to vector<2x128x128xf32>
    %6 = arith.subf %3, %5 : vector<2x128x128xf32>
    %7 = math.exp %6 : vector<2x128x128xf32>
    %c0_8 = arith.constant 0 : index
    %c0_9 = arith.constant 0 : index
    %c0_10 = arith.constant 0 : index
    %8 = vector.load %arg5[%c0_8, %c0_9, %c0_10] : memref<2x128x128xf32, #tpu.memory_space<vmem>>, vector<2x128x128xf32>
    tpu.vector_store %arg5[%c0_8, %c0_9, %c0_10], %7 {strides = array<i32>} : memref<2x128x128xf32, #tpu.memory_space<vmem>>, vector<2x128x128xf32>,
    %c0_11 = arith.constant 0 : index
    %c0_12 = arith.constant 0 : index
    %c0_13 = arith.constant 0 : index
    %9 = vector.load %arg4[%c0_11, %c0_12, %c0_13] : memref<2x32x128xf32, #tpu.memory_space<vmem>>, vector<2x32x128xf32>
    "tpu.trace_start"() <{level = 10 : i32, message = "hfs,hst->hft"}> : () -> ()
    %cst = arith.constant dense<0.000000e+00> : vector<2x32x128xf32>
    %10 = tpu.matmul %9, %7, %cst {dimension_numbers = #tpu.dot_dimension_numbers<[2], [1], [1], [2], [0, 0, 0, 1, 1, 2], [0], [0]>, precision = #tpu.contract_precision<fp32>} : vector<2x32x128xf32>, vector<2x128x128xf32>, vector<2x32x128xf32> -> vector<2x32x128xf32>
    "tpu.trace_stop"() : () -> ()
    %c0_14 = arith.constant 0 : index
    %c0_15 = arith.constant 0 : index
    %c0_16 = arith.constant 0 : index
    %11 = vector.load %arg6[%c0_14, %c0_15, %c0_16] : memref<2x32x128xf32, #tpu.memory_space<vmem>>, vector<2x32x128xf32>
    tpu.vector_store %arg6[%c0_14, %c0_15, %c0_16], %10 {strides = array<i32>} : memref<2x32x128xf32, #tpu.memory_space<vmem>>, vector<2x32x128xf32>,
    return
  }
  func.func @transform_0(%arg0: i32) -> (i32, i32, i32) {
    %c0_i32 = arith.constant 0 : i32
    %c0_i32_0 = arith.constant 0 : i32
    %c0_i32_1 = arith.constant 0 : i32
    return %c0_i32, %c0_i32_0, %arg0 : i32, i32, i32
  }
  func.func @transform_1(%arg0: i32) -> (i32, i32, i32) {
    %c0_i32 = arith.constant 0 : i32
    %c0_i32_0 = arith.constant 0 : i32
    %c0_i32_1 = arith.constant 0 : i32
    %c0_i32_2 = arith.constant 0 : i32
    return %c0_i32, %c0_i32_0, %c0_i32_1 : i32, i32, i32
  }
  func.func @transform_2(%arg0: i32) -> (i32, i32, i32) {
    %c0_i32 = arith.constant 0 : i32
    %c0_i32_0 = arith.constant 0 : i32
    %c0_i32_1 = arith.constant 0 : i32
    return %c0_i32, %c0_i32_0, %arg0 : i32, i32, i32
  }
  func.func @transform_3(%arg0: i32) -> (i32, i32, i32) {
    %c0_i32 = arith.constant 0 : i32
    %c0_i32_0 = arith.constant 0 : i32
    %c0_i32_1 = arith.constant 0 : i32
    %c0_i32_2 = arith.constant 0 : i32
    return %c0_i32, %c0_i32_0, %c0_i32_1 : i32, i32, i32
  }
  func.func @transform_4(%arg0: i32) -> (i32, i32, i32) {
    %c0_i32 = arith.constant 0 : i32
    %c0_i32_0 = arith.constant 0 : i32
    %c0_i32_1 = arith.constant 0 : i32
    return %c0_i32, %c0_i32_0, %arg0 : i32, i32, i32
  }
  func.func @transform_5(%arg0: i32) -> (i32, i32, i32) {
    %c0_i32 = arith.constant 0 : i32
    %c0_i32_0 = arith.constant 0 : i32
    %c0_i32_1 = arith.constant 0 : i32
    return %c0_i32, %c0_i32_0, %arg0 : i32, i32, i32
  }
}

module attributes {stable_mosaic.version = 11 : i64} {
  func.func @hop_kernel(%arg0: i32, %arg1: memref<2x128x128xf32, #tpu.memory_space<vmem>>, %arg2: memref<2x32x128xf32, #tpu.memory_space<vmem>>, %arg3: memref<2x32x128xf32, #tpu.memory_space<vmem>>) attributes {dimension_semantics = [#tpu.dimension_semantics<parallel>], iteration_bounds = array<i64: 1>, scalar_prefetch = 0 : i64, scratch_operands = 0 : i64, tpu.core_type = #tpu.core_type<tc>, window_params = [{transform_indices = @transform_0, window_bounds = array<i64: 2, 128, 128>}, {pipeline_mode = #tpu.pipeline_mode<synchronous>, transform_indices = @transform_1, window_bounds = array<i64: 2, 32, 128>}, {transform_indices = @transform_2, window_bounds = array<i64: 2, 32, 128>}]} {
    %c0 = arith.constant 0 : index
    %c0_0 = arith.constant 0 : index
    %c0_1 = arith.constant 0 : index
    %0 = vector.load %arg1[%c0, %c0_0, %c0_1] : memref<2x128x128xf32, #tpu.memory_space<vmem>>, vector<2x128x128xf32>
    %c0_2 = arith.constant 0 : index
    %c0_3 = arith.constant 0 : index
    %c0_4 = arith.constant 0 : index
    %1 = vector.load %arg2[%c0_2, %c0_3, %c0_4] : memref<2x32x128xf32, #tpu.memory_space<vmem>>, vector<2x32x128xf32>
    "tpu.trace_start"() <{level = 10 : i32, message = "hfs,hst->hft"}> : () -> ()
    %cst = arith.constant dense<0.000000e+00> : vector<2x32x128xf32>
    %2 = tpu.matmul %1, %0, %cst {dimension_numbers = #tpu.dot_dimension_numbers<[2], [1], [1], [2], [0, 0, 0, 1, 1, 2], [0], [0]>, precision = #tpu.contract_precision<fp32>} : vector<2x32x128xf32>, vector<2x128x128xf32>, vector<2x32x128xf32> -> vector<2x32x128xf32>
    "tpu.trace_stop"() : () -> ()
    %c0_5 = arith.constant 0 : index
    %c0_6 = arith.constant 0 : index
    %c0_7 = arith.constant 0 : index
    %3 = vector.load %arg3[%c0_5, %c0_6, %c0_7] : memref<2x32x128xf32, #tpu.memory_space<vmem>>, vector<2x32x128xf32>
    tpu.vector_store %arg3[%c0_5, %c0_6, %c0_7], %2 {strides = array<i32>} : memref<2x32x128xf32, #tpu.memory_space<vmem>>, vector<2x32x128xf32>,
    return
  }
  func.func @transform_0(%arg0: i32) -> (i32, i32, i32) {
    %c0_i32 = arith.constant 0 : i32
    %c0_i32_0 = arith.constant 0 : i32
    %c0_i32_1 = arith.constant 0 : i32
    return %c0_i32, %c0_i32_0, %arg0 : i32, i32, i32
  }
  func.func @transform_1(%arg0: i32) -> (i32, i32, i32) {
    %c0_i32 = arith.constant 0 : i32
    %c0_i32_0 = arith.constant 0 : i32
    %c0_i32_1 = arith.constant 0 : i32
    %c0_i32_2 = arith.constant 0 : i32
    return %c0_i32, %c0_i32_0, %c0_i32_1 : i32, i32, i32
  }
  func.func @transform_2(%arg0: i32) -> (i32, i32, i32) {
    %c0_i32 = arith.constant 0 : i32
    %c0_i32_0 = arith.constant 0 : i32
    %c0_i32_1 = arith.constant 0 : i32
    return %c0_i32, %c0_i32_0, %arg0 : i32, i32, i32
  }
}

module attributes {stable_mosaic.version = 11 : i64} {
  func.func @final_kernel(%arg0: i32, %arg1: memref<2x32x128xf32, #tpu.memory_space<vmem>>, %arg2: memref<2x32x128xf32, #tpu.memory_space<vmem>>, %arg3: memref<2x32x128xf32, #tpu.memory_space<vmem>>, %arg4: memref<2x32x128xf32, #tpu.memory_space<vmem>>, %arg5: memref<2x32x128xf32, #tpu.memory_space<vmem>>, %arg6: memref<4x2x32xf32, #tpu.memory_space<vmem>>, %arg7: memref<4x2x32xf32, #tpu.memory_space<vmem>>, %arg8: memref<4x2x32xf32, #tpu.memory_space<vmem>>, %arg9: memref<2x32xf32, #tpu.memory_space<vmem>>, %arg10: memref<2x32xf32, #tpu.memory_space<vmem>>, %arg11: memref<2x32x128xf32, #tpu.memory_space<vmem>>) attributes {dimension_semantics = [#tpu.dimension_semantics<parallel>], iteration_bounds = array<i64: 1>, scalar_prefetch = 0 : i64, scratch_operands = 0 : i64, tpu.core_type = #tpu.core_type<tc>, window_params = [{transform_indices = @transform_0, window_bounds = array<i64: 2, 32, 128>}, {transform_indices = @transform_1, window_bounds = array<i64: 2, 32, 128>}, {transform_indices = @transform_2, window_bounds = array<i64: 2, 32, 128>}, {transform_indices = @transform_3, window_bounds = array<i64: 2, 32, 128>}, {transform_indices = @transform_4, window_bounds = array<i64: 2, 32, 128>}, {pipeline_mode = #tpu.pipeline_mode<synchronous>, transform_indices = @transform_5, window_bounds = array<i64: 4, 2, 32>}, {pipeline_mode = #tpu.pipeline_mode<synchronous>, transform_indices = @transform_6, window_bounds = array<i64: 4, 2, 32>}, {pipeline_mode = #tpu.pipeline_mode<synchronous>, transform_indices = @transform_7, window_bounds = array<i64: 4, 2, 32>}, {pipeline_mode = #tpu.pipeline_mode<synchronous>, transform_indices = @transform_8, window_bounds = array<i64: 2, 32>}, {pipeline_mode = #tpu.pipeline_mode<synchronous>, transform_indices = @transform_9, window_bounds = array<i64: 2, 32>}, {transform_indices = @transform_10, window_bounds = array<i64: 2, 32, 128>}]} {
    %c0 = arith.constant 0 : index
    %c0_0 = arith.constant 0 : index
    %c0_1 = arith.constant 0 : index
    %0 = vector.load %arg6[%c0, %c0_0, %c0_1] : memref<4x2x32xf32, #tpu.memory_space<vmem>>, vector<4x2x32xf32>
    %c0_2 = arith.constant 0 : index
    %c0_3 = arith.constant 0 : index
    %c0_4 = arith.constant 0 : index
    %1 = vector.load %arg7[%c0_2, %c0_3, %c0_4] : memref<4x2x32xf32, #tpu.memory_space<vmem>>, vector<4x2x32xf32>
    %c0_5 = arith.constant 0 : index
    %c0_6 = arith.constant 0 : index
    %c0_7 = arith.constant 0 : index
    %2 = vector.load %arg8[%c0_5, %c0_6, %c0_7] : memref<4x2x32xf32, #tpu.memory_space<vmem>>, vector<4x2x32xf32>
    %c0_8 = arith.constant 0 : index
    %c0_9 = arith.constant 0 : index
    %3 = vector.load %arg9[%c0_8, %c0_9] : memref<2x32xf32, #tpu.memory_space<vmem>>, vector<2x32xf32>
    %4 = vector.shape_cast %3 : vector<2x32xf32> to vector<2x32x1xf32>
    %c0_10 = arith.constant 0 : index
    %c0_11 = arith.constant 0 : index
    %5 = vector.load %arg10[%c0_10, %c0_11] : memref<2x32xf32, #tpu.memory_space<vmem>>, vector<2x32xf32>
    %6 = vector.shape_cast %5 : vector<2x32xf32> to vector<2x32x1xf32>
    %c0_12 = arith.constant 0 : index
    %c0_13 = arith.constant 0 : index
    %c0_14 = arith.constant 0 : index
    %7 = vector.load %arg1[%c0_12, %c0_13, %c0_14] : memref<2x32x128xf32, #tpu.memory_space<vmem>>, vector<2x32x128xf32>
    %cst = arith.constant dense<0.000000e+00> : vector<2x128xf32>
    %8 = vector.multi_reduction <add>, %7, %cst [1] : vector<2x32x128xf32> to vector<2x128xf32>
    %9 = vector.shape_cast %8 : vector<2x128xf32> to vector<2x1x128xf32>
    %cst_15 = arith.constant 3.200000e+01 : f32
    %10 = vector.broadcast %cst_15 : f32 to vector<2x1x128xf32>
    %11 = arith.divf %9, %10 : vector<2x1x128xf32>
    %12 = vector.broadcast %11 : vector<2x1x128xf32> to vector<2x32x128xf32>
    %13 = arith.subf %7, %12 : vector<2x32x128xf32>
    %14 = arith.mulf %13, %13 : vector<2x32x128xf32>
    %cst_16 = arith.constant dense<0.000000e+00> : vector<2x128xf32>
    %15 = vector.multi_reduction <add>, %14, %cst_16 [1] : vector<2x32x128xf32> to vector<2x128xf32>
    %16 = vector.shape_cast %15 : vector<2x128xf32> to vector<2x1x128xf32>
    %cst_17 = arith.constant 3.200000e+01 : f32
    %17 = vector.broadcast %cst_17 : f32 to vector<2x1x128xf32>
    %18 = arith.divf %16, %17 : vector<2x1x128xf32>
    %cst_18 = arith.constant 9.99999971E-10 : f32
    %19 = vector.broadcast %cst_18 : f32 to vector<2x1x128xf32>
    %20 = arith.addf %18, %19 : vector<2x1x128xf32>
    %21 = vector.broadcast %11 : vector<2x1x128xf32> to vector<2x32x128xf32>
    %22 = arith.subf %7, %21 : vector<2x32x128xf32>
    %23 = vector.extract_strided_slice %0 {offsets = [0, 0, 0], sizes = [1, 2, 32], strides = [1, 1, 1]} : vector<4x2x32xf32> to vector<1x2x32xf32>
    %24 = vector.shape_cast %23 : vector<1x2x32xf32> to vector<2x32xf32>
    %25 = vector.shape_cast %24 : vector<2x32xf32> to vector<2x32x1xf32>
    %26 = math.rsqrt %20 : vector<2x1x128xf32>
    %27 = vector.broadcast %25 : vector<2x32x1xf32> to vector<2x32x128xf32>
    %28 = vector.broadcast %26 : vector<2x1x128xf32> to vector<2x32x128xf32>
    %29 = arith.mulf %27, %28 : vector<2x32x128xf32>
    %30 = arith.mulf %22, %29 : vector<2x32x128xf32>
    %31 = vector.extract_strided_slice %1 {offsets = [0, 0, 0], sizes = [1, 2, 32], strides = [1, 1, 1]} : vector<4x2x32xf32> to vector<1x2x32xf32>
    %32 = vector.shape_cast %31 : vector<1x2x32xf32> to vector<2x32xf32>
    %33 = vector.shape_cast %32 : vector<2x32xf32> to vector<2x32x1xf32>
    %34 = vector.broadcast %33 : vector<2x32x1xf32> to vector<2x32x128xf32>
    %35 = arith.addf %30, %34 : vector<2x32x128xf32>
    %36 = vector.extract_strided_slice %2 {offsets = [0, 0, 0], sizes = [1, 2, 32], strides = [1, 1, 1]} : vector<4x2x32xf32> to vector<1x2x32xf32>
    %37 = vector.shape_cast %36 : vector<1x2x32xf32> to vector<2x32xf32>
    %38 = vector.shape_cast %37 : vector<2x32xf32> to vector<2x32x1xf32>
    %39 = vector.broadcast %38 : vector<2x32x1xf32> to vector<2x32x128xf32>
    %40 = arith.addf %35, %39 : vector<2x32x128xf32>
    %41 = vector.broadcast %4 : vector<2x32x1xf32> to vector<2x32x128xf32>
    %42 = arith.mulf %40, %41 : vector<2x32x128xf32>
    %cst_19 = arith.constant dense<0.000000e+00> : vector<2x128xf32>
    %43 = vector.multi_reduction <add>, %42, %cst_19 [1] : vector<2x32x128xf32> to vector<2x128xf32>
    %44 = vector.shape_cast %43 : vector<2x128xf32> to vector<2x1x128xf32>
    %cst_20 = arith.constant 0xFF800000 : f32
    %45 = vector.broadcast %cst_20 : f32 to vector<2x1x128xf32>
    %cst_21 = arith.constant 0.000000e+00 : f32
    %46 = vector.broadcast %cst_21 : f32 to vector<2x1x128xf32>
    %cst_22 = arith.constant 0.000000e+00 : f32
    %47 = vector.broadcast %cst_22 : f32 to vector<2x32x128xf32>
    %c0_23 = arith.constant 0 : index
    %c0_24 = arith.constant 0 : index
    %c0_25 = arith.constant 0 : index
    %48 = vector.load %arg2[%c0_23, %c0_24, %c0_25] : memref<2x32x128xf32, #tpu.memory_space<vmem>>, vector<2x32x128xf32>
    %cst_26 = arith.constant dense<0.000000e+00> : vector<2x128xf32>
    %49 = vector.multi_reduction <add>, %48, %cst_26 [1] : vector<2x32x128xf32> to vector<2x128xf32>
    %50 = vector.shape_cast %49 : vector<2x128xf32> to vector<2x1x128xf32>
    %cst_27 = arith.constant 3.200000e+01 : f32
    %51 = vector.broadcast %cst_27 : f32 to vector<2x1x128xf32>
    %52 = arith.divf %50, %51 : vector<2x1x128xf32>
    %53 = vector.broadcast %52 : vector<2x1x128xf32> to vector<2x32x128xf32>
    %54 = arith.subf %48, %53 : vector<2x32x128xf32>
    %55 = arith.mulf %54, %54 : vector<2x32x128xf32>
    %cst_28 = arith.constant dense<0.000000e+00> : vector<2x128xf32>
    %56 = vector.multi_reduction <add>, %55, %cst_28 [1] : vector<2x32x128xf32> to vector<2x128xf32>
    %57 = vector.shape_cast %56 : vector<2x128xf32> to vector<2x1x128xf32>
    %cst_29 = arith.constant 3.200000e+01 : f32
    %58 = vector.broadcast %cst_29 : f32 to vector<2x1x128xf32>
    %59 = arith.divf %57, %58 : vector<2x1x128xf32>
    %cst_30 = arith.constant 9.99999971E-10 : f32
    %60 = vector.broadcast %cst_30 : f32 to vector<2x1x128xf32>
    %61 = arith.addf %59, %60 : vector<2x1x128xf32>
    %62 = vector.broadcast %52 : vector<2x1x128xf32> to vector<2x32x128xf32>
    %63 = arith.subf %48, %62 : vector<2x32x128xf32>
    %64 = vector.extract_strided_slice %0 {offsets = [1, 0, 0], sizes = [1, 2, 32], strides = [1, 1, 1]} : vector<4x2x32xf32> to vector<1x2x32xf32>
    %65 = vector.shape_cast %64 : vector<1x2x32xf32> to vector<2x32xf32>
    %66 = vector.shape_cast %65 : vector<2x32xf32> to vector<2x32x1xf32>
    %67 = math.rsqrt %61 : vector<2x1x128xf32>
    %68 = vector.broadcast %66 : vector<2x32x1xf32> to vector<2x32x128xf32>
    %69 = vector.broadcast %67 : vector<2x1x128xf32> to vector<2x32x128xf32>
    %70 = arith.mulf %68, %69 : vector<2x32x128xf32>
    %71 = arith.mulf %63, %70 : vector<2x32x128xf32>
    %72 = vector.extract_strided_slice %1 {offsets = [1, 0, 0], sizes = [1, 2, 32], strides = [1, 1, 1]} : vector<4x2x32xf32> to vector<1x2x32xf32>
    %73 = vector.shape_cast %72 : vector<1x2x32xf32> to vector<2x32xf32>
    %74 = vector.shape_cast %73 : vector<2x32xf32> to vector<2x32x1xf32>
    %75 = vector.broadcast %74 : vector<2x32x1xf32> to vector<2x32x128xf32>
    %76 = arith.addf %71, %75 : vector<2x32x128xf32>
    %77 = vector.extract_strided_slice %2 {offsets = [1, 0, 0], sizes = [1, 2, 32], strides = [1, 1, 1]} : vector<4x2x32xf32> to vector<1x2x32xf32>
    %78 = vector.shape_cast %77 : vector<1x2x32xf32> to vector<2x32xf32>
    %79 = vector.shape_cast %78 : vector<2x32xf32> to vector<2x32x1xf32>
    %80 = vector.broadcast %79 : vector<2x32x1xf32> to vector<2x32x128xf32>
    %81 = arith.addf %76, %80 : vector<2x32x128xf32>
    %82 = vector.broadcast %6 : vector<2x32x1xf32> to vector<2x32x128xf32>
    %83 = arith.mulf %81, %82 : vector<2x32x128xf32>
    %cst_31 = arith.constant dense<0.000000e+00> : vector<2x128xf32>
    %84 = vector.multi_reduction <add>, %83, %cst_31 [1] : vector<2x32x128xf32> to vector<2x128xf32>
    %85 = vector.shape_cast %84 : vector<2x128xf32> to vector<2x1x128xf32>
    %86 = arith.addf %85, %44 : vector<2x1x128xf32>
    %cst_32 = arith.constant 0.000000e+00 : f32
    %87 = vector.broadcast %cst_32 : f32 to vector<2x1x128xf32>
    %88 = arith.cmpf oge, %86, %87 : vector<2x1x128xf32>
    %cst_33 = arith.constant 2.000000e-01 : f32
    %89 = vector.broadcast %cst_33 : f32 to vector<2x1x128xf32>
    %90 = arith.mulf %89, %86 : vector<2x1x128xf32>
    %91 = arith.select %88, %86, %90 : vector<2x1x128xi1>, vector<2x1x128xf32>
    %92 = arith.maximumf %45, %91 : vector<2x1x128xf32>
    %93 = arith.subf %45, %92 : vector<2x1x128xf32>
    %94 = math.exp %93 : vector<2x1x128xf32>
    %95 = arith.subf %91, %92 : vector<2x1x128xf32>
    %96 = math.exp %95 : vector<2x1x128xf32>
    %97 = arith.mulf %46, %94 : vector<2x1x128xf32>
    %98 = arith.addf %97, %96 : vector<2x1x128xf32>
    %99 = vector.broadcast %94 : vector<2x1x128xf32> to vector<2x32x128xf32>
    %100 = arith.mulf %47, %99 : vector<2x32x128xf32>
    %101 = vector.broadcast %96 : vector<2x1x128xf32> to vector<2x32x128xf32>
    %102 = arith.mulf %101, %81 : vector<2x32x128xf32>
    %103 = arith.addf %100, %102 : vector<2x32x128xf32>
    %c0_34 = arith.constant 0 : index
    %c0_35 = arith.constant 0 : index
    %c0_36 = arith.constant 0 : index
    %104 = vector.load %arg3[%c0_34, %c0_35, %c0_36] : memref<2x32x128xf32, #tpu.memory_space<vmem>>, vector<2x32x128xf32>
    %cst_37 = arith.constant dense<0.000000e+00> : vector<2x128xf32>
    %105 = vector.multi_reduction <add>, %104, %cst_37 [1] : vector<2x32x128xf32> to vector<2x128xf32>
    %106 = vector.shape_cast %105 : vector<2x128xf32> to vector<2x1x128xf32>
    %cst_38 = arith.constant 3.200000e+01 : f32
    %107 = vector.broadcast %cst_38 : f32 to vector<2x1x128xf32>
    %108 = arith.divf %106, %107 : vector<2x1x128xf32>
    %109 = vector.broadcast %108 : vector<2x1x128xf32> to vector<2x32x128xf32>
    %110 = arith.subf %104, %109 : vector<2x32x128xf32>
    %111 = arith.mulf %110, %110 : vector<2x32x128xf32>
    %cst_39 = arith.constant dense<0.000000e+00> : vector<2x128xf32>
    %112 = vector.multi_reduction <add>, %111, %cst_39 [1] : vector<2x32x128xf32> to vector<2x128xf32>
    %113 = vector.shape_cast %112 : vector<2x128xf32> to vector<2x1x128xf32>
    %cst_40 = arith.constant 3.200000e+01 : f32
    %114 = vector.broadcast %cst_40 : f32 to vector<2x1x128xf32>
    %115 = arith.divf %113, %114 : vector<2x1x128xf32>
    %cst_41 = arith.constant 9.99999971E-10 : f32
    %116 = vector.broadcast %cst_41 : f32 to vector<2x1x128xf32>
    %117 = arith.addf %115, %116 : vector<2x1x128xf32>
    %118 = vector.broadcast %108 : vector<2x1x128xf32> to vector<2x32x128xf32>
    %119 = arith.subf %104, %118 : vector<2x32x128xf32>
    %120 = vector.extract_strided_slice %0 {offsets = [2, 0, 0], sizes = [1, 2, 32], strides = [1, 1, 1]} : vector<4x2x32xf32> to vector<1x2x32xf32>
    %121 = vector.shape_cast %120 : vector<1x2x32xf32> to vector<2x32xf32>
    %122 = vector.shape_cast %121 : vector<2x32xf32> to vector<2x32x1xf32>
    %123 = math.rsqrt %117 : vector<2x1x128xf32>
    %124 = vector.broadcast %122 : vector<2x32x1xf32> to vector<2x32x128xf32>
    %125 = vector.broadcast %123 : vector<2x1x128xf32> to vector<2x32x128xf32>
    %126 = arith.mulf %124, %125 : vector<2x32x128xf32>
    %127 = arith.mulf %119, %126 : vector<2x32x128xf32>
    %128 = vector.extract_strided_slice %1 {offsets = [2, 0, 0], sizes = [1, 2, 32], strides = [1, 1, 1]} : vector<4x2x32xf32> to vector<1x2x32xf32>
    %129 = vector.shape_cast %128 : vector<1x2x32xf32> to vector<2x32xf32>
    %130 = vector.shape_cast %129 : vector<2x32xf32> to vector<2x32x1xf32>
    %131 = vector.broadcast %130 : vector<2x32x1xf32> to vector<2x32x128xf32>
    %132 = arith.addf %127, %131 : vector<2x32x128xf32>
    %133 = vector.extract_strided_slice %2 {offsets = [2, 0, 0], sizes = [1, 2, 32], strides = [1, 1, 1]} : vector<4x2x32xf32> to vector<1x2x32xf32>
    %134 = vector.shape_cast %133 : vector<1x2x32xf32> to vector<2x32xf32>
    %135 = vector.shape_cast %134 : vector<2x32xf32> to vector<2x32x1xf32>
    %136 = vector.broadcast %135 : vector<2x32x1xf32> to vector<2x32x128xf32>
    %137 = arith.addf %132, %136 : vector<2x32x128xf32>
    %138 = vector.broadcast %6 : vector<2x32x1xf32> to vector<2x32x128xf32>
    %139 = arith.mulf %137, %138 : vector<2x32x128xf32>
    %cst_42 = arith.constant dense<0.000000e+00> : vector<2x128xf32>
    %140 = vector.multi_reduction <add>, %139, %cst_42 [1] : vector<2x32x128xf32> to vector<2x128xf32>
    %141 = vector.shape_cast %140 : vector<2x128xf32> to vector<2x1x128xf32>
    %142 = arith.addf %141, %44 : vector<2x1x128xf32>
    %cst_43 = arith.constant 0.000000e+00 : f32
    %143 = vector.broadcast %cst_43 : f32 to vector<2x1x128xf32>
    %144 = arith.cmpf oge, %142, %143 : vector<2x1x128xf32>
    %cst_44 = arith.constant 2.000000e-01 : f32
    %145 = vector.broadcast %cst_44 : f32 to vector<2x1x128xf32>
    %146 = arith.mulf %145, %142 : vector<2x1x128xf32>
    %147 = arith.select %144, %142, %146 : vector<2x1x128xi1>, vector<2x1x128xf32>
    %148 = arith.maximumf %92, %147 : vector<2x1x128xf32>
    %149 = arith.subf %92, %148 : vector<2x1x128xf32>
    %150 = math.exp %149 : vector<2x1x128xf32>
    %151 = arith.subf %147, %148 : vector<2x1x128xf32>
    %152 = math.exp %151 : vector<2x1x128xf32>
    %153 = arith.mulf %98, %150 : vector<2x1x128xf32>
    %154 = arith.addf %153, %152 : vector<2x1x128xf32>
    %155 = vector.broadcast %150 : vector<2x1x128xf32> to vector<2x32x128xf32>
    %156 = arith.mulf %103, %155 : vector<2x32x128xf32>
    %157 = vector.broadcast %152 : vector<2x1x128xf32> to vector<2x32x128xf32>
    %158 = arith.mulf %157, %137 : vector<2x32x128xf32>
    %159 = arith.addf %156, %158 : vector<2x32x128xf32>
    %c0_45 = arith.constant 0 : index
    %c0_46 = arith.constant 0 : index
    %c0_47 = arith.constant 0 : index
    %160 = vector.load %arg4[%c0_45, %c0_46, %c0_47] : memref<2x32x128xf32, #tpu.memory_space<vmem>>, vector<2x32x128xf32>
    %cst_48 = arith.constant dense<0.000000e+00> : vector<2x128xf32>
    %161 = vector.multi_reduction <add>, %160, %cst_48 [1] : vector<2x32x128xf32> to vector<2x128xf32>
    %162 = vector.shape_cast %161 : vector<2x128xf32> to vector<2x1x128xf32>
    %cst_49 = arith.constant 3.200000e+01 : f32
    %163 = vector.broadcast %cst_49 : f32 to vector<2x1x128xf32>
    %164 = arith.divf %162, %163 : vector<2x1x128xf32>
    %165 = vector.broadcast %164 : vector<2x1x128xf32> to vector<2x32x128xf32>
    %166 = arith.subf %160, %165 : vector<2x32x128xf32>
    %167 = arith.mulf %166, %166 : vector<2x32x128xf32>
    %cst_50 = arith.constant dense<0.000000e+00> : vector<2x128xf32>
    %168 = vector.multi_reduction <add>, %167, %cst_50 [1] : vector<2x32x128xf32> to vector<2x128xf32>
    %169 = vector.shape_cast %168 : vector<2x128xf32> to vector<2x1x128xf32>
    %cst_51 = arith.constant 3.200000e+01 : f32
    %170 = vector.broadcast %cst_51 : f32 to vector<2x1x128xf32>
    %171 = arith.divf %169, %170 : vector<2x1x128xf32>
    %cst_52 = arith.constant 9.99999971E-10 : f32
    %172 = vector.broadcast %cst_52 : f32 to vector<2x1x128xf32>
    %173 = arith.addf %171, %172 : vector<2x1x128xf32>
    %174 = vector.broadcast %164 : vector<2x1x128xf32> to vector<2x32x128xf32>
    %175 = arith.subf %160, %174 : vector<2x32x128xf32>
    %176 = vector.extract_strided_slice %0 {offsets = [3, 0, 0], sizes = [1, 2, 32], strides = [1, 1, 1]} : vector<4x2x32xf32> to vector<1x2x32xf32>
    %177 = vector.shape_cast %176 : vector<1x2x32xf32> to vector<2x32xf32>
    %178 = vector.shape_cast %177 : vector<2x32xf32> to vector<2x32x1xf32>
    %179 = math.rsqrt %173 : vector<2x1x128xf32>
    %180 = vector.broadcast %178 : vector<2x32x1xf32> to vector<2x32x128xf32>
    %181 = vector.broadcast %179 : vector<2x1x128xf32> to vector<2x32x128xf32>
    %182 = arith.mulf %180, %181 : vector<2x32x128xf32>
    %183 = arith.mulf %175, %182 : vector<2x32x128xf32>
    %184 = vector.extract_strided_slice %1 {offsets = [3, 0, 0], sizes = [1, 2, 32], strides = [1, 1, 1]} : vector<4x2x32xf32> to vector<1x2x32xf32>
    %185 = vector.shape_cast %184 : vector<1x2x32xf32> to vector<2x32xf32>
    %186 = vector.shape_cast %185 : vector<2x32xf32> to vector<2x32x1xf32>
    %187 = vector.broadcast %186 : vector<2x32x1xf32> to vector<2x32x128xf32>
    %188 = arith.addf %183, %187 : vector<2x32x128xf32>
    %189 = vector.extract_strided_slice %2 {offsets = [3, 0, 0], sizes = [1, 2, 32], strides = [1, 1, 1]} : vector<4x2x32xf32> to vector<1x2x32xf32>
    %190 = vector.shape_cast %189 : vector<1x2x32xf32> to vector<2x32xf32>
    %191 = vector.shape_cast %190 : vector<2x32xf32> to vector<2x32x1xf32>
    %192 = vector.broadcast %191 : vector<2x32x1xf32> to vector<2x32x128xf32>
    %193 = arith.addf %188, %192 : vector<2x32x128xf32>
    %194 = vector.broadcast %6 : vector<2x32x1xf32> to vector<2x32x128xf32>
    %195 = arith.mulf %193, %194 : vector<2x32x128xf32>
    %cst_53 = arith.constant dense<0.000000e+00> : vector<2x128xf32>
    %196 = vector.multi_reduction <add>, %195, %cst_53 [1] : vector<2x32x128xf32> to vector<2x128xf32>
    %197 = vector.shape_cast %196 : vector<2x128xf32> to vector<2x1x128xf32>
    %198 = arith.addf %197, %44 : vector<2x1x128xf32>
    %cst_54 = arith.constant 0.000000e+00 : f32
    %199 = vector.broadcast %cst_54 : f32 to vector<2x1x128xf32>
    %200 = arith.cmpf oge, %198, %199 : vector<2x1x128xf32>
    %cst_55 = arith.constant 2.000000e-01 : f32
    %201 = vector.broadcast %cst_55 : f32 to vector<2x1x128xf32>
    %202 = arith.mulf %201, %198 : vector<2x1x128xf32>
    %203 = arith.select %200, %198, %202 : vector<2x1x128xi1>, vector<2x1x128xf32>
    %204 = arith.maximumf %148, %203 : vector<2x1x128xf32>
    %205 = arith.subf %148, %204 : vector<2x1x128xf32>
    %206 = math.exp %205 : vector<2x1x128xf32>
    %207 = arith.subf %203, %204 : vector<2x1x128xf32>
    %208 = math.exp %207 : vector<2x1x128xf32>
    %209 = arith.mulf %154, %206 : vector<2x1x128xf32>
    %210 = arith.addf %209, %208 : vector<2x1x128xf32>
    %211 = vector.broadcast %206 : vector<2x1x128xf32> to vector<2x32x128xf32>
    %212 = arith.mulf %159, %211 : vector<2x32x128xf32>
    %213 = vector.broadcast %208 : vector<2x1x128xf32> to vector<2x32x128xf32>
    %214 = arith.mulf %213, %193 : vector<2x32x128xf32>
    %215 = arith.addf %212, %214 : vector<2x32x128xf32>
    %cst_56 = arith.constant 1.000000e+00 : f32
    %216 = vector.broadcast %cst_56 : f32 to vector<2x1x128xf32>
    %217 = arith.divf %216, %210 : vector<2x1x128xf32>
    %218 = vector.broadcast %217 : vector<2x1x128xf32> to vector<2x32x128xf32>
    %219 = arith.mulf %215, %218 : vector<2x32x128xf32>
    %c0_57 = arith.constant 0 : index
    %c0_58 = arith.constant 0 : index
    %c0_59 = arith.constant 0 : index
    %220 = vector.load %arg5[%c0_57, %c0_58, %c0_59] : memref<2x32x128xf32, #tpu.memory_space<vmem>>, vector<2x32x128xf32>
    %221 = arith.addf %219, %220 : vector<2x32x128xf32>
    %c0_60 = arith.constant 0 : index
    %c0_61 = arith.constant 0 : index
    %c0_62 = arith.constant 0 : index
    %222 = vector.load %arg11[%c0_60, %c0_61, %c0_62] : memref<2x32x128xf32, #tpu.memory_space<vmem>>, vector<2x32x128xf32>
    tpu.vector_store %arg11[%c0_60, %c0_61, %c0_62], %221 {strides = array<i32>} : memref<2x32x128xf32, #tpu.memory_space<vmem>>, vector<2x32x128xf32>,
    return
  }
  func.func @transform_0(%arg0: i32) -> (i32, i32, i32) {
    %c0_i32 = arith.constant 0 : i32
    %c0_i32_0 = arith.constant 0 : i32
    %c0_i32_1 = arith.constant 0 : i32
    return %c0_i32, %c0_i32_0, %arg0 : i32, i32, i32
  }
  func.func @transform_1(%arg0: i32) -> (i32, i32, i32) {
    %c0_i32 = arith.constant 0 : i32
    %c0_i32_0 = arith.constant 0 : i32
    %c0_i32_1 = arith.constant 0 : i32
    return %c0_i32, %c0_i32_0, %arg0 : i32, i32, i32
  }
  func.func @transform_2(%arg0: i32) -> (i32, i32, i32) {
    %c0_i32 = arith.constant 0 : i32
    %c0_i32_0 = arith.constant 0 : i32
    %c0_i32_1 = arith.constant 0 : i32
    return %c0_i32, %c0_i32_0, %arg0 : i32, i32, i32
  }
  func.func @transform_3(%arg0: i32) -> (i32, i32, i32) {
    %c0_i32 = arith.constant 0 : i32
    %c0_i32_0 = arith.constant 0 : i32
    %c0_i32_1 = arith.constant 0 : i32
    return %c0_i32, %c0_i32_0, %arg0 : i32, i32, i32
  }
  func.func @transform_4(%arg0: i32) -> (i32, i32, i32) {
    %c0_i32 = arith.constant 0 : i32
    %c0_i32_0 = arith.constant 0 : i32
    %c0_i32_1 = arith.constant 0 : i32
    return %c0_i32, %c0_i32_0, %arg0 : i32, i32, i32
  }
  func.func @transform_5(%arg0: i32) -> (i32, i32, i32) {
    %c0_i32 = arith.constant 0 : i32
    %c0_i32_0 = arith.constant 0 : i32
    %c0_i32_1 = arith.constant 0 : i32
    %c0_i32_2 = arith.constant 0 : i32
    return %c0_i32, %c0_i32_0, %c0_i32_1 : i32, i32, i32
  }
  func.func @transform_6(%arg0: i32) -> (i32, i32, i32) {
    %c0_i32 = arith.constant 0 : i32
    %c0_i32_0 = arith.constant 0 : i32
    %c0_i32_1 = arith.constant 0 : i32
    %c0_i32_2 = arith.constant 0 : i32
    return %c0_i32, %c0_i32_0, %c0_i32_1 : i32, i32, i32
  }
  func.func @transform_7(%arg0: i32) -> (i32, i32, i32) {
    %c0_i32 = arith.constant 0 : i32
    %c0_i32_0 = arith.constant 0 : i32
    %c0_i32_1 = arith.constant 0 : i32
    %c0_i32_2 = arith.constant 0 : i32
    return %c0_i32, %c0_i32_0, %c0_i32_1 : i32, i32, i32
  }
  func.func @transform_8(%arg0: i32) -> (i32, i32) {
    %c0_i32 = arith.constant 0 : i32
    %c0_i32_0 = arith.constant 0 : i32
    %c0_i32_1 = arith.constant 0 : i32
    return %c0_i32, %c0_i32_0 : i32, i32
  }
  func.func @transform_9(%arg0: i32) -> (i32, i32) {
    %c0_i32 = arith.constant 0 : i32
    %c0_i32_0 = arith.constant 0 : i32
    %c0_i32_1 = arith.constant 0 : i32
    return %c0_i32, %c0_i32_0 : i32, i32
  }
  func.func @transform_10(%arg0: i32) -> (i32, i32, i32) {
    %c0_i32 = arith.constant 0 : i32
    %c0_i32_0 = arith.constant 0 : i32
    %c0_i32_1 = arith.constant 0 : i32
    return %c0_i32, %c0_i32_0, %arg0 : i32, i32, i32
  }
}

</mosaic_0001>

<llo_original>
// kernel: agdn_conv_forward.5
$region0: #{agdn_conv_forward.5}
  #allocation0 [shape = 'u32[]', space=smem, size = 0x4, offset = 0x4, fixed_abs, tag = 'smem constant byte address 0x4 - core index']
  #allocation1 [shape = 'u32[144,128]{1,0:T(1,128)}', space=vmem, size = 0x12000, scoped, tag = 'internal scratch']
  %s0 = inlined_call_operand.vmem [shape: f32[128,16], index: 0, kind: input, shape index: {}]
  %s1 = inlined_call_operand.vmem [shape: f32[16,256], index: 1, kind: input, shape index: {}]
  %s2 = inlined_call_operand.vmem [shape: f32[1,256], index: 2, kind: input, shape index: {}]
  %s3 = inlined_call_operand.vmem [shape: f32[128,256], index: 3, kind: output, shape index: {}]
  %s4 = sld [smem:[#allocation0]]
  $region22: #{agdn_conv_forward.5} parent=0
    _
  %s6 = ssub.s32 1, %s4
  %s7 = scalar_select 0, %s6, %s4
  // Predicated region
  $region2: #{agdn_conv_forward.5} parent=0 // pred_check
    _
  $region3: #{agdn_conv_forward.5} parent=0 // pred_check_branch
    %9 = sbr.rel (0) target = $region5
  $region4: #{agdn_conv_forward.5} parent=0 // pred_region
    _
  $region5: #{agdn_conv_forward.5} parent=0 // pred_fallthru
    _
  // Predicated region
  $region6: #{agdn_conv_forward.5} parent=0 // pred_check
    _
  $region7: #{agdn_conv_forward.5} parent=0 // pred_check_branch
    %11 = sbr.rel (0) target = $region9
  $region8: #{agdn_conv_forward.5} parent=0 // pred_region
    _
  $region9: #{agdn_conv_forward.5} parent=0 // pred_fallthru
    _
  // Predicated region
  $region10: #{agdn_conv_forward.5} parent=0 // pred_check
    _
  $region11: #{agdn_conv_forward.5} parent=0 // pred_check_branch
    %13 = sbr.rel (0) target = $region13
  $region12: #{agdn_conv_forward.5} parent=0 // pred_region
    _
  $region13: #{agdn_conv_forward.5} parent=0 // pred_fallthru
    _
  %v14 = vld [vmem:[%s0] sm:$0xff]
  %v15 = vld [vmem:[%s0 + $0x8] sm:$0xff]
  %v16 = vld [vmem:[%s0 + $0x10] sm:$0xff]
  %v17 = vld [vmem:[%s0 + $0x18] sm:$0xff]
  %v18 = vld [vmem:[%s0 + $0x20] sm:$0xff]
  %v19 = vld [vmem:[%s0 + $0x28] sm:$0xff]
  %v20 = vld [vmem:[%s0 + $0x30] sm:$0xff]
  %v21 = vld [vmem:[%s0 + $0x38] sm:$0xff]
  %v22 = vld [vmem:[%s0 + $0x40] sm:$0xff]
  %v23 = vld [vmem:[%s0 + $0x48] sm:$0xff]
  %v24 = vld [vmem:[%s0 + $0x50] sm:$0xff]
  %v25 = vld [vmem:[%s0 + $0x58] sm:$0xff]
  %v26 = vld [vmem:[%s0 + $0x60] sm:$0xff]
  %v27 = vld [vmem:[%s0 + $0x68] sm:$0xff]
  %v28 = vld [vmem:[%s0 + $0x70] sm:$0xff]
  %v29 = vld [vmem:[%s0 + $0x78] sm:$0xff]
  %v30 = vld [vmem:[%s1] sm:$0xff]
  %v31 = vld [vmem:[%s1 + $0x8] sm:$0xff]
  %v32 = vld [vmem:[%s1 + $0x10] sm:$0xff]
  %v33 = vld [vmem:[%s1 + $0x18] sm:$0xff]
  %v34 = vld [vmem:[%s2] sm:$0x3]
  %v36 = vlaneseq
  %v37 = vshrl.u32 %v36, 7
  %v38 = vsub.s32 0, %v37
  %v39 = vrot.slane %v34, %v38
  %v40 = vlaneseq
  %v41 = vshrl.u32 %v40, 7
  %v42 = vsub.s32 1, %v41
  %v43 = vrot.slane %v34, %v42
  %vm46 = vcmask 130048
  %v48 = vsel %vm46, %v14, 0
  %v51 = vsel %vm46, %v15, 0
  %v54 = vsel %vm46, %v16, 0
  %v57 = vsel %vm46, %v17, 0
  %v60 = vsel %vm46, %v18, 0
  %v63 = vsel %vm46, %v19, 0
  %v66 = vsel %vm46, %v20, 0
  %v69 = vsel %vm46, %v21, 0
  %v72 = vsel %vm46, %v22, 0
  %v75 = vsel %vm46, %v23, 0
  %v78 = vsel %vm46, %v24, 0
  %v81 = vsel %vm46, %v25, 0
  %v84 = vsel %vm46, %v26, 0
  %v87 = vsel %vm46, %v27, 0
  %v90 = vsel %vm46, %v28, 0
  %v93 = vsel %vm46, %v29, 0
  %v95 = vand.u32 %v31, 4294901760
  %96 = vmatprep.subr.mxu0 %v95
  %v97 = vand.u32 %v30, 4294901760
  %98 = vmatpush1.msra.mxu0 %v97
  %v99 = vand.u32 %v33, 4294901760
  %100 = vmatprep.subr.mxu0 %v99
  %v101 = vand.u32 %v32, 4294901760
  %102 = vmatpush1.msra.mxu0 %v101
  %103 = vmatprep.subr.mxu0 0.0
  %104 = vmatpush1.msra.mxu0 0.0
  %105 = vmatprep.subr.mxu0 0.0
  %106 = vmatpush1.msra.mxu0 0.0
  %107 = vmatprep.subr.mxu0 0.0
  %108 = vmatpush1.msra.mxu0 0.0
  %109 = vmatprep.subr.mxu0 0.0
  %110 = vmatpush1.msra.mxu0 0.0
  %111 = vmatprep.subr.mxu0 0.0
  %112 = vmatpush1.msra.mxu0 0.0
  %113 = vmatprep.subr.mxu0 0.0
  %114 = vmatpush1.msra.mxu0 0.0
  %115 = vmatprep.subr.mxu0 0.0
  %116 = vmatpush1.msra.mxu0 0.0
  %117 = vmatprep.subr.mxu0 0.0
  %118 = vmatpush1.msra.mxu0 0.0
  %119 = vmatprep.subr.mxu0 0.0
  %120 = vmatpush1.msra.mxu0 0.0
  %121 = vmatprep.subr.mxu0 0.0
  %122 = vmatpush1.msra.mxu0 0.0
  %123 = vmatprep.subr.mxu0 0.0
  %124 = vmatpush1.msra.mxu0 0.0
  %125 = vmatprep.subr.mxu0 0.0
  %126 = vmatpush1.msra.mxu0 0.0
  %127 = vmatprep.subr.mxu0 0.0
  %128 = vmatpush1.msra.mxu0 0.0
  %129 = vmatprep.subr.mxu0 0.0
  %130 = vmatpush1.msra.mxu0 0.0
  %131 = vmatprep.subr.mxu0 0.0
  %132 = vmatpush1.msra.mxu0 0.0
  %133 = vmatprep.subr.mxu0 0.0
  %134 = vmatpush1.msra.mxu0 0.0
  %135 = vmatprep.subr.mxu0 0.0
  %136 = vmatpush1.msra.mxu0 0.0
  %137 = vmatprep.subr.mxu0 0.0
  %138 = vmatpush1.msra.mxu0 0.0
  %139 = vmatprep.subr.mxu0 0.0
  %140 = vmatpush1.msra.mxu0 0.0
  %141 = vmatprep.subr.mxu0 0.0
  %142 = vmatpush1.msra.mxu0 0.0
  %143 = vmatprep.subr.mxu0 0.0
  %144 = vmatpush1.msra.mxu0 0.0
  %145 = vmatprep.subr.mxu0 0.0
  %146 = vmatpush1.msra.mxu0 0.0
  %147 = vmatprep.subr.mxu0 0.0
  %148 = vmatpush1.msra.mxu0 0.0
  %149 = vmatprep.subr.mxu0 0.0
  %150 = vmatpush1.msra.mxu0 0.0
  %151 = vmatprep.subr.mxu0 0.0
  %152 = vmatpush1.msra.mxu0 0.0
  %153 = vmatprep.subr.mxu0 0.0
  %154 = vmatpush1.msra.mxu0 0.0
  %155 = vmatprep.subr.mxu0 0.0
  %156 = vmatpush1.msra.mxu0 0.0
  %157 = vmatprep.subr.mxu0 0.0
  %158 = vmatpush1.msra.mxu0 0.0
  %159 = vmatprep.subr.mxu0 0.0
  %160 = vmatpush1.msra.mxu0 0.0
  %161 = vmatprep.subr.mxu0 0.0
  %162 = vmatpush1.msra.mxu0 0.0
  %163 = vmatprep.mubr.f32.mxu0 0.0
  %v164 = vand.u32 %v48, 4294901760
  %v165 = vsub.f32 %v48, %v164
  %v166 = vand.u32 %v165, 4294901760
  %v167 = vsub.f32 %v165, %v166
  %v168 = vand.u32 %v167, 4294901760
  %169 = vmatmul.mubr.f32.gmra.mrb[0].mxu0 %v168
  %v170 = vpop.f32.mrb[0].mxu0
  %v171 = vadd.f32 %v39, %v170
  %v172 = vpop.f32.mrb[0].mxu0
  %v173 = vadd.f32 %v43, %v172
  %174 = vmatprep.mubr.f32.mxu0 0.0
  %v175 = vand.u32 %v51, 4294901760
  %v176 = vsub.f32 %v51, %v175
  %v177 = vand.u32 %v176, 4294901760
  %v178 = vsub.f32 %v176, %v177
  %v179 = vand.u32 %v178, 4294901760
  %180 = vmatmul.mubr.f32.gmra.mrb[0].mxu0 %v179
  %v181 = vpop.f32.mrb[0].mxu0
  %v182 = vadd.f32 %v39, %v181
  %v183 = vpop.f32.mrb[0].mxu0
  %v184 = vadd.f32 %v43, %v183
  %185 = vmatprep.mubr.f32.mxu0 0.0
  %v186 = vand.u32 %v54, 4294901760
  %v187 = vsub.f32 %v54, %v186
  %v188 = vand.u32 %v187, 4294901760
  %v189 = vsub.f32 %v187, %v188
  %v190 = vand.u32 %v189, 4294901760
  %191 = vmatmul.mubr.f32.gmra.mrb[0].mxu0 %v190
  %v192 = vpop.f32.mrb[0].mxu0
  %v193 = vadd.f32 %v39, %v192
  %v194 = vpop.f32.mrb[0].mxu0
  %v195 = vadd.f32 %v43, %v194
  %196 = vmatprep.mubr.f32.mxu0 0.0
  %v197 = vand.u32 %v57, 4294901760
  %v198 = vsub.f32 %v57, %v197
  %v199 = vand.u32 %v198, 4294901760
  %v200 = vsub.f32 %v198, %v199
  %v201 = vand.u32 %v200, 4294901760
  %202 = vmatmul.mubr.f32.gmra.mrb[0].mxu0 %v201
  %v203 = vpop.f32.mrb[0].mxu0
  %v204 = vadd.f32 %v39, %v203
  %v205 = vpop.f32.mrb[0].mxu0
  %v206 = vadd.f32 %v43, %v205
  %207 = vmatprep.mubr.f32.mxu0 0.0
  %v208 = vand.u32 %v60, 4294901760
  %v209 = vsub.f32 %v60, %v208
  %v210 = vand.u32 %v209, 4294901760
  %v211 = vsub.f32 %v209, %v210
  %v212 = vand.u32 %v211, 4294901760
  %213 = vmatmul.mubr.f32.gmra.mrb[0].mxu0 %v212
  %v214 = vpop.f32.mrb[0].mxu0
  %v215 = vadd.f32 %v39, %v214
  %v216 = vpop.f32.mrb[0].mxu0
  %v217 = vadd.f32 %v43, %v216
  %218 = vmatprep.mubr.f32.mxu0 0.0
  %v219 = vand.u32 %v63, 4294901760
  %v220 = vsub.f32 %v63, %v219
  %v221 = vand.u32 %v220, 4294901760
  %v222 = vsub.f32 %v220, %v221
  %v223 = vand.u32 %v222, 4294901760
  %224 = vmatmul.mubr.f32.gmra.mrb[0].mxu0 %v223
  %v225 = vpop.f32.mrb[0].mxu0
  %v226 = vadd.f32 %v39, %v225
  %v227 = vpop.f32.mrb[0].mxu0
  %v228 = vadd.f32 %v43, %v227
  %229 = vmatprep.mubr.f32.mxu0 0.0
  %v230 = vand.u32 %v66, 4294901760
  %v231 = vsub.f32 %v66, %v230
  %v232 = vand.u32 %v231, 4294901760
  %v233 = vsub.f32 %v231, %v232
  %v234 = vand.u32 %v233, 4294901760
  %235 = vmatmul.mubr.f32.gmra.mrb[0].mxu0 %v234
  %v236 = vpop.f32.mrb[0].mxu0
  %v237 = vadd.f32 %v39, %v236
  %v238 = vpop.f32.mrb[0].mxu0
  %v239 = vadd.f32 %v43, %v238
  %240 = vmatprep.mubr.f32.mxu0 0.0
  %v241 = vand.u32 %v69, 4294901760
  %v242 = vsub.f32 %v69, %v241
  %v243 = vand.u32 %v242, 4294901760
  %v244 = vsub.f32 %v242, %v243
  %v245 = vand.u32 %v244, 4294901760
  %246 = vmatmul.mubr.f32.gmra.mrb[0].mxu0 %v245
  %v247 = vpop.f32.mrb[0].mxu0
  %v248 = vadd.f32 %v39, %v247
  %v249 = vpop.f32.mrb[0].mxu0
  %v250 = vadd.f32 %v43, %v249
  %251 = vmatprep.mubr.f32.mxu0 0.0
  %v252 = vand.u32 %v72, 4294901760
  %v253 = vsub.f32 %v72, %v252
  %v254 = vand.u32 %v253, 4294901760
  %v255 = vsub.f32 %v253, %v254
  %v256 = vand.u32 %v255, 4294901760
  %257 = vmatmul.mubr.f32.gmra.mrb[0].mxu0 %v256
  %v258 = vpop.f32.mrb[0].mxu0
  %v259 = vadd.f32 %v39, %v258
  %v260 = vpop.f32.mrb[0].mxu0
  %v261 = vadd.f32 %v43, %v260
  %262 = vmatprep.mubr.f32.mxu0 0.0
  %v263 = vand.u32 %v75, 4294901760
  %v264 = vsub.f32 %v75, %v263
  %v265 = vand.u32 %v264, 4294901760
  %v266 = vsub.f32 %v264, %v265
  %v267 = vand.u32 %v266, 4294901760
  %268 = vmatmul.mubr.f32.gmra.mrb[0].mxu0 %v267
  %v269 = vpop.f32.mrb[0].mxu0
  %v270 = vadd.f32 %v39, %v269
  %v271 = vpop.f32.mrb[0].mxu0
  %v272 = vadd.f32 %v43, %v271
  %273 = vmatprep.mubr.f32.mxu0 0.0
  %v274 = vand.u32 %v78, 4294901760
  %v275 = vsub.f32 %v78, %v274
  %v276 = vand.u32 %v275, 4294901760
  %v277 = vsub.f32 %v275, %v276
  %v278 = vand.u32 %v277, 4294901760
  %279 = vmatmul.mubr.f32.gmra.mrb[0].mxu0 %v278
  %v280 = vpop.f32.mrb[0].mxu0
  %v281 = vadd.f32 %v39, %v280
  %v282 = vpop.f32.mrb[0].mxu0
  %v283 = vadd.f32 %v43, %v282
  %284 = vmatprep.mubr.f32.mxu0 0.0
  %v285 = vand.u32 %v81, 4294901760
  %v286 = vsub.f32 %v81, %v285
  %v287 = vand.u32 %v286, 4294901760
  %v288 = vsub.f32 %v286, %v287
  %v289 = vand.u32 %v288, 4294901760
  %290 = vmatmul.mubr.f32.gmra.mrb[0].mxu0 %v289
  %v291 = vpop.f32.mrb[0].mxu0
  %v292 = vadd.f32 %v39, %v291
  %v293 = vpop.f32.mrb[0].mxu0
  %v294 = vadd.f32 %v43, %v293
  %295 = vmatprep.mubr.f32.mxu0 0.0
  %v296 = vand.u32 %v84, 4294901760
  %v297 = vsub.f32 %v84, %v296
  %v298 = vand.u32 %v297, 4294901760
  %v299 = vsub.f32 %v297, %v298
  %v300 = vand.u32 %v299, 4294901760
  %301 = vmatmul.mubr.f32.gmra.mrb[0].mxu0 %v300
  %v302 = vpop.f32.mrb[0].mxu0
  %v303 = vadd.f32 %v39, %v302
  %v304 = vpop.f32.mrb[0].mxu0
  %v305 = vadd.f32 %v43, %v304
  %306 = vmatprep.mubr.f32.mxu0 0.0
  %v307 = vand.u32 %v87, 4294901760
  %v308 = vsub.f32 %v87, %v307
  %v309 = vand.u32 %v308, 4294901760
  %v310 = vsub.f32 %v308, %v309
  %v311 = vand.u32 %v310, 4294901760
  %312 = vmatmul.mubr.f32.gmra.mrb[0].mxu0 %v311
  %v313 = vpop.f32.mrb[0].mxu0
  %v314 = vadd.f32 %v39, %v313
  %v315 = vpop.f32.mrb[0].mxu0
  %v316 = vadd.f32 %v43, %v315
  %317 = vmatprep.mubr.f32.mxu0 0.0
  %v318 = vand.u32 %v90, 4294901760
  %v319 = vsub.f32 %v90, %v318
  %v320 = vand.u32 %v319, 4294901760
  %v321 = vsub.f32 %v319, %v320
  %v322 = vand.u32 %v321, 4294901760
  %323 = vmatmul.mubr.f32.gmra.mrb[0].mxu0 %v322
  %v324 = vpop.f32.mrb[0].mxu0
  %v325 = vadd.f32 %v39, %v324
  %v326 = vpop.f32.mrb[0].mxu0
  %v327 = vadd.f32 %v43, %v326
  %328 = vmatprep.mubr.f32.mxu0 0.0
  %v329 = vand.u32 %v93, 4294901760
  %v330 = vsub.f32 %v93, %v329
  %v331 = vand.u32 %v330, 4294901760
  %v332 = vsub.f32 %v330, %v331
  %v333 = vand.u32 %v332, 4294901760
  %334 = vmatmul.mubr.f32.gmra.mrb[0].mxu0 %v333
  %v335 = vpop.f32.mrb[0].mxu0
  %v336 = vadd.f32 %v39, %v335
  %v337 = vpop.f32.mrb[0].mxu0
  %v338 = vadd.f32 %v43, %v337
  %339 = vdwg.mxu0
  %v340 = vand.u32 %v31, 4294901760
  %v341 = vsub.f32 %v31, %v340
  %v342 = vand.u32 %v341, 4294901760
  %v343 = vsub.f32 %v341, %v342
  %v344 = vand.u32 %v343, 4294901760
  %345 = vmatprep.subr.mxu0 %v344
  %v346 = vand.u32 %v30, 4294901760
  %v347 = vsub.f32 %v30, %v346
  %v348 = vand.u32 %v347, 4294901760
  %v349 = vsub.f32 %v347, %v348
  %v350 = vand.u32 %v349, 4294901760
  %351 = vmatpush1.msra.mxu0 %v350
  %v352 = vand.u32 %v33, 4294901760
  %v353 = vsub.f32 %v33, %v352
  %v354 = vand.u32 %v353, 4294901760
  %v355 = vsub.f32 %v353, %v354
  %v356 = vand.u32 %v355, 4294901760
  %357 = vmatprep.subr.mxu0 %v356
  %v358 = vand.u32 %v32, 4294901760
  %v359 = vsub.f32 %v32, %v358
  %v360 = vand.u32 %v359, 4294901760
  %v361 = vsub.f32 %v359, %v360
  %v362 = vand.u32 %v361, 4294901760
  %363 = vmatpush1.msra.mxu0 %v362
  %364 = vmatprep.subr.mxu0 0.0
  %365 = vmatpush1.msra.mxu0 0.0
  %366 = vmatprep.subr.mxu0 0.0
  %367 = vmatpush1.msra.mxu0 0.0
  %368 = vmatprep.subr.mxu0 0.0
  %369 = vmatpush1.msra.mxu0 0.0
  %370 = vmatprep.subr.mxu0 0.0
  %371 = vmatpush1.msra.mxu0 0.0
  %372 = vmatprep.subr.mxu0 0.0
  %373 = vmatpush1.msra.mxu0 0.0
  %374 = vmatprep.subr.mxu0 0.0
  %375 = vmatpush1.msra.mxu0 0.0
  %376 = vmatprep.subr.mxu0 0.0
  %377 = vmatpush1.msra.mxu0 0.0
  %378 = vmatprep.subr.mxu0 0.0
  %379 = vmatpush1.msra.mxu0 0.0
  %380 = vmatprep.subr.mxu0 0.0
  %381 = vmatpush1.msra.mxu0 0.0
  %382 = vmatprep.subr.mxu0 0.0
  %383 = vmatpush1.msra.mxu0 0.0
  %384 = vmatprep.subr.mxu0 0.0
  %385 = vmatpush1.msra.mxu0 0.0
  %386 = vmatprep.subr.mxu0 0.0
  %387 = vmatpush1.msra.mxu0 0.0
  %388 = vmatprep.subr.mxu0 0.0
  %389 = vmatpush1.msra.mxu0 0.0
  %390 = vmatprep.subr.mxu0 0.0
  %391 = vmatpush1.msra.mxu0 0.0
  %392 = vmatprep.subr.mxu0 0.0
  %393 = vmatpush1.msra.mxu0 0.0
  %394 = vmatprep.subr.mxu0 0.0
  %395 = vmatpush1.msra.mxu0 0.0
  %396 = vmatprep.subr.mxu0 0.0
  %397 = vmatpush1.msra.mxu0 0.0
  %398 = vmatprep.subr.mxu0 0.0
  %399 = vmatpush1.msra.mxu0 0.0
  %400 = vmatprep.subr.mxu0 0.0
  %401 = vmatpush1.msra.mxu0 0.0
  %402 = vmatprep.subr.mxu0 0.0
  %403 = vmatpush1.msra.mxu0 0.0
  %404 = vmatprep.subr.mxu0 0.0
  %405 = vmatpush1.msra.mxu0 0.0
  %406 = vmatprep.subr.mxu0 0.0
  %407 = vmatpush1.msra.mxu0 0.0
  %408 = vmatprep.subr.mxu0 0.0
  %409 = vmatpush1.msra.mxu0 0.0
  %410 = vmatprep.subr.mxu0 0.0
  %411 = vmatpush1.msra.mxu0 0.0
  %412 = vmatprep.subr.mxu0 0.0
  %413 = vmatpush1.msra.mxu0 0.0
  %414 = vmatprep.subr.mxu0 0.0
  %415 = vmatpush1.msra.mxu0 0.0
  %416 = vmatprep.subr.mxu0 0.0
  %417 = vmatpush1.msra.mxu0 0.0
  %418 = vmatprep.subr.mxu0 0.0
  %419 = vmatpush1.msra.mxu0 0.0
  %420 = vmatprep.subr.mxu0 0.0
  %421 = vmatpush1.msra.mxu0 0.0
  %422 = vmatprep.subr.mxu0 0.0
  %423 = vmatpush1.msra.mxu0 0.0
  %424 = vmatprep.mubr.f32.mxu0 0.0
  %v425 = vand.u32 %v48, 4294901760
  %426 = vmatmul.mubr.f32.gmra.mrb[0].mxu0 %v425
  %v427 = vpop.f32.mrb[0].mxu0
  %v428 = vadd.f32 %v171, %v427
  %v429 = vpop.f32.mrb[0].mxu0
  %v430 = vadd.f32 %v173, %v429
  %431 = vmatprep.mubr.f32.mxu0 0.0
  %v432 = vand.u32 %v51, 4294901760
  %433 = vmatmul.mubr.f32.gmra.mrb[0].mxu0 %v432
  %v434 = vpop.f32.mrb[0].mxu0
  %v435 = vadd.f32 %v182, %v434
  %v436 = vpop.f32.mrb[0].mxu0
  %v437 = vadd.f32 %v184, %v436
  %438 = vmatprep.mubr.f32.mxu0 0.0
  %v439 = vand.u32 %v54, 4294901760
  %440 = vmatmul.mubr.f32.gmra.mrb[0].mxu0 %v439
  %v441 = vpop.f32.mrb[0].mxu0
  %v442 = vadd.f32 %v193, %v441
  %v443 = vpop.f32.mrb[0].mxu0
  %v444 = vadd.f32 %v195, %v443
  %445 = vmatprep.mubr.f32.mxu0 0.0
  %v446 = vand.u32 %v57, 4294901760
  %447 = vmatmul.mubr.f32.gmra.mrb[0].mxu0 %v446
  %v448 = vpop.f32.mrb[0].mxu0
  %v449 = vadd.f32 %v204, %v448
  %v450 = vpop.f32.mrb[0].mxu0
  %v451 = vadd.f32 %v206, %v450
  %452 = vmatprep.mubr.f32.mxu0 0.0
  %v453 = vand.u32 %v60, 4294901760
  %454 = vmatmul.mubr.f32.gmra.mrb[0].mxu0 %v453
  %v455 = vpop.f32.mrb[0].mxu0
  %v456 = vadd.f32 %v215, %v455
  %v457 = vpop.f32.mrb[0].mxu0
  %v458 = vadd.f32 %v217, %v457
  %459 = vmatprep.mubr.f32.mxu0 0.0
  %v460 = vand.u32 %v63, 4294901760
  %461 = vmatmul.mubr.f32.gmra.mrb[0].mxu0 %v460
  %v462 = vpop.f32.mrb[0].mxu0
  %v463 = vadd.f32 %v226, %v462
  %v464 = vpop.f32.mrb[0].mxu0
  %v465 = vadd.f32 %v228, %v464
  %466 = vmatprep.mubr.f32.mxu0 0.0
  %v467 = vand.u32 %v66, 4294901760
  %468 = vmatmul.mubr.f32.gmra.mrb[0].mxu0 %v467
  %v469 = vpop.f32.mrb[0].mxu0
  %v470 = vadd.f32 %v237, %v469
  %v471 = vpop.f32.mrb[0].mxu0
  %v472 = vadd.f32 %v239, %v471
  %473 = vmatprep.mubr.f32.mxu0 0.0
  %v474 = vand.u32 %v69, 4294901760
  %475 = vmatmul.mubr.f32.gmra.mrb[0].mxu0 %v474
  %v476 = vpop.f32.mrb[0].mxu0
  %v477 = vadd.f32 %v248, %v476
  %v478 = vpop.f32.mrb[0].mxu0
  %v479 = vadd.f32 %v250, %v478
  %480 = vmatprep.mubr.f32.mxu0 0.0
  %v481 = vand.u32 %v72, 4294901760
  %482 = vmatmul.mubr.f32.gmra.mrb[0].mxu0 %v481
  %v483 = vpop.f32.mrb[0].mxu0
  %v484 = vadd.f32 %v259, %v483
  %v485 = vpop.f32.mrb[0].mxu0
  %v486 = vadd.f32 %v261, %v485
  %487 = vmatprep.mubr.f32.mxu0 0.0
  %v488 = vand.u32 %v75, 4294901760
  %489 = vmatmul.mubr.f32.gmra.mrb[0].mxu0 %v488
  %v490 = vpop.f32.mrb[0].mxu0
  %v491 = vadd.f32 %v270, %v490
  %v492 = vpop.f32.mrb[0].mxu0
  %v493 = vadd.f32 %v272, %v492
  %494 = vmatprep.mubr.f32.mxu0 0.0
  %v495 = vand.u32 %v78, 4294901760
  %496 = vmatmul.mubr.f32.gmra.mrb[0].mxu0 %v495
  %v497 = vpop.f32.mrb[0].mxu0
  %v498 = vadd.f32 %v281, %v497
  %v499 = vpop.f32.mrb[0].mxu0
  %v500 = vadd.f32 %v283, %v499
  %501 = vmatprep.mubr.f32.mxu0 0.0
  %v502 = vand.u32 %v81, 4294901760
  %503 = vmatmul.mubr.f32.gmra.mrb[0].mxu0 %v502
  %v504 = vpop.f32.mrb[0].mxu0
  %v505 = vadd.f32 %v292, %v504
  %v506 = vpop.f32.mrb[0].mxu0
  %v507 = vadd.f32 %v294, %v506
  %508 = vmatprep.mubr.f32.mxu0 0.0
  %v509 = vand.u32 %v84, 4294901760
  %510 = vmatmul.mubr.f32.gmra.mrb[0].mxu0 %v509
  %v511 = vpop.f32.mrb[0].mxu0
  %v512 = vadd.f32 %v303, %v511
  %v513 = vpop.f32.mrb[0].mxu0
  %v514 = vadd.f32 %v305, %v513
  %515 = vmatprep.mubr.f32.mxu0 0.0
  %v516 = vand.u32 %v87, 4294901760
  %517 = vmatmul.mubr.f32.gmra.mrb[0].mxu0 %v516
  %v518 = vpop.f32.mrb[0].mxu0
  %v519 = vadd.f32 %v314, %v518
  %v520 = vpop.f32.mrb[0].mxu0
  %v521 = vadd.f32 %v316, %v520
  %522 = vmatprep.mubr.f32.mxu0 0.0
  %v523 = vand.u32 %v90, 4294901760
  %524 = vmatmul.mubr.f32.gmra.mrb[0].mxu0 %v523
  %v525 = vpop.f32.mrb[0].mxu0
  %v526 = vadd.f32 %v325, %v525
  %v527 = vpop.f32.mrb[0].mxu0
  %v528 = vadd.f32 %v327, %v527
  %529 = vmatprep.mubr.f32.mxu0 0.0
  %v530 = vand.u32 %v93, 4294901760
  %531 = vmatmul.mubr.f32.gmra.mrb[0].mxu0 %v530
  %v532 = vpop.f32.mrb[0].mxu0
  %v533 = vadd.f32 %v336, %v532
  %v534 = vpop.f32.mrb[0].mxu0
  %v535 = vadd.f32 %v338, %v534
  %536 = vdwg.mxu0
  %v537 = vand.u32 %v31, 4294901760
  %v538 = vsub.f32 %v31, %v537
  %539 = vmatprep.subr.mxu0 %v538
  %v540 = vand.u32 %v30, 4294901760
  %v541 = vsub.f32 %v30, %v540
  %542 = vmatpush1.msra.mxu0 %v541
  %v543 = vand.u32 %v33, 4294901760
  %v544 = vsub.f32 %v33, %v543
  %545 = vmatprep.subr.mxu0 %v544
  %v546 = vand.u32 %v32, 4294901760
  %v547 = vsub.f32 %v32, %v546
  %548 = vmatpush1.msra.mxu0 %v547
  %549 = vmatprep.subr.mxu0 0.0
  %550 = vmatpush1.msra.mxu0 0.0
  %551 = vmatprep.subr.mxu0 0.0
  %552 = vmatpush1.msra.mxu0 0.0
  %553 = vmatprep.subr.mxu0 0.0
  %554 = vmatpush1.msra.mxu0 0.0
  %555 = vmatprep.subr.mxu0 0.0
  %556 = vmatpush1.msra.mxu0 0.0
  %557 = vmatprep.subr.mxu0 0.0
  %558 = vmatpush1.msra.mxu0 0.0
  %559 = vmatprep.subr.mxu0 0.0
  %560 = vmatpush1.msra.mxu0 0.0
  %561 = vmatprep.subr.mxu0 0.0
  %562 = vmatpush1.msra.mxu0 0.0
  %563 = vmatprep.subr.mxu0 0.0
  %564 = vmatpush1.msra.mxu0 0.0
  %565 = vmatprep.subr.mxu0 0.0
  %566 = vmatpush1.msra.mxu0 0.0
  %567 = vmatprep.subr.mxu0 0.0
  %568 = vmatpush1.msra.mxu0 0.0
  %569 = vmatprep.subr.mxu0 0.0
  %570 = vmatpush1.msra.mxu0 0.0
  %571 = vmatprep.subr.mxu0 0.0
  %572 = vmatpush1.msra.mxu0 0.0
  %573 = vmatprep.subr.mxu0 0.0
  %574 = vmatpush1.msra.mxu0 0.0
  %575 = vmatprep.subr.mxu0 0.0
  %576 = vmatpush1.msra.mxu0 0.0
  %577 = vmatprep.subr.mxu0 0.0
  %578 = vmatpush1.msra.mxu0 0.0
  %579 = vmatprep.subr.mxu0 0.0
  %580 = vmatpush1.msra.mxu0 0.0
  %581 = vmatprep.subr.mxu0 0.0
  %582 = vmatpush1.msra.mxu0 0.0
  %583 = vmatprep.subr.mxu0 0.0
  %584 = vmatpush1.msra.mxu0 0.0
  %585 = vmatprep.subr.mxu0 0.0
  %586 = vmatpush1.msra.mxu0 0.0
  %587 = vmatprep.subr.mxu0 0.0
  %588 = vmatpush1.msra.mxu0 0.0
  %589 = vmatprep.subr.mxu0 0.0
  %590 = vmatpush1.msra.mxu0 0.0
  %591 = vmatprep.subr.mxu0 0.0
  %592 = vmatpush1.msra.mxu0 0.0
  %593 = vmatprep.subr.mxu0 0.0
  %594 = vmatpush1.msra.mxu0 0.0
  %595 = vmatprep.subr.mxu0 0.0
  %596 = vmatpush1.msra.mxu0 0.0
  %597 = vmatprep.subr.mxu0 0.0
  %598 = vmatpush1.msra.mxu0 0.0
  %599 = vmatprep.subr.mxu0 0.0
  %600 = vmatpush1.msra.mxu0 0.0
  %601 = vmatprep.subr.mxu0 0.0
  %602 = vmatpush1.msra.mxu0 0.0
  %603 = vmatprep.subr.mxu0 0.0
  %604 = vmatpush1.msra.mxu0 0.0
  %605 = vmatprep.subr.mxu0 0.0
  %606 = vmatpush1.msra.mxu0 0.0
  %607 = vmatprep.subr.mxu0 0.0
  %608 = vmatpush1.msra.mxu0 0.0
  %609 = vmatprep.mubr.f32.mxu0 0.0
  %v610 = vand.u32 %v48, 4294901760
  %v611 = vsub.f32 %v48, %v610
  %612 = vmatmul.mubr.f32.gmra.mrb[0].mxu0 %v611
  %v613 = vpop.f32.mrb[0].mxu0
  %v614 = vadd.f32 %v428, %v613
  %v615 = vpop.f32.mrb[0].mxu0
  %v616 = vadd.f32 %v430, %v615
  %617 = vmatprep.mubr.f32.mxu0 0.0
  %v618 = vand.u32 %v51, 4294901760
  %v619 = vsub.f32 %v51, %v618
  %620 = vmatmul.mubr.f32.gmra.mrb[0].mxu0 %v619
  %v621 = vpop.f32.mrb[0].mxu0
  %v622 = vadd.f32 %v435, %v621
  %v623 = vpop.f32.mrb[0].mxu0
  %v624 = vadd.f32 %v437, %v623
  %625 = vmatprep.mubr.f32.mxu0 0.0
  %v626 = vand.u32 %v54, 4294901760
  %v627 = vsub.f32 %v54, %v626
  %628 = vmatmul.mubr.f32.gmra.mrb[0].mxu0 %v627
  %v629 = vpop.f32.mrb[0].mxu0
  %v630 = vadd.f32 %v442, %v629
  %v631 = vpop.f32.mrb[0].mxu0
  %v632 = vadd.f32 %v444, %v631
  %633 = vmatprep.mubr.f32.mxu0 0.0
  %v634 = vand.u32 %v57, 4294901760
  %v635 = vsub.f32 %v57, %v634
  %636 = vmatmul.mubr.f32.gmra.mrb[0].mxu0 %v635
  %v637 = vpop.f32.mrb[0].mxu0
  %v638 = vadd.f32 %v449, %v637
  %v639 = vpop.f32.mrb[0].mxu0
  %v640 = vadd.f32 %v451, %v639
  %641 = vmatprep.mubr.f32.mxu0 0.0
  %v642 = vand.u32 %v60, 4294901760
  %v643 = vsub.f32 %v60, %v642
  %644 = vmatmul.mubr.f32.gmra.mrb[0].mxu0 %v643
  %v645 = vpop.f32.mrb[0].mxu0
  %v646 = vadd.f32 %v456, %v645
  %v647 = vpop.f32.mrb[0].mxu0
  %v648 = vadd.f32 %v458, %v647
  %649 = vmatprep.mubr.f32.mxu0 0.0
  %v650 = vand.u32 %v63, 4294901760
  %v651 = vsub.f32 %v63, %v650
  %652 = vmatmul.mubr.f32.gmra.mrb[0].mxu0 %v651
  %v653 = vpop.f32.mrb[0].mxu0
  %v654 = vadd.f32 %v463, %v653
  %v655 = vpop.f32.mrb[0].mxu0
  %v656 = vadd.f32 %v465, %v655
  %657 = vmatprep.mubr.f32.mxu0 0.0
  %v658 = vand.u32 %v66, 4294901760
  %v659 = vsub.f32 %v66, %v658
  %660 = vmatmul.mubr.f32.gmra.mrb[0].mxu0 %v659
  %v661 = vpop.f32.mrb[0].mxu0
  %v662 = vadd.f32 %v470, %v661
  %v663 = vpop.f32.mrb[0].mxu0
  %v664 = vadd.f32 %v472, %v663
  %665 = vmatprep.mubr.f32.mxu0 0.0
  %v666 = vand.u32 %v69, 4294901760
  %v667 = vsub.f32 %v69, %v666
  %668 = vmatmul.mubr.f32.gmra.mrb[0].mxu0 %v667
  %v669 = vpop.f32.mrb[0].mxu0
  %v670 = vadd.f32 %v477, %v669
  %v671 = vpop.f32.mrb[0].mxu0
  %v672 = vadd.f32 %v479, %v671
  %673 = vmatprep.mubr.f32.mxu0 0.0
  %v674 = vand.u32 %v72, 4294901760
  %v675 = vsub.f32 %v72, %v674
  %676 = vmatmul.mubr.f32.gmra.mrb[0].mxu0 %v675
  %v677 = vpop.f32.mrb[0].mxu0
  %v678 = vadd.f32 %v484, %v677
  %v679 = vpop.f32.mrb[0].mxu0
  %v680 = vadd.f32 %v486, %v679
  %681 = vmatprep.mubr.f32.mxu0 0.0
  %v682 = vand.u32 %v75, 4294901760
  %v683 = vsub.f32 %v75, %v682
  %684 = vmatmul.mubr.f32.gmra.mrb[0].mxu0 %v683
  %v685 = vpop.f32.mrb[0].mxu0
  %v686 = vadd.f32 %v491, %v685
  %v687 = vpop.f32.mrb[0].mxu0
  %v688 = vadd.f32 %v493, %v687
  %689 = vmatprep.mubr.f32.mxu0 0.0
  %v690 = vand.u32 %v78, 4294901760
  %v691 = vsub.f32 %v78, %v690
  %692 = vmatmul.mubr.f32.gmra.mrb[0].mxu0 %v691
  %v693 = vpop.f32.mrb[0].mxu0
  %v694 = vadd.f32 %v498, %v693
  %v695 = vpop.f32.mrb[0].mxu0
  %v696 = vadd.f32 %v500, %v695
  %697 = vmatprep.mubr.f32.mxu0 0.0
  %v698 = vand.u32 %v81, 4294901760
  %v699 = vsub.f32 %v81, %v698
  %700 = vmatmul.mubr.f32.gmra.mrb[0].mxu0 %v699
  %v701 = vpop.f32.mrb[0].mxu0
  %v702 = vadd.f32 %v505, %v701
  %v703 = vpop.f32.mrb[0].mxu0
  %v704 = vadd.f32 %v507, %v703
  %705 = vmatprep.mubr.f32.mxu0 0.0
  %v706 = vand.u32 %v84, 4294901760
  %v707 = vsub.f32 %v84, %v706
  %708 = vmatmul.mubr.f32.gmra.mrb[0].mxu0 %v707
  %v709 = vpop.f32.mrb[0].mxu0
  %v710 = vadd.f32 %v512, %v709
  %v711 = vpop.f32.mrb[0].mxu0
  %v712 = vadd.f32 %v514, %v711
  %713 = vmatprep.mubr.f32.mxu0 0.0
  %v714 = vand.u32 %v87, 4294901760
  %v715 = vsub.f32 %v87, %v714
  %716 = vmatmul.mubr.f32.gmra.mrb[0].mxu0 %v715
  %v717 = vpop.f32.mrb[0].mxu0
  %v718 = vadd.f32 %v519, %v717
  %v719 = vpop.f32.mrb[0].mxu0
  %v720 = vadd.f32 %v521, %v719
  %721 = vmatprep.mubr.f32.mxu0 0.0
  %v722 = vand.u32 %v90, 4294901760
  %v723 = vsub.f32 %v90, %v722
  %724 = vmatmul.mubr.f32.gmra.mrb[0].mxu0 %v723
  %v725 = vpop.f32.mrb[0].mxu0
  %v726 = vadd.f32 %v526, %v725
  %v727 = vpop.f32.mrb[0].mxu0
  %v728 = vadd.f32 %v528, %v727
  %729 = vmatprep.mubr.f32.mxu0 0.0
  %v730 = vand.u32 %v93, 4294901760
  %v731 = vsub.f32 %v93, %v730
  %732 = vmatmul.mubr.f32.gmra.mrb[0].mxu0 %v731
  %v733 = vpop.f32.mrb[0].mxu0
  %v734 = vadd.f32 %v533, %v733
  %v735 = vpop.f32.mrb[0].mxu0
  %v736 = vadd.f32 %v535, %v735
  %737 = vdwg.mxu0
  %v738 = vand.u32 %v31, 4294901760
  %739 = vmatprep.subr.mxu0 %v738
  %v740 = vand.u32 %v30, 4294901760
  %741 = vmatpush1.msra.mxu0 %v740
  %v742 = vand.u32 %v33, 4294901760
  %743 = vmatprep.subr.mxu0 %v742
  %v744 = vand.u32 %v32, 4294901760
  %745 = vmatpush1.msra.mxu0 %v744
  %746 = vmatprep.subr.mxu0 0.0
  %747 = vmatpush1.msra.mxu0 0.0
  %748 = vmatprep.subr.mxu0 0.0
  %749 = vmatpush1.msra.mxu0 0.0
  %750 = vmatprep.subr.mxu0 0.0
  %751 = vmatpush1.msra.mxu0 0.0
  %752 = vmatprep.subr.mxu0 0.0
  %753 = vmatpush1.msra.mxu0 0.0
  %754 = vmatprep.subr.mxu0 0.0
  %755 = vmatpush1.msra.mxu0 0.0
  %756 = vmatprep.subr.mxu0 0.0
  %757 = vmatpush1.msra.mxu0 0.0
  %758 = vmatprep.subr.mxu0 0.0
  %759 = vmatpush1.msra.mxu0 0.0
  %760 = vmatprep.subr.mxu0 0.0
  %761 = vmatpush1.msra.mxu0 0.0
  %762 = vmatprep.subr.mxu0 0.0
  %763 = vmatpush1.msra.mxu0 0.0
  %764 = vmatprep.subr.mxu0 0.0
  %765 = vmatpush1.msra.mxu0 0.0
  %766 = vmatprep.subr.mxu0 0.0
  %767 = vmatpush1.msra.mxu0 0.0
  %768 = vmatprep.subr.mxu0 0.0
  %769 = vmatpush1.msra.mxu0 0.0
  %770 = vmatprep.subr.mxu0 0.0
  %771 = vmatpush1.msra.mxu0 0.0
  %772 = vmatprep.subr.mxu0 0.0
  %773 = vmatpush1.msra.mxu0 0.0
  %774 = vmatprep.subr.mxu0 0.0
  %775 = vmatpush1.msra.mxu0 0.0
  %776 = vmatprep.subr.mxu0 0.0
  %777 = vmatpush1.msra.mxu0 0.0
  %778 = vmatprep.subr.mxu0 0.0
  %779 = vmatpush1.msra.mxu0 0.0
  %780 = vmatprep.subr.mxu0 0.0
  %781 = vmatpush1.msra.mxu0 0.0
  %782 = vmatprep.subr.mxu0 0.0
  %783 = vmatpush1.msra.mxu0 0.0
  %784 = vmatprep.subr.mxu0 0.0
  %785 = vmatpush1.msra.mxu0 0.0
  %786 = vmatprep.subr.mxu0 0.0
  %787 = vmatpush1.msra.mxu0 0.0
  %788 = vmatprep.subr.mxu0 0.0
  %789 = vmatpush1.msra.mxu0 0.0
  %790 = vmatprep.subr.mxu0 0.0
  %791 = vmatpush1.msra.mxu0 0.0
  %792 = vmatprep.subr.mxu0 0.0
  %793 = vmatpush1.msra.mxu0 0.0
  %794 = vmatprep.subr.mxu0 0.0
  %795 = vmatpush1.msra.mxu0 0.0
  %796 = vmatprep.subr.mxu0 0.0
  %797 = vmatpush1.msra.mxu0 0.0
  %798 = vmatprep.subr.mxu0 0.0
  %799 = vmatpush1.msra.mxu0 0.0
  %800 = vmatprep.subr.mxu0 0.0
  %801 = vmatpush1.msra.mxu0 0.0
  %802 = vmatprep.subr.mxu0 0.0
  %803 = vmatpush1.msra.mxu0 0.0
  %804 = vmatprep.subr.mxu0 0.0
  %805 = vmatpush1.msra.mxu0 0.0
  %806 = vmatprep.mubr.f32.mxu0 0.0
  %v807 = vand.u32 %v48, 4294901760
  %v808 = vsub.f32 %v48, %v807
  %v809 = vand.u32 %v808, 4294901760
  %810 = vmatmul.mubr.f32.gmra.mrb[0].mxu0 %v809
  %v811 = vpop.f32.mrb[0].mxu0
  %v812 = vadd.f32 %v614, %v811
  %v813 = vpop.f32.mrb[0].mxu0
  %v814 = vadd.f32 %v616, %v813
  %815 = vmatprep.mubr.f32.mxu0 0.0
  %v816 = vand.u32 %v51, 4294901760
  %v817 = vsub.f32 %v51, %v816
  %v818 = vand.u32 %v817, 4294901760
  %819 = vmatmul.mubr.f32.gmra.mrb[0].mxu0 %v818
  %v820 = vpop.f32.mrb[0].mxu0
  %v821 = vadd.f32 %v622, %v820
  %v822 = vpop.f32.mrb[0].mxu0
  %v823 = vadd.f32 %v624, %v822
  %824 = vmatprep.mubr.f32.mxu0 0.0
  %v825 = vand.u32 %v54, 4294901760
  %v826 = vsub.f32 %v54, %v825
  %v827 = vand.u32 %v826, 4294901760
  %828 = vmatmul.mubr.f32.gmra.mrb[0].mxu0 %v827
  %v829 = vpop.f32.mrb[0].mxu0
  %v830 = vadd.f32 %v630, %v829
  %v831 = vpop.f32.mrb[0].mxu0
  %v832 = vadd.f32 %v632, %v831
  %833 = vmatprep.mubr.f32.mxu0 0.0
  %v834 = vand.u32 %v57, 4294901760
  %v835 = vsub.f32 %v57, %v834
  %v836 = vand.u32 %v835, 4294901760
  %837 = vmatmul.mubr.f32.gmra.mrb[0].mxu0 %v836
  %v838 = vpop.f32.mrb[0].mxu0
  %v839 = vadd.f32 %v638, %v838
  %v840 = vpop.f32.mrb[0].mxu0
  %v841 = vadd.f32 %v640, %v840
  %842 = vmatprep.mubr.f32.mxu0 0.0
  %v843 = vand.u32 %v60, 4294901760
  %v844 = vsub.f32 %v60, %v843
  %v845 = vand.u32 %v844, 4294901760
  %846 = vmatmul.mubr.f32.gmra.mrb[0].mxu0 %v845
  %v847 = vpop.f32.mrb[0].mxu0
  %v848 = vadd.f32 %v646, %v847
  %v849 = vpop.f32.mrb[0].mxu0
  %v850 = vadd.f32 %v648, %v849
  %851 = vmatprep.mubr.f32.mxu0 0.0
  %v852 = vand.u32 %v63, 4294901760
  %v853 = vsub.f32 %v63, %v852
  %v854 = vand.u32 %v853, 4294901760
  %855 = vmatmul.mubr.f32.gmra.mrb[0].mxu0 %v854
  %v856 = vpop.f32.mrb[0].mxu0
  %v857 = vadd.f32 %v654, %v856
  %v858 = vpop.f32.mrb[0].mxu0
  %v859 = vadd.f32 %v656, %v858
  %860 = vmatprep.mubr.f32.mxu0 0.0
  %v861 = vand.u32 %v66, 4294901760
  %v862 = vsub.f32 %v66, %v861
  %v863 = vand.u32 %v862, 4294901760
  %864 = vmatmul.mubr.f32.gmra.mrb[0].mxu0 %v863
  %v865 = vpop.f32.mrb[0].mxu0
  %v866 = vadd.f32 %v662, %v865
  %v867 = vpop.f32.mrb[0].mxu0
  %v868 = vadd.f32 %v664, %v867
  %869 = vmatprep.mubr.f32.mxu0 0.0
  %v870 = vand.u32 %v69, 4294901760
  %v871 = vsub.f32 %v69, %v870
  %v872 = vand.u32 %v871, 4294901760
  %873 = vmatmul.mubr.f32.gmra.mrb[0].mxu0 %v872
  %v874 = vpop.f32.mrb[0].mxu0
  %v875 = vadd.f32 %v670, %v874
  %v876 = vpop.f32.mrb[0].mxu0
  %v877 = vadd.f32 %v672, %v876
  %878 = vmatprep.mubr.f32.mxu0 0.0
  %v879 = vand.u32 %v72, 4294901760
  %v880 = vsub.f32 %v72, %v879
  %v881 = vand.u32 %v880, 4294901760
  %882 = vmatmul.mubr.f32.gmra.mrb[0].mxu0 %v881
  %v883 = vpop.f32.mrb[0].mxu0
  %v884 = vadd.f32 %v678, %v883
  %v885 = vpop.f32.mrb[0].mxu0
  %v886 = vadd.f32 %v680, %v885
  %887 = vmatprep.mubr.f32.mxu0 0.0
  %v888 = vand.u32 %v75, 4294901760
  %v889 = vsub.f32 %v75, %v888
  %v890 = vand.u32 %v889, 4294901760
  %891 = vmatmul.mubr.f32.gmra.mrb[0].mxu0 %v890
  %v892 = vpop.f32.mrb[0].mxu0
  %v893 = vadd.f32 %v686, %v892
  %v894 = vpop.f32.mrb[0].mxu0
  %v895 = vadd.f32 %v688, %v894
  %896 = vmatprep.mubr.f32.mxu0 0.0
  %v897 = vand.u32 %v78, 4294901760
  %v898 = vsub.f32 %v78, %v897
  %v899 = vand.u32 %v898, 4294901760
  %900 = vmatmul.mubr.f32.gmra.mrb[0].mxu0 %v899
  %v901 = vpop.f32.mrb[0].mxu0
  %v902 = vadd.f32 %v694, %v901
  %v903 = vpop.f32.mrb[0].mxu0
  %v904 = vadd.f32 %v696, %v903
  %905 = vmatprep.mubr.f32.mxu0 0.0
  %v906 = vand.u32 %v81, 4294901760
  %v907 = vsub.f32 %v81, %v906
  %v908 = vand.u32 %v907, 4294901760
  %909 = vmatmul.mubr.f32.gmra.mrb[0].mxu0 %v908
  %v910 = vpop.f32.mrb[0].mxu0
  %v911 = vadd.f32 %v702, %v910
  %v912 = vpop.f32.mrb[0].mxu0
  %v913 = vadd.f32 %v704, %v912
  %914 = vmatprep.mubr.f32.mxu0 0.0
  %v915 = vand.u32 %v84, 4294901760
  %v916 = vsub.f32 %v84, %v915
  %v917 = vand.u32 %v916, 4294901760
  %918 = vmatmul.mubr.f32.gmra.mrb[0].mxu0 %v917
  %v919 = vpop.f32.mrb[0].mxu0
  %v920 = vadd.f32 %v710, %v919
  %v921 = vpop.f32.mrb[0].mxu0
  %v922 = vadd.f32 %v712, %v921
  %923 = vmatprep.mubr.f32.mxu0 0.0
  %v924 = vand.u32 %v87, 4294901760
  %v925 = vsub.f32 %v87, %v924
  %v926 = vand.u32 %v925, 4294901760
  %927 = vmatmul.mubr.f32.gmra.mrb[0].mxu0 %v926
  %v928 = vpop.f32.mrb[0].mxu0
  %v929 = vadd.f32 %v718, %v928
  %v930 = vpop.f32.mrb[0].mxu0
  %v931 = vadd.f32 %v720, %v930
  %932 = vmatprep.mubr.f32.mxu0 0.0
  %v933 = vand.u32 %v90, 4294901760
  %v934 = vsub.f32 %v90, %v933
  %v935 = vand.u32 %v934, 4294901760
  %936 = vmatmul.mubr.f32.gmra.mrb[0].mxu0 %v935
  %v937 = vpop.f32.mrb[0].mxu0
  %v938 = vadd.f32 %v726, %v937
  %v939 = vpop.f32.mrb[0].mxu0
  %v940 = vadd.f32 %v728, %v939
  %941 = vmatprep.mubr.f32.mxu0 0.0
  %v942 = vand.u32 %v93, 4294901760
  %v943 = vsub.f32 %v93, %v942
  %v944 = vand.u32 %v943, 4294901760
  %945 = vmatmul.mubr.f32.gmra.mrb[0].mxu0 %v944
  %v946 = vpop.f32.mrb[0].mxu0
  %v947 = vadd.f32 %v734, %v946
  %v948 = vpop.f32.mrb[0].mxu0
  %v949 = vadd.f32 %v736, %v948
  %950 = vdwg.mxu0
  %v951 = vand.u32 %v31, 4294901760
  %v952 = vsub.f32 %v31, %v951
  %v953 = vand.u32 %v952, 4294901760
  %954 = vmatprep.subr.mxu0 %v953
  %v955 = vand.u32 %v30, 4294901760
  %v956 = vsub.f32 %v30, %v955
  %v957 = vand.u32 %v956, 4294901760
  %958 = vmatpush1.msra.mxu0 %v957
  %v959 = vand.u32 %v33, 4294901760
  %v960 = vsub.f32 %v33, %v959
  %v961 = vand.u32 %v960, 4294901760
  %962 = vmatprep.subr.mxu0 %v961
  %v963 = vand.u32 %v32, 4294901760
  %v964 = vsub.f32 %v32, %v963
  %v965 = vand.u32 %v964, 4294901760
  %966 = vmatpush1.msra.mxu0 %v965
  %967 = vmatprep.subr.mxu0 0.0
  %968 = vmatpush1.msra.mxu0 0.0
  %969 = vmatprep.subr.mxu0 0.0
  %970 = vmatpush1.msra.mxu0 0.0
  %971 = vmatprep.subr.mxu0 0.0
  %972 = vmatpush1.msra.mxu0 0.0
  %973 = vmatprep.subr.mxu0 0.0
  %974 = vmatpush1.msra.mxu0 0.0
  %975 = vmatprep.subr.mxu0 0.0
  %976 = vmatpush1.msra.mxu0 0.0
  %977 = vmatprep.subr.mxu0 0.0
  %978 = vmatpush1.msra.mxu0 0.0
  %979 = vmatprep.subr.mxu0 0.0
  %980 = vmatpush1.msra.mxu0 0.0
  %981 = vmatprep.subr.mxu0 0.0
  %982 = vmatpush1.msra.mxu0 0.0
  %983 = vmatprep.subr.mxu0 0.0
  %984 = vmatpush1.msra.mxu0 0.0
  %985 = vmatprep.subr.mxu0 0.0
  %986 = vmatpush1.msra.mxu0 0.0
  %987 = vmatprep.subr.mxu0 0.0
  %988 = vmatpush1.msra.mxu0 0.0
  %989 = vmatprep.subr.mxu0 0.0
  %990 = vmatpush1.msra.mxu0 0.0
  %991 = vmatprep.subr.mxu0 0.0
  %992 = vmatpush1.msra.mxu0 0.0
  %993 = vmatprep.subr.mxu0 0.0
  %994 = vmatpush1.msra.mxu0 0.0
  %995 = vmatprep.subr.mxu0 0.0
  %996 = vmatpush1.msra.mxu0 0.0
  %997 = vmatprep.subr.mxu0 0.0
  %998 = vmatpush1.msra.mxu0 0.0
  %999 = vmatprep.subr.mxu0 0.0
  %1000 = vmatpush1.msra.mxu0 0.0
  %1001 = vmatprep.subr.mxu0 0.0
  %1002 = vmatpush1.msra.mxu0 0.0
  %1003 = vmatprep.subr.mxu0 0.0
  %1004 = vmatpush1.msra.mxu0 0.0
  %1005 = vmatprep.subr.mxu0 0.0
  %1006 = vmatpush1.msra.mxu0 0.0
  %1007 = vmatprep.subr.mxu0 0.0
  %1008 = vmatpush1.msra.mxu0 0.0
  %1009 = vmatprep.subr.mxu0 0.0
  %1010 = vmatpush1.msra.mxu0 0.0
  %1011 = vmatprep.subr.mxu0 0.0
  %1012 = vmatpush1.msra.mxu0 0.0
  %1013 = vmatprep.subr.mxu0 0.0
  %1014 = vmatpush1.msra.mxu0 0.0
  %1015 = vmatprep.subr.mxu0 0.0
  %1016 = vmatpush1.msra.mxu0 0.0
  %1017 = vmatprep.subr.mxu0 0.0
  %1018 = vmatpush1.msra.mxu0 0.0
  %1019 = vmatprep.subr.mxu0 0.0
  %1020 = vmatpush1.msra.mxu0 0.0
  %1021 = vmatprep.subr.mxu0 0.0
  %1022 = vmatpush1.msra.mxu0 0.0
  %1023 = vmatprep.subr.mxu0 0.0
  %1024 = vmatpush1.msra.mxu0 0.0
  %1025 = vmatprep.subr.mxu0 0.0
  %1026 = vmatpush1.msra.mxu0 0.0
  %1027 = vmatprep.mubr.f32.mxu0 0.0
  %v1028 = vand.u32 %v48, 4294901760
  %1029 = vmatmul.mubr.f32.gmra.mrb[0].mxu0 %v1028
  %v1030 = vpop.f32.mrb[0].mxu0
  %v1031 = vadd.f32 %v812, %v1030
  %v1032 = vpop.f32.mrb[0].mxu0
  %v1033 = vadd.f32 %v814, %v1032
  %1034 = vmatprep.mubr.f32.mxu0 0.0
  %v1035 = vand.u32 %v51, 4294901760
  %1036 = vmatmul.mubr.f32.gmra.mrb[0].mxu0 %v1035
  %v1037 = vpop.f32.mrb[0].mxu0
  %v1038 = vadd.f32 %v821, %v1037
  %v1039 = vpop.f32.mrb[0].mxu0
  %v1040 = vadd.f32 %v823, %v1039
  %1041 = vmatprep.mubr.f32.mxu0 0.0
  %v1042 = vand.u32 %v54, 4294901760
  %1043 = vmatmul.mubr.f32.gmra.mrb[0].mxu0 %v1042
  %v1044 = vpop.f32.mrb[0].mxu0
  %v1045 = vadd.f32 %v830, %v1044
  %v1046 = vpop.f32.mrb[0].mxu0
  %v1047 = vadd.f32 %v832, %v1046
  %1048 = vmatprep.mubr.f32.mxu0 0.0
  %v1049 = vand.u32 %v57, 4294901760
  %1050 = vmatmul.mubr.f32.gmra.mrb[0].mxu0 %v1049
  %v1051 = vpop.f32.mrb[0].mxu0
  %v1052 = vadd.f32 %v839, %v1051
  %v1053 = vpop.f32.mrb[0].mxu0
  %v1054 = vadd.f32 %v841, %v1053
  %1055 = vmatprep.mubr.f32.mxu0 0.0
  %v1056 = vand.u32 %v60, 4294901760
  %1057 = vmatmul.mubr.f32.gmra.mrb[0].mxu0 %v1056
  %v1058 = vpop.f32.mrb[0].mxu0
  %v1059 = vadd.f32 %v848, %v1058
  %v1060 = vpop.f32.mrb[0].mxu0
  %v1061 = vadd.f32 %v850, %v1060
  %1062 = vmatprep.mubr.f32.mxu0 0.0
  %v1063 = vand.u32 %v63, 4294901760
  %1064 = vmatmul.mubr.f32.gmra.mrb[0].mxu0 %v1063
  %v1065 = vpop.f32.mrb[0].mxu0
  %v1066 = vadd.f32 %v857, %v1065
  %v1067 = vpop.f32.mrb[0].mxu0
  %v1068 = vadd.f32 %v859, %v1067
  %1069 = vmatprep.mubr.f32.mxu0 0.0
  %v1070 = vand.u32 %v66, 4294901760
  %1071 = vmatmul.mubr.f32.gmra.mrb[0].mxu0 %v1070
  %v1072 = vpop.f32.mrb[0].mxu0
  %v1073 = vadd.f32 %v866, %v1072
  %v1074 = vpop.f32.mrb[0].mxu0
  %v1075 = vadd.f32 %v868, %v1074
  %1076 = vmatprep.mubr.f32.mxu0 0.0
  %v1077 = vand.u32 %v69, 4294901760
  %1078 = vmatmul.mubr.f32.gmra.mrb[0].mxu0 %v1077
  %v1079 = vpop.f32.mrb[0].mxu0
  %v1080 = vadd.f32 %v875, %v1079
  %v1081 = vpop.f32.mrb[0].mxu0
  %v1082 = vadd.f32 %v877, %v1081
  %1083 = vmatprep.mubr.f32.mxu0 0.0
  %v1084 = vand.u32 %v72, 4294901760
  %1085 = vmatmul.mubr.f32.gmra.mrb[0].mxu0 %v1084
  %v1086 = vpop.f32.mrb[0].mxu0
  %v1087 = vadd.f32 %v884, %v1086
  %v1088 = vpop.f32.mrb[0].mxu0
  %v1089 = vadd.f32 %v886, %v1088
  %1090 = vmatprep.mubr.f32.mxu0 0.0
  %v1091 = vand.u32 %v75, 4294901760
  %1092 = vmatmul.mubr.f32.gmra.mrb[0].mxu0 %v1091
  %v1093 = vpop.f32.mrb[0].mxu0
  %v1094 = vadd.f32 %v893, %v1093
  %v1095 = vpop.f32.mrb[0].mxu0
  %v1096 = vadd.f32 %v895, %v1095
  %1097 = vmatprep.mubr.f32.mxu0 0.0
  %v1098 = vand.u32 %v78, 4294901760
  %1099 = vmatmul.mubr.f32.gmra.mrb[0].mxu0 %v1098
  %v1100 = vpop.f32.mrb[0].mxu0
  %v1101 = vadd.f32 %v902, %v1100
  %v1102 = vpop.f32.mrb[0].mxu0
  %v1103 = vadd.f32 %v904, %v1102
  %1104 = vmatprep.mubr.f32.mxu0 0.0
  %v1105 = vand.u32 %v81, 4294901760
  %1106 = vmatmul.mubr.f32.gmra.mrb[0].mxu0 %v1105
  %v1107 = vpop.f32.mrb[0].mxu0
  %v1108 = vadd.f32 %v911, %v1107
  %v1109 = vpop.f32.mrb[0].mxu0
  %v1110 = vadd.f32 %v913, %v1109
  %1111 = vmatprep.mubr.f32.mxu0 0.0
  %v1112 = vand.u32 %v84, 4294901760
  %1113 = vmatmul.mubr.f32.gmra.mrb[0].mxu0 %v1112
  %v1114 = vpop.f32.mrb[0].mxu0
  %v1115 = vadd.f32 %v920, %v1114
  %v1116 = vpop.f32.mrb[0].mxu0
  %v1117 = vadd.f32 %v922, %v1116
  %1118 = vmatprep.mubr.f32.mxu0 0.0
  %v1119 = vand.u32 %v87, 4294901760
  %1120 = vmatmul.mubr.f32.gmra.mrb[0].mxu0 %v1119
  %v1121 = vpop.f32.mrb[0].mxu0
  %v1122 = vadd.f32 %v929, %v1121
  %v1123 = vpop.f32.mrb[0].mxu0
  %v1124 = vadd.f32 %v931, %v1123
  %1125 = vmatprep.mubr.f32.mxu0 0.0
  %v1126 = vand.u32 %v90, 4294901760
  %1127 = vmatmul.mubr.f32.gmra.mrb[0].mxu0 %v1126
  %v1128 = vpop.f32.mrb[0].mxu0
  %v1129 = vadd.f32 %v938, %v1128
  %v1130 = vpop.f32.mrb[0].mxu0
  %v1131 = vadd.f32 %v940, %v1130
  %1132 = vmatprep.mubr.f32.mxu0 0.0
  %v1133 = vand.u32 %v93, 4294901760
  %1134 = vmatmul.mubr.f32.gmra.mrb[0].mxu0 %v1133
  %v1135 = vpop.f32.mrb[0].mxu0
  %v1136 = vadd.f32 %v947, %v1135
  %v1137 = vpop.f32.mrb[0].mxu0
  %v1138 = vadd.f32 %v949, %v1137
  %1139 = vdwg.mxu0
  %v1140 = vand.u32 %v31, 4294901760
  %1141 = vmatprep.subr.mxu0 %v1140
  %v1142 = vand.u32 %v30, 4294901760
  %1143 = vmatpush1.msra.mxu0 %v1142
  %v1144 = vand.u32 %v33, 4294901760
  %1145 = vmatprep.subr.mxu0 %v1144
  %v1146 = vand.u32 %v32, 4294901760
  %1147 = vmatpush1.msra.mxu0 %v1146
  %1148 = vmatprep.subr.mxu0 0.0
  %1149 = vmatpush1.msra.mxu0 0.0
  %1150 = vmatprep.subr.mxu0 0.0
  %1151 = vmatpush1.msra.mxu0 0.0
  %1152 = vmatprep.subr.mxu0 0.0
  %1153 = vmatpush1.msra.mxu0 0.0
  %1154 = vmatprep.subr.mxu0 0.0
  %1155 = vmatpush1.msra.mxu0 0.0
  %1156 = vmatprep.subr.mxu0 0.0
  %1157 = vmatpush1.msra.mxu0 0.0
  %1158 = vmatprep.subr.mxu0 0.0
  %1159 = vmatpush1.msra.mxu0 0.0
  %1160 = vmatprep.subr.mxu0 0.0
  %1161 = vmatpush1.msra.mxu0 0.0
  %1162 = vmatprep.subr.mxu0 0.0
  %1163 = vmatpush1.msra.mxu0 0.0
  %1164 = vmatprep.subr.mxu0 0.0
  %1165 = vmatpush1.msra.mxu0 0.0
  %1166 = vmatprep.subr.mxu0 0.0
  %1167 = vmatpush1.msra.mxu0 0.0
  %1168 = vmatprep.subr.mxu0 0.0
  %1169 = vmatpush1.msra.mxu0 0.0
  %1170 = vmatprep.subr.mxu0 0.0
  %1171 = vmatpush1.msra.mxu0 0.0
  %1172 = vmatprep.subr.mxu0 0.0
  %1173 = vmatpush1.msra.mxu0 0.0
  %1174 = vmatprep.subr.mxu0 0.0
  %1175 = vmatpush1.msra.mxu0 0.0
  %1176 = vmatprep.subr.mxu0 0.0
  %1177 = vmatpush1.msra.mxu0 0.0
  %1178 = vmatprep.subr.mxu0 0.0
  %1179 = vmatpush1.msra.mxu0 0.0
  %1180 = vmatprep.subr.mxu0 0.0
  %1181 = vmatpush1.msra.mxu0 0.0
  %1182 = vmatprep.subr.mxu0 0.0
  %1183 = vmatpush1.msra.mxu0 0.0
  %1184 = vmatprep.subr.mxu0 0.0
  %1185 = vmatpush1.msra.mxu0 0.0
  %1186 = vmatprep.subr.mxu0 0.0
  %1187 = vmatpush1.msra.mxu0 0.0
  %1188 = vmatprep.subr.mxu0 0.0
  %1189 = vmatpush1.msra.mxu0 0.0
  %1190 = vmatprep.subr.mxu0 0.0
  %1191 = vmatpush1.msra.mxu0 0.0
  %1192 = vmatprep.subr.mxu0 0.0
  %1193 = vmatpush1.msra.mxu0 0.0
  %1194 = vmatprep.subr.mxu0 0.0
  %1195 = vmatpush1.msra.mxu0 0.0
  %1196 = vmatprep.subr.mxu0 0.0
  %1197 = vmatpush1.msra.mxu0 0.0
  %1198 = vmatprep.subr.mxu0 0.0
  %1199 = vmatpush1.msra.mxu0 0.0
  %1200 = vmatprep.subr.mxu0 0.0
  %1201 = vmatpush1.msra.mxu0 0.0
  %1202 = vmatprep.subr.mxu0 0.0
  %1203 = vmatpush1.msra.mxu0 0.0
  %1204 = vmatprep.subr.mxu0 0.0
  %1205 = vmatpush1.msra.mxu0 0.0
  %1206 = vmatprep.subr.mxu0 0.0
  %1207 = vmatpush1.msra.mxu0 0.0
  %1208 = vmatprep.mubr.f32.mxu0 0.0
  %v1209 = vand.u32 %v48, 4294901760
  %1210 = vmatmul.mubr.f32.gmra.mrb[0].mxu0 %v1209
  %v1211 = vpop.f32.mrb[0].mxu0
  %v1212 = vadd.f32 %v1031, %v1211
  %v1213 = vpop.f32.mrb[0].mxu0
  %v1214 = vadd.f32 %v1033, %v1213
  %1215 = vmatprep.mubr.f32.mxu0 0.0
  %v1216 = vand.u32 %v51, 4294901760
  %1217 = vmatmul.mubr.f32.gmra.mrb[0].mxu0 %v1216
  %v1218 = vpop.f32.mrb[0].mxu0
  %v1219 = vadd.f32 %v1038, %v1218
  %v1220 = vpop.f32.mrb[0].mxu0
  %v1221 = vadd.f32 %v1040, %v1220
  %1222 = vmatprep.mubr.f32.mxu0 0.0
  %v1223 = vand.u32 %v54, 4294901760
  %1224 = vmatmul.mubr.f32.gmra.mrb[0].mxu0 %v1223
  %v1225 = vpop.f32.mrb[0].mxu0
  %v1226 = vadd.f32 %v1045, %v1225
  %v1227 = vpop.f32.mrb[0].mxu0
  %v1228 = vadd.f32 %v1047, %v1227
  %1229 = vmatprep.mubr.f32.mxu0 0.0
  %v1230 = vand.u32 %v57, 4294901760
  %1231 = vmatmul.mubr.f32.gmra.mrb[0].mxu0 %v1230
  %v1232 = vpop.f32.mrb[0].mxu0
  %v1233 = vadd.f32 %v1052, %v1232
  %v1234 = vpop.f32.mrb[0].mxu0
  %v1235 = vadd.f32 %v1054, %v1234
  %1236 = vmatprep.mubr.f32.mxu0 0.0
  %v1237 = vand.u32 %v60, 4294901760
  %1238 = vmatmul.mubr.f32.gmra.mrb[0].mxu0 %v1237
  %v1239 = vpop.f32.mrb[0].mxu0
  %v1240 = vadd.f32 %v1059, %v1239
  %v1241 = vpop.f32.mrb[0].mxu0
  %v1242 = vadd.f32 %v1061, %v1241
  %1243 = vmatprep.mubr.f32.mxu0 0.0
  %v1244 = vand.u32 %v63, 4294901760
  %1245 = vmatmul.mubr.f32.gmra.mrb[0].mxu0 %v1244
  %v1246 = vpop.f32.mrb[0].mxu0
  %v1247 = vadd.f32 %v1066, %v1246
  %v1248 = vpop.f32.mrb[0].mxu0
  %v1249 = vadd.f32 %v1068, %v1248
  %1250 = vmatprep.mubr.f32.mxu0 0.0
  %v1251 = vand.u32 %v66, 4294901760
  %1252 = vmatmul.mubr.f32.gmra.mrb[0].mxu0 %v1251
  %v1253 = vpop.f32.mrb[0].mxu0
  %v1254 = vadd.f32 %v1073, %v1253
  %v1255 = vpop.f32.mrb[0].mxu0
  %v1256 = vadd.f32 %v1075, %v1255
  %1257 = vmatprep.mubr.f32.mxu0 0.0
  %v1258 = vand.u32 %v69, 4294901760
  %1259 = vmatmul.mubr.f32.gmra.mrb[0].mxu0 %v1258
  %v1260 = vpop.f32.mrb[0].mxu0
  %v1261 = vadd.f32 %v1080, %v1260
  %v1262 = vpop.f32.mrb[0].mxu0
  %v1263 = vadd.f32 %v1082, %v1262
  %1264 = vmatprep.mubr.f32.mxu0 0.0
  %v1265 = vand.u32 %v72, 4294901760
  %1266 = vmatmul.mubr.f32.gmra.mrb[0].mxu0 %v1265
  %v1267 = vpop.f32.mrb[0].mxu0
  %v1268 = vadd.f32 %v1087, %v1267
  %v1269 = vpop.f32.mrb[0].mxu0
  %v1270 = vadd.f32 %v1089, %v1269
  %1271 = vmatprep.mubr.f32.mxu0 0.0
  %v1272 = vand.u32 %v75, 4294901760
  %1273 = vmatmul.mubr.f32.gmra.mrb[0].mxu0 %v1272
  %v1274 = vpop.f32.mrb[0].mxu0
  %v1275 = vadd.f32 %v1094, %v1274
  %v1276 = vpop.f32.mrb[0].mxu0
  %v1277 = vadd.f32 %v1096, %v1276
  %1278 = vmatprep.mubr.f32.mxu0 0.0
  %v1279 = vand.u32 %v78, 4294901760
  %1280 = vmatmul.mubr.f32.gmra.mrb[0].mxu0 %v1279
  %v1281 = vpop.f32.mrb[0].mxu0
  %v1282 = vadd.f32 %v1101, %v1281
  %v1283 = vpop.f32.mrb[0].mxu0
  %v1284 = vadd.f32 %v1103, %v1283
  %1285 = vmatprep.mubr.f32.mxu0 0.0
  %v1286 = vand.u32 %v81, 4294901760
  %1287 = vmatmul.mubr.f32.gmra.mrb[0].mxu0 %v1286
  %v1288 = vpop.f32.mrb[0].mxu0
  %v1289 = vadd.f32 %v1108, %v1288
  %v1290 = vpop.f32.mrb[0].mxu0
  %v1291 = vadd.f32 %v1110, %v1290
  %1292 = vmatprep.mubr.f32.mxu0 0.0
  %v1293 = vand.u32 %v84, 4294901760
  %1294 = vmatmul.mubr.f32.gmra.mrb[0].mxu0 %v1293
  %v1295 = vpop.f32.mrb[0].mxu0
  %v1296 = vadd.f32 %v1115, %v1295
  %v1297 = vpop.f32.mrb[0].mxu0
  %v1298 = vadd.f32 %v1117, %v1297
  %1299 = vmatprep.mubr.f32.mxu0 0.0
  %v1300 = vand.u32 %v87, 4294901760
  %1301 = vmatmul.mubr.f32.gmra.mrb[0].mxu0 %v1300
  %v1302 = vpop.f32.mrb[0].mxu0
  %v1303 = vadd.f32 %v1122, %v1302
  %v1304 = vpop.f32.mrb[0].mxu0
  %v1305 = vadd.f32 %v1124, %v1304
  %1306 = vmatprep.mubr.f32.mxu0 0.0
  %v1307 = vand.u32 %v90, 4294901760
  %1308 = vmatmul.mubr.f32.gmra.mrb[0].mxu0 %v1307
  %v1309 = vpop.f32.mrb[0].mxu0
  %v1310 = vadd.f32 %v1129, %v1309
  %v1311 = vpop.f32.mrb[0].mxu0
  %v1312 = vadd.f32 %v1131, %v1311
  %1313 = vmatprep.mubr.f32.mxu0 0.0
  %v1314 = vand.u32 %v93, 4294901760
  %1315 = vmatmul.mubr.f32.gmra.mrb[0].mxu0 %v1314
  %v1316 = vpop.f32.mrb[0].mxu0
  %v1317 = vadd.f32 %v1136, %v1316
  %v1318 = vpop.f32.mrb[0].mxu0
  %v1319 = vadd.f32 %v1138, %v1318
  %1320 = vdwg.mxu0
  %1321 = vst [vmem:[%s3] sm:$0xff] %v1212
  %1322 = vst [vmem:[%s3 + $0x8] sm:$0xff] %v1214
  %1323 = vst [vmem:[%s3 + $0x10] sm:$0xff] %v1219
  %1324 = vst [vmem:[%s3 + $0x18] sm:$0xff] %v1221
  %1325 = vst [vmem:[%s3 + $0x20] sm:$0xff] %v1226
  %1326 = vst [vmem:[%s3 + $0x28] sm:$0xff] %v1228
  %1327 = vst [vmem:[%s3 + $0x30] sm:$0xff] %v1233
  %1328 = vst [vmem:[%s3 + $0x38] sm:$0xff] %v1235
  %1329 = vst [vmem:[%s3 + $0x40] sm:$0xff] %v1240
  %1330 = vst [vmem:[%s3 + $0x48] sm:$0xff] %v1242
  %1331 = vst [vmem:[%s3 + $0x50] sm:$0xff] %v1247
  %1332 = vst [vmem:[%s3 + $0x58] sm:$0xff] %v1249
  %1333 = vst [vmem:[%s3 + $0x60] sm:$0xff] %v1254
  %1334 = vst [vmem:[%s3 + $0x68] sm:$0xff] %v1256
  %1335 = vst [vmem:[%s3 + $0x70] sm:$0xff] %v1261
  %1336 = vst [vmem:[%s3 + $0x78] sm:$0xff] %v1263
  %1337 = vst [vmem:[%s3 + $0x80] sm:$0xff] %v1268
  %1338 = vst [vmem:[%s3 + $0x88] sm:$0xff] %v1270
  %1339 = vst [vmem:[%s3 + $0x90] sm:$0xff] %v1275
  %1340 = vst [vmem:[%s3 + $0x98] sm:$0xff] %v1277
  %1341 = vst [vmem:[%s3 + $0xa0] sm:$0xff] %v1282
  %1342 = vst [vmem:[%s3 + $0xa8] sm:$0xff] %v1284
  %1343 = vst [vmem:[%s3 + $0xb0] sm:$0xff] %v1289
  %1344 = vst [vmem:[%s3 + $0xb8] sm:$0xff] %v1291
  %1345 = vst [vmem:[%s3 + $0xc0] sm:$0xff] %v1296
  %1346 = vst [vmem:[%s3 + $0xc8] sm:$0xff] %v1298
  %1347 = vst [vmem:[%s3 + $0xd0] sm:$0xff] %v1303
  %1348 = vst [vmem:[%s3 + $0xd8] sm:$0xff] %v1305
  %1349 = vst [vmem:[%s3 + $0xe0] sm:$0xff] %v1310
  %1350 = vst [vmem:[%s3 + $0xe8] sm:$0xff] %v1312
  %1351 = vst [vmem:[%s3 + $0xf0] sm:$0xff] %v1317
  %1352 = vst [vmem:[%s3 + $0xf8] sm:$0xff] %v1319
  // Predicated region
  $region14: #{agdn_conv_forward.5} parent=0 // pred_check
    _
  $region15: #{agdn_conv_forward.5} parent=0 // pred_check_branch
    %1354 = sbr.rel (0) target = $region17
  $region16: #{agdn_conv_forward.5} parent=0 // pred_region
    _
  $region17: #{agdn_conv_forward.5} parent=0 // pred_fallthru
    _
  // Predicated region
  $region18: #{agdn_conv_forward.5} parent=0 // pred_check
    _
  $region19: #{agdn_conv_forward.5} parent=0 // pred_check_branch
    %1356 = sbr.rel (0) target = $region21
  $region20: #{agdn_conv_forward.5} parent=0 // pred_region
    _
  $region21: #{agdn_conv_forward.5} parent=0 // pred_fallthru
    _

// kernel: agdn_conv_forward.6
$region0: #{agdn_conv_forward.6}
  #allocation0 [shape = 'u32[]', space=smem, size = 0x4, offset = 0x4, fixed_abs, tag = 'smem constant byte address 0x4 - core index']
  #allocation1 [shape = 'u32[144,128]{1,0:T(1,128)}', space=vmem, size = 0x12000, scoped, tag = 'internal scratch']
  %s0 = inlined_call_operand.vmem [shape: f32[2,128,128], index: 0, kind: input, shape index: {}]
  %s1 = inlined_call_operand.vmem [shape: f32[2,128,1], index: 1, kind: input, shape index: {}]
  %s2 = inlined_call_operand.vmem [shape: f32[2,1,128], index: 2, kind: input, shape index: {}]
  %s3 = inlined_call_operand.vmem [shape: f32[2,32,128], index: 3, kind: input, shape index: {}]
  %s4 = inlined_call_operand.vmem [shape: f32[2,128,128], index: 4, kind: output, shape index: {0}]
  %s5 = inlined_call_operand.vmem [shape: f32[2,32,128], index: 5, kind: output, shape index: {1}]
  %6 = xla_tuple %s4, %s5
  %s7 = sld [smem:[#allocation0]]
  $region34: #{agdn_conv_forward.6} parent=0
    _
  %s9 = ssub.s32 1, %s7
  %s10 = scalar_select 0, %s9, %s7
  // Predicated region
  $region2: #{agdn_conv_forward.6} parent=0 // pred_check
    _
  $region3: #{agdn_conv_forward.6} parent=0 // pred_check_branch
    %12 = sbr.rel (0) target = $region5
  $region4: #{agdn_conv_forward.6} parent=0 // pred_region
    _
  $region5: #{agdn_conv_forward.6} parent=0 // pred_fallthru
    _
  // Predicated region
  $region6: #{agdn_conv_forward.6} parent=0 // pred_check
    _
  $region7: #{agdn_conv_forward.6} parent=0 // pred_check_branch
    %14 = sbr.rel (0) target = $region9
  $region8: #{agdn_conv_forward.6} parent=0 // pred_region
    _
  $region9: #{agdn_conv_forward.6} parent=0 // pred_fallthru
    _
  // Predicated region
  $region10: #{agdn_conv_forward.6} parent=0 // pred_check
    _
  $region11: #{agdn_conv_forward.6} parent=0 // pred_check_branch
    %16 = sbr.rel (0) target = $region13
  $region12: #{agdn_conv_forward.6} parent=0 // pred_region
    _
  $region13: #{agdn_conv_forward.6} parent=0 // pred_fallthru
    _
  // Predicated region
  $region14: #{agdn_conv_forward.6} parent=0 // pred_check
    _
  $region15: #{agdn_conv_forward.6} parent=0 // pred_check_branch
    %18 = sbr.rel (0) target = $region17
  $region16: #{agdn_conv_forward.6} parent=0 // pred_region
    _
  $region17: #{agdn_conv_forward.6} parent=0 // pred_fallthru
    _
  %v19 = vld [vmem:[%s0] sm:$0xff]
  %v20 = vld [vmem:[%s0 + $0x8] sm:$0xff]
  %v21 = vld [vmem:[%s0 + $0x10] sm:$0xff]
  %v22 = vld [vmem:[%s0 + $0x18] sm:$0xff]
  %v23 = vld [vmem:[%s0 + $0x20] sm:$0xff]
  %v24 = vld [vmem:[%s0 + $0x28] sm:$0xff]
  %v25 = vld [vmem:[%s0 + $0x30] sm:$0xff]
  %v26 = vld [vmem:[%s0 + $0x38] sm:$0xff]
  %v27 = vld [vmem:[%s0 + $0x40] sm:$0xff]
  %v28 = vld [vmem:[%s0 + $0x48] sm:$0xff]
  %v29 = vld [vmem:[%s0 + $0x50] sm:$0xff]
  %v30 = vld [vmem:[%s0 + $0x58] sm:$0xff]
  %v31 = vld [vmem:[%s0 + $0x60] sm:$0xff]
  %v32 = vld [vmem:[%s0 + $0x68] sm:$0xff]
  %v33 = vld [vmem:[%s0 + $0x70] sm:$0xff]
  %v34 = vld [vmem:[%s0 + $0x78] sm:$0xff]
  %v35 = vld [vmem:[%s0 + $0x80] sm:$0xff]
  %v36 = vld [vmem:[%s0 + $0x88] sm:$0xff]
  %v37 = vld [vmem:[%s0 + $0x90] sm:$0xff]
  %v38 = vld [vmem:[%s0 + $0x98] sm:$0xff]
  %v39 = vld [vmem:[%s0 + $0xa0] sm:$0xff]
  %v40 = vld [vmem:[%s0 + $0xa8] sm:$0xff]
  %v41 = vld [vmem:[%s0 + $0xb0] sm:$0xff]
  %v42 = vld [vmem:[%s0 + $0xb8] sm:$0xff]
  %v43 = vld [vmem:[%s0 + $0xc0] sm:$0xff]
  %v44 = vld [vmem:[%s0 + $0xc8] sm:$0xff]
  %v45 = vld [vmem:[%s0 + $0xd0] sm:$0xff]
  %v46 = vld [vmem:[%s0 + $0xd8] sm:$0xff]
  %v47 = vld [vmem:[%s0 + $0xe0] sm:$0xff]
  %v48 = vld [vmem:[%s0 + $0xe8] sm:$0xff]
  %v49 = vld [vmem:[%s0 + $0xf0] sm:$0xff]
  %v50 = vld [vmem:[%s0 + $0xf8] sm:$0xff]
  %v51 = vld [vmem:[%s1] sm:$0xff]
  %v52 = vld [vmem:[%s1 + $0x8] sm:$0xff]
  %v53 = vld [vmem:[%s1 + $0x10] sm:$0xff]
  %v54 = vld [vmem:[%s1 + $0x18] sm:$0xff]
  %v55 = vld [vmem:[%s1 + $0x20] sm:$0xff]
  %v56 = vld [vmem:[%s1 + $0x28] sm:$0xff]
  %v57 = vld [vmem:[%s1 + $0x30] sm:$0xff]
  %v58 = vld [vmem:[%s1 + $0x38] sm:$0xff]
  %v59 = vld [vmem:[%s1 + $0x40] sm:$0xff]
  %v60 = vld [vmem:[%s1 + $0x48] sm:$0xff]
  %v61 = vld [vmem:[%s1 + $0x50] sm:$0xff]
  %v62 = vld [vmem:[%s1 + $0x58] sm:$0xff]
  %v63 = vld [vmem:[%s1 + $0x60] sm:$0xff]
  %v64 = vld [vmem:[%s1 + $0x68] sm:$0xff]
  %v65 = vld [vmem:[%s1 + $0x70] sm:$0xff]
  %v66 = vld [vmem:[%s1 + $0x78] sm:$0xff]
  %v67 = vld [vmem:[%s1 + $0x80] sm:$0xff]
  %v68 = vld [vmem:[%s1 + $0x88] sm:$0xff]
  %v69 = vld [vmem:[%s1 + $0x90] sm:$0xff]
  %v70 = vld [vmem:[%s1 + $0x98] sm:$0xff]
  %v71 = vld [vmem:[%s1 + $0xa0] sm:$0xff]
  %v72 = vld [vmem:[%s1 + $0xa8] sm:$0xff]
  %v73 = vld [vmem:[%s1 + $0xb0] sm:$0xff]
  %v74 = vld [vmem:[%s1 + $0xb8] sm:$0xff]
  %v75 = vld [vmem:[%s1 + $0xc0] sm:$0xff]
  %v76 = vld [vmem:[%s1 + $0xc8] sm:$0xff]
  %v77 = vld [vmem:[%s1 + $0xd0] sm:$0xff]
  %v78 = vld [vmem:[%s1 + $0xd8] sm:$0xff]
  %v79 = vld [vmem:[%s1 + $0xe0] sm:$0xff]
  %v80 = vld [vmem:[%s1 + $0xe8] sm:$0xff]
  %v81 = vld [vmem:[%s1 + $0xf0] sm:$0xff]
  %v82 = vld [vmem:[%s1 + $0xf8] sm:$0xff]
  %84 = vset.pattern.permute.xlu0 0
  %85 = vperm.xlu0 %84, %v51
  %v86 = vpop.permute.xlu0 %85
  %89 = vset.pattern.permute.xlu0 0
  %90 = vperm.xlu0 %89, %v52
  %v91 = vpop.permute.xlu0 %90
  %94 = vset.pattern.permute.xlu0 0
  %95 = vperm.xlu0 %94, %v53
  %v96 = vpop.permute.xlu0 %95
  %99 = vset.pattern.permute.xlu0 0
  %100 = vperm.xlu0 %99, %v54
  %v101 = vpop.permute.xlu0 %100
  %104 = vset.pattern.permute.xlu0 0
  %105 = vperm.xlu0 %104, %v55
  %v106 = vpop.permute.xlu0 %105
  %109 = vset.pattern.permute.xlu0 0
  %110 = vperm.xlu0 %109, %v56
  %v111 = vpop.permute.xlu0 %110
  %114 = vset.pattern.permute.xlu0 0
  %115 = vperm.xlu0 %114, %v57
  %v116 = vpop.permute.xlu0 %115
  %119 = vset.pattern.permute.xlu0 0
  %120 = vperm.xlu0 %119, %v58
  %v121 = vpop.permute.xlu0 %120
  %124 = vset.pattern.permute.xlu0 0
  %125 = vperm.xlu0 %124, %v59
  %v126 = vpop.permute.xlu0 %125
  %129 = vset.pattern.permute.xlu0 0
  %130 = vperm.xlu0 %129, %v60
  %v131 = vpop.permute.xlu0 %130
  %134 = vset.pattern.permute.xlu0 0
  %135 = vperm.xlu0 %134, %v61
  %v136 = vpop.permute.xlu0 %135
  %139 = vset.pattern.permute.xlu0 0
  %140 = vperm.xlu0 %139, %v62
  %v141 = vpop.permute.xlu0 %140
  %144 = vset.pattern.permute.xlu0 0
  %145 = vperm.xlu0 %144, %v63
  %v146 = vpop.permute.xlu0 %145
  %149 = vset.pattern.permute.xlu0 0
  %150 = vperm.xlu0 %149, %v64
  %v151 = vpop.permute.xlu0 %150
  %154 = vset.pattern.permute.xlu0 0
  %155 = vperm.xlu0 %154, %v65
  %v156 = vpop.permute.xlu0 %155
  %159 = vset.pattern.permute.xlu0 0
  %160 = vperm.xlu0 %159, %v66
  %v161 = vpop.permute.xlu0 %160
  %164 = vset.pattern.permute.xlu0 0
  %165 = vperm.xlu0 %164, %v67
  %v166 = vpop.permute.xlu0 %165
  %169 = vset.pattern.permute.xlu0 0
  %170 = vperm.xlu0 %169, %v68
  %v171 = vpop.permute.xlu0 %170
  %174 = vset.pattern.permute.xlu0 0
  %175 = vperm.xlu0 %174, %v69
  %v176 = vpop.permute.xlu0 %175
  %179 = vset.pattern.permute.xlu0 0
  %180 = vperm.xlu0 %179, %v70
  %v181 = vpop.permute.xlu0 %180
  %184 = vset.pattern.permute.xlu0 0
  %185 = vperm.xlu0 %184, %v71
  %v186 = vpop.permute.xlu0 %185
  %189 = vset.pattern.permute.xlu0 0
  %190 = vperm.xlu0 %189, %v72
  %v191 = vpop.permute.xlu0 %190
  %194 = vset.pattern.permute.xlu0 0
  %195 = vperm.xlu0 %194, %v73
  %v196 = vpop.permute.xlu0 %195
  %199 = vset.pattern.permute.xlu0 0
  %200 = vperm.xlu0 %199, %v74
  %v201 = vpop.permute.xlu0 %200
  %204 = vset.pattern.permute.xlu0 0
  %205 = vperm.xlu0 %204, %v75
  %v206 = vpop.permute.xlu0 %205
  %209 = vset.pattern.permute.xlu0 0
  %210 = vperm.xlu0 %209, %v76
  %v211 = vpop.permute.xlu0 %210
  %214 = vset.pattern.permute.xlu0 0
  %215 = vperm.xlu0 %214, %v77
  %v216 = vpop.permute.xlu0 %215
  %219 = vset.pattern.permute.xlu0 0
  %220 = vperm.xlu0 %219, %v78
  %v221 = vpop.permute.xlu0 %220
  %224 = vset.pattern.permute.xlu0 0
  %225 = vperm.xlu0 %224, %v79
  %v226 = vpop.permute.xlu0 %225
  %229 = vset.pattern.permute.xlu0 0
  %230 = vperm.xlu0 %229, %v80
  %v231 = vpop.permute.xlu0 %230
  %234 = vset.pattern.permute.xlu0 0
  %235 = vperm.xlu0 %234, %v81
  %v236 = vpop.permute.xlu0 %235
  %239 = vset.pattern.permute.xlu0 0
  %240 = vperm.xlu0 %239, %v82
  %v241 = vpop.permute.xlu0 %240
  %v243 = vsub.f32 %v19, %v86
  %v244 = vsub.f32 %v20, %v91
  %v245 = vsub.f32 %v21, %v96
  %v246 = vsub.f32 %v22, %v101
  %v247 = vsub.f32 %v23, %v106
  %v248 = vsub.f32 %v24, %v111
  %v249 = vsub.f32 %v25, %v116
  %v250 = vsub.f32 %v26, %v121
  %v251 = vsub.f32 %v27, %v126
  %v252 = vsub.f32 %v28, %v131
  %v253 = vsub.f32 %v29, %v136
  %v254 = vsub.f32 %v30, %v141
  %v255 = vsub.f32 %v31, %v146
  %v256 = vsub.f32 %v32, %v151
  %v257 = vsub.f32 %v33, %v156
  %v258 = vsub.f32 %v34, %v161
  %v259 = vsub.f32 %v35, %v166
  %v260 = vsub.f32 %v36, %v171
  %v261 = vsub.f32 %v37, %v176
  %v262 = vsub.f32 %v38, %v181
  %v263 = vsub.f32 %v39, %v186
  %v264 = vsub.f32 %v40, %v191
  %v265 = vsub.f32 %v41, %v196
  %v266 = vsub.f32 %v42, %v201
  %v267 = vsub.f32 %v43, %v206
  %v268 = vsub.f32 %v44, %v211
  %v269 = vsub.f32 %v45, %v216
  %v270 = vsub.f32 %v46, %v221
  %v271 = vsub.f32 %v47, %v226
  %v272 = vsub.f32 %v48, %v231
  %v273 = vsub.f32 %v49, %v236
  %v274 = vsub.f32 %v50, %v241
  %v275 = vld [vmem:[%s2] sm:$0x1]
  %v276 = vld [vmem:[%s2 + $0x1] sm:$0x1]
  %v279 = vlaneseq
  %v280 = vshrl.u32 %v279, 7
  %v281 = vsub.s32 0, %v280
  %v282 = vrot.slane %v275, %v281
  %v283 = vlaneseq
  %v284 = vshrl.u32 %v283, 7
  %v285 = vsub.s32 0, %v284
  %v286 = vrot.slane %v276, %v285
  %v289 = vsub.f32 %v243, %v282
  %v290 = vsub.f32 %v244, %v282
  %v291 = vsub.f32 %v245, %v282
  %v292 = vsub.f32 %v246, %v282
  %v293 = vsub.f32 %v247, %v282
  %v294 = vsub.f32 %v248, %v282
  %v295 = vsub.f32 %v249, %v282
  %v296 = vsub.f32 %v250, %v282
  %v297 = vsub.f32 %v251, %v282
  %v298 = vsub.f32 %v252, %v282
  %v299 = vsub.f32 %v253, %v282
  %v300 = vsub.f32 %v254, %v282
  %v301 = vsub.f32 %v255, %v282
  %v302 = vsub.f32 %v256, %v282
  %v303 = vsub.f32 %v257, %v282
  %v304 = vsub.f32 %v258, %v282
  %v305 = vsub.f32 %v259, %v286
  %v306 = vsub.f32 %v260, %v286
  %v307 = vsub.f32 %v261, %v286
  %v308 = vsub.f32 %v262, %v286
  %v309 = vsub.f32 %v263, %v286
  %v310 = vsub.f32 %v264, %v286
  %v311 = vsub.f32 %v265, %v286
  %v312 = vsub.f32 %v266, %v286
  %v313 = vsub.f32 %v267, %v286
  %v314 = vsub.f32 %v268, %v286
  %v315 = vsub.f32 %v269, %v286
  %v316 = vsub.f32 %v270, %v286
  %v317 = vsub.f32 %v271, %v286
  %v318 = vsub.f32 %v272, %v286
  %v319 = vsub.f32 %v273, %v286
  %v320 = vsub.f32 %v274, %v286
  %v321 = vmul.f32 %v289, 1.442695
  %v322 = vpow.pop %v321
  %v323 = vmul.f32 %v290, 1.442695
  %v324 = vpow.pop %v323
  %v325 = vmul.f32 %v291, 1.442695
  %v326 = vpow.pop %v325
  %v327 = vmul.f32 %v292, 1.442695
  %v328 = vpow.pop %v327
  %v329 = vmul.f32 %v293, 1.442695
  %v330 = vpow.pop %v329
  %v331 = vmul.f32 %v294, 1.442695
  %v332 = vpow.pop %v331
  %v333 = vmul.f32 %v295, 1.442695
  %v334 = vpow.pop %v333
  %v335 = vmul.f32 %v296, 1.442695
  %v336 = vpow.pop %v335
  %v337 = vmul.f32 %v297, 1.442695
  %v338 = vpow.pop %v337
  %v339 = vmul.f32 %v298, 1.442695
  %v340 = vpow.pop %v339
  %v341 = vmul.f32 %v299, 1.442695
  %v342 = vpow.pop %v341
  %v343 = vmul.f32 %v300, 1.442695
  %v344 = vpow.pop %v343
  %v345 = vmul.f32 %v301, 1.442695
  %v346 = vpow.pop %v345
  %v347 = vmul.f32 %v302, 1.442695
  %v348 = vpow.pop %v347
  %v349 = vmul.f32 %v303, 1.442695
  %v350 = vpow.pop %v349
  %v351 = vmul.f32 %v304, 1.442695
  %v352 = vpow.pop %v351
  %v353 = vmul.f32 %v305, 1.442695
  %v354 = vpow.pop %v353
  %v355 = vmul.f32 %v306, 1.442695
  %v356 = vpow.pop %v355
  %v357 = vmul.f32 %v307, 1.442695
  %v358 = vpow.pop %v357
  %v359 = vmul.f32 %v308, 1.442695
  %v360 = vpow.pop %v359
  %v361 = vmul.f32 %v309, 1.442695
  %v362 = vpow.pop %v361
  %v363 = vmul.f32 %v310, 1.442695
  %v364 = vpow.pop %v363
  %v365 = vmul.f32 %v311, 1.442695
  %v366 = vpow.pop %v365
  %v367 = vmul.f32 %v312, 1.442695
  %v368 = vpow.pop %v367
  %v369 = vmul.f32 %v313, 1.442695
  %v370 = vpow.pop %v369
  %v371 = vmul.f32 %v314, 1.442695
  %v372 = vpow.pop %v371
  %v373 = vmul.f32 %v315, 1.442695
  %v374 = vpow.pop %v373
  %v375 = vmul.f32 %v316, 1.442695
  %v376 = vpow.pop %v375
  %v377 = vmul.f32 %v317, 1.442695
  %v378 = vpow.pop %v377
  %v379 = vmul.f32 %v318, 1.442695
  %v380 = vpow.pop %v379
  %v381 = vmul.f32 %v319, 1.442695
  %v382 = vpow.pop %v381
  %v383 = vmul.f32 %v320, 1.442695
  %v384 = vpow.pop %v383
  %385 = vst [vmem:[%s4] sm:$0xff] %v322
  %386 = vst [vmem:[%s4 + $0x8] sm:$0xff] %v324
  %387 = vst [vmem:[%s4 + $0x10] sm:$0xff] %v326
  %388 = vst [vmem:[%s4 + $0x18] sm:$0xff] %v328
  %389 = vst [vmem:[%s4 + $0x20] sm:$0xff] %v330
  %390 = vst [vmem:[%s4 + $0x28] sm:$0xff] %v332
  %391 = vst [vmem:[%s4 + $0x30] sm:$0xff] %v334
  %392 = vst [vmem:[%s4 + $0x38] sm:$0xff] %v336
  %393 = vst [vmem:[%s4 + $0x40] sm:$0xff] %v338
  %394 = vst [vmem:[%s4 + $0x48] sm:$0xff] %v340
  %395 = vst [vmem:[%s4 + $0x50] sm:$0xff] %v342
  %396 = vst [vmem:[%s4 + $0x58] sm:$0xff] %v344
  %397 = vst [vmem:[%s4 + $0x60] sm:$0xff] %v346
  %398 = vst [vmem:[%s4 + $0x68] sm:$0xff] %v348
  %399 = vst [vmem:[%s4 + $0x70] sm:$0xff] %v350
  %400 = vst [vmem:[%s4 + $0x78] sm:$0xff] %v352
  %401 = vst [vmem:[%s4 + $0x80] sm:$0xff] %v354
  %402 = vst [vmem:[%s4 + $0x88] sm:$0xff] %v356
  %403 = vst [vmem:[%s4 + $0x90] sm:$0xff] %v358
  %404 = vst [vmem:[%s4 + $0x98] sm:$0xff] %v360
  %405 = vst [vmem:[%s4 + $0xa0] sm:$0xff] %v362
  %406 = vst [vmem:[%s4 + $0xa8] sm:$0xff] %v364
  %407 = vst [vmem:[%s4 + $0xb0] sm:$0xff] %v366
  %408 = vst [vmem:[%s4 + $0xb8] sm:$0xff] %v368
  %409 = vst [vmem:[%s4 + $0xc0] sm:$0xff] %v370
  %410 = vst [vmem:[%s4 + $0xc8] sm:$0xff] %v372
  %411 = vst [vmem:[%s4 + $0xd0] sm:$0xff] %v374
  %412 = vst [vmem:[%s4 + $0xd8] sm:$0xff] %v376
  %413 = vst [vmem:[%s4 + $0xe0] sm:$0xff] %v378
  %414 = vst [vmem:[%s4 + $0xe8] sm:$0xff] %v380
  %415 = vst [vmem:[%s4 + $0xf0] sm:$0xff] %v382
  %416 = vst [vmem:[%s4 + $0xf8] sm:$0xff] %v384
  %v417 = vld [vmem:[%s3] sm:$0xff]
  %v418 = vld [vmem:[%s3 + $0x8] sm:$0xff]
  %v419 = vld [vmem:[%s3 + $0x10] sm:$0xff]
  %v420 = vld [vmem:[%s3 + $0x18] sm:$0xff]
  %v421 = vld [vmem:[%s3 + $0x20] sm:$0xff]
  %v422 = vld [vmem:[%s3 + $0x28] sm:$0xff]
  %v423 = vld [vmem:[%s3 + $0x30] sm:$0xff]
  %v424 = vld [vmem:[%s3 + $0x38] sm:$0xff]
  %425 = vmatprep.subr.mxu0 0.0
  %v426 = vand.u32 %v322, 4294901760
  %427 = vmatpush1.msra.mxu0 %v426
  %428 = vmatprep.subr.mxu0 0.0
  %v429 = vand.u32 %v324, 4294901760
  %430 = vmatpush1.msra.mxu0 %v429
  %431 = vmatprep.subr.mxu0 0.0
  %v432 = vand.u32 %v326, 4294901760
  %433 = vmatpush1.msra.mxu0 %v432
  %434 = vmatprep.subr.mxu0 0.0
  %v435 = vand.u32 %v328, 4294901760
  %436 = vmatpush1.msra.mxu0 %v435
  %437 = vmatprep.subr.mxu0 0.0
  %v438 = vand.u32 %v330, 4294901760
  %439 = vmatpush1.msra.mxu0 %v438
  %440 = vmatprep.subr.mxu0 0.0
  %v441 = vand.u32 %v332, 4294901760
  %442 = vmatpush1.msra.mxu0 %v441
  %443 = vmatprep.subr.mxu0 0.0
  %v444 = vand.u32 %v334, 4294901760
  %445 = vmatpush1.msra.mxu0 %v444
  %446 = vmatprep.subr.mxu0 0.0
  %v447 = vand.u32 %v336, 4294901760
  %448 = vmatpush1.msra.mxu0 %v447
  %449 = vmatprep.subr.mxu0 0.0
  %v450 = vand.u32 %v338, 4294901760
  %451 = vmatpush1.msra.mxu0 %v450
  %452 = vmatprep.subr.mxu0 0.0
  %v453 = vand.u32 %v340, 4294901760
  %454 = vmatpush1.msra.mxu0 %v453
  %455 = vmatprep.subr.mxu0 0.0
  %v456 = vand.u32 %v342, 4294901760
  %457 = vmatpush1.msra.mxu0 %v456
  %458 = vmatprep.subr.mxu0 0.0
  %v459 = vand.u32 %v344, 4294901760
  %460 = vmatpush1.msra.mxu0 %v459
  %461 = vmatprep.subr.mxu0 0.0
  %v462 = vand.u32 %v346, 4294901760
  %463 = vmatpush1.msra.mxu0 %v462
  %464 = vmatprep.subr.mxu0 0.0
  %v465 = vand.u32 %v348, 4294901760
  %466 = vmatpush1.msra.mxu0 %v465
  %467 = vmatprep.subr.mxu0 0.0
  %v468 = vand.u32 %v350, 4294901760
  %469 = vmatpush1.msra.mxu0 %v468
  %470 = vmatprep.subr.mxu0 0.0
  %v471 = vand.u32 %v352, 4294901760
  %472 = vmatpush1.msra.mxu0 %v471
  %473 = vmatprep.subr.mxu0 0.0
  %474 = vmatpush1.msra.mxu0 0.0
  %475 = vmatprep.subr.mxu0 0.0
  %476 = vmatpush1.msra.mxu0 0.0
  %477 = vmatprep.subr.mxu0 0.0
  %478 = vmatpush1.msra.mxu0 0.0
  %479 = vmatprep.subr.mxu0 0.0
  %480 = vmatpush1.msra.mxu0 0.0
  %481 = vmatprep.subr.mxu0 0.0
  %482 = vmatpush1.msra.mxu0 0.0
  %483 = vmatprep.subr.mxu0 0.0
  %484 = vmatpush1.msra.mxu0 0.0
  %485 = vmatprep.subr.mxu0 0.0
  %486 = vmatpush1.msra.mxu0 0.0
  %487 = vmatprep.subr.mxu0 0.0
  %488 = vmatpush1.msra.mxu0 0.0
  %489 = vmatprep.subr.mxu0 0.0
  %490 = vmatpush1.msra.mxu0 0.0
  %491 = vmatprep.subr.mxu0 0.0
  %492 = vmatpush1.msra.mxu0 0.0
  %493 = vmatprep.subr.mxu0 0.0
  %494 = vmatpush1.msra.mxu0 0.0
  %495 = vmatprep.subr.mxu0 0.0
  %496 = vmatpush1.msra.mxu0 0.0
  %497 = vmatprep.subr.mxu0 0.0
  %498 = vmatpush1.msra.mxu0 0.0
  %499 = vmatprep.subr.mxu0 0.0
  %500 = vmatpush1.msra.mxu0 0.0
  %501 = vmatprep.subr.mxu0 0.0
  %502 = vmatpush1.msra.mxu0 0.0
  %503 = vmatprep.subr.mxu0 0.0
  %504 = vmatpush1.msra.mxu0 0.0
  %505 = vmatprep.mubr.f32.mxu0 0.0
  %v506 = vand.u32 %v417, 4294901760
  %v507 = vsub.f32 %v417, %v506
  %v508 = vand.u32 %v507, 4294901760
  %v509 = vsub.f32 %v507, %v508
  %v510 = vand.u32 %v509, 4294901760
  %511 = vmatmul.mubr.f32.gmra.mrb[0].mxu0 %v510
  %v512 = vpop.f32.mrb[0].mxu0
  %v513 = vadd.f32 0.0, %v512
  %v514 = vpop.f32.mrb[0].mxu0
  %515 = vmatprep.mubr.f32.mxu0 0.0
  %v516 = vand.u32 %v418, 4294901760
  %v517 = vsub.f32 %v418, %v516
  %v518 = vand.u32 %v517, 4294901760
  %v519 = vsub.f32 %v517, %v518
  %v520 = vand.u32 %v519, 4294901760
  %521 = vmatmul.mubr.f32.gmra.mrb[0].mxu0 %v520
  %v522 = vpop.f32.mrb[0].mxu0
  %v523 = vadd.f32 0.0, %v522
  %v524 = vpop.f32.mrb[0].mxu0
  %525 = vmatprep.mubr.f32.mxu0 0.0
  %v526 = vand.u32 %v419, 4294901760
  %v527 = vsub.f32 %v419, %v526
  %v528 = vand.u32 %v527, 4294901760
  %v529 = vsub.f32 %v527, %v528
  %v530 = vand.u32 %v529, 4294901760
  %531 = vmatmul.mubr.f32.gmra.mrb[0].mxu0 %v530
  %v532 = vpop.f32.mrb[0].mxu0
  %v533 = vadd.f32 0.0, %v532
  %v534 = vpop.f32.mrb[0].mxu0
  %535 = vmatprep.mubr.f32.mxu0 0.0
  %v536 = vand.u32 %v420, 4294901760
  %v537 = vsub.f32 %v420, %v536
  %v538 = vand.u32 %v537, 4294901760
  %v539 = vsub.f32 %v537, %v538
  %v540 = vand.u32 %v539, 4294901760
  %541 = vmatmul.mubr.f32.gmra.mrb[0].mxu0 %v540
  %v542 = vpop.f32.mrb[0].mxu0
  %v543 = vadd.f32 0.0, %v542
  %v544 = vpop.f32.mrb[0].mxu0
  %545 = vdwg.mxu0
  %546 = vmatprep.subr.mxu0 0.0
  %v547 = vand.u32 %v322, 4294901760
  %v548 = vsub.f32 %v322, %v547
  %v549 = vand.u32 %v548, 4294901760
  %v550 = vsub.f32 %v548, %v549
  %v551 = vand.u32 %v550, 4294901760
  %552 = vmatpush1.msra.mxu0 %v551
  %553 = vmatprep.subr.mxu0 0.0
  %v554 = vand.u32 %v324, 4294901760
  %v555 = vsub.f32 %v324, %v554
  %v556 = vand.u32 %v555, 4294901760
  %v557 = vsub.f32 %v555, %v556
  %v558 = vand.u32 %v557, 4294901760
  %559 = vmatpush1.msra.mxu0 %v558
  %560 = vmatprep.subr.mxu0 0.0
  %v561 = vand.u32 %v326, 4294901760
  %v562 = vsub.f32 %v326, %v561
  %v563 = vand.u32 %v562, 4294901760
  %v564 = vsub.f32 %v562, %v563
  %v565 = vand.u32 %v564, 4294901760
  %566 = vmatpush1.msra.mxu0 %v565
  %567 = vmatprep.subr.mxu0 0.0
  %v568 = vand.u32 %v328, 4294901760
  %v569 = vsub.f32 %v328, %v568
  %v570 = vand.u32 %v569, 4294901760
  %v571 = vsub.f32 %v569, %v570
  %v572 = vand.u32 %v571, 4294901760
  %573 = vmatpush1.msra.mxu0 %v572
  %574 = vmatprep.subr.mxu0 0.0
  %v575 = vand.u32 %v330, 4294901760
  %v576 = vsub.f32 %v330, %v575
  %v577 = vand.u32 %v576, 4294901760
  %v578 = vsub.f32 %v576, %v577
  %v579 = vand.u32 %v578, 4294901760
  %580 = vmatpush1.msra.mxu0 %v579
  %581 = vmatprep.subr.mxu0 0.0
  %v582 = vand.u32 %v332, 4294901760
  %v583 = vsub.f32 %v332, %v582
  %v584 = vand.u32 %v583, 4294901760
  %v585 = vsub.f32 %v583, %v584
  %v586 = vand.u32 %v585, 4294901760
  %587 = vmatpush1.msra.mxu0 %v586
  %588 = vmatprep.subr.mxu0 0.0
  %v589 = vand.u32 %v334, 4294901760
  %v590 = vsub.f32 %v334, %v589
  %v591 = vand.u32 %v590, 4294901760
  %v592 = vsub.f32 %v590, %v591
  %v593 = vand.u32 %v592, 4294901760
  %594 = vmatpush1.msra.mxu0 %v593
  %595 = vmatprep.subr.mxu0 0.0
  %v596 = vand.u32 %v336, 4294901760
  %v597 = vsub.f32 %v336, %v596
  %v598 = vand.u32 %v597, 4294901760
  %v599 = vsub.f32 %v597, %v598
  %v600 = vand.u32 %v599, 4294901760
  %601 = vmatpush1.msra.mxu0 %v600
  %602 = vmatprep.subr.mxu0 0.0
  %v603 = vand.u32 %v338, 4294901760
  %v604 = vsub.f32 %v338, %v603
  %v605 = vand.u32 %v604, 4294901760
  %v606 = vsub.f32 %v604, %v605
  %v607 = vand.u32 %v606, 4294901760
  %608 = vmatpush1.msra.mxu0 %v607
  %609 = vmatprep.subr.mxu0 0.0
  %v610 = vand.u32 %v340, 4294901760
  %v611 = vsub.f32 %v340, %v610
  %v612 = vand.u32 %v611, 4294901760
  %v613 = vsub.f32 %v611, %v612
  %v614 = vand.u32 %v613, 4294901760
  %615 = vmatpush1.msra.mxu0 %v614
  %616 = vmatprep.subr.mxu0 0.0
  %v617 = vand.u32 %v342, 4294901760
  %v618 = vsub.f32 %v342, %v617
  %v619 = vand.u32 %v618, 4294901760
  %v620 = vsub.f32 %v618, %v619
  %v621 = vand.u32 %v620, 4294901760
  %622 = vmatpush1.msra.mxu0 %v621
  %623 = vmatprep.subr.mxu0 0.0
  %v624 = vand.u32 %v344, 4294901760
  %v625 = vsub.f32 %v344, %v624
  %v626 = vand.u32 %v625, 4294901760
  %v627 = vsub.f32 %v625, %v626
  %v628 = vand.u32 %v627, 4294901760
  %629 = vmatpush1.msra.mxu0 %v628
  %630 = vmatprep.subr.mxu0 0.0
  %v631 = vand.u32 %v346, 4294901760
  %v632 = vsub.f32 %v346, %v631
  %v633 = vand.u32 %v632, 4294901760
  %v634 = vsub.f32 %v632, %v633
  %v635 = vand.u32 %v634, 4294901760
  %636 = vmatpush1.msra.mxu0 %v635
  %637 = vmatprep.subr.mxu0 0.0
  %v638 = vand.u32 %v348, 4294901760
  %v639 = vsub.f32 %v348, %v638
  %v640 = vand.u32 %v639, 4294901760
  %v641 = vsub.f32 %v639, %v640
  %v642 = vand.u32 %v641, 4294901760
  %643 = vmatpush1.msra.mxu0 %v642
  %644 = vmatprep.subr.mxu0 0.0
  %v645 = vand.u32 %v350, 4294901760
  %v646 = vsub.f32 %v350, %v645
  %v647 = vand.u32 %v646, 4294901760
  %v648 = vsub.f32 %v646, %v647
  %v649 = vand.u32 %v648, 4294901760
  %650 = vmatpush1.msra.mxu0 %v649
  %651 = vmatprep.subr.mxu0 0.0
  %v652 = vand.u32 %v352, 4294901760
  %v653 = vsub.f32 %v352, %v652
  %v654 = vand.u32 %v653, 4294901760
  %v655 = vsub.f32 %v653, %v654
  %v656 = vand.u32 %v655, 4294901760
  %657 = vmatpush1.msra.mxu0 %v656
  %658 = vmatprep.subr.mxu0 0.0
  %659 = vmatpush1.msra.mxu0 0.0
  %660 = vmatprep.subr.mxu0 0.0
  %661 = vmatpush1.msra.mxu0 0.0
  %662 = vmatprep.subr.mxu0 0.0
  %663 = vmatpush1.msra.mxu0 0.0
  %664 = vmatprep.subr.mxu0 0.0
  %665 = vmatpush1.msra.mxu0 0.0
  %666 = vmatprep.subr.mxu0 0.0
  %667 = vmatpush1.msra.mxu0 0.0
  %668 = vmatprep.subr.mxu0 0.0
  %669 = vmatpush1.msra.mxu0 0.0
  %670 = vmatprep.subr.mxu0 0.0
  %671 = vmatpush1.msra.mxu0 0.0
  %672 = vmatprep.subr.mxu0 0.0
  %673 = vmatpush1.msra.mxu0 0.0
  %674 = vmatprep.subr.mxu0 0.0
  %675 = vmatpush1.msra.mxu0 0.0
  %676 = vmatprep.subr.mxu0 0.0
  %677 = vmatpush1.msra.mxu0 0.0
  %678 = vmatprep.subr.mxu0 0.0
  %679 = vmatpush1.msra.mxu0 0.0
  %680 = vmatprep.subr.mxu0 0.0
  %681 = vmatpush1.msra.mxu0 0.0
  %682 = vmatprep.subr.mxu0 0.0
  %683 = vmatpush1.msra.mxu0 0.0
  %684 = vmatprep.subr.mxu0 0.0
  %685 = vmatpush1.msra.mxu0 0.0
  %686 = vmatprep.subr.mxu0 0.0
  %687 = vmatpush1.msra.mxu0 0.0
  %688 = vmatprep.subr.mxu0 0.0
  %689 = vmatpush1.msra.mxu0 0.0
  %690 = vmatprep.mubr.f32.mxu0 0.0
  %v691 = vand.u32 %v417, 4294901760
  %692 = vmatmul.mubr.f32.gmra.mrb[0].mxu0 %v691
  %v693 = vpop.f32.mrb[0].mxu0
  %v694 = vadd.f32 %v513, %v693
  %v695 = vpop.f32.mrb[0].mxu0
  %696 = vmatprep.mubr.f32.mxu0 0.0
  %v697 = vand.u32 %v418, 4294901760
  %698 = vmatmul.mubr.f32.gmra.mrb[0].mxu0 %v697
  %v699 = vpop.f32.mrb[0].mxu0
  %v700 = vadd.f32 %v523, %v699
  %v701 = vpop.f32.mrb[0].mxu0
  %702 = vmatprep.mubr.f32.mxu0 0.0
  %v703 = vand.u32 %v419, 4294901760
  %704 = vmatmul.mubr.f32.gmra.mrb[0].mxu0 %v703
  %v705 = vpop.f32.mrb[0].mxu0
  %v706 = vadd.f32 %v533, %v705
  %v707 = vpop.f32.mrb[0].mxu0
  %708 = vmatprep.mubr.f32.mxu0 0.0
  %v709 = vand.u32 %v420, 4294901760
  %710 = vmatmul.mubr.f32.gmra.mrb[0].mxu0 %v709
  %v711 = vpop.f32.mrb[0].mxu0
  %v712 = vadd.f32 %v543, %v711
  %v713 = vpop.f32.mrb[0].mxu0
  %714 = vdwg.mxu0
  %715 = vmatprep.subr.mxu0 0.0
  %v716 = vand.u32 %v322, 4294901760
  %v717 = vsub.f32 %v322, %v716
  %718 = vmatpush1.msra.mxu0 %v717
  %719 = vmatprep.subr.mxu0 0.0
  %v720 = vand.u32 %v324, 4294901760
  %v721 = vsub.f32 %v324, %v720
  %722 = vmatpush1.msra.mxu0 %v721
  %723 = vmatprep.subr.mxu0 0.0
  %v724 = vand.u32 %v326, 4294901760
  %v725 = vsub.f32 %v326, %v724
  %726 = vmatpush1.msra.mxu0 %v725
  %727 = vmatprep.subr.mxu0 0.0
  %v728 = vand.u32 %v328, 4294901760
  %v729 = vsub.f32 %v328, %v728
  %730 = vmatpush1.msra.mxu0 %v729
  %731 = vmatprep.subr.mxu0 0.0
  %v732 = vand.u32 %v330, 4294901760
  %v733 = vsub.f32 %v330, %v732
  %734 = vmatpush1.msra.mxu0 %v733
  %735 = vmatprep.subr.mxu0 0.0
  %v736 = vand.u32 %v332, 4294901760
  %v737 = vsub.f32 %v332, %v736
  %738 = vmatpush1.msra.mxu0 %v737
  %739 = vmatprep.subr.mxu0 0.0
  %v740 = vand.u32 %v334, 4294901760
  %v741 = vsub.f32 %v334, %v740
  %742 = vmatpush1.msra.mxu0 %v741
  %743 = vmatprep.subr.mxu0 0.0
  %v744 = vand.u32 %v336, 4294901760
  %v745 = vsub.f32 %v336, %v744
  %746 = vmatpush1.msra.mxu0 %v745
  %747 = vmatprep.subr.mxu0 0.0
  %v748 = vand.u32 %v338, 4294901760
  %v749 = vsub.f32 %v338, %v748
  %750 = vmatpush1.msra.mxu0 %v749
  %751 = vmatprep.subr.mxu0 0.0
  %v752 = vand.u32 %v340, 4294901760
  %v753 = vsub.f32 %v340, %v752
  %754 = vmatpush1.msra.mxu0 %v753
  %755 = vmatprep.subr.mxu0 0.0
  %v756 = vand.u32 %v342, 4294901760
  %v757 = vsub.f32 %v342, %v756
  %758 = vmatpush1.msra.mxu0 %v757
  %759 = vmatprep.subr.mxu0 0.0
  %v760 = vand.u32 %v344, 4294901760
  %v761 = vsub.f32 %v344, %v760
  %762 = vmatpush1.msra.mxu0 %v761
  %763 = vmatprep.subr.mxu0 0.0
  %v764 = vand.u32 %v346, 4294901760
  %v765 = vsub.f32 %v346, %v764
  %766 = vmatpush1.msra.mxu0 %v765
  %767 = vmatprep.subr.mxu0 0.0
  %v768 = vand.u32 %v348, 4294901760
  %v769 = vsub.f32 %v348, %v768
  %770 = vmatpush1.msra.mxu0 %v769
  %771 = vmatprep.subr.mxu0 0.0
  %v772 = vand.u32 %v350, 4294901760
  %v773 = vsub.f32 %v350, %v772
  %774 = vmatpush1.msra.mxu0 %v773
  %775 = vmatprep.subr.mxu0 0.0
  %v776 = vand.u32 %v352, 4294901760
  %v777 = vsub.f32 %v352, %v776
  %778 = vmatpush1.msra.mxu0 %v777
  %779 = vmatprep.subr.mxu0 0.0
  %780 = vmatpush1.msra.mxu0 0.0
  %781 = vmatprep.subr.mxu0 0.0
  %782 = vmatpush1.msra.mxu0 0.0
  %783 = vmatprep.subr.mxu0 0.0
  %784 = vmatpush1.msra.mxu0 0.0
  %785 = vmatprep.subr.mxu0 0.0
  %786 = vmatpush1.msra.mxu0 0.0
  %787 = vmatprep.subr.mxu0 0.0
  %788 = vmatpush1.msra.mxu0 0.0
  %789 = vmatprep.subr.mxu0 0.0
  %790 = vmatpush1.msra.mxu0 0.0
  %791 = vmatprep.subr.mxu0 0.0
  %792 = vmatpush1.msra.mxu0 0.0
  %793 = vmatprep.subr.mxu0 0.0
  %794 = vmatpush1.msra.mxu0 0.0
  %795 = vmatprep.subr.mxu0 0.0
  %796 = vmatpush1.msra.mxu0 0.0
  %797 = vmatprep.subr.mxu0 0.0
  %798 = vmatpush1.msra.mxu0 0.0
  %799 = vmatprep.subr.mxu0 0.0
  %800 = vmatpush1.msra.mxu0 0.0
  %801 = vmatprep.subr.mxu0 0.0
  %802 = vmatpush1.msra.mxu0 0.0
  %803 = vmatprep.subr.mxu0 0.0
  %804 = vmatpush1.msra.mxu0 0.0
  %805 = vmatprep.subr.mxu0 0.0
  %806 = vmatpush1.msra.mxu0 0.0
  %807 = vmatprep.subr.mxu0 0.0
  %808 = vmatpush1.msra.mxu0 0.0
  %809 = vmatprep.subr.mxu0 0.0
  %810 = vmatpush1.msra.mxu0 0.0
  %811 = vmatprep.mubr.f32.mxu0 0.0
  %v812 = vand.u32 %v417, 4294901760
  %v813 = vsub.f32 %v417, %v812
  %814 = vmatmul.mubr.f32.gmra.mrb[0].mxu0 %v813
  %v815 = vpop.f32.mrb[0].mxu0
  %v816 = vadd.f32 %v694, %v815
  %v817 = vpop.f32.mrb[0].mxu0
  %818 = vmatprep.mubr.f32.mxu0 0.0
  %v819 = vand.u32 %v418, 4294901760
  %v820 = vsub.f32 %v418, %v819
  %821 = vmatmul.mubr.f32.gmra.mrb[0].mxu0 %v820
  %v822 = vpop.f32.mrb[0].mxu0
  %v823 = vadd.f32 %v700, %v822
  %v824 = vpop.f32.mrb[0].mxu0
  %825 = vmatprep.mubr.f32.mxu0 0.0
  %v826 = vand.u32 %v419, 4294901760
  %v827 = vsub.f32 %v419, %v826
  %828 = vmatmul.mubr.f32.gmra.mrb[0].mxu0 %v827
  %v829 = vpop.f32.mrb[0].mxu0
  %v830 = vadd.f32 %v706, %v829
  %v831 = vpop.f32.mrb[0].mxu0
  %832 = vmatprep.mubr.f32.mxu0 0.0
  %v833 = vand.u32 %v420, 4294901760
  %v834 = vsub.f32 %v420, %v833
  %835 = vmatmul.mubr.f32.gmra.mrb[0].mxu0 %v834
  %v836 = vpop.f32.mrb[0].mxu0
  %v837 = vadd.f32 %v712, %v836
  %v838 = vpop.f32.mrb[0].mxu0
  %839 = vdwg.mxu0
  %840 = vmatprep.subr.mxu0 0.0
  %v841 = vand.u32 %v322, 4294901760
  %842 = vmatpush1.msra.mxu0 %v841
  %843 = vmatprep.subr.mxu0 0.0
  %v844 = vand.u32 %v324, 4294901760
  %845 = vmatpush1.msra.mxu0 %v844
  %846 = vmatprep.subr.mxu0 0.0
  %v847 = vand.u32 %v326, 4294901760
  %848 = vmatpush1.msra.mxu0 %v847
  %849 = vmatprep.subr.mxu0 0.0
  %v850 = vand.u32 %v328, 4294901760
  %851 = vmatpush1.msra.mxu0 %v850
  %852 = vmatprep.subr.mxu0 0.0
  %v853 = vand.u32 %v330, 4294901760
  %854 = vmatpush1.msra.mxu0 %v853
  %855 = vmatprep.subr.mxu0 0.0
  %v856 = vand.u32 %v332, 4294901760
  %857 = vmatpush1.msra.mxu0 %v856
  %858 = vmatprep.subr.mxu0 0.0
  %v859 = vand.u32 %v334, 4294901760
  %860 = vmatpush1.msra.mxu0 %v859
  %861 = vmatprep.subr.mxu0 0.0
  %v862 = vand.u32 %v336, 4294901760
  %863 = vmatpush1.msra.mxu0 %v862
  %864 = vmatprep.subr.mxu0 0.0
  %v865 = vand.u32 %v338, 4294901760
  %866 = vmatpush1.msra.mxu0 %v865
  %867 = vmatprep.subr.mxu0 0.0
  %v868 = vand.u32 %v340, 4294901760
  %869 = vmatpush1.msra.mxu0 %v868
  %870 = vmatprep.subr.mxu0 0.0
  %v871 = vand.u32 %v342, 4294901760
  %872 = vmatpush1.msra.mxu0 %v871
  %873 = vmatprep.subr.mxu0 0.0
  %v874 = vand.u32 %v344, 4294901760
  %875 = vmatpush1.msra.mxu0 %v874
  %876 = vmatprep.subr.mxu0 0.0
  %v877 = vand.u32 %v346, 4294901760
  %878 = vmatpush1.msra.mxu0 %v877
  %879 = vmatprep.subr.mxu0 0.0
  %v880 = vand.u32 %v348, 4294901760
  %881 = vmatpush1.msra.mxu0 %v880
  %882 = vmatprep.subr.mxu0 0.0
  %v883 = vand.u32 %v350, 4294901760
  %884 = vmatpush1.msra.mxu0 %v883
  %885 = vmatprep.subr.mxu0 0.0
  %v886 = vand.u32 %v352, 4294901760
  %887 = vmatpush1.msra.mxu0 %v886
  %888 = vmatprep.subr.mxu0 0.0
  %889 = vmatpush1.msra.mxu0 0.0
  %890 = vmatprep.subr.mxu0 0.0
  %891 = vmatpush1.msra.mxu0 0.0
  %892 = vmatprep.subr.mxu0 0.0
  %893 = vmatpush1.msra.mxu0 0.0
  %894 = vmatprep.subr.mxu0 0.0
  %895 = vmatpush1.msra.mxu0 0.0
  %896 = vmatprep.subr.mxu0 0.0
  %897 = vmatpush1.msra.mxu0 0.0
  %898 = vmatprep.subr.mxu0 0.0
  %899 = vmatpush1.msra.mxu0 0.0
  %900 = vmatprep.subr.mxu0 0.0
  %901 = vmatpush1.msra.mxu0 0.0
  %902 = vmatprep.subr.mxu0 0.0
  %903 = vmatpush1.msra.mxu0 0.0
  %904 = vmatprep.subr.mxu0 0.0
  %905 = vmatpush1.msra.mxu0 0.0
  %906 = vmatprep.subr.mxu0 0.0
  %907 = vmatpush1.msra.mxu0 0.0
  %908 = vmatprep.subr.mxu0 0.0
  %909 = vmatpush1.msra.mxu0 0.0
  %910 = vmatprep.subr.mxu0 0.0
  %911 = vmatpush1.msra.mxu0 0.0
  %912 = vmatprep.subr.mxu0 0.0
  %913 = vmatpush1.msra.mxu0 0.0
  %914 = vmatprep.subr.mxu0 0.0
  %915 = vmatpush1.msra.mxu0 0.0
  %916 = vmatprep.subr.mxu0 0.0
  %917 = vmatpush1.msra.mxu0 0.0
  %918 = vmatprep.subr.mxu0 0.0
  %919 = vmatpush1.msra.mxu0 0.0
  %920 = vmatprep.mubr.f32.mxu0 0.0
  %v921 = vand.u32 %v417, 4294901760
  %v922 = vsub.f32 %v417, %v921
  %v923 = vand.u32 %v922, 4294901760
  %924 = vmatmul.mubr.f32.gmra.mrb[0].mxu0 %v923
  %v925 = vpop.f32.mrb[0].mxu0
  %v926 = vadd.f32 %v816, %v925
  %v927 = vpop.f32.mrb[0].mxu0
  %928 = vmatprep.mubr.f32.mxu0 0.0
  %v929 = vand.u32 %v418, 4294901760
  %v930 = vsub.f32 %v418, %v929
  %v931 = vand.u32 %v930, 4294901760
  %932 = vmatmul.mubr.f32.gmra.mrb[0].mxu0 %v931
  %v933 = vpop.f32.mrb[0].mxu0
  %v934 = vadd.f32 %v823, %v933
  %v935 = vpop.f32.mrb[0].mxu0
  %936 = vmatprep.mubr.f32.mxu0 0.0
  %v937 = vand.u32 %v419, 4294901760
  %v938 = vsub.f32 %v419, %v937
  %v939 = vand.u32 %v938, 4294901760
  %940 = vmatmul.mubr.f32.gmra.mrb[0].mxu0 %v939
  %v941 = vpop.f32.mrb[0].mxu0
  %v942 = vadd.f32 %v830, %v941
  %v943 = vpop.f32.mrb[0].mxu0
  %944 = vmatprep.mubr.f32.mxu0 0.0
  %v945 = vand.u32 %v420, 4294901760
  %v946 = vsub.f32 %v420, %v945
  %v947 = vand.u32 %v946, 4294901760
  %948 = vmatmul.mubr.f32.gmra.mrb[0].mxu0 %v947
  %v949 = vpop.f32.mrb[0].mxu0
  %v950 = vadd.f32 %v837, %v949
  %v951 = vpop.f32.mrb[0].mxu0
  %952 = vdwg.mxu0
  %953 = vmatprep.subr.mxu0 0.0
  %v954 = vand.u32 %v322, 4294901760
  %v955 = vsub.f32 %v322, %v954
  %v956 = vand.u32 %v955, 4294901760
  %957 = vmatpush1.msra.mxu0 %v956
  %958 = vmatprep.subr.mxu0 0.0
  %v959 = vand.u32 %v324, 4294901760
  %v960 = vsub.f32 %v324, %v959
  %v961 = vand.u32 %v960, 4294901760
  %962 = vmatpush1.msra.mxu0 %v961
  %963 = vmatprep.subr.mxu0 0.0
  %v964 = vand.u32 %v326, 4294901760
  %v965 = vsub.f32 %v326, %v964
  %v966 = vand.u32 %v965, 4294901760
  %967 = vmatpush1.msra.mxu0 %v966
  %968 = vmatprep.subr.mxu0 0.0
  %v969 = vand.u32 %v328, 4294901760
  %v970 = vsub.f32 %v328, %v969
  %v971 = vand.u32 %v970, 4294901760
  %972 = vmatpush1.msra.mxu0 %v971
  %973 = vmatprep.subr.mxu0 0.0
  %v974 = vand.u32 %v330, 4294901760
  %v975 = vsub.f32 %v330, %v974
  %v976 = vand.u32 %v975, 4294901760
  %977 = vmatpush1.msra.mxu0 %v976
  %978 = vmatprep.subr.mxu0 0.0
  %v979 = vand.u32 %v332, 4294901760
  %v980 = vsub.f32 %v332, %v979
  %v981 = vand.u32 %v980, 4294901760
  %982 = vmatpush1.msra.mxu0 %v981
  %983 = vmatprep.subr.mxu0 0.0
  %v984 = vand.u32 %v334, 4294901760
  %v985 = vsub.f32 %v334, %v984
  %v986 = vand.u32 %v985, 4294901760
  %987 = vmatpush1.msra.mxu0 %v986
  %988 = vmatprep.subr.mxu0 0.0
  %v989 = vand.u32 %v336, 4294901760
  %v990 = vsub.f32 %v336, %v989
  %v991 = vand.u32 %v990, 4294901760
  %992 = vmatpush1.msra.mxu0 %v991
  %993 = vmatprep.subr.mxu0 0.0
  %v994 = vand.u32 %v338, 4294901760
  %v995 = vsub.f32 %v338, %v994
  %v996 = vand.u32 %v995, 4294901760
  %997 = vmatpush1.msra.mxu0 %v996
  %998 = vmatprep.subr.mxu0 0.0
  %v999 = vand.u32 %v340, 4294901760
  %v1000 = vsub.f32 %v340, %v999
  %v1001 = vand.u32 %v1000, 4294901760
  %1002 = vmatpush1.msra.mxu0 %v1001
  %1003 = vmatprep.subr.mxu0 0.0
  %v1004 = vand.u32 %v342, 4294901760
  %v1005 = vsub.f32 %v342, %v1004
  %v1006 = vand.u32 %v1005, 4294901760
  %1007 = vmatpush1.msra.mxu0 %v1006
  %1008 = vmatprep.subr.mxu0 0.0
  %v1009 = vand.u32 %v344, 4294901760
  %v1010 = vsub.f32 %v344, %v1009
  %v1011 = vand.u32 %v1010, 4294901760
  %1012 = vmatpush1.msra.mxu0 %v1011
  %1013 = vmatprep.subr.mxu0 0.0
  %v1014 = vand.u32 %v346, 4294901760
  %v1015 = vsub.f32 %v346, %v1014
  %v1016 = vand.u32 %v1015, 4294901760
  %1017 = vmatpush1.msra.mxu0 %v1016
  %1018 = vmatprep.subr.mxu0 0.0
  %v1019 = vand.u32 %v348, 4294901760
  %v1020 = vsub.f32 %v348, %v1019
  %v1021 = vand.u32 %v1020, 4294901760
  %1022 = vmatpush1.msra.mxu0 %v1021
  %1023 = vmatprep.subr.mxu0 0.0
  %v1024 = vand.u32 %v350, 4294901760
  %v1025 = vsub.f32 %v350, %v1024
  %v1026 = vand.u32 %v1025, 4294901760
  %1027 = vmatpush1.msra.mxu0 %v1026
  %1028 = vmatprep.subr.mxu0 0.0
  %v1029 = vand.u32 %v352, 4294901760
  %v1030 = vsub.f32 %v352, %v1029
  %v1031 = vand.u32 %v1030, 4294901760
  %1032 = vmatpush1.msra.mxu0 %v1031
  %1033 = vmatprep.subr.mxu0 0.0
  %1034 = vmatpush1.msra.mxu0 0.0
  %1035 = vmatprep.subr.mxu0 0.0
  %1036 = vmatpush1.msra.mxu0 0.0
  %1037 = vmatprep.subr.mxu0 0.0
  %1038 = vmatpush1.msra.mxu0 0.0
  %1039 = vmatprep.subr.mxu0 0.0
  %1040 = vmatpush1.msra.mxu0 0.0
  %1041 = vmatprep.subr.mxu0 0.0
  %1042 = vmatpush1.msra.mxu0 0.0
  %1043 = vmatprep.subr.mxu0 0.0
  %1044 = vmatpush1.msra.mxu0 0.0
  %1045 = vmatprep.subr.mxu0 0.0
  %1046 = vmatpush1.msra.mxu0 0.0
  %1047 = vmatprep.subr.mxu0 0.0
  %1048 = vmatpush1.msra.mxu0 0.0
  %1049 = vmatprep.subr.mxu0 0.0
  %1050 = vmatpush1.msra.mxu0 0.0
  %1051 = vmatprep.subr.mxu0 0.0
  %1052 = vmatpush1.msra.mxu0 0.0
  %1053 = vmatprep.subr.mxu0 0.0
  %1054 = vmatpush1.msra.mxu0 0.0
  %1055 = vmatprep.subr.mxu0 0.0
  %1056 = vmatpush1.msra.mxu0 0.0
  %1057 = vmatprep.subr.mxu0 0.0
  %1058 = vmatpush1.msra.mxu0 0.0
  %1059 = vmatprep.subr.mxu0 0.0
  %1060 = vmatpush1.msra.mxu0 0.0
  %1061 = vmatprep.subr.mxu0 0.0
  %1062 = vmatpush1.msra.mxu0 0.0
  %1063 = vmatprep.subr.mxu0 0.0
  %1064 = vmatpush1.msra.mxu0 0.0
  %1065 = vmatprep.mubr.f32.mxu0 0.0
  %v1066 = vand.u32 %v417, 4294901760
  %1067 = vmatmul.mubr.f32.gmra.mrb[0].mxu0 %v1066
  %v1068 = vpop.f32.mrb[0].mxu0
  %v1069 = vadd.f32 %v926, %v1068
  %v1070 = vpop.f32.mrb[0].mxu0
  %1071 = vmatprep.mubr.f32.mxu0 0.0
  %v1072 = vand.u32 %v418, 4294901760
  %1073 = vmatmul.mubr.f32.gmra.mrb[0].mxu0 %v1072
  %v1074 = vpop.f32.mrb[0].mxu0
  %v1075 = vadd.f32 %v934, %v1074
  %v1076 = vpop.f32.mrb[0].mxu0
  %1077 = vmatprep.mubr.f32.mxu0 0.0
  %v1078 = vand.u32 %v419, 4294901760
  %1079 = vmatmul.mubr.f32.gmra.mrb[0].mxu0 %v1078
  %v1080 = vpop.f32.mrb[0].mxu0
  %v1081 = vadd.f32 %v942, %v1080
  %v1082 = vpop.f32.mrb[0].mxu0
  %1083 = vmatprep.mubr.f32.mxu0 0.0
  %v1084 = vand.u32 %v420, 4294901760
  %1085 = vmatmul.mubr.f32.gmra.mrb[0].mxu0 %v1084
  %v1086 = vpop.f32.mrb[0].mxu0
  %v1087 = vadd.f32 %v950, %v1086
  %v1088 = vpop.f32.mrb[0].mxu0
  %1089 = vdwg.mxu0
  %1090 = vmatprep.subr.mxu0 0.0
  %v1091 = vand.u32 %v322, 4294901760
  %1092 = vmatpush1.msra.mxu0 %v1091
  %1093 = vmatprep.subr.mxu0 0.0
  %v1094 = vand.u32 %v324, 4294901760
  %1095 = vmatpush1.msra.mxu0 %v1094
  %1096 = vmatprep.subr.mxu0 0.0
  %v1097 = vand.u32 %v326, 4294901760
  %1098 = vmatpush1.msra.mxu0 %v1097
  %1099 = vmatprep.subr.mxu0 0.0
  %v1100 = vand.u32 %v328, 4294901760
  %1101 = vmatpush1.msra.mxu0 %v1100
  %1102 = vmatprep.subr.mxu0 0.0
  %v1103 = vand.u32 %v330, 4294901760
  %1104 = vmatpush1.msra.mxu0 %v1103
  %1105 = vmatprep.subr.mxu0 0.0
  %v1106 = vand.u32 %v332, 4294901760
  %1107 = vmatpush1.msra.mxu0 %v1106
  %1108 = vmatprep.subr.mxu0 0.0
  %v1109 = vand.u32 %v334, 4294901760
  %1110 = vmatpush1.msra.mxu0 %v1109
  %1111 = vmatprep.subr.mxu0 0.0
  %v1112 = vand.u32 %v336, 4294901760
  %1113 = vmatpush1.msra.mxu0 %v1112
  %1114 = vmatprep.subr.mxu0 0.0
  %v1115 = vand.u32 %v338, 4294901760
  %1116 = vmatpush1.msra.mxu0 %v1115
  %1117 = vmatprep.subr.mxu0 0.0
  %v1118 = vand.u32 %v340, 4294901760
  %1119 = vmatpush1.msra.mxu0 %v1118
  %1120 = vmatprep.subr.mxu0 0.0
  %v1121 = vand.u32 %v342, 4294901760
  %1122 = vmatpush1.msra.mxu0 %v1121
  %1123 = vmatprep.subr.mxu0 0.0
  %v1124 = vand.u32 %v344, 4294901760
  %1125 = vmatpush1.msra.mxu0 %v1124
  %1126 = vmatprep.subr.mxu0 0.0
  %v1127 = vand.u32 %v346, 4294901760
  %1128 = vmatpush1.msra.mxu0 %v1127
  %1129 = vmatprep.subr.mxu0 0.0
  %v1130 = vand.u32 %v348, 4294901760
  %1131 = vmatpush1.msra.mxu0 %v1130
  %1132 = vmatprep.subr.mxu0 0.0
  %v1133 = vand.u32 %v350, 4294901760
  %1134 = vmatpush1.msra.mxu0 %v1133
  %1135 = vmatprep.subr.mxu0 0.0
  %v1136 = vand.u32 %v352, 4294901760
  %1137 = vmatpush1.msra.mxu0 %v1136
  %1138 = vmatprep.subr.mxu0 0.0
  %1139 = vmatpush1.msra.mxu0 0.0
  %1140 = vmatprep.subr.mxu0 0.0
  %1141 = vmatpush1.msra.mxu0 0.0
  %1142 = vmatprep.subr.mxu0 0.0
  %1143 = vmatpush1.msra.mxu0 0.0
  %1144 = vmatprep.subr.mxu0 0.0
  %1145 = vmatpush1.msra.mxu0 0.0
  %1146 = vmatprep.subr.mxu0 0.0
  %1147 = vmatpush1.msra.mxu0 0.0
  %1148 = vmatprep.subr.mxu0 0.0
  %1149 = vmatpush1.msra.mxu0 0.0
  %1150 = vmatprep.subr.mxu0 0.0
  %1151 = vmatpush1.msra.mxu0 0.0
  %1152 = vmatprep.subr.mxu0 0.0
  %1153 = vmatpush1.msra.mxu0 0.0
  %1154 = vmatprep.subr.mxu0 0.0
  %1155 = vmatpush1.msra.mxu0 0.0
  %1156 = vmatprep.subr.mxu0 0.0
  %1157 = vmatpush1.msra.mxu0 0.0
  %1158 = vmatprep.subr.mxu0 0.0
  %1159 = vmatpush1.msra.mxu0 0.0
  %1160 = vmatprep.subr.mxu0 0.0
  %1161 = vmatpush1.msra.mxu0 0.0
  %1162 = vmatprep.subr.mxu0 0.0
  %1163 = vmatpush1.msra.mxu0 0.0
  %1164 = vmatprep.subr.mxu0 0.0
  %1165 = vmatpush1.msra.mxu0 0.0
  %1166 = vmatprep.subr.mxu0 0.0
  %1167 = vmatpush1.msra.mxu0 0.0
  %1168 = vmatprep.subr.mxu0 0.0
  %1169 = vmatpush1.msra.mxu0 0.0
  %1170 = vmatprep.mubr.f32.mxu0 0.0
  %v1171 = vand.u32 %v417, 4294901760
  %1172 = vmatmul.mubr.f32.gmra.mrb[0].mxu0 %v1171
  %v1173 = vpop.f32.mrb[0].mxu0
  %v1174 = vadd.f32 %v1069, %v1173
  %v1175 = vpop.f32.mrb[0].mxu0
  %1176 = vmatprep.mubr.f32.mxu0 0.0
  %v1177 = vand.u32 %v418, 4294901760
  %1178 = vmatmul.mubr.f32.gmra.mrb[0].mxu0 %v1177
  %v1179 = vpop.f32.mrb[0].mxu0
  %v1180 = vadd.f32 %v1075, %v1179
  %v1181 = vpop.f32.mrb[0].mxu0
  %1182 = vmatprep.mubr.f32.mxu0 0.0
  %v1183 = vand.u32 %v419, 4294901760
  %1184 = vmatmul.mubr.f32.gmra.mrb[0].mxu0 %v1183
  %v1185 = vpop.f32.mrb[0].mxu0
  %v1186 = vadd.f32 %v1081, %v1185
  %v1187 = vpop.f32.mrb[0].mxu0
  %1188 = vmatprep.mubr.f32.mxu0 0.0
  %v1189 = vand.u32 %v420, 4294901760
  %1190 = vmatmul.mubr.f32.gmra.mrb[0].mxu0 %v1189
  %v1191 = vpop.f32.mrb[0].mxu0
  %v1192 = vadd.f32 %v1087, %v1191
  %v1193 = vpop.f32.mrb[0].mxu0
  %1194 = vdwg.mxu0
  %1195 = vmatprep.subr.mxu0 0.0
  %v1196 = vand.u32 %v354, 4294901760
  %1197 = vmatpush1.msra.mxu0 %v1196
  %1198 = vmatprep.subr.mxu0 0.0
  %v1199 = vand.u32 %v356, 4294901760
  %1200 = vmatpush1.msra.mxu0 %v1199
  %1201 = vmatprep.subr.mxu0 0.0
  %v1202 = vand.u32 %v358, 4294901760
  %1203 = vmatpush1.msra.mxu0 %v1202
  %1204 = vmatprep.subr.mxu0 0.0
  %v1205 = vand.u32 %v360, 4294901760
  %1206 = vmatpush1.msra.mxu0 %v1205
  %1207 = vmatprep.subr.mxu0 0.0
  %v1208 = vand.u32 %v362, 4294901760
  %1209 = vmatpush1.msra.mxu0 %v1208
  %1210 = vmatprep.subr.mxu0 0.0
  %v1211 = vand.u32 %v364, 4294901760
  %1212 = vmatpush1.msra.mxu0 %v1211
  %1213 = vmatprep.subr.mxu0 0.0
  %v1214 = vand.u32 %v366, 4294901760
  %1215 = vmatpush1.msra.mxu0 %v1214
  %1216 = vmatprep.subr.mxu0 0.0
  %v1217 = vand.u32 %v368, 4294901760
  %1218 = vmatpush1.msra.mxu0 %v1217
  %1219 = vmatprep.subr.mxu0 0.0
  %v1220 = vand.u32 %v370, 4294901760
  %1221 = vmatpush1.msra.mxu0 %v1220
  %1222 = vmatprep.subr.mxu0 0.0
  %v1223 = vand.u32 %v372, 4294901760
  %1224 = vmatpush1.msra.mxu0 %v1223
  %1225 = vmatprep.subr.mxu0 0.0
  %v1226 = vand.u32 %v374, 4294901760
  %1227 = vmatpush1.msra.mxu0 %v1226
  %1228 = vmatprep.subr.mxu0 0.0
  %v1229 = vand.u32 %v376, 4294901760
  %1230 = vmatpush1.msra.mxu0 %v1229
  %1231 = vmatprep.subr.mxu0 0.0
  %v1232 = vand.u32 %v378, 4294901760
  %1233 = vmatpush1.msra.mxu0 %v1232
  %1234 = vmatprep.subr.mxu0 0.0
  %v1235 = vand.u32 %v380, 4294901760
  %1236 = vmatpush1.msra.mxu0 %v1235
  %1237 = vmatprep.subr.mxu0 0.0
  %v1238 = vand.u32 %v382, 4294901760
  %1239 = vmatpush1.msra.mxu0 %v1238
  %1240 = vmatprep.subr.mxu0 0.0
  %v1241 = vand.u32 %v384, 4294901760
  %1242 = vmatpush1.msra.mxu0 %v1241
  %1243 = vmatprep.subr.mxu0 0.0
  %1244 = vmatpush1.msra.mxu0 0.0
  %1245 = vmatprep.subr.mxu0 0.0
  %1246 = vmatpush1.msra.mxu0 0.0
  %1247 = vmatprep.subr.mxu0 0.0
  %1248 = vmatpush1.msra.mxu0 0.0
  %1249 = vmatprep.subr.mxu0 0.0
  %1250 = vmatpush1.msra.mxu0 0.0
  %1251 = vmatprep.subr.mxu0 0.0
  %1252 = vmatpush1.msra.mxu0 0.0
  %1253 = vmatprep.subr.mxu0 0.0
  %1254 = vmatpush1.msra.mxu0 0.0
  %1255 = vmatprep.subr.mxu0 0.0
  %1256 = vmatpush1.msra.mxu0 0.0
  %1257 = vmatprep.subr.mxu0 0.0
  %1258 = vmatpush1.msra.mxu0 0.0
  %1259 = vmatprep.subr.mxu0 0.0
  %1260 = vmatpush1.msra.mxu0 0.0
  %1261 = vmatprep.subr.mxu0 0.0
  %1262 = vmatpush1.msra.mxu0 0.0
  %1263 = vmatprep.subr.mxu0 0.0
  %1264 = vmatpush1.msra.mxu0 0.0
  %1265 = vmatprep.subr.mxu0 0.0
  %1266 = vmatpush1.msra.mxu0 0.0
  %1267 = vmatprep.subr.mxu0 0.0
  %1268 = vmatpush1.msra.mxu0 0.0
  %1269 = vmatprep.subr.mxu0 0.0
  %1270 = vmatpush1.msra.mxu0 0.0
  %1271 = vmatprep.subr.mxu0 0.0
  %1272 = vmatpush1.msra.mxu0 0.0
  %1273 = vmatprep.subr.mxu0 0.0
  %1274 = vmatpush1.msra.mxu0 0.0
  %1275 = vmatprep.mubr.f32.mxu0 0.0
  %v1276 = vand.u32 %v421, 4294901760
  %v1277 = vsub.f32 %v421, %v1276
  %v1278 = vand.u32 %v1277, 4294901760
  %v1279 = vsub.f32 %v1277, %v1278
  %v1280 = vand.u32 %v1279, 4294901760
  %1281 = vmatmul.mubr.f32.gmra.mrb[0].mxu0 %v1280
  %v1282 = vpop.f32.mrb[0].mxu0
  %v1283 = vadd.f32 0.0, %v1282
  %v1284 = vpop.f32.mrb[0].mxu0
  %1285 = vmatprep.mubr.f32.mxu0 0.0
  %v1286 = vand.u32 %v422, 4294901760
  %v1287 = vsub.f32 %v422, %v1286
  %v1288 = vand.u32 %v1287, 4294901760
  %v1289 = vsub.f32 %v1287, %v1288
  %v1290 = vand.u32 %v1289, 4294901760
  %1291 = vmatmul.mubr.f32.gmra.mrb[0].mxu0 %v1290
  %v1292 = vpop.f32.mrb[0].mxu0
  %v1293 = vadd.f32 0.0, %v1292
  %v1294 = vpop.f32.mrb[0].mxu0
  %1295 = vmatprep.mubr.f32.mxu0 0.0
  %v1296 = vand.u32 %v423, 4294901760
  %v1297 = vsub.f32 %v423, %v1296
  %v1298 = vand.u32 %v1297, 4294901760
  %v1299 = vsub.f32 %v1297, %v1298
  %v1300 = vand.u32 %v1299, 4294901760
  %1301 = vmatmul.mubr.f32.gmra.mrb[0].mxu0 %v1300
  %v1302 = vpop.f32.mrb[0].mxu0
  %v1303 = vadd.f32 0.0, %v1302
  %v1304 = vpop.f32.mrb[0].mxu0
  %1305 = vmatprep.mubr.f32.mxu0 0.0
  %v1306 = vand.u32 %v424, 4294901760
  %v1307 = vsub.f32 %v424, %v1306
  %v1308 = vand.u32 %v1307, 4294901760
  %v1309 = vsub.f32 %v1307, %v1308
  %v1310 = vand.u32 %v1309, 4294901760
  %1311 = vmatmul.mubr.f32.gmra.mrb[0].mxu0 %v1310
  %v1312 = vpop.f32.mrb[0].mxu0
  %v1313 = vadd.f32 0.0, %v1312
  %v1314 = vpop.f32.mrb[0].mxu0
  %1315 = vdwg.mxu0
  %1316 = vmatprep.subr.mxu0 0.0
  %v1317 = vand.u32 %v354, 4294901760
  %v1318 = vsub.f32 %v354, %v1317
  %v1319 = vand.u32 %v1318, 4294901760
  %v1320 = vsub.f32 %v1318, %v1319
  %v1321 = vand.u32 %v1320, 4294901760
  %1322 = vmatpush1.msra.mxu0 %v1321
  %1323 = vmatprep.subr.mxu0 0.0
  %v1324 = vand.u32 %v356, 4294901760
  %v1325 = vsub.f32 %v356, %v1324
  %v1326 = vand.u32 %v1325, 4294901760
  %v1327 = vsub.f32 %v1325, %v1326
  %v1328 = vand.u32 %v1327, 4294901760
  %1329 = vmatpush1.msra.mxu0 %v1328
  %1330 = vmatprep.subr.mxu0 0.0
  %v1331 = vand.u32 %v358, 4294901760
  %v1332 = vsub.f32 %v358, %v1331
  %v1333 = vand.u32 %v1332, 4294901760
  %v1334 = vsub.f32 %v1332, %v1333
  %v1335 = vand.u32 %v1334, 4294901760
  %1336 = vmatpush1.msra.mxu0 %v1335
  %1337 = vmatprep.subr.mxu0 0.0
  %v1338 = vand.u32 %v360, 4294901760
  %v1339 = vsub.f32 %v360, %v1338
  %v1340 = vand.u32 %v1339, 4294901760
  %v1341 = vsub.f32 %v1339, %v1340
  %v1342 = vand.u32 %v1341, 4294901760
  %1343 = vmatpush1.msra.mxu0 %v1342
  %1344 = vmatprep.subr.mxu0 0.0
  %v1345 = vand.u32 %v362, 4294901760
  %v1346 = vsub.f32 %v362, %v1345
  %v1347 = vand.u32 %v1346, 4294901760
  %v1348 = vsub.f32 %v1346, %v1347
  %v1349 = vand.u32 %v1348, 4294901760
  %1350 = vmatpush1.msra.mxu0 %v1349
  %1351 = vmatprep.subr.mxu0 0.0
  %v1352 = vand.u32 %v364, 4294901760
  %v1353 = vsub.f32 %v364, %v1352
  %v1354 = vand.u32 %v1353, 4294901760
  %v1355 = vsub.f32 %v1353, %v1354
  %v1356 = vand.u32 %v1355, 4294901760
  %1357 = vmatpush1.msra.mxu0 %v1356
  %1358 = vmatprep.subr.mxu0 0.0
  %v1359 = vand.u32 %v366, 4294901760
  %v1360 = vsub.f32 %v366, %v1359
  %v1361 = vand.u32 %v1360, 4294901760
  %v1362 = vsub.f32 %v1360, %v1361
  %v1363 = vand.u32 %v1362, 4294901760
  %1364 = vmatpush1.msra.mxu0 %v1363
  %1365 = vmatprep.subr.mxu0 0.0
  %v1366 = vand.u32 %v368, 4294901760
  %v1367 = vsub.f32 %v368, %v1366
  %v1368 = vand.u32 %v1367, 4294901760
  %v1369 = vsub.f32 %v1367, %v1368
  %v1370 = vand.u32 %v1369, 4294901760
  %1371 = vmatpush1.msra.mxu0 %v1370
  %1372 = vmatprep.subr.mxu0 0.0
  %v1373 = vand.u32 %v370, 4294901760
  %v1374 = vsub.f32 %v370, %v1373
  %v1375 = vand.u32 %v1374, 4294901760
  %v1376 = vsub.f32 %v1374, %v1375
  %v1377 = vand.u32 %v1376, 4294901760
  %1378 = vmatpush1.msra.mxu0 %v1377
  %1379 = vmatprep.subr.mxu0 0.0
  %v1380 = vand.u32 %v372, 4294901760
  %v1381 = vsub.f32 %v372, %v1380
  %v1382 = vand.u32 %v1381, 4294901760
  %v1383 = vsub.f32 %v1381, %v1382
  %v1384 = vand.u32 %v1383, 4294901760
  %1385 = vmatpush1.msra.mxu0 %v1384
  %1386 = vmatprep.subr.mxu0 0.0
  %v1387 = vand.u32 %v374, 4294901760
  %v1388 = vsub.f32 %v374, %v1387
  %v1389 = vand.u32 %v1388, 4294901760
  %v1390 = vsub.f32 %v1388, %v1389
  %v1391 = vand.u32 %v1390, 4294901760
  %1392 = vmatpush1.msra.mxu0 %v1391
  %1393 = vmatprep.subr.mxu0 0.0
  %v1394 = vand.u32 %v376, 4294901760
  %v1395 = vsub.f32 %v376, %v1394
  %v1396 = vand.u32 %v1395, 4294901760
  %v1397 = vsub.f32 %v1395, %v1396
  %v1398 = vand.u32 %v1397, 4294901760
  %1399 = vmatpush1.msra.mxu0 %v1398
  %1400 = vmatprep.subr.mxu0 0.0
  %v1401 = vand.u32 %v378, 4294901760
  %v1402 = vsub.f32 %v378, %v1401
  %v1403 = vand.u32 %v1402, 4294901760
  %v1404 = vsub.f32 %v1402, %v1403
  %v1405 = vand.u32 %v1404, 4294901760
  %1406 = vmatpush1.msra.mxu0 %v1405
  %1407 = vmatprep.subr.mxu0 0.0
  %v1408 = vand.u32 %v380, 4294901760
  %v1409 = vsub.f32 %v380, %v1408
  %v1410 = vand.u32 %v1409, 4294901760
  %v1411 = vsub.f32 %v1409, %v1410
  %v1412 = vand.u32 %v1411, 4294901760
  %1413 = vmatpush1.msra.mxu0 %v1412
  %1414 = vmatprep.subr.mxu0 0.0
  %v1415 = vand.u32 %v382, 4294901760
  %v1416 = vsub.f32 %v382, %v1415
  %v1417 = vand.u32 %v1416, 4294901760
  %v1418 = vsub.f32 %v1416, %v1417
  %v1419 = vand.u32 %v1418, 4294901760
  %1420 = vmatpush1.msra.mxu0 %v1419
  %1421 = vmatprep.subr.mxu0 0.0
  %v1422 = vand.u32 %v384, 4294901760
  %v1423 = vsub.f32 %v384, %v1422
  %v1424 = vand.u32 %v1423, 4294901760
  %v1425 = vsub.f32 %v1423, %v1424
  %v1426 = vand.u32 %v1425, 4294901760
  %1427 = vmatpush1.msra.mxu0 %v1426
  %1428 = vmatprep.subr.mxu0 0.0
  %1429 = vmatpush1.msra.mxu0 0.0
  %1430 = vmatprep.subr.mxu0 0.0
  %1431 = vmatpush1.msra.mxu0 0.0
  %1432 = vmatprep.subr.mxu0 0.0
  %1433 = vmatpush1.msra.mxu0 0.0
  %1434 = vmatprep.subr.mxu0 0.0
  %1435 = vmatpush1.msra.mxu0 0.0
  %1436 = vmatprep.subr.mxu0 0.0
  %1437 = vmatpush1.msra.mxu0 0.0
  %1438 = vmatprep.subr.mxu0 0.0
  %1439 = vmatpush1.msra.mxu0 0.0
  %1440 = vmatprep.subr.mxu0 0.0
  %1441 = vmatpush1.msra.mxu0 0.0
  %1442 = vmatprep.subr.mxu0 0.0
  %1443 = vmatpush1.msra.mxu0 0.0
  %1444 = vmatprep.subr.mxu0 0.0
  %1445 = vmatpush1.msra.mxu0 0.0
  %1446 = vmatprep.subr.mxu0 0.0
  %1447 = vmatpush1.msra.mxu0 0.0
  %1448 = vmatprep.subr.mxu0 0.0
  %1449 = vmatpush1.msra.mxu0 0.0
  %1450 = vmatprep.subr.mxu0 0.0
  %1451 = vmatpush1.msra.mxu0 0.0
  %1452 = vmatprep.subr.mxu0 0.0
  %1453 = vmatpush1.msra.mxu0 0.0
  %1454 = vmatprep.subr.mxu0 0.0
  %1455 = vmatpush1.msra.mxu0 0.0
  %1456 = vmatprep.subr.mxu0 0.0
  %1457 = vmatpush1.msra.mxu0 0.0
  %1458 = vmatprep.subr.mxu0 0.0
  %1459 = vmatpush1.msra.mxu0 0.0
  %1460 = vmatprep.mubr.f32.mxu0 0.0
  %v1461 = vand.u32 %v421, 4294901760
  %1462 = vmatmul.mubr.f32.gmra.mrb[0].mxu0 %v1461
  %v1463 = vpop.f32.mrb[0].mxu0
  %v1464 = vadd.f32 %v1283, %v1463
  %v1465 = vpop.f32.mrb[0].mxu0
  %1466 = vmatprep.mubr.f32.mxu0 0.0
  %v1467 = vand.u32 %v422, 4294901760
  %1468 = vmatmul.mubr.f32.gmra.mrb[0].mxu0 %v1467
  %v1469 = vpop.f32.mrb[0].mxu0
  %v1470 = vadd.f32 %v1293, %v1469
  %v1471 = vpop.f32.mrb[0].mxu0
  %1472 = vmatprep.mubr.f32.mxu0 0.0
  %v1473 = vand.u32 %v423, 4294901760
  %1474 = vmatmul.mubr.f32.gmra.mrb[0].mxu0 %v1473
  %v1475 = vpop.f32.mrb[0].mxu0
  %v1476 = vadd.f32 %v1303, %v1475
  %v1477 = vpop.f32.mrb[0].mxu0
  %1478 = vmatprep.mubr.f32.mxu0 0.0
  %v1479 = vand.u32 %v424, 4294901760
  %1480 = vmatmul.mubr.f32.gmra.mrb[0].mxu0 %v1479
  %v1481 = vpop.f32.mrb[0].mxu0
  %v1482 = vadd.f32 %v1313, %v1481
  %v1483 = vpop.f32.mrb[0].mxu0
  %1484 = vdwg.mxu0
  %1485 = vmatprep.subr.mxu0 0.0
  %v1486 = vand.u32 %v354, 4294901760
  %v1487 = vsub.f32 %v354, %v1486
  %1488 = vmatpush1.msra.mxu0 %v1487
  %1489 = vmatprep.subr.mxu0 0.0
  %v1490 = vand.u32 %v356, 4294901760
  %v1491 = vsub.f32 %v356, %v1490
  %1492 = vmatpush1.msra.mxu0 %v1491
  %1493 = vmatprep.subr.mxu0 0.0
  %v1494 = vand.u32 %v358, 4294901760
  %v1495 = vsub.f32 %v358, %v1494
  %1496 = vmatpush1.msra.mxu0 %v1495
  %1497 = vmatprep.subr.mxu0 0.0
  %v1498 = vand.u32 %v360, 4294901760
  %v1499 = vsub.f32 %v360, %v1498
  %1500 = vmatpush1.msra.mxu0 %v1499
  %1501 = vmatprep.subr.mxu0 0.0
  %v1502 = vand.u32 %v362, 4294901760
  %v1503 = vsub.f32 %v362, %v1502
  %1504 = vmatpush1.msra.mxu0 %v1503
  %1505 = vmatprep.subr.mxu0 0.0
  %v1506 = vand.u32 %v364, 4294901760
  %v1507 = vsub.f32 %v364, %v1506
  %1508 = vmatpush1.msra.mxu0 %v1507
  %1509 = vmatprep.subr.mxu0 0.0
  %v1510 = vand.u32 %v366, 4294901760
  %v1511 = vsub.f32 %v366, %v1510
  %1512 = vmatpush1.msra.mxu0 %v1511
  %1513 = vmatprep.subr.mxu0 0.0
  %v1514 = vand.u32 %v368, 4294901760
  %v1515 = vsub.f32 %v368, %v1514
  %1516 = vmatpush1.msra.mxu0 %v1515
  %1517 = vmatprep.subr.mxu0 0.0
  %v1518 = vand.u32 %v370, 4294901760
  %v1519 = vsub.f32 %v370, %v1518
  %1520 = vmatpush1.msra.mxu0 %v1519
  %1521 = vmatprep.subr.mxu0 0.0
  %v1522 = vand.u32 %v372, 4294901760
  %v1523 = vsub.f32 %v372, %v1522
  %1524 = vmatpush1.msra.mxu0 %v1523
  %1525 = vmatprep.subr.mxu0 0.0
  %v1526 = vand.u32 %v374, 4294901760
  %v1527 = vsub.f32 %v374, %v1526
  %1528 = vmatpush1.msra.mxu0 %v1527
  %1529 = vmatprep.subr.mxu0 0.0
  %v1530 = vand.u32 %v376, 4294901760
  %v1531 = vsub.f32 %v376, %v1530
  %1532 = vmatpush1.msra.mxu0 %v1531
  %1533 = vmatprep.subr.mxu0 0.0
  %v1534 = vand.u32 %v378, 4294901760
  %v1535 = vsub.f32 %v378, %v1534
  %1536 = vmatpush1.msra.mxu0 %v1535
  %1537 = vmatprep.subr.mxu0 0.0
  %v1538 = vand.u32 %v380, 4294901760
  %v1539 = vsub.f32 %v380, %v1538
  %1540 = vmatpush1.msra.mxu0 %v1539
  %1541 = vmatprep.subr.mxu0 0.0
  %v1542 = vand.u32 %v382, 4294901760
  %v1543 = vsub.f32 %v382, %v1542
  %1544 = vmatpush1.msra.mxu0 %v1543
  %1545 = vmatprep.subr.mxu0 0.0
  %v1546 = vand.u32 %v384, 4294901760
  %v1547 = vsub.f32 %v384, %v1546
  %1548 = vmatpush1.msra.mxu0 %v1547
  %1549 = vmatprep.subr.mxu0 0.0
  %1550 = vmatpush1.msra.mxu0 0.0
  %1551 = vmatprep.subr.mxu0 0.0
  %1552 = vmatpush1.msra.mxu0 0.0
  %1553 = vmatprep.subr.mxu0 0.0
  %1554 = vmatpush1.msra.mxu0 0.0
  %1555 = vmatprep.subr.mxu0 0.0
  %1556 = vmatpush1.msra.mxu0 0.0
  %1557 = vmatprep.subr.mxu0 0.0
  %1558 = vmatpush1.msra.mxu0 0.0
  %1559 = vmatprep.subr.mxu0 0.0
  %1560 = vmatpush1.msra.mxu0 0.0
  %1561 = vmatprep.subr.mxu0 0.0
  %1562 = vmatpush1.msra.mxu0 0.0
  %1563 = vmatprep.subr.mxu0 0.0
  %1564 = vmatpush1.msra.mxu0 0.0
  %1565 = vmatprep.subr.mxu0 0.0
  %1566 = vmatpush1.msra.mxu0 0.0
  %1567 = vmatprep.subr.mxu0 0.0
  %1568 = vmatpush1.msra.mxu0 0.0
  %1569 = vmatprep.subr.mxu0 0.0
  %1570 = vmatpush1.msra.mxu0 0.0
  %1571 = vmatprep.subr.mxu0 0.0
  %1572 = vmatpush1.msra.mxu0 0.0
  %1573 = vmatprep.subr.mxu0 0.0
  %1574 = vmatpush1.msra.mxu0 0.0
  %1575 = vmatprep.subr.mxu0 0.0
  %1576 = vmatpush1.msra.mxu0 0.0
  %1577 = vmatprep.subr.mxu0 0.0
  %1578 = vmatpush1.msra.mxu0 0.0
  %1579 = vmatprep.subr.mxu0 0.0
  %1580 = vmatpush1.msra.mxu0 0.0
  %1581 = vmatprep.mubr.f32.mxu0 0.0
  %v1582 = vand.u32 %v421, 4294901760
  %v1583 = vsub.f32 %v421, %v1582
  %1584 = vmatmul.mubr.f32.gmra.mrb[0].mxu0 %v1583
  %v1585 = vpop.f32.mrb[0].mxu0
  %v1586 = vadd.f32 %v1464, %v1585
  %v1587 = vpop.f32.mrb[0].mxu0
  %1588 = vmatprep.mubr.f32.mxu0 0.0
  %v1589 = vand.u32 %v422, 4294901760
  %v1590 = vsub.f32 %v422, %v1589
  %1591 = vmatmul.mubr.f32.gmra.mrb[0].mxu0 %v1590
  %v1592 = vpop.f32.mrb[0].mxu0
  %v1593 = vadd.f32 %v1470, %v1592
  %v1594 = vpop.f32.mrb[0].mxu0
  %1595 = vmatprep.mubr.f32.mxu0 0.0
  %v1596 = vand.u32 %v423, 4294901760
  %v1597 = vsub.f32 %v423, %v1596
  %1598 = vmatmul.mubr.f32.gmra.mrb[0].mxu0 %v1597
  %v1599 = vpop.f32.mrb[0].mxu0
  %v1600 = vadd.f32 %v1476, %v1599
  %v1601 = vpop.f32.mrb[0].mxu0
  %1602 = vmatprep.mubr.f32.mxu0 0.0
  %v1603 = vand.u32 %v424, 4294901760
  %v1604 = vsub.f32 %v424, %v1603
  %1605 = vmatmul.mubr.f32.gmra.mrb[0].mxu0 %v1604
  %v1606 = vpop.f32.mrb[0].mxu0
  %v1607 = vadd.f32 %v1482, %v1606
  %v1608 = vpop.f32.mrb[0].mxu0
  %1609 = vdwg.mxu0
  %1610 = vmatprep.subr.mxu0 0.0
  %v1611 = vand.u32 %v354, 4294901760
  %1612 = vmatpush1.msra.mxu0 %v1611
  %1613 = vmatprep.subr.mxu0 0.0
  %v1614 = vand.u32 %v356, 4294901760
  %1615 = vmatpush1.msra.mxu0 %v1614
  %1616 = vmatprep.subr.mxu0 0.0
  %v1617 = vand.u32 %v358, 4294901760
  %1618 = vmatpush1.msra.mxu0 %v1617
  %1619 = vmatprep.subr.mxu0 0.0
  %v1620 = vand.u32 %v360, 4294901760
  %1621 = vmatpush1.msra.mxu0 %v1620
  %1622 = vmatprep.subr.mxu0 0.0
  %v1623 = vand.u32 %v362, 4294901760
  %1624 = vmatpush1.msra.mxu0 %v1623
  %1625 = vmatprep.subr.mxu0 0.0
  %v1626 = vand.u32 %v364, 4294901760
  %1627 = vmatpush1.msra.mxu0 %v1626
  %1628 = vmatprep.subr.mxu0 0.0
  %v1629 = vand.u32 %v366, 4294901760
  %1630 = vmatpush1.msra.mxu0 %v1629
  %1631 = vmatprep.subr.mxu0 0.0
  %v1632 = vand.u32 %v368, 4294901760
  %1633 = vmatpush1.msra.mxu0 %v1632
  %1634 = vmatprep.subr.mxu0 0.0
  %v1635 = vand.u32 %v370, 4294901760
  %1636 = vmatpush1.msra.mxu0 %v1635
  %1637 = vmatprep.subr.mxu0 0.0
  %v1638 = vand.u32 %v372, 4294901760
  %1639 = vmatpush1.msra.mxu0 %v1638
  %1640 = vmatprep.subr.mxu0 0.0
  %v1641 = vand.u32 %v374, 4294901760
  %1642 = vmatpush1.msra.mxu0 %v1641
  %1643 = vmatprep.subr.mxu0 0.0
  %v1644 = vand.u32 %v376, 4294901760
  %1645 = vmatpush1.msra.mxu0 %v1644
  %1646 = vmatprep.subr.mxu0 0.0
  %v1647 = vand.u32 %v378, 4294901760
  %1648 = vmatpush1.msra.mxu0 %v1647
  %1649 = vmatprep.subr.mxu0 0.0
  %v1650 = vand.u32 %v380, 4294901760
  %1651 = vmatpush1.msra.mxu0 %v1650
  %1652 = vmatprep.subr.mxu0 0.0
  %v1653 = vand.u32 %v382, 4294901760
  %1654 = vmatpush1.msra.mxu0 %v1653
  %1655 = vmatprep.subr.mxu0 0.0
  %v1656 = vand.u32 %v384, 4294901760
  %1657 = vmatpush1.msra.mxu0 %v1656
  %1658 = vmatprep.subr.mxu0 0.0
  %1659 = vmatpush1.msra.mxu0 0.0
  %1660 = vmatprep.subr.mxu0 0.0
  %1661 = vmatpush1.msra.mxu0 0.0
  %1662 = vmatprep.subr.mxu0 0.0
  %1663 = vmatpush1.msra.mxu0 0.0
  %1664 = vmatprep.subr.mxu0 0.0
  %1665 = vmatpush1.msra.mxu0 0.0
  %1666 = vmatprep.subr.mxu0 0.0
  %1667 = vmatpush1.msra.mxu0 0.0
  %1668 = vmatprep.subr.mxu0 0.0
  %1669 = vmatpush1.msra.mxu0 0.0
  %1670 = vmatprep.subr.mxu0 0.0
  %1671 = vmatpush1.msra.mxu0 0.0
  %1672 = vmatprep.subr.mxu0 0.0
  %1673 = vmatpush1.msra.mxu0 0.0
  %1674 = vmatprep.subr.mxu0 0.0
  %1675 = vmatpush1.msra.mxu0 0.0
  %1676 = vmatprep.subr.mxu0 0.0
  %1677 = vmatpush1.msra.mxu0 0.0
  %1678 = vmatprep.subr.mxu0 0.0
  %1679 = vmatpush1.msra.mxu0 0.0
  %1680 = vmatprep.subr.mxu0 0.0
  %1681 = vmatpush1.msra.mxu0 0.0
  %1682 = vmatprep.subr.mxu0 0.0
  %1683 = vmatpush1.msra.mxu0 0.0
  %1684 = vmatprep.subr.mxu0 0.0
  %1685 = vmatpush1.msra.mxu0 0.0
  %1686 = vmatprep.subr.mxu0 0.0
  %1687 = vmatpush1.msra.mxu0 0.0
  %1688 = vmatprep.subr.mxu0 0.0
  %1689 = vmatpush1.msra.mxu0 0.0
  %1690 = vmatprep.mubr.f32.mxu0 0.0
  %v1691 = vand.u32 %v421, 4294901760
  %v1692 = vsub.f32 %v421, %v1691
  %v1693 = vand.u32 %v1692, 4294901760
  %1694 = vmatmul.mubr.f32.gmra.mrb[0].mxu0 %v1693
  %v1695 = vpop.f32.mrb[0].mxu0
  %v1696 = vadd.f32 %v1586, %v1695
  %v1697 = vpop.f32.mrb[0].mxu0
  %1698 = vmatprep.mubr.f32.mxu0 0.0
  %v1699 = vand.u32 %v422, 4294901760
  %v1700 = vsub.f32 %v422, %v1699
  %v1701 = vand.u32 %v1700, 4294901760
  %1702 = vmatmul.mubr.f32.gmra.mrb[0].mxu0 %v1701
  %v1703 = vpop.f32.mrb[0].mxu0
  %v1704 = vadd.f32 %v1593, %v1703
  %v1705 = vpop.f32.mrb[0].mxu0
  %1706 = vmatprep.mubr.f32.mxu0 0.0
  %v1707 = vand.u32 %v423, 4294901760
  %v1708 = vsub.f32 %v423, %v1707
  %v1709 = vand.u32 %v1708, 4294901760
  %1710 = vmatmul.mubr.f32.gmra.mrb[0].mxu0 %v1709
  %v1711 = vpop.f32.mrb[0].mxu0
  %v1712 = vadd.f32 %v1600, %v1711
  %v1713 = vpop.f32.mrb[0].mxu0
  %1714 = vmatprep.mubr.f32.mxu0 0.0
  %v1715 = vand.u32 %v424, 4294901760
  %v1716 = vsub.f32 %v424, %v1715
  %v1717 = vand.u32 %v1716, 4294901760
  %1718 = vmatmul.mubr.f32.gmra.mrb[0].mxu0 %v1717
  %v1719 = vpop.f32.mrb[0].mxu0
  %v1720 = vadd.f32 %v1607, %v1719
  %v1721 = vpop.f32.mrb[0].mxu0
  %1722 = vdwg.mxu0
  %1723 = vmatprep.subr.mxu0 0.0
  %v1724 = vand.u32 %v354, 4294901760
  %v1725 = vsub.f32 %v354, %v1724
  %v1726 = vand.u32 %v1725, 4294901760
  %1727 = vmatpush1.msra.mxu0 %v1726
  %1728 = vmatprep.subr.mxu0 0.0
  %v1729 = vand.u32 %v356, 4294901760
  %v1730 = vsub.f32 %v356, %v1729
  %v1731 = vand.u32 %v1730, 4294901760
  %1732 = vmatpush1.msra.mxu0 %v1731
  %1733 = vmatprep.subr.mxu0 0.0
  %v1734 = vand.u32 %v358, 4294901760
  %v1735 = vsub.f32 %v358, %v1734
  %v1736 = vand.u32 %v1735, 4294901760
  %1737 = vmatpush1.msra.mxu0 %v1736
  %1738 = vmatprep.subr.mxu0 0.0
  %v1739 = vand.u32 %v360, 4294901760
  %v1740 = vsub.f32 %v360, %v1739
  %v1741 = vand.u32 %v1740, 4294901760
  %1742 = vmatpush1.msra.mxu0 %v1741
  %1743 = vmatprep.subr.mxu0 0.0
  %v1744 = vand.u32 %v362, 4294901760
  %v1745 = vsub.f32 %v362, %v1744
  %v1746 = vand.u32 %v1745, 4294901760
  %1747 = vmatpush1.msra.mxu0 %v1746
  %1748 = vmatprep.subr.mxu0 0.0
  %v1749 = vand.u32 %v364, 4294901760
  %v1750 = vsub.f32 %v364, %v1749
  %v1751 = vand.u32 %v1750, 4294901760
  %1752 = vmatpush1.msra.mxu0 %v1751
  %1753 = vmatprep.subr.mxu0 0.0
  %v1754 = vand.u32 %v366, 4294901760
  %v1755 = vsub.f32 %v366, %v1754
  %v1756 = vand.u32 %v1755, 4294901760
  %1757 = vmatpush1.msra.mxu0 %v1756
  %1758 = vmatprep.subr.mxu0 0.0
  %v1759 = vand.u32 %v368, 4294901760
  %v1760 = vsub.f32 %v368, %v1759
  %v1761 = vand.u32 %v1760, 4294901760
  %1762 = vmatpush1.msra.mxu0 %v1761
  %1763 = vmatprep.subr.mxu0 0.0
  %v1764 = vand.u32 %v370, 4294901760
  %v1765 = vsub.f32 %v370, %v1764
  %v1766 = vand.u32 %v1765, 4294901760
  %1767 = vmatpush1.msra.mxu0 %v1766
  %1768 = vmatprep.subr.mxu0 0.0
  %v1769 = vand.u32 %v372, 4294901760
  %v1770 = vsub.f32 %v372, %v1769
  %v1771 = vand.u32 %v1770, 4294901760
  %1772 = vmatpush1.msra.mxu0 %v1771
  %1773 = vmatprep.subr.mxu0 0.0
  %v1774 = vand.u32 %v374, 4294901760
  %v1775 = vsub.f32 %v374, %v1774
  %v1776 = vand.u32 %v1775, 4294901760
  %1777 = vmatpush1.msra.mxu0 %v1776
  %1778 = vmatprep.subr.mxu0 0.0
  %v1779 = vand.u32 %v376, 4294901760
  %v1780 = vsub.f32 %v376, %v1779
  %v1781 = vand.u32 %v1780, 4294901760
  %1782 = vmatpush1.msra.mxu0 %v1781
  %1783 = vmatprep.subr.mxu0 0.0
  %v1784 = vand.u32 %v378, 4294901760
  %v1785 = vsub.f32 %v378, %v1784
  %v1786 = vand.u32 %v1785, 4294901760
  %1787 = vmatpush1.msra.mxu0 %v1786
  %1788 = vmatprep.subr.mxu0 0.0
  %v1789 = vand.u32 %v380, 4294901760
  %v1790 = vsub.f32 %v380, %v1789
  %v1791 = vand.u32 %v1790, 4294901760
  %1792 = vmatpush1.msra.mxu0 %v1791
  %1793 = vmatprep.subr.mxu0 0.0
  %v1794 = vand.u32 %v382, 4294901760
  %v1795 = vsub.f32 %v382, %v1794
  %v1796 = vand.u32 %v1795, 4294901760
  %1797 = vmatpush1.msra.mxu0 %v1796
  %1798 = vmatprep.subr.mxu0 0.0
  %v1799 = vand.u32 %v384, 4294901760
  %v1800 = vsub.f32 %v384, %v1799
  %v1801 = vand.u32 %v1800, 4294901760
  %1802 = vmatpush1.msra.mxu0 %v1801
  %1803 = vmatprep.subr.mxu0 0.0
  %1804 = vmatpush1.msra.mxu0 0.0
  %1805 = vmatprep.subr.mxu0 0.0
  %1806 = vmatpush1.msra.mxu0 0.0
  %1807 = vmatprep.subr.mxu0 0.0
  %1808 = vmatpush1.msra.mxu0 0.0
  %1809 = vmatprep.subr.mxu0 0.0
  %1810 = vmatpush1.msra.mxu0 0.0
  %1811 = vmatprep.subr.mxu0 0.0
  %1812 = vmatpush1.msra.mxu0 0.0
  %1813 = vmatprep.subr.mxu0 0.0
  %1814 = vmatpush1.msra.mxu0 0.0
  %1815 = vmatprep.subr.mxu0 0.0
  %1816 = vmatpush1.msra.mxu0 0.0
  %1817 = vmatprep.subr.mxu0 0.0
  %1818 = vmatpush1.msra.mxu0 0.0
  %1819 = vmatprep.subr.mxu0 0.0
  %1820 = vmatpush1.msra.mxu0 0.0
  %1821 = vmatprep.subr.mxu0 0.0
  %1822 = vmatpush1.msra.mxu0 0.0
  %1823 = vmatprep.subr.mxu0 0.0
  %1824 = vmatpush1.msra.mxu0 0.0
  %1825 = vmatprep.subr.mxu0 0.0
  %1826 = vmatpush1.msra.mxu0 0.0
  %1827 = vmatprep.subr.mxu0 0.0
  %1828 = vmatpush1.msra.mxu0 0.0
  %1829 = vmatprep.subr.mxu0 0.0
  %1830 = vmatpush1.msra.mxu0 0.0
  %1831 = vmatprep.subr.mxu0 0.0
  %1832 = vmatpush1.msra.mxu0 0.0
  %1833 = vmatprep.subr.mxu0 0.0
  %1834 = vmatpush1.msra.mxu0 0.0
  %1835 = vmatprep.mubr.f32.mxu0 0.0
  %v1836 = vand.u32 %v421, 4294901760
  %1837 = vmatmul.mubr.f32.gmra.mrb[0].mxu0 %v1836
  %v1838 = vpop.f32.mrb[0].mxu0
  %v1839 = vadd.f32 %v1696, %v1838
  %v1840 = vpop.f32.mrb[0].mxu0
  %1841 = vmatprep.mubr.f32.mxu0 0.0
  %v1842 = vand.u32 %v422, 4294901760
  %1843 = vmatmul.mubr.f32.gmra.mrb[0].mxu0 %v1842
  %v1844 = vpop.f32.mrb[0].mxu0
  %v1845 = vadd.f32 %v1704, %v1844
  %v1846 = vpop.f32.mrb[0].mxu0
  %1847 = vmatprep.mubr.f32.mxu0 0.0
  %v1848 = vand.u32 %v423, 4294901760
  %1849 = vmatmul.mubr.f32.gmra.mrb[0].mxu0 %v1848
  %v1850 = vpop.f32.mrb[0].mxu0
  %v1851 = vadd.f32 %v1712, %v1850
  %v1852 = vpop.f32.mrb[0].mxu0
  %1853 = vmatprep.mubr.f32.mxu0 0.0
  %v1854 = vand.u32 %v424, 4294901760
  %1855 = vmatmul.mubr.f32.gmra.mrb[0].mxu0 %v1854
  %v1856 = vpop.f32.mrb[0].mxu0
  %v1857 = vadd.f32 %v1720, %v1856
  %v1858 = vpop.f32.mrb[0].mxu0
  %1859 = vdwg.mxu0
  %1860 = vmatprep.subr.mxu0 0.0
  %v1861 = vand.u32 %v354, 4294901760
  %1862 = vmatpush1.msra.mxu0 %v1861
  %1863 = vmatprep.subr.mxu0 0.0
  %v1864 = vand.u32 %v356, 4294901760
  %1865 = vmatpush1.msra.mxu0 %v1864
  %1866 = vmatprep.subr.mxu0 0.0
  %v1867 = vand.u32 %v358, 4294901760
  %1868 = vmatpush1.msra.mxu0 %v1867
  %1869 = vmatprep.subr.mxu0 0.0
  %v1870 = vand.u32 %v360, 4294901760
  %1871 = vmatpush1.msra.mxu0 %v1870
  %1872 = vmatprep.subr.mxu0 0.0
  %v1873 = vand.u32 %v362, 4294901760
  %1874 = vmatpush1.msra.mxu0 %v1873
  %1875 = vmatprep.subr.mxu0 0.0
  %v1876 = vand.u32 %v364, 4294901760
  %1877 = vmatpush1.msra.mxu0 %v1876
  %1878 = vmatprep.subr.mxu0 0.0
  %v1879 = vand.u32 %v366, 4294901760
  %1880 = vmatpush1.msra.mxu0 %v1879
  %1881 = vmatprep.subr.mxu0 0.0
  %v1882 = vand.u32 %v368, 4294901760
  %1883 = vmatpush1.msra.mxu0 %v1882
  %1884 = vmatprep.subr.mxu0 0.0
  %v1885 = vand.u32 %v370, 4294901760
  %1886 = vmatpush1.msra.mxu0 %v1885
  %1887 = vmatprep.subr.mxu0 0.0
  %v1888 = vand.u32 %v372, 4294901760
  %1889 = vmatpush1.msra.mxu0 %v1888
  %1890 = vmatprep.subr.mxu0 0.0
  %v1891 = vand.u32 %v374, 4294901760
  %1892 = vmatpush1.msra.mxu0 %v1891
  %1893 = vmatprep.subr.mxu0 0.0
  %v1894 = vand.u32 %v376, 4294901760
  %1895 = vmatpush1.msra.mxu0 %v1894
  %1896 = vmatprep.subr.mxu0 0.0
  %v1897 = vand.u32 %v378, 4294901760
  %1898 = vmatpush1.msra.mxu0 %v1897
  %1899 = vmatprep.subr.mxu0 0.0
  %v1900 = vand.u32 %v380, 4294901760
  %1901 = vmatpush1.msra.mxu0 %v1900
  %1902 = vmatprep.subr.mxu0 0.0
  %v1903 = vand.u32 %v382, 4294901760
  %1904 = vmatpush1.msra.mxu0 %v1903
  %1905 = vmatprep.subr.mxu0 0.0
  %v1906 = vand.u32 %v384, 4294901760
  %1907 = vmatpush1.msra.mxu0 %v1906
  %1908 = vmatprep.subr.mxu0 0.0
  %1909 = vmatpush1.msra.mxu0 0.0
  %1910 = vmatprep.subr.mxu0 0.0
  %1911 = vmatpush1.msra.mxu0 0.0
  %1912 = vmatprep.subr.mxu0 0.0
  %1913 = vmatpush1.msra.mxu0 0.0
  %1914 = vmatprep.subr.mxu0 0.0
  %1915 = vmatpush1.msra.mxu0 0.0
  %1916 = vmatprep.subr.mxu0 0.0
  %1917 = vmatpush1.msra.mxu0 0.0
  %1918 = vmatprep.subr.mxu0 0.0
  %1919 = vmatpush1.msra.mxu0 0.0
  %1920 = vmatprep.subr.mxu0 0.0
  %1921 = vmatpush1.msra.mxu0 0.0
  %1922 = vmatprep.subr.mxu0 0.0
  %1923 = vmatpush1.msra.mxu0 0.0
  %1924 = vmatprep.subr.mxu0 0.0
  %1925 = vmatpush1.msra.mxu0 0.0
  %1926 = vmatprep.subr.mxu0 0.0
  %1927 = vmatpush1.msra.mxu0 0.0
  %1928 = vmatprep.subr.mxu0 0.0
  %1929 = vmatpush1.msra.mxu0 0.0
  %1930 = vmatprep.subr.mxu0 0.0
  %1931 = vmatpush1.msra.mxu0 0.0
  %1932 = vmatprep.subr.mxu0 0.0
  %1933 = vmatpush1.msra.mxu0 0.0
  %1934 = vmatprep.subr.mxu0 0.0
  %1935 = vmatpush1.msra.mxu0 0.0
  %1936 = vmatprep.subr.mxu0 0.0
  %1937 = vmatpush1.msra.mxu0 0.0
  %1938 = vmatprep.subr.mxu0 0.0
  %1939 = vmatpush1.msra.mxu0 0.0
  %1940 = vmatprep.mubr.f32.mxu0 0.0
  %v1941 = vand.u32 %v421, 4294901760
  %1942 = vmatmul.mubr.f32.gmra.mrb[0].mxu0 %v1941
  %v1943 = vpop.f32.mrb[0].mxu0
  %v1944 = vadd.f32 %v1839, %v1943
  %v1945 = vpop.f32.mrb[0].mxu0
  %1946 = vmatprep.mubr.f32.mxu0 0.0
  %v1947 = vand.u32 %v422, 4294901760
  %1948 = vmatmul.mubr.f32.gmra.mrb[0].mxu0 %v1947
  %v1949 = vpop.f32.mrb[0].mxu0
  %v1950 = vadd.f32 %v1845, %v1949
  %v1951 = vpop.f32.mrb[0].mxu0
  %1952 = vmatprep.mubr.f32.mxu0 0.0
  %v1953 = vand.u32 %v423, 4294901760
  %1954 = vmatmul.mubr.f32.gmra.mrb[0].mxu0 %v1953
  %v1955 = vpop.f32.mrb[0].mxu0
  %v1956 = vadd.f32 %v1851, %v1955
  %v1957 = vpop.f32.mrb[0].mxu0
  %1958 = vmatprep.mubr.f32.mxu0 0.0
  %v1959 = vand.u32 %v424, 4294901760
  %1960 = vmatmul.mubr.f32.gmra.mrb[0].mxu0 %v1959
  %v1961 = vpop.f32.mrb[0].mxu0
  %v1962 = vadd.f32 %v1857, %v1961
  %v1963 = vpop.f32.mrb[0].mxu0
  %1964 = vdwg.mxu0
  %1965 = vst [vmem:[%s5] sm:$0xff] %v1174
  %1966 = vst [vmem:[%s5 + $0x8] sm:$0xff] %v1180
  %1967 = vst [vmem:[%s5 + $0x10] sm:$0xff] %v1186
  %1968 = vst [vmem:[%s5 + $0x18] sm:$0xff] %v1192
  %1969 = vst [vmem:[%s5 + $0x20] sm:$0xff] %v1944
  %1970 = vst [vmem:[%s5 + $0x28] sm:$0xff] %v1950
  %1971 = vst [vmem:[%s5 + $0x30] sm:$0xff] %v1956
  %1972 = vst [vmem:[%s5 + $0x38] sm:$0xff] %v1962
  // Predicated region
  $region18: #{agdn_conv_forward.6} parent=0 // pred_check
    _
  $region19: #{agdn_conv_forward.6} parent=0 // pred_check_branch
    %1974 = sbr.rel (0) target = $region21
  $region20: #{agdn_conv_forward.6} parent=0 // pred_region
    _
  $region21: #{agdn_conv_forward.6} parent=0 // pred_fallthru
    _
  // Predicated region
  $region22: #{agdn_conv_forward.6} parent=0 // pred_check
    _
  $region23: #{agdn_conv_forward.6} parent=0 // pred_check_branch
    %1976 = sbr.rel (0) target = $region25
  $region24: #{agdn_conv_forward.6} parent=0 // pred_region
    _
  $region25: #{agdn_conv_forward.6} parent=0 // pred_fallthru
    _
  // Predicated region
  $region26: #{agdn_conv_forward.6} parent=0 // pred_check
    _
  $region27: #{agdn_conv_forward.6} parent=0 // pred_check_branch
    %1978 = sbr.rel (0) target = $region29
  $region28: #{agdn_conv_forward.6} parent=0 // pred_region
    _
  $region29: #{agdn_conv_forward.6} parent=0 // pred_fallthru
    _
  // Predicated region
  $region30: #{agdn_conv_forward.6} parent=0 // pred_check
    _
  $region31: #{agdn_conv_forward.6} parent=0 // pred_check_branch
    %1980 = sbr.rel (0) target = $region33
  $region32: #{agdn_conv_forward.6} parent=0 // pred_region
    _
  $region33: #{agdn_conv_forward.6} parent=0 // pred_fallthru
    _

// kernel: agdn_conv_forward.7
$region0: #{agdn_conv_forward.7}
  #allocation0 [shape = 'u32[]', space=smem, size = 0x4, offset = 0x4, fixed_abs, tag = 'smem constant byte address 0x4 - core index']
  #allocation1 [shape = 'u32[144,128]{1,0:T(1,128)}', space=vmem, size = 0x12000, scoped, tag = 'internal scratch']
  %s0 = inlined_call_operand.vmem [shape: f32[2,128,128], index: 0, kind: input, shape index: {}]
  %s1 = inlined_call_operand.vmem [shape: f32[2,32,128], index: 1, kind: input, shape index: {}]
  %s2 = inlined_call_operand.vmem [shape: f32[2,32,128], index: 2, kind: output, shape index: {}]
  %s3 = sld [smem:[#allocation0]]
  $region18: #{agdn_conv_forward.7} parent=0
    _
  %s5 = ssub.s32 1, %s3
  %s6 = scalar_select 0, %s5, %s3
  // Predicated region
  $region2: #{agdn_conv_forward.7} parent=0 // pred_check
    _
  $region3: #{agdn_conv_forward.7} parent=0 // pred_check_branch
    %8 = sbr.rel (0) target = $region5
  $region4: #{agdn_conv_forward.7} parent=0 // pred_region
    _
  $region5: #{agdn_conv_forward.7} parent=0 // pred_fallthru
    _
  // Predicated region
  $region6: #{agdn_conv_forward.7} parent=0 // pred_check
    _
  $region7: #{agdn_conv_forward.7} parent=0 // pred_check_branch
    %10 = sbr.rel (0) target = $region9
  $region8: #{agdn_conv_forward.7} parent=0 // pred_region
    _
  $region9: #{agdn_conv_forward.7} parent=0 // pred_fallthru
    _
  %v11 = vld [vmem:[%s0] sm:$0xff]
  %v12 = vld [vmem:[%s0 + $0x8] sm:$0xff]
  %v13 = vld [vmem:[%s0 + $0x10] sm:$0xff]
  %v14 = vld [vmem:[%s0 + $0x18] sm:$0xff]
  %v15 = vld [vmem:[%s0 + $0x20] sm:$0xff]
  %v16 = vld [vmem:[%s0 + $0x28] sm:$0xff]
  %v17 = vld [vmem:[%s0 + $0x30] sm:$0xff]
  %v18 = vld [vmem:[%s0 + $0x38] sm:$0xff]
  %v19 = vld [vmem:[%s0 + $0x40] sm:$0xff]
  %v20 = vld [vmem:[%s0 + $0x48] sm:$0xff]
  %v21 = vld [vmem:[%s0 + $0x50] sm:$0xff]
  %v22 = vld [vmem:[%s0 + $0x58] sm:$0xff]
  %v23 = vld [vmem:[%s0 + $0x60] sm:$0xff]
  %v24 = vld [vmem:[%s0 + $0x68] sm:$0xff]
  %v25 = vld [vmem:[%s0 + $0x70] sm:$0xff]
  %v26 = vld [vmem:[%s0 + $0x78] sm:$0xff]
  %v27 = vld [vmem:[%s0 + $0x80] sm:$0xff]
  %v28 = vld [vmem:[%s0 + $0x88] sm:$0xff]
  %v29 = vld [vmem:[%s0 + $0x90] sm:$0xff]
  %v30 = vld [vmem:[%s0 + $0x98] sm:$0xff]
  %v31 = vld [vmem:[%s0 + $0xa0] sm:$0xff]
  %v32 = vld [vmem:[%s0 + $0xa8] sm:$0xff]
  %v33 = vld [vmem:[%s0 + $0xb0] sm:$0xff]
  %v34 = vld [vmem:[%s0 + $0xb8] sm:$0xff]
  %v35 = vld [vmem:[%s0 + $0xc0] sm:$0xff]
  %v36 = vld [vmem:[%s0 + $0xc8] sm:$0xff]
  %v37 = vld [vmem:[%s0 + $0xd0] sm:$0xff]
  %v38 = vld [vmem:[%s0 + $0xd8] sm:$0xff]
  %v39 = vld [vmem:[%s0 + $0xe0] sm:$0xff]
  %v40 = vld [vmem:[%s0 + $0xe8] sm:$0xff]
  %v41 = vld [vmem:[%s0 + $0xf0] sm:$0xff]
  %v42 = vld [vmem:[%s0 + $0xf8] sm:$0xff]
  %v43 = vld [vmem:[%s1] sm:$0xff]
  %v44 = vld [vmem:[%s1 + $0x8] sm:$0xff]
  %v45 = vld [vmem:[%s1 + $0x10] sm:$0xff]
  %v46 = vld [vmem:[%s1 + $0x18] sm:$0xff]
  %v47 = vld [vmem:[%s1 + $0x20] sm:$0xff]
  %v48 = vld [vmem:[%s1 + $0x28] sm:$0xff]
  %v49 = vld [vmem:[%s1 + $0x30] sm:$0xff]
  %v50 = vld [vmem:[%s1 + $0x38] sm:$0xff]
  %51 = vmatprep.subr.mxu0 0.0
  %v52 = vand.u32 %v11, 4294901760
  %53 = vmatpush1.msra.mxu0 %v52
  %54 = vmatprep.subr.mxu0 0.0
  %v55 = vand.u32 %v12, 4294901760
  %56 = vmatpush1.msra.mxu0 %v55
  %57 = vmatprep.subr.mxu0 0.0
  %v58 = vand.u32 %v13, 4294901760
  %59 = vmatpush1.msra.mxu0 %v58
  %60 = vmatprep.subr.mxu0 0.0
  %v61 = vand.u32 %v14, 4294901760
  %62 = vmatpush1.msra.mxu0 %v61
  %63 = vmatprep.subr.mxu0 0.0
  %v64 = vand.u32 %v15, 4294901760
  %65 = vmatpush1.msra.mxu0 %v64
  %66 = vmatprep.subr.mxu0 0.0
  %v67 = vand.u32 %v16, 4294901760
  %68 = vmatpush1.msra.mxu0 %v67
  %69 = vmatprep.subr.mxu0 0.0
  %v70 = vand.u32 %v17, 4294901760
  %71 = vmatpush1.msra.mxu0 %v70
  %72 = vmatprep.subr.mxu0 0.0
  %v73 = vand.u32 %v18, 4294901760
  %74 = vmatpush1.msra.mxu0 %v73
  %75 = vmatprep.subr.mxu0 0.0
  %v76 = vand.u32 %v19, 4294901760
  %77 = vmatpush1.msra.mxu0 %v76
  %78 = vmatprep.subr.mxu0 0.0
  %v79 = vand.u32 %v20, 4294901760
  %80 = vmatpush1.msra.mxu0 %v79
  %81 = vmatprep.subr.mxu0 0.0
  %v82 = vand.u32 %v21, 4294901760
  %83 = vmatpush1.msra.mxu0 %v82
  %84 = vmatprep.subr.mxu0 0.0
  %v85 = vand.u32 %v22, 4294901760
  %86 = vmatpush1.msra.mxu0 %v85
  %87 = vmatprep.subr.mxu0 0.0
  %v88 = vand.u32 %v23, 4294901760
  %89 = vmatpush1.msra.mxu0 %v88
  %90 = vmatprep.subr.mxu0 0.0
  %v91 = vand.u32 %v24, 4294901760
  %92 = vmatpush1.msra.mxu0 %v91
  %93 = vmatprep.subr.mxu0 0.0
  %v94 = vand.u32 %v25, 4294901760
  %95 = vmatpush1.msra.mxu0 %v94
  %96 = vmatprep.subr.mxu0 0.0
  %v97 = vand.u32 %v26, 4294901760
  %98 = vmatpush1.msra.mxu0 %v97
  %99 = vmatprep.subr.mxu0 0.0
  %100 = vmatpush1.msra.mxu0 0.0
  %101 = vmatprep.subr.mxu0 0.0
  %102 = vmatpush1.msra.mxu0 0.0
  %103 = vmatprep.subr.mxu0 0.0
  %104 = vmatpush1.msra.mxu0 0.0
  %105 = vmatprep.subr.mxu0 0.0
  %106 = vmatpush1.msra.mxu0 0.0
  %107 = vmatprep.subr.mxu0 0.0
  %108 = vmatpush1.msra.mxu0 0.0
  %109 = vmatprep.subr.mxu0 0.0
  %110 = vmatpush1.msra.mxu0 0.0
  %111 = vmatprep.subr.mxu0 0.0
  %112 = vmatpush1.msra.mxu0 0.0
  %113 = vmatprep.subr.mxu0 0.0
  %114 = vmatpush1.msra.mxu0 0.0
  %115 = vmatprep.subr.mxu0 0.0
  %116 = vmatpush1.msra.mxu0 0.0
  %117 = vmatprep.subr.mxu0 0.0
  %118 = vmatpush1.msra.mxu0 0.0
  %119 = vmatprep.subr.mxu0 0.0
  %120 = vmatpush1.msra.mxu0 0.0
  %121 = vmatprep.subr.mxu0 0.0
  %122 = vmatpush1.msra.mxu0 0.0
  %123 = vmatprep.subr.mxu0 0.0
  %124 = vmatpush1.msra.mxu0 0.0
  %125 = vmatprep.subr.mxu0 0.0
  %126 = vmatpush1.msra.mxu0 0.0
  %127 = vmatprep.subr.mxu0 0.0
  %128 = vmatpush1.msra.mxu0 0.0
  %129 = vmatprep.subr.mxu0 0.0
  %130 = vmatpush1.msra.mxu0 0.0
  %131 = vmatprep.mubr.f32.mxu0 0.0
  %v132 = vand.u32 %v43, 4294901760
  %v133 = vsub.f32 %v43, %v132
  %v134 = vand.u32 %v133, 4294901760
  %v135 = vsub.f32 %v133, %v134
  %v136 = vand.u32 %v135, 4294901760
  %137 = vmatmul.mubr.f32.gmra.mrb[0].mxu0 %v136
  %v138 = vpop.f32.mrb[0].mxu0
  %v139 = vadd.f32 0.0, %v138
  %v140 = vpop.f32.mrb[0].mxu0
  %141 = vmatprep.mubr.f32.mxu0 0.0
  %v142 = vand.u32 %v44, 4294901760
  %v143 = vsub.f32 %v44, %v142
  %v144 = vand.u32 %v143, 4294901760
  %v145 = vsub.f32 %v143, %v144
  %v146 = vand.u32 %v145, 4294901760
  %147 = vmatmul.mubr.f32.gmra.mrb[0].mxu0 %v146
  %v148 = vpop.f32.mrb[0].mxu0
  %v149 = vadd.f32 0.0, %v148
  %v150 = vpop.f32.mrb[0].mxu0
  %151 = vmatprep.mubr.f32.mxu0 0.0
  %v152 = vand.u32 %v45, 4294901760
  %v153 = vsub.f32 %v45, %v152
  %v154 = vand.u32 %v153, 4294901760
  %v155 = vsub.f32 %v153, %v154
  %v156 = vand.u32 %v155, 4294901760
  %157 = vmatmul.mubr.f32.gmra.mrb[0].mxu0 %v156
  %v158 = vpop.f32.mrb[0].mxu0
  %v159 = vadd.f32 0.0, %v158
  %v160 = vpop.f32.mrb[0].mxu0
  %161 = vmatprep.mubr.f32.mxu0 0.0
  %v162 = vand.u32 %v46, 4294901760
  %v163 = vsub.f32 %v46, %v162
  %v164 = vand.u32 %v163, 4294901760
  %v165 = vsub.f32 %v163, %v164
  %v166 = vand.u32 %v165, 4294901760
  %167 = vmatmul.mubr.f32.gmra.mrb[0].mxu0 %v166
  %v168 = vpop.f32.mrb[0].mxu0
  %v169 = vadd.f32 0.0, %v168
  %v170 = vpop.f32.mrb[0].mxu0
  %171 = vdwg.mxu0
  %172 = vmatprep.subr.mxu0 0.0
  %v173 = vand.u32 %v11, 4294901760
  %v174 = vsub.f32 %v11, %v173
  %v175 = vand.u32 %v174, 4294901760
  %v176 = vsub.f32 %v174, %v175
  %v177 = vand.u32 %v176, 4294901760
  %178 = vmatpush1.msra.mxu0 %v177
  %179 = vmatprep.subr.mxu0 0.0
  %v180 = vand.u32 %v12, 4294901760
  %v181 = vsub.f32 %v12, %v180
  %v182 = vand.u32 %v181, 4294901760
  %v183 = vsub.f32 %v181, %v182
  %v184 = vand.u32 %v183, 4294901760
  %185 = vmatpush1.msra.mxu0 %v184
  %186 = vmatprep.subr.mxu0 0.0
  %v187 = vand.u32 %v13, 4294901760
  %v188 = vsub.f32 %v13, %v187
  %v189 = vand.u32 %v188, 4294901760
  %v190 = vsub.f32 %v188, %v189
  %v191 = vand.u32 %v190, 4294901760
  %192 = vmatpush1.msra.mxu0 %v191
  %193 = vmatprep.subr.mxu0 0.0
  %v194 = vand.u32 %v14, 4294901760
  %v195 = vsub.f32 %v14, %v194
  %v196 = vand.u32 %v195, 4294901760
  %v197 = vsub.f32 %v195, %v196
  %v198 = vand.u32 %v197, 4294901760
  %199 = vmatpush1.msra.mxu0 %v198
  %200 = vmatprep.subr.mxu0 0.0
  %v201 = vand.u32 %v15, 4294901760
  %v202 = vsub.f32 %v15, %v201
  %v203 = vand.u32 %v202, 4294901760
  %v204 = vsub.f32 %v202, %v203
  %v205 = vand.u32 %v204, 4294901760
  %206 = vmatpush1.msra.mxu0 %v205
  %207 = vmatprep.subr.mxu0 0.0
  %v208 = vand.u32 %v16, 4294901760
  %v209 = vsub.f32 %v16, %v208
  %v210 = vand.u32 %v209, 4294901760
  %v211 = vsub.f32 %v209, %v210
  %v212 = vand.u32 %v211, 4294901760
  %213 = vmatpush1.msra.mxu0 %v212
  %214 = vmatprep.subr.mxu0 0.0
  %v215 = vand.u32 %v17, 4294901760
  %v216 = vsub.f32 %v17, %v215
  %v217 = vand.u32 %v216, 4294901760
  %v218 = vsub.f32 %v216, %v217
  %v219 = vand.u32 %v218, 4294901760
  %220 = vmatpush1.msra.mxu0 %v219
  %221 = vmatprep.subr.mxu0 0.0
  %v222 = vand.u32 %v18, 4294901760
  %v223 = vsub.f32 %v18, %v222
  %v224 = vand.u32 %v223, 4294901760
  %v225 = vsub.f32 %v223, %v224
  %v226 = vand.u32 %v225, 4294901760
  %227 = vmatpush1.msra.mxu0 %v226
  %228 = vmatprep.subr.mxu0 0.0
  %v229 = vand.u32 %v19, 4294901760
  %v230 = vsub.f32 %v19, %v229
  %v231 = vand.u32 %v230, 4294901760
  %v232 = vsub.f32 %v230, %v231
  %v233 = vand.u32 %v232, 4294901760
  %234 = vmatpush1.msra.mxu0 %v233
  %235 = vmatprep.subr.mxu0 0.0
  %v236 = vand.u32 %v20, 4294901760
  %v237 = vsub.f32 %v20, %v236
  %v238 = vand.u32 %v237, 4294901760
  %v239 = vsub.f32 %v237, %v238
  %v240 = vand.u32 %v239, 4294901760
  %241 = vmatpush1.msra.mxu0 %v240
  %242 = vmatprep.subr.mxu0 0.0
  %v243 = vand.u32 %v21, 4294901760
  %v244 = vsub.f32 %v21, %v243
  %v245 = vand.u32 %v244, 4294901760
  %v246 = vsub.f32 %v244, %v245
  %v247 = vand.u32 %v246, 4294901760
  %248 = vmatpush1.msra.mxu0 %v247
  %249 = vmatprep.subr.mxu0 0.0
  %v250 = vand.u32 %v22, 4294901760
  %v251 = vsub.f32 %v22, %v250
  %v252 = vand.u32 %v251, 4294901760
  %v253 = vsub.f32 %v251, %v252
  %v254 = vand.u32 %v253, 4294901760
  %255 = vmatpush1.msra.mxu0 %v254
  %256 = vmatprep.subr.mxu0 0.0
  %v257 = vand.u32 %v23, 4294901760
  %v258 = vsub.f32 %v23, %v257
  %v259 = vand.u32 %v258, 4294901760
  %v260 = vsub.f32 %v258, %v259
  %v261 = vand.u32 %v260, 4294901760
  %262 = vmatpush1.msra.mxu0 %v261
  %263 = vmatprep.subr.mxu0 0.0
  %v264 = vand.u32 %v24, 4294901760
  %v265 = vsub.f32 %v24, %v264
  %v266 = vand.u32 %v265, 4294901760
  %v267 = vsub.f32 %v265, %v266
  %v268 = vand.u32 %v267, 4294901760
  %269 = vmatpush1.msra.mxu0 %v268
  %270 = vmatprep.subr.mxu0 0.0
  %v271 = vand.u32 %v25, 4294901760
  %v272 = vsub.f32 %v25, %v271
  %v273 = vand.u32 %v272, 4294901760
  %v274 = vsub.f32 %v272, %v273
  %v275 = vand.u32 %v274, 4294901760
  %276 = vmatpush1.msra.mxu0 %v275
  %277 = vmatprep.subr.mxu0 0.0
  %v278 = vand.u32 %v26, 4294901760
  %v279 = vsub.f32 %v26, %v278
  %v280 = vand.u32 %v279, 4294901760
  %v281 = vsub.f32 %v279, %v280
  %v282 = vand.u32 %v281, 4294901760
  %283 = vmatpush1.msra.mxu0 %v282
  %284 = vmatprep.subr.mxu0 0.0
  %285 = vmatpush1.msra.mxu0 0.0
  %286 = vmatprep.subr.mxu0 0.0
  %287 = vmatpush1.msra.mxu0 0.0
  %288 = vmatprep.subr.mxu0 0.0
  %289 = vmatpush1.msra.mxu0 0.0
  %290 = vmatprep.subr.mxu0 0.0
  %291 = vmatpush1.msra.mxu0 0.0
  %292 = vmatprep.subr.mxu0 0.0
  %293 = vmatpush1.msra.mxu0 0.0
  %294 = vmatprep.subr.mxu0 0.0
  %295 = vmatpush1.msra.mxu0 0.0
  %296 = vmatprep.subr.mxu0 0.0
  %297 = vmatpush1.msra.mxu0 0.0
  %298 = vmatprep.subr.mxu0 0.0
  %299 = vmatpush1.msra.mxu0 0.0
  %300 = vmatprep.subr.mxu0 0.0
  %301 = vmatpush1.msra.mxu0 0.0
  %302 = vmatprep.subr.mxu0 0.0
  %303 = vmatpush1.msra.mxu0 0.0
  %304 = vmatprep.subr.mxu0 0.0
  %305 = vmatpush1.msra.mxu0 0.0
  %306 = vmatprep.subr.mxu0 0.0
  %307 = vmatpush1.msra.mxu0 0.0
  %308 = vmatprep.subr.mxu0 0.0
  %309 = vmatpush1.msra.mxu0 0.0
  %310 = vmatprep.subr.mxu0 0.0
  %311 = vmatpush1.msra.mxu0 0.0
  %312 = vmatprep.subr.mxu0 0.0
  %313 = vmatpush1.msra.mxu0 0.0
  %314 = vmatprep.subr.mxu0 0.0
  %315 = vmatpush1.msra.mxu0 0.0
  %316 = vmatprep.mubr.f32.mxu0 0.0
  %v317 = vand.u32 %v43, 4294901760
  %318 = vmatmul.mubr.f32.gmra.mrb[0].mxu0 %v317
  %v319 = vpop.f32.mrb[0].mxu0
  %v320 = vadd.f32 %v139, %v319
  %v321 = vpop.f32.mrb[0].mxu0
  %322 = vmatprep.mubr.f32.mxu0 0.0
  %v323 = vand.u32 %v44, 4294901760
  %324 = vmatmul.mubr.f32.gmra.mrb[0].mxu0 %v323
  %v325 = vpop.f32.mrb[0].mxu0
  %v326 = vadd.f32 %v149, %v325
  %v327 = vpop.f32.mrb[0].mxu0
  %328 = vmatprep.mubr.f32.mxu0 0.0
  %v329 = vand.u32 %v45, 4294901760
  %330 = vmatmul.mubr.f32.gmra.mrb[0].mxu0 %v329
  %v331 = vpop.f32.mrb[0].mxu0
  %v332 = vadd.f32 %v159, %v331
  %v333 = vpop.f32.mrb[0].mxu0
  %334 = vmatprep.mubr.f32.mxu0 0.0
  %v335 = vand.u32 %v46, 4294901760
  %336 = vmatmul.mubr.f32.gmra.mrb[0].mxu0 %v335
  %v337 = vpop.f32.mrb[0].mxu0
  %v338 = vadd.f32 %v169, %v337
  %v339 = vpop.f32.mrb[0].mxu0
  %340 = vdwg.mxu0
  %341 = vmatprep.subr.mxu0 0.0
  %v342 = vand.u32 %v11, 4294901760
  %v343 = vsub.f32 %v11, %v342
  %344 = vmatpush1.msra.mxu0 %v343
  %345 = vmatprep.subr.mxu0 0.0
  %v346 = vand.u32 %v12, 4294901760
  %v347 = vsub.f32 %v12, %v346
  %348 = vmatpush1.msra.mxu0 %v347
  %349 = vmatprep.subr.mxu0 0.0
  %v350 = vand.u32 %v13, 4294901760
  %v351 = vsub.f32 %v13, %v350
  %352 = vmatpush1.msra.mxu0 %v351
  %353 = vmatprep.subr.mxu0 0.0
  %v354 = vand.u32 %v14, 4294901760
  %v355 = vsub.f32 %v14, %v354
  %356 = vmatpush1.msra.mxu0 %v355
  %357 = vmatprep.subr.mxu0 0.0
  %v358 = vand.u32 %v15, 4294901760
  %v359 = vsub.f32 %v15, %v358
  %360 = vmatpush1.msra.mxu0 %v359
  %361 = vmatprep.subr.mxu0 0.0
  %v362 = vand.u32 %v16, 4294901760
  %v363 = vsub.f32 %v16, %v362
  %364 = vmatpush1.msra.mxu0 %v363
  %365 = vmatprep.subr.mxu0 0.0
  %v366 = vand.u32 %v17, 4294901760
  %v367 = vsub.f32 %v17, %v366
  %368 = vmatpush1.msra.mxu0 %v367
  %369 = vmatprep.subr.mxu0 0.0
  %v370 = vand.u32 %v18, 4294901760
  %v371 = vsub.f32 %v18, %v370
  %372 = vmatpush1.msra.mxu0 %v371
  %373 = vmatprep.subr.mxu0 0.0
  %v374 = vand.u32 %v19, 4294901760
  %v375 = vsub.f32 %v19, %v374
  %376 = vmatpush1.msra.mxu0 %v375
  %377 = vmatprep.subr.mxu0 0.0
  %v378 = vand.u32 %v20, 4294901760
  %v379 = vsub.f32 %v20, %v378
  %380 = vmatpush1.msra.mxu0 %v379
  %381 = vmatprep.subr.mxu0 0.0
  %v382 = vand.u32 %v21, 4294901760
  %v383 = vsub.f32 %v21, %v382
  %384 = vmatpush1.msra.mxu0 %v383
  %385 = vmatprep.subr.mxu0 0.0
  %v386 = vand.u32 %v22, 4294901760
  %v387 = vsub.f32 %v22, %v386
  %388 = vmatpush1.msra.mxu0 %v387
  %389 = vmatprep.subr.mxu0 0.0
  %v390 = vand.u32 %v23, 4294901760
  %v391 = vsub.f32 %v23, %v390
  %392 = vmatpush1.msra.mxu0 %v391
  %393 = vmatprep.subr.mxu0 0.0
  %v394 = vand.u32 %v24, 4294901760
  %v395 = vsub.f32 %v24, %v394
  %396 = vmatpush1.msra.mxu0 %v395
  %397 = vmatprep.subr.mxu0 0.0
  %v398 = vand.u32 %v25, 4294901760
  %v399 = vsub.f32 %v25, %v398
  %400 = vmatpush1.msra.mxu0 %v399
  %401 = vmatprep.subr.mxu0 0.0
  %v402 = vand.u32 %v26, 4294901760
  %v403 = vsub.f32 %v26, %v402
  %404 = vmatpush1.msra.mxu0 %v403
  %405 = vmatprep.subr.mxu0 0.0
  %406 = vmatpush1.msra.mxu0 0.0
  %407 = vmatprep.subr.mxu0 0.0
  %408 = vmatpush1.msra.mxu0 0.0
  %409 = vmatprep.subr.mxu0 0.0
  %410 = vmatpush1.msra.mxu0 0.0
  %411 = vmatprep.subr.mxu0 0.0
  %412 = vmatpush1.msra.mxu0 0.0
  %413 = vmatprep.subr.mxu0 0.0
  %414 = vmatpush1.msra.mxu0 0.0
  %415 = vmatprep.subr.mxu0 0.0
  %416 = vmatpush1.msra.mxu0 0.0
  %417 = vmatprep.subr.mxu0 0.0
  %418 = vmatpush1.msra.mxu0 0.0
  %419 = vmatprep.subr.mxu0 0.0
  %420 = vmatpush1.msra.mxu0 0.0
  %421 = vmatprep.subr.mxu0 0.0
  %422 = vmatpush1.msra.mxu0 0.0
  %423 = vmatprep.subr.mxu0 0.0
  %424 = vmatpush1.msra.mxu0 0.0
  %425 = vmatprep.subr.mxu0 0.0
  %426 = vmatpush1.msra.mxu0 0.0
  %427 = vmatprep.subr.mxu0 0.0
  %428 = vmatpush1.msra.mxu0 0.0
  %429 = vmatprep.subr.mxu0 0.0
  %430 = vmatpush1.msra.mxu0 0.0
  %431 = vmatprep.subr.mxu0 0.0
  %432 = vmatpush1.msra.mxu0 0.0
  %433 = vmatprep.subr.mxu0 0.0
  %434 = vmatpush1.msra.mxu0 0.0
  %435 = vmatprep.subr.mxu0 0.0
  %436 = vmatpush1.msra.mxu0 0.0
  %437 = vmatprep.mubr.f32.mxu0 0.0
  %v438 = vand.u32 %v43, 4294901760
  %v439 = vsub.f32 %v43, %v438
  %440 = vmatmul.mubr.f32.gmra.mrb[0].mxu0 %v439
  %v441 = vpop.f32.mrb[0].mxu0
  %v442 = vadd.f32 %v320, %v441
  %v443 = vpop.f32.mrb[0].mxu0
  %444 = vmatprep.mubr.f32.mxu0 0.0
  %v445 = vand.u32 %v44, 4294901760
  %v446 = vsub.f32 %v44, %v445
  %447 = vmatmul.mubr.f32.gmra.mrb[0].mxu0 %v446
  %v448 = vpop.f32.mrb[0].mxu0
  %v449 = vadd.f32 %v326, %v448
  %v450 = vpop.f32.mrb[0].mxu0
  %451 = vmatprep.mubr.f32.mxu0 0.0
  %v452 = vand.u32 %v45, 4294901760
  %v453 = vsub.f32 %v45, %v452
  %454 = vmatmul.mubr.f32.gmra.mrb[0].mxu0 %v453
  %v455 = vpop.f32.mrb[0].mxu0
  %v456 = vadd.f32 %v332, %v455
  %v457 = vpop.f32.mrb[0].mxu0
  %458 = vmatprep.mubr.f32.mxu0 0.0
  %v459 = vand.u32 %v46, 4294901760
  %v460 = vsub.f32 %v46, %v459
  %461 = vmatmul.mubr.f32.gmra.mrb[0].mxu0 %v460
  %v462 = vpop.f32.mrb[0].mxu0
  %v463 = vadd.f32 %v338, %v462
  %v464 = vpop.f32.mrb[0].mxu0
  %465 = vdwg.mxu0
  %466 = vmatprep.subr.mxu0 0.0
  %v467 = vand.u32 %v11, 4294901760
  %468 = vmatpush1.msra.mxu0 %v467
  %469 = vmatprep.subr.mxu0 0.0
  %v470 = vand.u32 %v12, 4294901760
  %471 = vmatpush1.msra.mxu0 %v470
  %472 = vmatprep.subr.mxu0 0.0
  %v473 = vand.u32 %v13, 4294901760
  %474 = vmatpush1.msra.mxu0 %v473
  %475 = vmatprep.subr.mxu0 0.0
  %v476 = vand.u32 %v14, 4294901760
  %477 = vmatpush1.msra.mxu0 %v476
  %478 = vmatprep.subr.mxu0 0.0
  %v479 = vand.u32 %v15, 4294901760
  %480 = vmatpush1.msra.mxu0 %v479
  %481 = vmatprep.subr.mxu0 0.0
  %v482 = vand.u32 %v16, 4294901760
  %483 = vmatpush1.msra.mxu0 %v482
  %484 = vmatprep.subr.mxu0 0.0
  %v485 = vand.u32 %v17, 4294901760
  %486 = vmatpush1.msra.mxu0 %v485
  %487 = vmatprep.subr.mxu0 0.0
  %v488 = vand.u32 %v18, 4294901760
  %489 = vmatpush1.msra.mxu0 %v488
  %490 = vmatprep.subr.mxu0 0.0
  %v491 = vand.u32 %v19, 4294901760
  %492 = vmatpush1.msra.mxu0 %v491
  %493 = vmatprep.subr.mxu0 0.0
  %v494 = vand.u32 %v20, 4294901760
  %495 = vmatpush1.msra.mxu0 %v494
  %496 = vmatprep.subr.mxu0 0.0
  %v497 = vand.u32 %v21, 4294901760
  %498 = vmatpush1.msra.mxu0 %v497
  %499 = vmatprep.subr.mxu0 0.0
  %v500 = vand.u32 %v22, 4294901760
  %501 = vmatpush1.msra.mxu0 %v500
  %502 = vmatprep.subr.mxu0 0.0
  %v503 = vand.u32 %v23, 4294901760
  %504 = vmatpush1.msra.mxu0 %v503
  %505 = vmatprep.subr.mxu0 0.0
  %v506 = vand.u32 %v24, 4294901760
  %507 = vmatpush1.msra.mxu0 %v506
  %508 = vmatprep.subr.mxu0 0.0
  %v509 = vand.u32 %v25, 4294901760
  %510 = vmatpush1.msra.mxu0 %v509
  %511 = vmatprep.subr.mxu0 0.0
  %v512 = vand.u32 %v26, 4294901760
  %513 = vmatpush1.msra.mxu0 %v512
  %514 = vmatprep.subr.mxu0 0.0
  %515 = vmatpush1.msra.mxu0 0.0
  %516 = vmatprep.subr.mxu0 0.0
  %517 = vmatpush1.msra.mxu0 0.0
  %518 = vmatprep.subr.mxu0 0.0
  %519 = vmatpush1.msra.mxu0 0.0
  %520 = vmatprep.subr.mxu0 0.0
  %521 = vmatpush1.msra.mxu0 0.0
  %522 = vmatprep.subr.mxu0 0.0
  %523 = vmatpush1.msra.mxu0 0.0
  %524 = vmatprep.subr.mxu0 0.0
  %525 = vmatpush1.msra.mxu0 0.0
  %526 = vmatprep.subr.mxu0 0.0
  %527 = vmatpush1.msra.mxu0 0.0
  %528 = vmatprep.subr.mxu0 0.0
  %529 = vmatpush1.msra.mxu0 0.0
  %530 = vmatprep.subr.mxu0 0.0
  %531 = vmatpush1.msra.mxu0 0.0
  %532 = vmatprep.subr.mxu0 0.0
  %533 = vmatpush1.msra.mxu0 0.0
  %534 = vmatprep.subr.mxu0 0.0
  %535 = vmatpush1.msra.mxu0 0.0
  %536 = vmatprep.subr.mxu0 0.0
  %537 = vmatpush1.msra.mxu0 0.0
  %538 = vmatprep.subr.mxu0 0.0
  %539 = vmatpush1.msra.mxu0 0.0
  %540 = vmatprep.subr.mxu0 0.0
  %541 = vmatpush1.msra.mxu0 0.0
  %542 = vmatprep.subr.mxu0 0.0
  %543 = vmatpush1.msra.mxu0 0.0
  %544 = vmatprep.subr.mxu0 0.0
  %545 = vmatpush1.msra.mxu0 0.0
  %546 = vmatprep.mubr.f32.mxu0 0.0
  %v547 = vand.u32 %v43, 4294901760
  %v548 = vsub.f32 %v43, %v547
  %v549 = vand.u32 %v548, 4294901760
  %550 = vmatmul.mubr.f32.gmra.mrb[0].mxu0 %v549
  %v551 = vpop.f32.mrb[0].mxu0
  %v552 = vadd.f32 %v442, %v551
  %v553 = vpop.f32.mrb[0].mxu0
  %554 = vmatprep.mubr.f32.mxu0 0.0
  %v555 = vand.u32 %v44, 4294901760
  %v556 = vsub.f32 %v44, %v555
  %v557 = vand.u32 %v556, 4294901760
  %558 = vmatmul.mubr.f32.gmra.mrb[0].mxu0 %v557
  %v559 = vpop.f32.mrb[0].mxu0
  %v560 = vadd.f32 %v449, %v559
  %v561 = vpop.f32.mrb[0].mxu0
  %562 = vmatprep.mubr.f32.mxu0 0.0
  %v563 = vand.u32 %v45, 4294901760
  %v564 = vsub.f32 %v45, %v563
  %v565 = vand.u32 %v564, 4294901760
  %566 = vmatmul.mubr.f32.gmra.mrb[0].mxu0 %v565
  %v567 = vpop.f32.mrb[0].mxu0
  %v568 = vadd.f32 %v456, %v567
  %v569 = vpop.f32.mrb[0].mxu0
  %570 = vmatprep.mubr.f32.mxu0 0.0
  %v571 = vand.u32 %v46, 4294901760
  %v572 = vsub.f32 %v46, %v571
  %v573 = vand.u32 %v572, 4294901760
  %574 = vmatmul.mubr.f32.gmra.mrb[0].mxu0 %v573
  %v575 = vpop.f32.mrb[0].mxu0
  %v576 = vadd.f32 %v463, %v575
  %v577 = vpop.f32.mrb[0].mxu0
  %578 = vdwg.mxu0
  %579 = vmatprep.subr.mxu0 0.0
  %v580 = vand.u32 %v11, 4294901760
  %v581 = vsub.f32 %v11, %v580
  %v582 = vand.u32 %v581, 4294901760
  %583 = vmatpush1.msra.mxu0 %v582
  %584 = vmatprep.subr.mxu0 0.0
  %v585 = vand.u32 %v12, 4294901760
  %v586 = vsub.f32 %v12, %v585
  %v587 = vand.u32 %v586, 4294901760
  %588 = vmatpush1.msra.mxu0 %v587
  %589 = vmatprep.subr.mxu0 0.0
  %v590 = vand.u32 %v13, 4294901760
  %v591 = vsub.f32 %v13, %v590
  %v592 = vand.u32 %v591, 4294901760
  %593 = vmatpush1.msra.mxu0 %v592
  %594 = vmatprep.subr.mxu0 0.0
  %v595 = vand.u32 %v14, 4294901760
  %v596 = vsub.f32 %v14, %v595
  %v597 = vand.u32 %v596, 4294901760
  %598 = vmatpush1.msra.mxu0 %v597
  %599 = vmatprep.subr.mxu0 0.0
  %v600 = vand.u32 %v15, 4294901760
  %v601 = vsub.f32 %v15, %v600
  %v602 = vand.u32 %v601, 4294901760
  %603 = vmatpush1.msra.mxu0 %v602
  %604 = vmatprep.subr.mxu0 0.0
  %v605 = vand.u32 %v16, 4294901760
  %v606 = vsub.f32 %v16, %v605
  %v607 = vand.u32 %v606, 4294901760
  %608 = vmatpush1.msra.mxu0 %v607
  %609 = vmatprep.subr.mxu0 0.0
  %v610 = vand.u32 %v17, 4294901760
  %v611 = vsub.f32 %v17, %v610
  %v612 = vand.u32 %v611, 4294901760
  %613 = vmatpush1.msra.mxu0 %v612
  %614 = vmatprep.subr.mxu0 0.0
  %v615 = vand.u32 %v18, 4294901760
  %v616 = vsub.f32 %v18, %v615
  %v617 = vand.u32 %v616, 4294901760
  %618 = vmatpush1.msra.mxu0 %v617
  %619 = vmatprep.subr.mxu0 0.0
  %v620 = vand.u32 %v19, 4294901760
  %v621 = vsub.f32 %v19, %v620
  %v622 = vand.u32 %v621, 4294901760
  %623 = vmatpush1.msra.mxu0 %v622
  %624 = vmatprep.subr.mxu0 0.0
  %v625 = vand.u32 %v20, 4294901760
  %v626 = vsub.f32 %v20, %v625
  %v627 = vand.u32 %v626, 4294901760
  %628 = vmatpush1.msra.mxu0 %v627
  %629 = vmatprep.subr.mxu0 0.0
  %v630 = vand.u32 %v21, 4294901760
  %v631 = vsub.f32 %v21, %v630
  %v632 = vand.u32 %v631, 4294901760
  %633 = vmatpush1.msra.mxu0 %v632
  %634 = vmatprep.subr.mxu0 0.0
  %v635 = vand.u32 %v22, 4294901760
  %v636 = vsub.f32 %v22, %v635
  %v637 = vand.u32 %v636, 4294901760
  %638 = vmatpush1.msra.mxu0 %v637
  %639 = vmatprep.subr.mxu0 0.0
  %v640 = vand.u32 %v23, 4294901760
  %v641 = vsub.f32 %v23, %v640
  %v642 = vand.u32 %v641, 4294901760
  %643 = vmatpush1.msra.mxu0 %v642
  %644 = vmatprep.subr.mxu0 0.0
  %v645 = vand.u32 %v24, 4294901760
  %v646 = vsub.f32 %v24, %v645
  %v647 = vand.u32 %v646, 4294901760
  %648 = vmatpush1.msra.mxu0 %v647
  %649 = vmatprep.subr.mxu0 0.0
  %v650 = vand.u32 %v25, 4294901760
  %v651 = vsub.f32 %v25, %v650
  %v652 = vand.u32 %v651, 4294901760
  %653 = vmatpush1.msra.mxu0 %v652
  %654 = vmatprep.subr.mxu0 0.0
  %v655 = vand.u32 %v26, 4294901760
  %v656 = vsub.f32 %v26, %v655
  %v657 = vand.u32 %v656, 4294901760
  %658 = vmatpush1.msra.mxu0 %v657
  %659 = vmatprep.subr.mxu0 0.0
  %660 = vmatpush1.msra.mxu0 0.0
  %661 = vmatprep.subr.mxu0 0.0
  %662 = vmatpush1.msra.mxu0 0.0
  %663 = vmatprep.subr.mxu0 0.0
  %664 = vmatpush1.msra.mxu0 0.0
  %665 = vmatprep.subr.mxu0 0.0
  %666 = vmatpush1.msra.mxu0 0.0
  %667 = vmatprep.subr.mxu0 0.0
  %668 = vmatpush1.msra.mxu0 0.0
  %669 = vmatprep.subr.mxu0 0.0
  %670 = vmatpush1.msra.mxu0 0.0
  %671 = vmatprep.subr.mxu0 0.0
  %672 = vmatpush1.msra.mxu0 0.0
  %673 = vmatprep.subr.mxu0 0.0
  %674 = vmatpush1.msra.mxu0 0.0
  %675 = vmatprep.subr.mxu0 0.0
  %676 = vmatpush1.msra.mxu0 0.0
  %677 = vmatprep.subr.mxu0 0.0
  %678 = vmatpush1.msra.mxu0 0.0
  %679 = vmatprep.subr.mxu0 0.0
  %680 = vmatpush1.msra.mxu0 0.0
  %681 = vmatprep.subr.mxu0 0.0
  %682 = vmatpush1.msra.mxu0 0.0
  %683 = vmatprep.subr.mxu0 0.0
  %684 = vmatpush1.msra.mxu0 0.0
  %685 = vmatprep.subr.mxu0 0.0
  %686 = vmatpush1.msra.mxu0 0.0
  %687 = vmatprep.subr.mxu0 0.0
  %688 = vmatpush1.msra.mxu0 0.0
  %689 = vmatprep.subr.mxu0 0.0
  %690 = vmatpush1.msra.mxu0 0.0
  %691 = vmatprep.mubr.f32.mxu0 0.0
  %v692 = vand.u32 %v43, 4294901760
  %693 = vmatmul.mubr.f32.gmra.mrb[0].mxu0 %v692
  %v694 = vpop.f32.mrb[0].mxu0
  %v695 = vadd.f32 %v552, %v694
  %v696 = vpop.f32.mrb[0].mxu0
  %697 = vmatprep.mubr.f32.mxu0 0.0
  %v698 = vand.u32 %v44, 4294901760
  %699 = vmatmul.mubr.f32.gmra.mrb[0].mxu0 %v698
  %v700 = vpop.f32.mrb[0].mxu0
  %v701 = vadd.f32 %v560, %v700
  %v702 = vpop.f32.mrb[0].mxu0
  %703 = vmatprep.mubr.f32.mxu0 0.0
  %v704 = vand.u32 %v45, 4294901760
  %705 = vmatmul.mubr.f32.gmra.mrb[0].mxu0 %v704
  %v706 = vpop.f32.mrb[0].mxu0
  %v707 = vadd.f32 %v568, %v706
  %v708 = vpop.f32.mrb[0].mxu0
  %709 = vmatprep.mubr.f32.mxu0 0.0
  %v710 = vand.u32 %v46, 4294901760
  %711 = vmatmul.mubr.f32.gmra.mrb[0].mxu0 %v710
  %v712 = vpop.f32.mrb[0].mxu0
  %v713 = vadd.f32 %v576, %v712
  %v714 = vpop.f32.mrb[0].mxu0
  %715 = vdwg.mxu0
  %716 = vmatprep.subr.mxu0 0.0
  %v717 = vand.u32 %v11, 4294901760
  %718 = vmatpush1.msra.mxu0 %v717
  %719 = vmatprep.subr.mxu0 0.0
  %v720 = vand.u32 %v12, 4294901760
  %721 = vmatpush1.msra.mxu0 %v720
  %722 = vmatprep.subr.mxu0 0.0
  %v723 = vand.u32 %v13, 4294901760
  %724 = vmatpush1.msra.mxu0 %v723
  %725 = vmatprep.subr.mxu0 0.0
  %v726 = vand.u32 %v14, 4294901760
  %727 = vmatpush1.msra.mxu0 %v726
  %728 = vmatprep.subr.mxu0 0.0
  %v729 = vand.u32 %v15, 4294901760
  %730 = vmatpush1.msra.mxu0 %v729
  %731 = vmatprep.subr.mxu0 0.0
  %v732 = vand.u32 %v16, 4294901760
  %733 = vmatpush1.msra.mxu0 %v732
  %734 = vmatprep.subr.mxu0 0.0
  %v735 = vand.u32 %v17, 4294901760
  %736 = vmatpush1.msra.mxu0 %v735
  %737 = vmatprep.subr.mxu0 0.0
  %v738 = vand.u32 %v18, 4294901760
  %739 = vmatpush1.msra.mxu0 %v738
  %740 = vmatprep.subr.mxu0 0.0
  %v741 = vand.u32 %v19, 4294901760
  %742 = vmatpush1.msra.mxu0 %v741
  %743 = vmatprep.subr.mxu0 0.0
  %v744 = vand.u32 %v20, 4294901760
  %745 = vmatpush1.msra.mxu0 %v744
  %746 = vmatprep.subr.mxu0 0.0
  %v747 = vand.u32 %v21, 4294901760
  %748 = vmatpush1.msra.mxu0 %v747
  %749 = vmatprep.subr.mxu0 0.0
  %v750 = vand.u32 %v22, 4294901760
  %751 = vmatpush1.msra.mxu0 %v750
  %752 = vmatprep.subr.mxu0 0.0
  %v753 = vand.u32 %v23, 4294901760
  %754 = vmatpush1.msra.mxu0 %v753
  %755 = vmatprep.subr.mxu0 0.0
  %v756 = vand.u32 %v24, 4294901760
  %757 = vmatpush1.msra.mxu0 %v756
  %758 = vmatprep.subr.mxu0 0.0
  %v759 = vand.u32 %v25, 4294901760
  %760 = vmatpush1.msra.mxu0 %v759
  %761 = vmatprep.subr.mxu0 0.0
  %v762 = vand.u32 %v26, 4294901760
  %763 = vmatpush1.msra.mxu0 %v762
  %764 = vmatprep.subr.mxu0 0.0
  %765 = vmatpush1.msra.mxu0 0.0
  %766 = vmatprep.subr.mxu0 0.0
  %767 = vmatpush1.msra.mxu0 0.0
  %768 = vmatprep.subr.mxu0 0.0
  %769 = vmatpush1.msra.mxu0 0.0
  %770 = vmatprep.subr.mxu0 0.0
  %771 = vmatpush1.msra.mxu0 0.0
  %772 = vmatprep.subr.mxu0 0.0
  %773 = vmatpush1.msra.mxu0 0.0
  %774 = vmatprep.subr.mxu0 0.0
  %775 = vmatpush1.msra.mxu0 0.0
  %776 = vmatprep.subr.mxu0 0.0
  %777 = vmatpush1.msra.mxu0 0.0
  %778 = vmatprep.subr.mxu0 0.0
  %779 = vmatpush1.msra.mxu0 0.0
  %780 = vmatprep.subr.mxu0 0.0
  %781 = vmatpush1.msra.mxu0 0.0
  %782 = vmatprep.subr.mxu0 0.0
  %783 = vmatpush1.msra.mxu0 0.0
  %784 = vmatprep.subr.mxu0 0.0
  %785 = vmatpush1.msra.mxu0 0.0
  %786 = vmatprep.subr.mxu0 0.0
  %787 = vmatpush1.msra.mxu0 0.0
  %788 = vmatprep.subr.mxu0 0.0
  %789 = vmatpush1.msra.mxu0 0.0
  %790 = vmatprep.subr.mxu0 0.0
  %791 = vmatpush1.msra.mxu0 0.0
  %792 = vmatprep.subr.mxu0 0.0
  %793 = vmatpush1.msra.mxu0 0.0
  %794 = vmatprep.subr.mxu0 0.0
  %795 = vmatpush1.msra.mxu0 0.0
  %796 = vmatprep.mubr.f32.mxu0 0.0
  %v797 = vand.u32 %v43, 4294901760
  %798 = vmatmul.mubr.f32.gmra.mrb[0].mxu0 %v797
  %v799 = vpop.f32.mrb[0].mxu0
  %v800 = vadd.f32 %v695, %v799
  %v801 = vpop.f32.mrb[0].mxu0
  %802 = vmatprep.mubr.f32.mxu0 0.0
  %v803 = vand.u32 %v44, 4294901760
  %804 = vmatmul.mubr.f32.gmra.mrb[0].mxu0 %v803
  %v805 = vpop.f32.mrb[0].mxu0
  %v806 = vadd.f32 %v701, %v805
  %v807 = vpop.f32.mrb[0].mxu0
  %808 = vmatprep.mubr.f32.mxu0 0.0
  %v809 = vand.u32 %v45, 4294901760
  %810 = vmatmul.mubr.f32.gmra.mrb[0].mxu0 %v809
  %v811 = vpop.f32.mrb[0].mxu0
  %v812 = vadd.f32 %v707, %v811
  %v813 = vpop.f32.mrb[0].mxu0
  %814 = vmatprep.mubr.f32.mxu0 0.0
  %v815 = vand.u32 %v46, 4294901760
  %816 = vmatmul.mubr.f32.gmra.mrb[0].mxu0 %v815
  %v817 = vpop.f32.mrb[0].mxu0
  %v818 = vadd.f32 %v713, %v817
  %v819 = vpop.f32.mrb[0].mxu0
  %820 = vdwg.mxu0
  %821 = vmatprep.subr.mxu0 0.0
  %v822 = vand.u32 %v27, 4294901760
  %823 = vmatpush1.msra.mxu0 %v822
  %824 = vmatprep.subr.mxu0 0.0
  %v825 = vand.u32 %v28, 4294901760
  %826 = vmatpush1.msra.mxu0 %v825
  %827 = vmatprep.subr.mxu0 0.0
  %v828 = vand.u32 %v29, 4294901760
  %829 = vmatpush1.msra.mxu0 %v828
  %830 = vmatprep.subr.mxu0 0.0
  %v831 = vand.u32 %v30, 4294901760
  %832 = vmatpush1.msra.mxu0 %v831
  %833 = vmatprep.subr.mxu0 0.0
  %v834 = vand.u32 %v31, 4294901760
  %835 = vmatpush1.msra.mxu0 %v834
  %836 = vmatprep.subr.mxu0 0.0
  %v837 = vand.u32 %v32, 4294901760
  %838 = vmatpush1.msra.mxu0 %v837
  %839 = vmatprep.subr.mxu0 0.0
  %v840 = vand.u32 %v33, 4294901760
  %841 = vmatpush1.msra.mxu0 %v840
  %842 = vmatprep.subr.mxu0 0.0
  %v843 = vand.u32 %v34, 4294901760
  %844 = vmatpush1.msra.mxu0 %v843
  %845 = vmatprep.subr.mxu0 0.0
  %v846 = vand.u32 %v35, 4294901760
  %847 = vmatpush1.msra.mxu0 %v846
  %848 = vmatprep.subr.mxu0 0.0
  %v849 = vand.u32 %v36, 4294901760
  %850 = vmatpush1.msra.mxu0 %v849
  %851 = vmatprep.subr.mxu0 0.0
  %v852 = vand.u32 %v37, 4294901760
  %853 = vmatpush1.msra.mxu0 %v852
  %854 = vmatprep.subr.mxu0 0.0
  %v855 = vand.u32 %v38, 4294901760
  %856 = vmatpush1.msra.mxu0 %v855
  %857 = vmatprep.subr.mxu0 0.0
  %v858 = vand.u32 %v39, 4294901760
  %859 = vmatpush1.msra.mxu0 %v858
  %860 = vmatprep.subr.mxu0 0.0
  %v861 = vand.u32 %v40, 4294901760
  %862 = vmatpush1.msra.mxu0 %v861
  %863 = vmatprep.subr.mxu0 0.0
  %v864 = vand.u32 %v41, 4294901760
  %865 = vmatpush1.msra.mxu0 %v864
  %866 = vmatprep.subr.mxu0 0.0
  %v867 = vand.u32 %v42, 4294901760
  %868 = vmatpush1.msra.mxu0 %v867
  %869 = vmatprep.subr.mxu0 0.0
  %870 = vmatpush1.msra.mxu0 0.0
  %871 = vmatprep.subr.mxu0 0.0
  %872 = vmatpush1.msra.mxu0 0.0
  %873 = vmatprep.subr.mxu0 0.0
  %874 = vmatpush1.msra.mxu0 0.0
  %875 = vmatprep.subr.mxu0 0.0
  %876 = vmatpush1.msra.mxu0 0.0
  %877 = vmatprep.subr.mxu0 0.0
  %878 = vmatpush1.msra.mxu0 0.0
  %879 = vmatprep.subr.mxu0 0.0
  %880 = vmatpush1.msra.mxu0 0.0
  %881 = vmatprep.subr.mxu0 0.0
  %882 = vmatpush1.msra.mxu0 0.0
  %883 = vmatprep.subr.mxu0 0.0
  %884 = vmatpush1.msra.mxu0 0.0
  %885 = vmatprep.subr.mxu0 0.0
  %886 = vmatpush1.msra.mxu0 0.0
  %887 = vmatprep.subr.mxu0 0.0
  %888 = vmatpush1.msra.mxu0 0.0
  %889 = vmatprep.subr.mxu0 0.0
  %890 = vmatpush1.msra.mxu0 0.0
  %891 = vmatprep.subr.mxu0 0.0
  %892 = vmatpush1.msra.mxu0 0.0
  %893 = vmatprep.subr.mxu0 0.0
  %894 = vmatpush1.msra.mxu0 0.0
  %895 = vmatprep.subr.mxu0 0.0
  %896 = vmatpush1.msra.mxu0 0.0
  %897 = vmatprep.subr.mxu0 0.0
  %898 = vmatpush1.msra.mxu0 0.0
  %899 = vmatprep.subr.mxu0 0.0
  %900 = vmatpush1.msra.mxu0 0.0
  %901 = vmatprep.mubr.f32.mxu0 0.0
  %v902 = vand.u32 %v47, 4294901760
  %v903 = vsub.f32 %v47, %v902
  %v904 = vand.u32 %v903, 4294901760
  %v905 = vsub.f32 %v903, %v904
  %v906 = vand.u32 %v905, 4294901760
  %907 = vmatmul.mubr.f32.gmra.mrb[0].mxu0 %v906
  %v908 = vpop.f32.mrb[0].mxu0
  %v909 = vadd.f32 0.0, %v908
  %v910 = vpop.f32.mrb[0].mxu0
  %911 = vmatprep.mubr.f32.mxu0 0.0
  %v912 = vand.u32 %v48, 4294901760
  %v913 = vsub.f32 %v48, %v912
  %v914 = vand.u32 %v913, 4294901760
  %v915 = vsub.f32 %v913, %v914
  %v916 = vand.u32 %v915, 4294901760
  %917 = vmatmul.mubr.f32.gmra.mrb[0].mxu0 %v916
  %v918 = vpop.f32.mrb[0].mxu0
  %v919 = vadd.f32 0.0, %v918
  %v920 = vpop.f32.mrb[0].mxu0
  %921 = vmatprep.mubr.f32.mxu0 0.0
  %v922 = vand.u32 %v49, 4294901760
  %v923 = vsub.f32 %v49, %v922
  %v924 = vand.u32 %v923, 4294901760
  %v925 = vsub.f32 %v923, %v924
  %v926 = vand.u32 %v925, 4294901760
  %927 = vmatmul.mubr.f32.gmra.mrb[0].mxu0 %v926
  %v928 = vpop.f32.mrb[0].mxu0
  %v929 = vadd.f32 0.0, %v928
  %v930 = vpop.f32.mrb[0].mxu0
  %931 = vmatprep.mubr.f32.mxu0 0.0
  %v932 = vand.u32 %v50, 4294901760
  %v933 = vsub.f32 %v50, %v932
  %v934 = vand.u32 %v933, 4294901760
  %v935 = vsub.f32 %v933, %v934
  %v936 = vand.u32 %v935, 4294901760
  %937 = vmatmul.mubr.f32.gmra.mrb[0].mxu0 %v936
  %v938 = vpop.f32.mrb[0].mxu0
  %v939 = vadd.f32 0.0, %v938
  %v940 = vpop.f32.mrb[0].mxu0
  %941 = vdwg.mxu0
  %942 = vmatprep.subr.mxu0 0.0
  %v943 = vand.u32 %v27, 4294901760
  %v944 = vsub.f32 %v27, %v943
  %v945 = vand.u32 %v944, 4294901760
  %v946 = vsub.f32 %v944, %v945
  %v947 = vand.u32 %v946, 4294901760
  %948 = vmatpush1.msra.mxu0 %v947
  %949 = vmatprep.subr.mxu0 0.0
  %v950 = vand.u32 %v28, 4294901760
  %v951 = vsub.f32 %v28, %v950
  %v952 = vand.u32 %v951, 4294901760
  %v953 = vsub.f32 %v951, %v952
  %v954 = vand.u32 %v953, 4294901760
  %955 = vmatpush1.msra.mxu0 %v954
  %956 = vmatprep.subr.mxu0 0.0
  %v957 = vand.u32 %v29, 4294901760
  %v958 = vsub.f32 %v29, %v957
  %v959 = vand.u32 %v958, 4294901760
  %v960 = vsub.f32 %v958, %v959
  %v961 = vand.u32 %v960, 4294901760
  %962 = vmatpush1.msra.mxu0 %v961
  %963 = vmatprep.subr.mxu0 0.0
  %v964 = vand.u32 %v30, 4294901760
  %v965 = vsub.f32 %v30, %v964
  %v966 = vand.u32 %v965, 4294901760
  %v967 = vsub.f32 %v965, %v966
  %v968 = vand.u32 %v967, 4294901760
  %969 = vmatpush1.msra.mxu0 %v968
  %970 = vmatprep.subr.mxu0 0.0
  %v971 = vand.u32 %v31, 4294901760
  %v972 = vsub.f32 %v31, %v971
  %v973 = vand.u32 %v972, 4294901760
  %v974 = vsub.f32 %v972, %v973
  %v975 = vand.u32 %v974, 4294901760
  %976 = vmatpush1.msra.mxu0 %v975
  %977 = vmatprep.subr.mxu0 0.0
  %v978 = vand.u32 %v32, 4294901760
  %v979 = vsub.f32 %v32, %v978
  %v980 = vand.u32 %v979, 4294901760
  %v981 = vsub.f32 %v979, %v980
  %v982 = vand.u32 %v981, 4294901760
  %983 = vmatpush1.msra.mxu0 %v982
  %984 = vmatprep.subr.mxu0 0.0
  %v985 = vand.u32 %v33, 4294901760
  %v986 = vsub.f32 %v33, %v985
  %v987 = vand.u32 %v986, 4294901760
  %v988 = vsub.f32 %v986, %v987
  %v989 = vand.u32 %v988, 4294901760
  %990 = vmatpush1.msra.mxu0 %v989
  %991 = vmatprep.subr.mxu0 0.0
  %v992 = vand.u32 %v34, 4294901760
  %v993 = vsub.f32 %v34, %v992
  %v994 = vand.u32 %v993, 4294901760
  %v995 = vsub.f32 %v993, %v994
  %v996 = vand.u32 %v995, 4294901760
  %997 = vmatpush1.msra.mxu0 %v996
  %998 = vmatprep.subr.mxu0 0.0
  %v999 = vand.u32 %v35, 4294901760
  %v1000 = vsub.f32 %v35, %v999
  %v1001 = vand.u32 %v1000, 4294901760
  %v1002 = vsub.f32 %v1000, %v1001
  %v1003 = vand.u32 %v1002, 4294901760
  %1004 = vmatpush1.msra.mxu0 %v1003
  %1005 = vmatprep.subr.mxu0 0.0
  %v1006 = vand.u32 %v36, 4294901760
  %v1007 = vsub.f32 %v36, %v1006
  %v1008 = vand.u32 %v1007, 4294901760
  %v1009 = vsub.f32 %v1007, %v1008
  %v1010 = vand.u32 %v1009, 4294901760
  %1011 = vmatpush1.msra.mxu0 %v1010
  %1012 = vmatprep.subr.mxu0 0.0
  %v1013 = vand.u32 %v37, 4294901760
  %v1014 = vsub.f32 %v37, %v1013
  %v1015 = vand.u32 %v1014, 4294901760
  %v1016 = vsub.f32 %v1014, %v1015
  %v1017 = vand.u32 %v1016, 4294901760
  %1018 = vmatpush1.msra.mxu0 %v1017
  %1019 = vmatprep.subr.mxu0 0.0
  %v1020 = vand.u32 %v38, 4294901760
  %v1021 = vsub.f32 %v38, %v1020
  %v1022 = vand.u32 %v1021, 4294901760
  %v1023 = vsub.f32 %v1021, %v1022
  %v1024 = vand.u32 %v1023, 4294901760
  %1025 = vmatpush1.msra.mxu0 %v1024
  %1026 = vmatprep.subr.mxu0 0.0
  %v1027 = vand.u32 %v39, 4294901760
  %v1028 = vsub.f32 %v39, %v1027
  %v1029 = vand.u32 %v1028, 4294901760
  %v1030 = vsub.f32 %v1028, %v1029
  %v1031 = vand.u32 %v1030, 4294901760
  %1032 = vmatpush1.msra.mxu0 %v1031
  %1033 = vmatprep.subr.mxu0 0.0
  %v1034 = vand.u32 %v40, 4294901760
  %v1035 = vsub.f32 %v40, %v1034
  %v1036 = vand.u32 %v1035, 4294901760
  %v1037 = vsub.f32 %v1035, %v1036
  %v1038 = vand.u32 %v1037, 4294901760
  %1039 = vmatpush1.msra.mxu0 %v1038
  %1040 = vmatprep.subr.mxu0 0.0
  %v1041 = vand.u32 %v41, 4294901760
  %v1042 = vsub.f32 %v41, %v1041
  %v1043 = vand.u32 %v1042, 4294901760
  %v1044 = vsub.f32 %v1042, %v1043
  %v1045 = vand.u32 %v1044, 4294901760
  %1046 = vmatpush1.msra.mxu0 %v1045
  %1047 = vmatprep.subr.mxu0 0.0
  %v1048 = vand.u32 %v42, 4294901760
  %v1049 = vsub.f32 %v42, %v1048
  %v1050 = vand.u32 %v1049, 4294901760
  %v1051 = vsub.f32 %v1049, %v1050
  %v1052 = vand.u32 %v1051, 4294901760
  %1053 = vmatpush1.msra.mxu0 %v1052
  %1054 = vmatprep.subr.mxu0 0.0
  %1055 = vmatpush1.msra.mxu0 0.0
  %1056 = vmatprep.subr.mxu0 0.0
  %1057 = vmatpush1.msra.mxu0 0.0
  %1058 = vmatprep.subr.mxu0 0.0
  %1059 = vmatpush1.msra.mxu0 0.0
  %1060 = vmatprep.subr.mxu0 0.0
  %1061 = vmatpush1.msra.mxu0 0.0
  %1062 = vmatprep.subr.mxu0 0.0
  %1063 = vmatpush1.msra.mxu0 0.0
  %1064 = vmatprep.subr.mxu0 0.0
  %1065 = vmatpush1.msra.mxu0 0.0
  %1066 = vmatprep.subr.mxu0 0.0
  %1067 = vmatpush1.msra.mxu0 0.0
  %1068 = vmatprep.subr.mxu0 0.0
  %1069 = vmatpush1.msra.mxu0 0.0
  %1070 = vmatprep.subr.mxu0 0.0
  %1071 = vmatpush1.msra.mxu0 0.0
  %1072 = vmatprep.subr.mxu0 0.0
  %1073 = vmatpush1.msra.mxu0 0.0
  %1074 = vmatprep.subr.mxu0 0.0
  %1075 = vmatpush1.msra.mxu0 0.0
  %1076 = vmatprep.subr.mxu0 0.0
  %1077 = vmatpush1.msra.mxu0 0.0
  %1078 = vmatprep.subr.mxu0 0.0
  %1079 = vmatpush1.msra.mxu0 0.0
  %1080 = vmatprep.subr.mxu0 0.0
  %1081 = vmatpush1.msra.mxu0 0.0
  %1082 = vmatprep.subr.mxu0 0.0
  %1083 = vmatpush1.msra.mxu0 0.0
  %1084 = vmatprep.subr.mxu0 0.0
  %1085 = vmatpush1.msra.mxu0 0.0
  %1086 = vmatprep.mubr.f32.mxu0 0.0
  %v1087 = vand.u32 %v47, 4294901760
  %1088 = vmatmul.mubr.f32.gmra.mrb[0].mxu0 %v1087
  %v1089 = vpop.f32.mrb[0].mxu0
  %v1090 = vadd.f32 %v909, %v1089
  %v1091 = vpop.f32.mrb[0].mxu0
  %1092 = vmatprep.mubr.f32.mxu0 0.0
  %v1093 = vand.u32 %v48, 4294901760
  %1094 = vmatmul.mubr.f32.gmra.mrb[0].mxu0 %v1093
  %v1095 = vpop.f32.mrb[0].mxu0
  %v1096 = vadd.f32 %v919, %v1095
  %v1097 = vpop.f32.mrb[0].mxu0
  %1098 = vmatprep.mubr.f32.mxu0 0.0
  %v1099 = vand.u32 %v49, 4294901760
  %1100 = vmatmul.mubr.f32.gmra.mrb[0].mxu0 %v1099
  %v1101 = vpop.f32.mrb[0].mxu0
  %v1102 = vadd.f32 %v929, %v1101
  %v1103 = vpop.f32.mrb[0].mxu0
  %1104 = vmatprep.mubr.f32.mxu0 0.0
  %v1105 = vand.u32 %v50, 4294901760
  %1106 = vmatmul.mubr.f32.gmra.mrb[0].mxu0 %v1105
  %v1107 = vpop.f32.mrb[0].mxu0
  %v1108 = vadd.f32 %v939, %v1107
  %v1109 = vpop.f32.mrb[0].mxu0
  %1110 = vdwg.mxu0
  %1111 = vmatprep.subr.mxu0 0.0
  %v1112 = vand.u32 %v27, 4294901760
  %v1113 = vsub.f32 %v27, %v1112
  %1114 = vmatpush1.msra.mxu0 %v1113
  %1115 = vmatprep.subr.mxu0 0.0
  %v1116 = vand.u32 %v28, 4294901760
  %v1117 = vsub.f32 %v28, %v1116
  %1118 = vmatpush1.msra.mxu0 %v1117
  %1119 = vmatprep.subr.mxu0 0.0
  %v1120 = vand.u32 %v29, 4294901760
  %v1121 = vsub.f32 %v29, %v1120
  %1122 = vmatpush1.msra.mxu0 %v1121
  %1123 = vmatprep.subr.mxu0 0.0
  %v1124 = vand.u32 %v30, 4294901760
  %v1125 = vsub.f32 %v30, %v1124
  %1126 = vmatpush1.msra.mxu0 %v1125
  %1127 = vmatprep.subr.mxu0 0.0
  %v1128 = vand.u32 %v31, 4294901760
  %v1129 = vsub.f32 %v31, %v1128
  %1130 = vmatpush1.msra.mxu0 %v1129
  %1131 = vmatprep.subr.mxu0 0.0
  %v1132 = vand.u32 %v32, 4294901760
  %v1133 = vsub.f32 %v32, %v1132
  %1134 = vmatpush1.msra.mxu0 %v1133
  %1135 = vmatprep.subr.mxu0 0.0
  %v1136 = vand.u32 %v33, 4294901760
  %v1137 = vsub.f32 %v33, %v1136
  %1138 = vmatpush1.msra.mxu0 %v1137
  %1139 = vmatprep.subr.mxu0 0.0
  %v1140 = vand.u32 %v34, 4294901760
  %v1141 = vsub.f32 %v34, %v1140
  %1142 = vmatpush1.msra.mxu0 %v1141
  %1143 = vmatprep.subr.mxu0 0.0
  %v1144 = vand.u32 %v35, 4294901760
  %v1145 = vsub.f32 %v35, %v1144
  %1146 = vmatpush1.msra.mxu0 %v1145
  %1147 = vmatprep.subr.mxu0 0.0
  %v1148 = vand.u32 %v36, 4294901760
  %v1149 = vsub.f32 %v36, %v1148
  %1150 = vmatpush1.msra.mxu0 %v1149
  %1151 = vmatprep.subr.mxu0 0.0
  %v1152 = vand.u32 %v37, 4294901760
  %v1153 = vsub.f32 %v37, %v1152
  %1154 = vmatpush1.msra.mxu0 %v1153
  %1155 = vmatprep.subr.mxu0 0.0
  %v1156 = vand.u32 %v38, 4294901760
  %v1157 = vsub.f32 %v38, %v1156
  %1158 = vmatpush1.msra.mxu0 %v1157
  %1159 = vmatprep.subr.mxu0 0.0
  %v1160 = vand.u32 %v39, 4294901760
  %v1161 = vsub.f32 %v39, %v1160
  %1162 = vmatpush1.msra.mxu0 %v1161
  %1163 = vmatprep.subr.mxu0 0.0
  %v1164 = vand.u32 %v40, 4294901760
  %v1165 = vsub.f32 %v40, %v1164
  %1166 = vmatpush1.msra.mxu0 %v1165
  %1167 = vmatprep.subr.mxu0 0.0
  %v1168 = vand.u32 %v41, 4294901760
  %v1169 = vsub.f32 %v41, %v1168
  %1170 = vmatpush1.msra.mxu0 %v1169
  %1171 = vmatprep.subr.mxu0 0.0
  %v1172 = vand.u32 %v42, 4294901760
  %v1173 = vsub.f32 %v42, %v1172
  %1174 = vmatpush1.msra.mxu0 %v1173
  %1175 = vmatprep.subr.mxu0 0.0
  %1176 = vmatpush1.msra.mxu0 0.0
  %1177 = vmatprep.subr.mxu0 0.0
  %1178 = vmatpush1.msra.mxu0 0.0
  %1179 = vmatprep.subr.mxu0 0.0
  %1180 = vmatpush1.msra.mxu0 0.0
  %1181 = vmatprep.subr.mxu0 0.0
  %1182 = vmatpush1.msra.mxu0 0.0
  %1183 = vmatprep.subr.mxu0 0.0
  %1184 = vmatpush1.msra.mxu0 0.0
  %1185 = vmatprep.subr.mxu0 0.0
  %1186 = vmatpush1.msra.mxu0 0.0
  %1187 = vmatprep.subr.mxu0 0.0
  %1188 = vmatpush1.msra.mxu0 0.0
  %1189 = vmatprep.subr.mxu0 0.0
  %1190 = vmatpush1.msra.mxu0 0.0
  %1191 = vmatprep.subr.mxu0 0.0
  %1192 = vmatpush1.msra.mxu0 0.0
  %1193 = vmatprep.subr.mxu0 0.0
  %1194 = vmatpush1.msra.mxu0 0.0
  %1195 = vmatprep.subr.mxu0 0.0
  %1196 = vmatpush1.msra.mxu0 0.0
  %1197 = vmatprep.subr.mxu0 0.0
  %1198 = vmatpush1.msra.mxu0 0.0
  %1199 = vmatprep.subr.mxu0 0.0
  %1200 = vmatpush1.msra.mxu0 0.0
  %1201 = vmatprep.subr.mxu0 0.0
  %1202 = vmatpush1.msra.mxu0 0.0
  %1203 = vmatprep.subr.mxu0 0.0
  %1204 = vmatpush1.msra.mxu0 0.0
  %1205 = vmatprep.subr.mxu0 0.0
  %1206 = vmatpush1.msra.mxu0 0.0
  %1207 = vmatprep.mubr.f32.mxu0 0.0
  %v1208 = vand.u32 %v47, 4294901760
  %v1209 = vsub.f32 %v47, %v1208
  %1210 = vmatmul.mubr.f32.gmra.mrb[0].mxu0 %v1209
  %v1211 = vpop.f32.mrb[0].mxu0
  %v1212 = vadd.f32 %v1090, %v1211
  %v1213 = vpop.f32.mrb[0].mxu0
  %1214 = vmatprep.mubr.f32.mxu0 0.0
  %v1215 = vand.u32 %v48, 4294901760
  %v1216 = vsub.f32 %v48, %v1215
  %1217 = vmatmul.mubr.f32.gmra.mrb[0].mxu0 %v1216
  %v1218 = vpop.f32.mrb[0].mxu0
  %v1219 = vadd.f32 %v1096, %v1218
  %v1220 = vpop.f32.mrb[0].mxu0
  %1221 = vmatprep.mubr.f32.mxu0 0.0
  %v1222 = vand.u32 %v49, 4294901760
  %v1223 = vsub.f32 %v49, %v1222
  %1224 = vmatmul.mubr.f32.gmra.mrb[0].mxu0 %v1223
  %v1225 = vpop.f32.mrb[0].mxu0
  %v1226 = vadd.f32 %v1102, %v1225
  %v1227 = vpop.f32.mrb[0].mxu0
  %1228 = vmatprep.mubr.f32.mxu0 0.0
  %v1229 = vand.u32 %v50, 4294901760
  %v1230 = vsub.f32 %v50, %v1229
  %1231 = vmatmul.mubr.f32.gmra.mrb[0].mxu0 %v1230
  %v1232 = vpop.f32.mrb[0].mxu0
  %v1233 = vadd.f32 %v1108, %v1232
  %v1234 = vpop.f32.mrb[0].mxu0
  %1235 = vdwg.mxu0
  %1236 = vmatprep.subr.mxu0 0.0
  %v1237 = vand.u32 %v27, 4294901760
  %1238 = vmatpush1.msra.mxu0 %v1237
  %1239 = vmatprep.subr.mxu0 0.0
  %v1240 = vand.u32 %v28, 4294901760
  %1241 = vmatpush1.msra.mxu0 %v1240
  %1242 = vmatprep.subr.mxu0 0.0
  %v1243 = vand.u32 %v29, 4294901760
  %1244 = vmatpush1.msra.mxu0 %v1243
  %1245 = vmatprep.subr.mxu0 0.0
  %v1246 = vand.u32 %v30, 4294901760
  %1247 = vmatpush1.msra.mxu0 %v1246
  %1248 = vmatprep.subr.mxu0 0.0
  %v1249 = vand.u32 %v31, 4294901760
  %1250 = vmatpush1.msra.mxu0 %v1249
  %1251 = vmatprep.subr.mxu0 0.0
  %v1252 = vand.u32 %v32, 4294901760
  %1253 = vmatpush1.msra.mxu0 %v1252
  %1254 = vmatprep.subr.mxu0 0.0
  %v1255 = vand.u32 %v33, 4294901760
  %1256 = vmatpush1.msra.mxu0 %v1255
  %1257 = vmatprep.subr.mxu0 0.0
  %v1258 = vand.u32 %v34, 4294901760
  %1259 = vmatpush1.msra.mxu0 %v1258
  %1260 = vmatprep.subr.mxu0 0.0
  %v1261 = vand.u32 %v35, 4294901760
  %1262 = vmatpush1.msra.mxu0 %v1261
  %1263 = vmatprep.subr.mxu0 0.0
  %v1264 = vand.u32 %v36, 4294901760
  %1265 = vmatpush1.msra.mxu0 %v1264
  %1266 = vmatprep.subr.mxu0 0.0
  %v1267 = vand.u32 %v37, 4294901760
  %1268 = vmatpush1.msra.mxu0 %v1267
  %1269 = vmatprep.subr.mxu0 0.0
  %v1270 = vand.u32 %v38, 4294901760
  %1271 = vmatpush1.msra.mxu0 %v1270
  %1272 = vmatprep.subr.mxu0 0.0
  %v1273 = vand.u32 %v39, 4294901760
  %1274 = vmatpush1.msra.mxu0 %v1273
  %1275 = vmatprep.subr.mxu0 0.0
  %v1276 = vand.u32 %v40, 4294901760
  %1277 = vmatpush1.msra.mxu0 %v1276
  %1278 = vmatprep.subr.mxu0 0.0
  %v1279 = vand.u32 %v41, 4294901760
  %1280 = vmatpush1.msra.mxu0 %v1279
  %1281 = vmatprep.subr.mxu0 0.0
  %v1282 = vand.u32 %v42, 4294901760
  %1283 = vmatpush1.msra.mxu0 %v1282
  %1284 = vmatprep.subr.mxu0 0.0
  %1285 = vmatpush1.msra.mxu0 0.0
  %1286 = vmatprep.subr.mxu0 0.0
  %1287 = vmatpush1.msra.mxu0 0.0
  %1288 = vmatprep.subr.mxu0 0.0
  %1289 = vmatpush1.msra.mxu0 0.0
  %1290 = vmatprep.subr.mxu0 0.0
  %1291 = vmatpush1.msra.mxu0 0.0
  %1292 = vmatprep.subr.mxu0 0.0
  %1293 = vmatpush1.msra.mxu0 0.0
  %1294 = vmatprep.subr.mxu0 0.0
  %1295 = vmatpush1.msra.mxu0 0.0
  %1296 = vmatprep.subr.mxu0 0.0
  %1297 = vmatpush1.msra.mxu0 0.0
  %1298 = vmatprep.subr.mxu0 0.0
  %1299 = vmatpush1.msra.mxu0 0.0
  %1300 = vmatprep.subr.mxu0 0.0
  %1301 = vmatpush1.msra.mxu0 0.0
  %1302 = vmatprep.subr.mxu0 0.0
  %1303 = vmatpush1.msra.mxu0 0.0
  %1304 = vmatprep.subr.mxu0 0.0
  %1305 = vmatpush1.msra.mxu0 0.0
  %1306 = vmatprep.subr.mxu0 0.0
  %1307 = vmatpush1.msra.mxu0 0.0
  %1308 = vmatprep.subr.mxu0 0.0
  %1309 = vmatpush1.msra.mxu0 0.0
  %1310 = vmatprep.subr.mxu0 0.0
  %1311 = vmatpush1.msra.mxu0 0.0
  %1312 = vmatprep.subr.mxu0 0.0
  %1313 = vmatpush1.msra.mxu0 0.0
  %1314 = vmatprep.subr.mxu0 0.0
  %1315 = vmatpush1.msra.mxu0 0.0
  %1316 = vmatprep.mubr.f32.mxu0 0.0
  %v1317 = vand.u32 %v47, 4294901760
  %v1318 = vsub.f32 %v47, %v1317
  %v1319 = vand.u32 %v1318, 4294901760
  %1320 = vmatmul.mubr.f32.gmra.mrb[0].mxu0 %v1319
  %v1321 = vpop.f32.mrb[0].mxu0
  %v1322 = vadd.f32 %v1212, %v1321
  %v1323 = vpop.f32.mrb[0].mxu0
  %1324 = vmatprep.mubr.f32.mxu0 0.0
  %v1325 = vand.u32 %v48, 4294901760
  %v1326 = vsub.f32 %v48, %v1325
  %v1327 = vand.u32 %v1326, 4294901760
  %1328 = vmatmul.mubr.f32.gmra.mrb[0].mxu0 %v1327
  %v1329 = vpop.f32.mrb[0].mxu0
  %v1330 = vadd.f32 %v1219, %v1329
  %v1331 = vpop.f32.mrb[0].mxu0
  %1332 = vmatprep.mubr.f32.mxu0 0.0
  %v1333 = vand.u32 %v49, 4294901760
  %v1334 = vsub.f32 %v49, %v1333
  %v1335 = vand.u32 %v1334, 4294901760
  %1336 = vmatmul.mubr.f32.gmra.mrb[0].mxu0 %v1335
  %v1337 = vpop.f32.mrb[0].mxu0
  %v1338 = vadd.f32 %v1226, %v1337
  %v1339 = vpop.f32.mrb[0].mxu0
  %1340 = vmatprep.mubr.f32.mxu0 0.0
  %v1341 = vand.u32 %v50, 4294901760
  %v1342 = vsub.f32 %v50, %v1341
  %v1343 = vand.u32 %v1342, 4294901760
  %1344 = vmatmul.mubr.f32.gmra.mrb[0].mxu0 %v1343
  %v1345 = vpop.f32.mrb[0].mxu0
  %v1346 = vadd.f32 %v1233, %v1345
  %v1347 = vpop.f32.mrb[0].mxu0
  %1348 = vdwg.mxu0
  %1349 = vmatprep.subr.mxu0 0.0
  %v1350 = vand.u32 %v27, 4294901760
  %v1351 = vsub.f32 %v27, %v1350
  %v1352 = vand.u32 %v1351, 4294901760
  %1353 = vmatpush1.msra.mxu0 %v1352
  %1354 = vmatprep.subr.mxu0 0.0
  %v1355 = vand.u32 %v28, 4294901760
  %v1356 = vsub.f32 %v28, %v1355
  %v1357 = vand.u32 %v1356, 4294901760
  %1358 = vmatpush1.msra.mxu0 %v1357
  %1359 = vmatprep.subr.mxu0 0.0
  %v1360 = vand.u32 %v29, 4294901760
  %v1361 = vsub.f32 %v29, %v1360
  %v1362 = vand.u32 %v1361, 4294901760
  %1363 = vmatpush1.msra.mxu0 %v1362
  %1364 = vmatprep.subr.mxu0 0.0
  %v1365 = vand.u32 %v30, 4294901760
  %v1366 = vsub.f32 %v30, %v1365
  %v1367 = vand.u32 %v1366, 4294901760
  %1368 = vmatpush1.msra.mxu0 %v1367
  %1369 = vmatprep.subr.mxu0 0.0
  %v1370 = vand.u32 %v31, 4294901760
  %v1371 = vsub.f32 %v31, %v1370
  %v1372 = vand.u32 %v1371, 4294901760
  %1373 = vmatpush1.msra.mxu0 %v1372
  %1374 = vmatprep.subr.mxu0 0.0
  %v1375 = vand.u32 %v32, 4294901760
  %v1376 = vsub.f32 %v32, %v1375
  %v1377 = vand.u32 %v1376, 4294901760
  %1378 = vmatpush1.msra.mxu0 %v1377
  %1379 = vmatprep.subr.mxu0 0.0
  %v1380 = vand.u32 %v33, 4294901760
  %v1381 = vsub.f32 %v33, %v1380
  %v1382 = vand.u32 %v1381, 4294901760
  %1383 = vmatpush1.msra.mxu0 %v1382
  %1384 = vmatprep.subr.mxu0 0.0
  %v1385 = vand.u32 %v34, 4294901760
  %v1386 = vsub.f32 %v34, %v1385
  %v1387 = vand.u32 %v1386, 4294901760
  %1388 = vmatpush1.msra.mxu0 %v1387
  %1389 = vmatprep.subr.mxu0 0.0
  %v1390 = vand.u32 %v35, 4294901760
  %v1391 = vsub.f32 %v35, %v1390
  %v1392 = vand.u32 %v1391, 4294901760
  %1393 = vmatpush1.msra.mxu0 %v1392
  %1394 = vmatprep.subr.mxu0 0.0
  %v1395 = vand.u32 %v36, 4294901760
  %v1396 = vsub.f32 %v36, %v1395
  %v1397 = vand.u32 %v1396, 4294901760
  %1398 = vmatpush1.msra.mxu0 %v1397
  %1399 = vmatprep.subr.mxu0 0.0
  %v1400 = vand.u32 %v37, 4294901760
  %v1401 = vsub.f32 %v37, %v1400
  %v1402 = vand.u32 %v1401, 4294901760
  %1403 = vmatpush1.msra.mxu0 %v1402
  %1404 = vmatprep.subr.mxu0 0.0
  %v1405 = vand.u32 %v38, 4294901760
  %v1406 = vsub.f32 %v38, %v1405
  %v1407 = vand.u32 %v1406, 4294901760
  %1408 = vmatpush1.msra.mxu0 %v1407
  %1409 = vmatprep.subr.mxu0 0.0
  %v1410 = vand.u32 %v39, 4294901760
  %v1411 = vsub.f32 %v39, %v1410
  %v1412 = vand.u32 %v1411, 4294901760
  %1413 = vmatpush1.msra.mxu0 %v1412
  %1414 = vmatprep.subr.mxu0 0.0
  %v1415 = vand.u32 %v40, 4294901760
  %v1416 = vsub.f32 %v40, %v1415
  %v1417 = vand.u32 %v1416, 4294901760
  %1418 = vmatpush1.msra.mxu0 %v1417
  %1419 = vmatprep.subr.mxu0 0.0
  %v1420 = vand.u32 %v41, 4294901760
  %v1421 = vsub.f32 %v41, %v1420
  %v1422 = vand.u32 %v1421, 4294901760
  %1423 = vmatpush1.msra.mxu0 %v1422
  %1424 = vmatprep.subr.mxu0 0.0
  %v1425 = vand.u32 %v42, 4294901760
  %v1426 = vsub.f32 %v42, %v1425
  %v1427 = vand.u32 %v1426, 4294901760
  %1428 = vmatpush1.msra.mxu0 %v1427
  %1429 = vmatprep.subr.mxu0 0.0
  %1430 = vmatpush1.msra.mxu0 0.0
  %1431 = vmatprep.subr.mxu0 0.0
  %1432 = vmatpush1.msra.mxu0 0.0
  %1433 = vmatprep.subr.mxu0 0.0
  %1434 = vmatpush1.msra.mxu0 0.0
  %1435 = vmatprep.subr.mxu0 0.0
  %1436 = vmatpush1.msra.mxu0 0.0
  %1437 = vmatprep.subr.mxu0 0.0
  %1438 = vmatpush1.msra.mxu0 0.0
  %1439 = vmatprep.subr.mxu0 0.0
  %1440 = vmatpush1.msra.mxu0 0.0
  %1441 = vmatprep.subr.mxu0 0.0
  %1442 = vmatpush1.msra.mxu0 0.0
  %1443 = vmatprep.subr.mxu0 0.0
  %1444 = vmatpush1.msra.mxu0 0.0
  %1445 = vmatprep.subr.mxu0 0.0
  %1446 = vmatpush1.msra.mxu0 0.0
  %1447 = vmatprep.subr.mxu0 0.0
  %1448 = vmatpush1.msra.mxu0 0.0
  %1449 = vmatprep.subr.mxu0 0.0
  %1450 = vmatpush1.msra.mxu0 0.0
  %1451 = vmatprep.subr.mxu0 0.0
  %1452 = vmatpush1.msra.mxu0 0.0
  %1453 = vmatprep.subr.mxu0 0.0
  %1454 = vmatpush1.msra.mxu0 0.0
  %1455 = vmatprep.subr.mxu0 0.0
  %1456 = vmatpush1.msra.mxu0 0.0
  %1457 = vmatprep.subr.mxu0 0.0
  %1458 = vmatpush1.msra.mxu0 0.0
  %1459 = vmatprep.subr.mxu0 0.0
  %1460 = vmatpush1.msra.mxu0 0.0
  %1461 = vmatprep.mubr.f32.mxu0 0.0
  %v1462 = vand.u32 %v47, 4294901760
  %1463 = vmatmul.mubr.f32.gmra.mrb[0].mxu0 %v1462
  %v1464 = vpop.f32.mrb[0].mxu0
  %v1465 = vadd.f32 %v1322, %v1464
  %v1466 = vpop.f32.mrb[0].mxu0
  %1467 = vmatprep.mubr.f32.mxu0 0.0
  %v1468 = vand.u32 %v48, 4294901760
  %1469 = vmatmul.mubr.f32.gmra.mrb[0].mxu0 %v1468
  %v1470 = vpop.f32.mrb[0].mxu0
  %v1471 = vadd.f32 %v1330, %v1470
  %v1472 = vpop.f32.mrb[0].mxu0
  %1473 = vmatprep.mubr.f32.mxu0 0.0
  %v1474 = vand.u32 %v49, 4294901760
  %1475 = vmatmul.mubr.f32.gmra.mrb[0].mxu0 %v1474
  %v1476 = vpop.f32.mrb[0].mxu0
  %v1477 = vadd.f32 %v1338, %v1476
  %v1478 = vpop.f32.mrb[0].mxu0
  %1479 = vmatprep.mubr.f32.mxu0 0.0
  %v1480 = vand.u32 %v50, 4294901760
  %1481 = vmatmul.mubr.f32.gmra.mrb[0].mxu0 %v1480
  %v1482 = vpop.f32.mrb[0].mxu0
  %v1483 = vadd.f32 %v1346, %v1482
  %v1484 = vpop.f32.mrb[0].mxu0
  %1485 = vdwg.mxu0
  %1486 = vmatprep.subr.mxu0 0.0
  %v1487 = vand.u32 %v27, 4294901760
  %1488 = vmatpush1.msra.mxu0 %v1487
  %1489 = vmatprep.subr.mxu0 0.0
  %v1490 = vand.u32 %v28, 4294901760
  %1491 = vmatpush1.msra.mxu0 %v1490
  %1492 = vmatprep.subr.mxu0 0.0
  %v1493 = vand.u32 %v29, 4294901760
  %1494 = vmatpush1.msra.mxu0 %v1493
  %1495 = vmatprep.subr.mxu0 0.0
  %v1496 = vand.u32 %v30, 4294901760
  %1497 = vmatpush1.msra.mxu0 %v1496
  %1498 = vmatprep.subr.mxu0 0.0
  %v1499 = vand.u32 %v31, 4294901760
  %1500 = vmatpush1.msra.mxu0 %v1499
  %1501 = vmatprep.subr.mxu0 0.0
  %v1502 = vand.u32 %v32, 4294901760
  %1503 = vmatpush1.msra.mxu0 %v1502
  %1504 = vmatprep.subr.mxu0 0.0
  %v1505 = vand.u32 %v33, 4294901760
  %1506 = vmatpush1.msra.mxu0 %v1505
  %1507 = vmatprep.subr.mxu0 0.0
  %v1508 = vand.u32 %v34, 4294901760
  %1509 = vmatpush1.msra.mxu0 %v1508
  %1510 = vmatprep.subr.mxu0 0.0
  %v1511 = vand.u32 %v35, 4294901760
  %1512 = vmatpush1.msra.mxu0 %v1511
  %1513 = vmatprep.subr.mxu0 0.0
  %v1514 = vand.u32 %v36, 4294901760
  %1515 = vmatpush1.msra.mxu0 %v1514
  %1516 = vmatprep.subr.mxu0 0.0
  %v1517 = vand.u32 %v37, 4294901760
  %1518 = vmatpush1.msra.mxu0 %v1517
  %1519 = vmatprep.subr.mxu0 0.0
  %v1520 = vand.u32 %v38, 4294901760
  %1521 = vmatpush1.msra.mxu0 %v1520
  %1522 = vmatprep.subr.mxu0 0.0
  %v1523 = vand.u32 %v39, 4294901760
  %1524 = vmatpush1.msra.mxu0 %v1523
  %1525 = vmatprep.subr.mxu0 0.0
  %v1526 = vand.u32 %v40, 4294901760
  %1527 = vmatpush1.msra.mxu0 %v1526
  %1528 = vmatprep.subr.mxu0 0.0
  %v1529 = vand.u32 %v41, 4294901760
  %1530 = vmatpush1.msra.mxu0 %v1529
  %1531 = vmatprep.subr.mxu0 0.0
  %v1532 = vand.u32 %v42, 4294901760
  %1533 = vmatpush1.msra.mxu0 %v1532
  %1534 = vmatprep.subr.mxu0 0.0
  %1535 = vmatpush1.msra.mxu0 0.0
  %1536 = vmatprep.subr.mxu0 0.0
  %1537 = vmatpush1.msra.mxu0 0.0
  %1538 = vmatprep.subr.mxu0 0.0
  %1539 = vmatpush1.msra.mxu0 0.0
  %1540 = vmatprep.subr.mxu0 0.0
  %1541 = vmatpush1.msra.mxu0 0.0
  %1542 = vmatprep.subr.mxu0 0.0
  %1543 = vmatpush1.msra.mxu0 0.0
  %1544 = vmatprep.subr.mxu0 0.0
  %1545 = vmatpush1.msra.mxu0 0.0
  %1546 = vmatprep.subr.mxu0 0.0
  %1547 = vmatpush1.msra.mxu0 0.0
  %1548 = vmatprep.subr.mxu0 0.0
  %1549 = vmatpush1.msra.mxu0 0.0
  %1550 = vmatprep.subr.mxu0 0.0
  %1551 = vmatpush1.msra.mxu0 0.0
  %1552 = vmatprep.subr.mxu0 0.0
  %1553 = vmatpush1.msra.mxu0 0.0
  %1554 = vmatprep.subr.mxu0 0.0
  %1555 = vmatpush1.msra.mxu0 0.0
  %1556 = vmatprep.subr.mxu0 0.0
  %1557 = vmatpush1.msra.mxu0 0.0
  %1558 = vmatprep.subr.mxu0 0.0
  %1559 = vmatpush1.msra.mxu0 0.0
  %1560 = vmatprep.subr.mxu0 0.0
  %1561 = vmatpush1.msra.mxu0 0.0
  %1562 = vmatprep.subr.mxu0 0.0
  %1563 = vmatpush1.msra.mxu0 0.0
  %1564 = vmatprep.subr.mxu0 0.0
  %1565 = vmatpush1.msra.mxu0 0.0
  %1566 = vmatprep.mubr.f32.mxu0 0.0
  %v1567 = vand.u32 %v47, 4294901760
  %1568 = vmatmul.mubr.f32.gmra.mrb[0].mxu0 %v1567
  %v1569 = vpop.f32.mrb[0].mxu0
  %v1570 = vadd.f32 %v1465, %v1569
  %v1571 = vpop.f32.mrb[0].mxu0
  %1572 = vmatprep.mubr.f32.mxu0 0.0
  %v1573 = vand.u32 %v48, 4294901760
  %1574 = vmatmul.mubr.f32.gmra.mrb[0].mxu0 %v1573
  %v1575 = vpop.f32.mrb[0].mxu0
  %v1576 = vadd.f32 %v1471, %v1575
  %v1577 = vpop.f32.mrb[0].mxu0
  %1578 = vmatprep.mubr.f32.mxu0 0.0
  %v1579 = vand.u32 %v49, 4294901760
  %1580 = vmatmul.mubr.f32.gmra.mrb[0].mxu0 %v1579
  %v1581 = vpop.f32.mrb[0].mxu0
  %v1582 = vadd.f32 %v1477, %v1581
  %v1583 = vpop.f32.mrb[0].mxu0
  %1584 = vmatprep.mubr.f32.mxu0 0.0
  %v1585 = vand.u32 %v50, 4294901760
  %1586 = vmatmul.mubr.f32.gmra.mrb[0].mxu0 %v1585
  %v1587 = vpop.f32.mrb[0].mxu0
  %v1588 = vadd.f32 %v1483, %v1587
  %v1589 = vpop.f32.mrb[0].mxu0
  %1590 = vdwg.mxu0
  %1591 = vst [vmem:[%s2] sm:$0xff] %v800
  %1592 = vst [vmem:[%s2 + $0x8] sm:$0xff] %v806
  %1593 = vst [vmem:[%s2 + $0x10] sm:$0xff] %v812
  %1594 = vst [vmem:[%s2 + $0x18] sm:$0xff] %v818
  %1595 = vst [vmem:[%s2 + $0x20] sm:$0xff] %v1570
  %1596 = vst [vmem:[%s2 + $0x28] sm:$0xff] %v1576
  %1597 = vst [vmem:[%s2 + $0x30] sm:$0xff] %v1582
  %1598 = vst [vmem:[%s2 + $0x38] sm:$0xff] %v1588
  // Predicated region
  $region10: #{agdn_conv_forward.7} parent=0 // pred_check
    _
  $region11: #{agdn_conv_forward.7} parent=0 // pred_check_branch
    %1600 = sbr.rel (0) target = $region13
  $region12: #{agdn_conv_forward.7} parent=0 // pred_region
    _
  $region13: #{agdn_conv_forward.7} parent=0 // pred_fallthru
    _
  // Predicated region
  $region14: #{agdn_conv_forward.7} parent=0 // pred_check
    _
  $region15: #{agdn_conv_forward.7} parent=0 // pred_check_branch
    %1602 = sbr.rel (0) target = $region17
  $region16: #{agdn_conv_forward.7} parent=0 // pred_region
    _
  $region17: #{agdn_conv_forward.7} parent=0 // pred_fallthru
    _

// kernel: agdn_conv_forward.9
$region0: #{agdn_conv_forward.9}
  #allocation0 [shape = 'u32[]', space=smem, size = 0x4, offset = 0x4, fixed_abs, tag = 'smem constant byte address 0x4 - core index']
  #allocation1 [shape = 'u32[144,128]{1,0:T(1,128)}', space=vmem, size = 0x12000, scoped, tag = 'internal scratch']
  %s0 = inlined_call_operand.vmem [shape: f32[2,32,128], index: 0, kind: input, shape index: {}]
  %s1 = inlined_call_operand.vmem [shape: f32[2,32,128], index: 1, kind: input, shape index: {}]
  %s2 = inlined_call_operand.vmem [shape: f32[2,32,128], index: 2, kind: input, shape index: {}]
  %s3 = inlined_call_operand.vmem [shape: f32[2,32,128], index: 3, kind: input, shape index: {}]
  %s4 = inlined_call_operand.vmem [shape: f32[2,32,128], index: 4, kind: input, shape index: {}]
  %s5 = inlined_call_operand.vmem [shape: f32[4,2,32], index: 5, kind: input, shape index: {}]
  %s6 = inlined_call_operand.vmem [shape: f32[4,2,32], index: 6, kind: input, shape index: {}]
  %s7 = inlined_call_operand.vmem [shape: f32[4,2,32], index: 7, kind: input, shape index: {}]
  %s8 = inlined_call_operand.vmem [shape: f32[2,32], index: 8, kind: input, shape index: {}]
  %s9 = inlined_call_operand.vmem [shape: f32[2,32], index: 9, kind: input, shape index: {}]
  %s10 = inlined_call_operand.vmem [shape: f32[2,32,128], index: 10, kind: output, shape index: {}]
  %s11 = sld [smem:[#allocation0]]
  $region50: #{agdn_conv_forward.9} parent=0
    _
  %s13 = ssub.s32 1, %s11
  %s14 = scalar_select 0, %s13, %s11
  // Predicated region
  $region2: #{agdn_conv_forward.9} parent=0 // pred_check
    _
  $region3: #{agdn_conv_forward.9} parent=0 // pred_check_branch
    %16 = sbr.rel (0) target = $region5
  $region4: #{agdn_conv_forward.9} parent=0 // pred_region
    _
  $region5: #{agdn_conv_forward.9} parent=0 // pred_fallthru
    _
  // Predicated region
  $region6: #{agdn_conv_forward.9} parent=0 // pred_check
    _
  $region7: #{agdn_conv_forward.9} parent=0 // pred_check_branch
    %18 = sbr.rel (0) target = $region9
  $region8: #{agdn_conv_forward.9} parent=0 // pred_region
    _
  $region9: #{agdn_conv_forward.9} parent=0 // pred_fallthru
    _
  // Predicated region
  $region10: #{agdn_conv_forward.9} parent=0 // pred_check
    _
  $region11: #{agdn_conv_forward.9} parent=0 // pred_check_branch
    %20 = sbr.rel (0) target = $region13
  $region12: #{agdn_conv_forward.9} parent=0 // pred_region
    _
  $region13: #{agdn_conv_forward.9} parent=0 // pred_fallthru
    _
  // Predicated region
  $region14: #{agdn_conv_forward.9} parent=0 // pred_check
    _
  $region15: #{agdn_conv_forward.9} parent=0 // pred_check_branch
    %22 = sbr.rel (0) target = $region17
  $region16: #{agdn_conv_forward.9} parent=0 // pred_region
    _
  $region17: #{agdn_conv_forward.9} parent=0 // pred_fallthru
    _
  // Predicated region
  $region18: #{agdn_conv_forward.9} parent=0 // pred_check
    _
  $region19: #{agdn_conv_forward.9} parent=0 // pred_check_branch
    %24 = sbr.rel (0) target = $region21
  $region20: #{agdn_conv_forward.9} parent=0 // pred_region
    _
  $region21: #{agdn_conv_forward.9} parent=0 // pred_fallthru
    _
  // Predicated region
  $region22: #{agdn_conv_forward.9} parent=0 // pred_check
    _
  $region23: #{agdn_conv_forward.9} parent=0 // pred_check_branch
    %26 = sbr.rel (0) target = $region25
  $region24: #{agdn_conv_forward.9} parent=0 // pred_region
    _
  $region25: #{agdn_conv_forward.9} parent=0 // pred_fallthru
    _
  // Predicated region
  $region26: #{agdn_conv_forward.9} parent=0 // pred_check
    _
  $region27: #{agdn_conv_forward.9} parent=0 // pred_check_branch
    %28 = sbr.rel (0) target = $region29
  $region28: #{agdn_conv_forward.9} parent=0 // pred_region
    _
  $region29: #{agdn_conv_forward.9} parent=0 // pred_fallthru
    _
  // Predicated region
  $region30: #{agdn_conv_forward.9} parent=0 // pred_check
    _
  $region31: #{agdn_conv_forward.9} parent=0 // pred_check_branch
    %30 = sbr.rel (0) target = $region33
  $region32: #{agdn_conv_forward.9} parent=0 // pred_region
    _
  $region33: #{agdn_conv_forward.9} parent=0 // pred_fallthru
    _
  // Predicated region
  $region34: #{agdn_conv_forward.9} parent=0 // pred_check
    _
  $region35: #{agdn_conv_forward.9} parent=0 // pred_check_branch
    %32 = sbr.rel (0) target = $region37
  $region36: #{agdn_conv_forward.9} parent=0 // pred_region
    _
  $region37: #{agdn_conv_forward.9} parent=0 // pred_fallthru
    _
  // Predicated region
  $region38: #{agdn_conv_forward.9} parent=0 // pred_check
    _
  $region39: #{agdn_conv_forward.9} parent=0 // pred_check_branch
    %34 = sbr.rel (0) target = $region41
  $region40: #{agdn_conv_forward.9} parent=0 // pred_region
    _
  $region41: #{agdn_conv_forward.9} parent=0 // pred_fallthru
    _
  %v35 = vld [vmem:[%s5] sm:$0x3]
  %v36 = vld [vmem:[%s5 + $0x2] sm:$0x3]
  %v37 = vld [vmem:[%s5 + $0x4] sm:$0x3]
  %v38 = vld [vmem:[%s5 + $0x6] sm:$0x3]
  %v39 = vld [vmem:[%s6] sm:$0x3]
  %v40 = vld [vmem:[%s6 + $0x2] sm:$0x3]
  %v41 = vld [vmem:[%s6 + $0x4] sm:$0x3]
  %v42 = vld [vmem:[%s6 + $0x6] sm:$0x3]
  %v43 = vld [vmem:[%s7] sm:$0x3]
  %v44 = vld [vmem:[%s7 + $0x2] sm:$0x3]
  %v45 = vld [vmem:[%s7 + $0x4] sm:$0x3]
  %v46 = vld [vmem:[%s7 + $0x6] sm:$0x3]
  %v47 = vld [vmem:[%s8] sm:$0x3]
  %v48 = vlaneseq
  %v49 = vshrl.u32 %v48, 7
  %v50 = vsub.s32 0, %v49
  %v51 = vrot.slane %v47, %v50
  %53 = vbcast.lane.b32.xlu0 %v51, 256
  %v54 = vpop.permute.xlu0 %53
  %s56 = sor.u32 256, 8
  %57 = vbcast.lane.b32.xlu0 %v51, %s56
  %v58 = vpop.permute.xlu0 %57
  %s60 = sor.u32 256, 16
  %61 = vbcast.lane.b32.xlu0 %v51, %s60
  %v62 = vpop.permute.xlu0 %61
  %s64 = sor.u32 256, 24
  %65 = vbcast.lane.b32.xlu0 %v51, %s64
  %v66 = vpop.permute.xlu0 %65
  %v67 = vlaneseq
  %v68 = vshrl.u32 %v67, 7
  %v69 = vsub.s32 1, %v68
  %v70 = vrot.slane %v47, %v69
  %72 = vbcast.lane.b32.xlu0 %v70, 256
  %v73 = vpop.permute.xlu0 %72
  %s75 = sor.u32 256, 8
  %76 = vbcast.lane.b32.xlu0 %v70, %s75
  %v77 = vpop.permute.xlu0 %76
  %s79 = sor.u32 256, 16
  %80 = vbcast.lane.b32.xlu0 %v70, %s79
  %v81 = vpop.permute.xlu0 %80
  %s83 = sor.u32 256, 24
  %84 = vbcast.lane.b32.xlu0 %v70, %s83
  %v85 = vpop.permute.xlu0 %84
  %v86 = vld [vmem:[%s9] sm:$0x3]
  %v87 = vlaneseq
  %v88 = vshrl.u32 %v87, 7
  %v89 = vsub.s32 0, %v88
  %v90 = vrot.slane %v86, %v89
  %92 = vbcast.lane.b32.xlu0 %v90, 256
  %v93 = vpop.permute.xlu0 %92
  %s95 = sor.u32 256, 8
  %96 = vbcast.lane.b32.xlu0 %v90, %s95
  %v97 = vpop.permute.xlu0 %96
  %s99 = sor.u32 256, 16
  %100 = vbcast.lane.b32.xlu0 %v90, %s99
  %v101 = vpop.permute.xlu0 %100
  %s103 = sor.u32 256, 24
  %104 = vbcast.lane.b32.xlu0 %v90, %s103
  %v105 = vpop.permute.xlu0 %104
  %v106 = vlaneseq
  %v107 = vshrl.u32 %v106, 7
  %v108 = vsub.s32 1, %v107
  %v109 = vrot.slane %v86, %v108
  %111 = vbcast.lane.b32.xlu0 %v109, 256
  %v112 = vpop.permute.xlu0 %111
  %s114 = sor.u32 256, 8
  %115 = vbcast.lane.b32.xlu0 %v109, %s114
  %v116 = vpop.permute.xlu0 %115
  %s118 = sor.u32 256, 16
  %119 = vbcast.lane.b32.xlu0 %v109, %s118
  %v120 = vpop.permute.xlu0 %119
  %s122 = sor.u32 256, 24
  %123 = vbcast.lane.b32.xlu0 %v109, %s122
  %v124 = vpop.permute.xlu0 %123
  %v125 = vld [vmem:[%s0] sm:$0xff]
  %v126 = vld [vmem:[%s0 + $0x8] sm:$0xff]
  %v127 = vld [vmem:[%s0 + $0x10] sm:$0xff]
  %v128 = vld [vmem:[%s0 + $0x18] sm:$0xff]
  %v129 = vld [vmem:[%s0 + $0x20] sm:$0xff]
  %v130 = vld [vmem:[%s0 + $0x28] sm:$0xff]
  %v131 = vld [vmem:[%s0 + $0x30] sm:$0xff]
  %v132 = vld [vmem:[%s0 + $0x38] sm:$0xff]
  %v133 = vadd.f32 %v125, %v126
  %v134 = vadd.f32 %v133, %v127
  %v135 = vadd.f32 %v134, %v128
  %v136 = vrot.slane %v135, 4
  %v137 = vadd.f32 %v135, %v136
  %v138 = vrot.slane %v137, 2
  %v139 = vadd.f32 %v137, %v138
  %v140 = vrot.slane %v139, 1
  %v141 = vadd.f32 %v139, %v140
  %v142 = vadd.f32 %v129, %v130
  %v143 = vadd.f32 %v142, %v131
  %v144 = vadd.f32 %v143, %v132
  %v145 = vrot.slane %v144, 4
  %v146 = vadd.f32 %v144, %v145
  %v147 = vrot.slane %v146, 2
  %v148 = vadd.f32 %v146, %v147
  %v149 = vrot.slane %v148, 1
  %v150 = vadd.f32 %v148, %v149
  %v151 = vrcp.pop 32.0
  %v152 = vmul.f32 %v141, %v151
  %v153 = vmul.f32 %v150, %v151
  %v154 = vsub.f32 %v125, %v152
  %v155 = vsub.f32 %v126, %v152
  %v156 = vsub.f32 %v127, %v152
  %v157 = vsub.f32 %v128, %v152
  %v158 = vsub.f32 %v129, %v153
  %v159 = vsub.f32 %v130, %v153
  %v160 = vsub.f32 %v131, %v153
  %v161 = vsub.f32 %v132, %v153
  %v162 = vmul.f32 %v154, %v154
  %v163 = vmul.f32 %v155, %v155
  %v164 = vmul.f32 %v156, %v156
  %v165 = vmul.f32 %v157, %v157
  %v166 = vmul.f32 %v158, %v158
  %v167 = vmul.f32 %v159, %v159
  %v168 = vmul.f32 %v160, %v160
  %v169 = vmul.f32 %v161, %v161
  %v170 = vadd.f32 %v162, %v163
  %v171 = vadd.f32 %v170, %v164
  %v172 = vadd.f32 %v171, %v165
  %v173 = vrot.slane %v172, 4
  %v174 = vadd.f32 %v172, %v173
  %v175 = vrot.slane %v174, 2
  %v176 = vadd.f32 %v174, %v175
  %v177 = vrot.slane %v176, 1
  %v178 = vadd.f32 %v176, %v177
  %v179 = vadd.f32 %v166, %v167
  %v180 = vadd.f32 %v179, %v168
  %v181 = vadd.f32 %v180, %v169
  %v182 = vrot.slane %v181, 4
  %v183 = vadd.f32 %v181, %v182
  %v184 = vrot.slane %v183, 2
  %v185 = vadd.f32 %v183, %v184
  %v186 = vrot.slane %v185, 1
  %v187 = vadd.f32 %v185, %v186
  %v188 = vmul.f32 %v178, %v151
  %v189 = vmul.f32 %v187, %v151
  %v190 = vadd.f32 %v188, 1e-09
  %v191 = vadd.f32 %v189, 1e-09
  %v192 = vlaneseq
  %v193 = vshrl.u32 %v192, 7
  %v194 = vsub.s32 0, %v193
  %v195 = vrot.slane %v35, %v194
  %197 = vbcast.lane.b32.xlu0 %v195, 256
  %v198 = vpop.permute.xlu0 %197
  %s200 = sor.u32 256, 8
  %201 = vbcast.lane.b32.xlu0 %v195, %s200
  %v202 = vpop.permute.xlu0 %201
  %s204 = sor.u32 256, 16
  %205 = vbcast.lane.b32.xlu0 %v195, %s204
  %v206 = vpop.permute.xlu0 %205
  %s208 = sor.u32 256, 24
  %209 = vbcast.lane.b32.xlu0 %v195, %s208
  %v210 = vpop.permute.xlu0 %209
  %v211 = vlaneseq
  %v212 = vshrl.u32 %v211, 7
  %v213 = vsub.s32 1, %v212
  %v214 = vrot.slane %v35, %v213
  %216 = vbcast.lane.b32.xlu0 %v214, 256
  %v217 = vpop.permute.xlu0 %216
  %s219 = sor.u32 256, 8
  %220 = vbcast.lane.b32.xlu0 %v214, %s219
  %v221 = vpop.permute.xlu0 %220
  %s223 = sor.u32 256, 16
  %224 = vbcast.lane.b32.xlu0 %v214, %s223
  %v225 = vpop.permute.xlu0 %224
  %s227 = sor.u32 256, 24
  %228 = vbcast.lane.b32.xlu0 %v214, %s227
  %v229 = vpop.permute.xlu0 %228
  %v230 = vrsqrt.pop %v190
  %v231 = vrsqrt.pop %v191
  %v232 = vmul.f32 %v198, %v230
  %v233 = vmul.f32 %v202, %v230
  %v234 = vmul.f32 %v206, %v230
  %v235 = vmul.f32 %v210, %v230
  %v236 = vmul.f32 %v217, %v231
  %v237 = vmul.f32 %v221, %v231
  %v238 = vmul.f32 %v225, %v231
  %v239 = vmul.f32 %v229, %v231
  %v240 = vmul.f32 %v154, %v232
  %v241 = vmul.f32 %v155, %v233
  %v242 = vmul.f32 %v156, %v234
  %v243 = vmul.f32 %v157, %v235
  %v244 = vmul.f32 %v158, %v236
  %v245 = vmul.f32 %v159, %v237
  %v246 = vmul.f32 %v160, %v238
  %v247 = vmul.f32 %v161, %v239
  %v248 = vlaneseq
  %v249 = vshrl.u32 %v248, 7
  %v250 = vsub.s32 0, %v249
  %v251 = vrot.slane %v39, %v250
  %253 = vbcast.lane.b32.xlu0 %v251, 256
  %v254 = vpop.permute.xlu0 %253
  %s256 = sor.u32 256, 8
  %257 = vbcast.lane.b32.xlu0 %v251, %s256
  %v258 = vpop.permute.xlu0 %257
  %s260 = sor.u32 256, 16
  %261 = vbcast.lane.b32.xlu0 %v251, %s260
  %v262 = vpop.permute.xlu0 %261
  %s264 = sor.u32 256, 24
  %265 = vbcast.lane.b32.xlu0 %v251, %s264
  %v266 = vpop.permute.xlu0 %265
  %v267 = vlaneseq
  %v268 = vshrl.u32 %v267, 7
  %v269 = vsub.s32 1, %v268
  %v270 = vrot.slane %v39, %v269
  %272 = vbcast.lane.b32.xlu0 %v270, 256
  %v273 = vpop.permute.xlu0 %272
  %s275 = sor.u32 256, 8
  %276 = vbcast.lane.b32.xlu0 %v270, %s275
  %v277 = vpop.permute.xlu0 %276
  %s279 = sor.u32 256, 16
  %280 = vbcast.lane.b32.xlu0 %v270, %s279
  %v281 = vpop.permute.xlu0 %280
  %s283 = sor.u32 256, 24
  %284 = vbcast.lane.b32.xlu0 %v270, %s283
  %v285 = vpop.permute.xlu0 %284
  %v286 = vadd.f32 %v240, %v254
  %v287 = vadd.f32 %v241, %v258
  %v288 = vadd.f32 %v242, %v262
  %v289 = vadd.f32 %v243, %v266
  %v290 = vadd.f32 %v244, %v273
  %v291 = vadd.f32 %v245, %v277
  %v292 = vadd.f32 %v246, %v281
  %v293 = vadd.f32 %v247, %v285
  %v294 = vlaneseq
  %v295 = vshrl.u32 %v294, 7
  %v296 = vsub.s32 0, %v295
  %v297 = vrot.slane %v43, %v296
  %299 = vbcast.lane.b32.xlu0 %v297, 256
  %v300 = vpop.permute.xlu0 %299
  %s302 = sor.u32 256, 8
  %303 = vbcast.lane.b32.xlu0 %v297, %s302
  %v304 = vpop.permute.xlu0 %303
  %s306 = sor.u32 256, 16
  %307 = vbcast.lane.b32.xlu0 %v297, %s306
  %v308 = vpop.permute.xlu0 %307
  %s310 = sor.u32 256, 24
  %311 = vbcast.lane.b32.xlu0 %v297, %s310
  %v312 = vpop.permute.xlu0 %311
  %v313 = vlaneseq
  %v314 = vshrl.u32 %v313, 7
  %v315 = vsub.s32 1, %v314
  %v316 = vrot.slane %v43, %v315
  %318 = vbcast.lane.b32.xlu0 %v316, 256
  %v319 = vpop.permute.xlu0 %318
  %s321 = sor.u32 256, 8
  %322 = vbcast.lane.b32.xlu0 %v316, %s321
  %v323 = vpop.permute.xlu0 %322
  %s325 = sor.u32 256, 16
  %326 = vbcast.lane.b32.xlu0 %v316, %s325
  %v327 = vpop.permute.xlu0 %326
  %s329 = sor.u32 256, 24
  %330 = vbcast.lane.b32.xlu0 %v316, %s329
  %v331 = vpop.permute.xlu0 %330
  %v332 = vadd.f32 %v286, %v300
  %v333 = vadd.f32 %v287, %v304
  %v334 = vadd.f32 %v288, %v308
  %v335 = vadd.f32 %v289, %v312
  %v336 = vadd.f32 %v290, %v319
  %v337 = vadd.f32 %v291, %v323
  %v338 = vadd.f32 %v292, %v327
  %v339 = vadd.f32 %v293, %v331
  %v340 = vmul.f32 %v332, %v54
  %v341 = vmul.f32 %v333, %v58
  %v342 = vmul.f32 %v334, %v62
  %v343 = vmul.f32 %v335, %v66
  %v344 = vmul.f32 %v336, %v73
  %v345 = vmul.f32 %v337, %v77
  %v346 = vmul.f32 %v338, %v81
  %v347 = vmul.f32 %v339, %v85
  %v348 = vadd.f32 %v340, %v341
  %v349 = vadd.f32 %v348, %v342
  %v350 = vadd.f32 %v349, %v343
  %v351 = vrot.slane %v350, 4
  %v352 = vadd.f32 %v350, %v351
  %v353 = vrot.slane %v352, 2
  %v354 = vadd.f32 %v352, %v353
  %v355 = vrot.slane %v354, 1
  %v356 = vadd.f32 %v354, %v355
  %v357 = vadd.f32 %v344, %v345
  %v358 = vadd.f32 %v357, %v346
  %v359 = vadd.f32 %v358, %v347
  %v360 = vrot.slane %v359, 4
  %v361 = vadd.f32 %v359, %v360
  %v362 = vrot.slane %v361, 2
  %v363 = vadd.f32 %v361, %v362
  %v364 = vrot.slane %v363, 1
  %v365 = vadd.f32 %v363, %v364
  %v366 = vld [vmem:[%s1] sm:$0xff]
  %v367 = vld [vmem:[%s1 + $0x8] sm:$0xff]
  %v368 = vld [vmem:[%s1 + $0x10] sm:$0xff]
  %v369 = vld [vmem:[%s1 + $0x18] sm:$0xff]
  %v370 = vld [vmem:[%s1 + $0x20] sm:$0xff]
  %v371 = vld [vmem:[%s1 + $0x28] sm:$0xff]
  %v372 = vld [vmem:[%s1 + $0x30] sm:$0xff]
  %v373 = vld [vmem:[%s1 + $0x38] sm:$0xff]
  %v374 = vadd.f32 %v366, %v367
  %v375 = vadd.f32 %v374, %v368
  %v376 = vadd.f32 %v375, %v369
  %v377 = vrot.slane %v376, 4
  %v378 = vadd.f32 %v376, %v377
  %v379 = vrot.slane %v378, 2
  %v380 = vadd.f32 %v378, %v379
  %v381 = vrot.slane %v380, 1
  %v382 = vadd.f32 %v380, %v381
  %v383 = vadd.f32 %v370, %v371
  %v384 = vadd.f32 %v383, %v372
  %v385 = vadd.f32 %v384, %v373
  %v386 = vrot.slane %v385, 4
  %v387 = vadd.f32 %v385, %v386
  %v388 = vrot.slane %v387, 2
  %v389 = vadd.f32 %v387, %v388
  %v390 = vrot.slane %v389, 1
  %v391 = vadd.f32 %v389, %v390
  %v392 = vmul.f32 %v382, %v151
  %v393 = vmul.f32 %v391, %v151
  %v394 = vsub.f32 %v366, %v392
  %v395 = vsub.f32 %v367, %v392
  %v396 = vsub.f32 %v368, %v392
  %v397 = vsub.f32 %v369, %v392
  %v398 = vsub.f32 %v370, %v393
  %v399 = vsub.f32 %v371, %v393
  %v400 = vsub.f32 %v372, %v393
  %v401 = vsub.f32 %v373, %v393
  %v402 = vmul.f32 %v394, %v394
  %v403 = vmul.f32 %v395, %v395
  %v404 = vmul.f32 %v396, %v396
  %v405 = vmul.f32 %v397, %v397
  %v406 = vmul.f32 %v398, %v398
  %v407 = vmul.f32 %v399, %v399
  %v408 = vmul.f32 %v400, %v400
  %v409 = vmul.f32 %v401, %v401
  %v410 = vadd.f32 %v402, %v403
  %v411 = vadd.f32 %v410, %v404
  %v412 = vadd.f32 %v411, %v405
  %v413 = vrot.slane %v412, 4
  %v414 = vadd.f32 %v412, %v413
  %v415 = vrot.slane %v414, 2
  %v416 = vadd.f32 %v414, %v415
  %v417 = vrot.slane %v416, 1
  %v418 = vadd.f32 %v416, %v417
  %v419 = vadd.f32 %v406, %v407
  %v420 = vadd.f32 %v419, %v408
  %v421 = vadd.f32 %v420, %v409
  %v422 = vrot.slane %v421, 4
  %v423 = vadd.f32 %v421, %v422
  %v424 = vrot.slane %v423, 2
  %v425 = vadd.f32 %v423, %v424
  %v426 = vrot.slane %v425, 1
  %v427 = vadd.f32 %v425, %v426
  %v428 = vmul.f32 %v418, %v151
  %v429 = vmul.f32 %v427, %v151
  %v430 = vadd.f32 %v428, 1e-09
  %v431 = vadd.f32 %v429, 1e-09
  %v432 = vlaneseq
  %v433 = vshrl.u32 %v432, 7
  %v434 = vsub.s32 0, %v433
  %v435 = vrot.slane %v36, %v434
  %437 = vbcast.lane.b32.xlu0 %v435, 256
  %v438 = vpop.permute.xlu0 %437
  %s440 = sor.u32 256, 8
  %441 = vbcast.lane.b32.xlu0 %v435, %s440
  %v442 = vpop.permute.xlu0 %441
  %s444 = sor.u32 256, 16
  %445 = vbcast.lane.b32.xlu0 %v435, %s444
  %v446 = vpop.permute.xlu0 %445
  %s448 = sor.u32 256, 24
  %449 = vbcast.lane.b32.xlu0 %v435, %s448
  %v450 = vpop.permute.xlu0 %449
  %v451 = vlaneseq
  %v452 = vshrl.u32 %v451, 7
  %v453 = vsub.s32 1, %v452
  %v454 = vrot.slane %v36, %v453
  %456 = vbcast.lane.b32.xlu0 %v454, 256
  %v457 = vpop.permute.xlu0 %456
  %s459 = sor.u32 256, 8
  %460 = vbcast.lane.b32.xlu0 %v454, %s459
  %v461 = vpop.permute.xlu0 %460
  %s463 = sor.u32 256, 16
  %464 = vbcast.lane.b32.xlu0 %v454, %s463
  %v465 = vpop.permute.xlu0 %464
  %s467 = sor.u32 256, 24
  %468 = vbcast.lane.b32.xlu0 %v454, %s467
  %v469 = vpop.permute.xlu0 %468
  %v470 = vrsqrt.pop %v430
  %v471 = vrsqrt.pop %v431
  %v472 = vmul.f32 %v438, %v470
  %v473 = vmul.f32 %v442, %v470
  %v474 = vmul.f32 %v446, %v470
  %v475 = vmul.f32 %v450, %v470
  %v476 = vmul.f32 %v457, %v471
  %v477 = vmul.f32 %v461, %v471
  %v478 = vmul.f32 %v465, %v471
  %v479 = vmul.f32 %v469, %v471
  %v480 = vmul.f32 %v394, %v472
  %v481 = vmul.f32 %v395, %v473
  %v482 = vmul.f32 %v396, %v474
  %v483 = vmul.f32 %v397, %v475
  %v484 = vmul.f32 %v398, %v476
  %v485 = vmul.f32 %v399, %v477
  %v486 = vmul.f32 %v400, %v478
  %v487 = vmul.f32 %v401, %v479
  %v488 = vlaneseq
  %v489 = vshrl.u32 %v488, 7
  %v490 = vsub.s32 0, %v489
  %v491 = vrot.slane %v40, %v490
  %493 = vbcast.lane.b32.xlu0 %v491, 256
  %v494 = vpop.permute.xlu0 %493
  %s496 = sor.u32 256, 8
  %497 = vbcast.lane.b32.xlu0 %v491, %s496
  %v498 = vpop.permute.xlu0 %497
  %s500 = sor.u32 256, 16
  %501 = vbcast.lane.b32.xlu0 %v491, %s500
  %v502 = vpop.permute.xlu0 %501
  %s504 = sor.u32 256, 24
  %505 = vbcast.lane.b32.xlu0 %v491, %s504
  %v506 = vpop.permute.xlu0 %505
  %v507 = vlaneseq
  %v508 = vshrl.u32 %v507, 7
  %v509 = vsub.s32 1, %v508
  %v510 = vrot.slane %v40, %v509
  %512 = vbcast.lane.b32.xlu0 %v510, 256
  %v513 = vpop.permute.xlu0 %512
  %s515 = sor.u32 256, 8
  %516 = vbcast.lane.b32.xlu0 %v510, %s515
  %v517 = vpop.permute.xlu0 %516
  %s519 = sor.u32 256, 16
  %520 = vbcast.lane.b32.xlu0 %v510, %s519
  %v521 = vpop.permute.xlu0 %520
  %s523 = sor.u32 256, 24
  %524 = vbcast.lane.b32.xlu0 %v510, %s523
  %v525 = vpop.permute.xlu0 %524
  %v526 = vadd.f32 %v480, %v494
  %v527 = vadd.f32 %v481, %v498
  %v528 = vadd.f32 %v482, %v502
  %v529 = vadd.f32 %v483, %v506
  %v530 = vadd.f32 %v484, %v513
  %v531 = vadd.f32 %v485, %v517
  %v532 = vadd.f32 %v486, %v521
  %v533 = vadd.f32 %v487, %v525
  %v534 = vlaneseq
  %v535 = vshrl.u32 %v534, 7
  %v536 = vsub.s32 0, %v535
  %v537 = vrot.slane %v44, %v536
  %539 = vbcast.lane.b32.xlu0 %v537, 256
  %v540 = vpop.permute.xlu0 %539
  %s542 = sor.u32 256, 8
  %543 = vbcast.lane.b32.xlu0 %v537, %s542
  %v544 = vpop.permute.xlu0 %543
  %s546 = sor.u32 256, 16
  %547 = vbcast.lane.b32.xlu0 %v537, %s546
  %v548 = vpop.permute.xlu0 %547
  %s550 = sor.u32 256, 24
  %551 = vbcast.lane.b32.xlu0 %v537, %s550
  %v552 = vpop.permute.xlu0 %551
  %v553 = vlaneseq
  %v554 = vshrl.u32 %v553, 7
  %v555 = vsub.s32 1, %v554
  %v556 = vrot.slane %v44, %v555
  %558 = vbcast.lane.b32.xlu0 %v556, 256
  %v559 = vpop.permute.xlu0 %558
  %s561 = sor.u32 256, 8
  %562 = vbcast.lane.b32.xlu0 %v556, %s561
  %v563 = vpop.permute.xlu0 %562
  %s565 = sor.u32 256, 16
  %566 = vbcast.lane.b32.xlu0 %v556, %s565
  %v567 = vpop.permute.xlu0 %566
  %s569 = sor.u32 256, 24
  %570 = vbcast.lane.b32.xlu0 %v556, %s569
  %v571 = vpop.permute.xlu0 %570
  %v572 = vadd.f32 %v526, %v540
  %v573 = vadd.f32 %v527, %v544
  %v574 = vadd.f32 %v528, %v548
  %v575 = vadd.f32 %v529, %v552
  %v576 = vadd.f32 %v530, %v559
  %v577 = vadd.f32 %v531, %v563
  %v578 = vadd.f32 %v532, %v567
  %v579 = vadd.f32 %v533, %v571
  %v580 = vmul.f32 %v572, %v93
  %v581 = vmul.f32 %v573, %v97
  %v582 = vmul.f32 %v574, %v101
  %v583 = vmul.f32 %v575, %v105
  %v584 = vmul.f32 %v576, %v112
  %v585 = vmul.f32 %v577, %v116
  %v586 = vmul.f32 %v578, %v120
  %v587 = vmul.f32 %v579, %v124
  %v588 = vadd.f32 %v580, %v581
  %v589 = vadd.f32 %v588, %v582
  %v590 = vadd.f32 %v589, %v583
  %v591 = vrot.slane %v590, 4
  %v592 = vadd.f32 %v590, %v591
  %v593 = vrot.slane %v592, 2
  %v594 = vadd.f32 %v592, %v593
  %v595 = vrot.slane %v594, 1
  %v596 = vadd.f32 %v594, %v595
  %v597 = vadd.f32 %v584, %v585
  %v598 = vadd.f32 %v597, %v586
  %v599 = vadd.f32 %v598, %v587
  %v600 = vrot.slane %v599, 4
  %v601 = vadd.f32 %v599, %v600
  %v602 = vrot.slane %v601, 2
  %v603 = vadd.f32 %v601, %v602
  %v604 = vrot.slane %v603, 1
  %v605 = vadd.f32 %v603, %v604
  %v606 = vadd.f32 %v596, %v356
  %v607 = vadd.f32 %v605, %v365
  %vm608 = vcmp.ge.f32.partialorder %v606, 0.0
  %vm609 = vcmp.ge.f32.partialorder %v607, 0.0
  %v610 = vmul.f32 %v606, 0.2
  %v611 = vmul.f32 %v607, 0.2
  %v612 = vsel %vm608, %v606, %v610
  %v613 = vsel %vm609, %v607, %v611
  %v614 = vsub.f32 -inf, %v612
  %v615 = vsub.f32 -inf, %v613
  %v616 = vmul.f32 %v614, 1.442695
  %v617 = vpow.pop %v616
  %v618 = vmul.f32 %v615, 1.442695
  %v619 = vpow.pop %v618
  %v620 = vsub.f32 %v612, %v612
  %v621 = vsub.f32 %v613, %v613
  %v622 = vmul.f32 %v620, 1.442695
  %v623 = vpow.pop %v622
  %v624 = vmul.f32 %v621, 1.442695
  %v625 = vpow.pop %v624
  %v626 = vmul.f32 %v617, 0.0
  %v627 = vmul.f32 %v619, 0.0
  %v628 = vadd.f32 %v626, %v623
  %v629 = vadd.f32 %v627, %v625
  %v630 = vmul.f32 %v623, %v572
  %v631 = vmul.f32 %v623, %v573
  %v632 = vmul.f32 %v623, %v574
  %v633 = vmul.f32 %v623, %v575
  %v634 = vmul.f32 %v625, %v576
  %v635 = vmul.f32 %v625, %v577
  %v636 = vmul.f32 %v625, %v578
  %v637 = vmul.f32 %v625, %v579
  %v638 = vadd.f32 %v626, %v630
  %v639 = vadd.f32 %v626, %v631
  %v640 = vadd.f32 %v626, %v632
  %v641 = vadd.f32 %v626, %v633
  %v642 = vadd.f32 %v627, %v634
  %v643 = vadd.f32 %v627, %v635
  %v644 = vadd.f32 %v627, %v636
  %v645 = vadd.f32 %v627, %v637
  %v646 = vld [vmem:[%s2] sm:$0xff]
  %v647 = vld [vmem:[%s2 + $0x8] sm:$0xff]
  %v648 = vld [vmem:[%s2 + $0x10] sm:$0xff]
  %v649 = vld [vmem:[%s2 + $0x18] sm:$0xff]
  %v650 = vld [vmem:[%s2 + $0x20] sm:$0xff]
  %v651 = vld [vmem:[%s2 + $0x28] sm:$0xff]
  %v652 = vld [vmem:[%s2 + $0x30] sm:$0xff]
  %v653 = vld [vmem:[%s2 + $0x38] sm:$0xff]
  %v654 = vadd.f32 %v646, %v647
  %v655 = vadd.f32 %v654, %v648
  %v656 = vadd.f32 %v655, %v649
  %v657 = vrot.slane %v656, 4
  %v658 = vadd.f32 %v656, %v657
  %v659 = vrot.slane %v658, 2
  %v660 = vadd.f32 %v658, %v659
  %v661 = vrot.slane %v660, 1
  %v662 = vadd.f32 %v660, %v661
  %v663 = vadd.f32 %v650, %v651
  %v664 = vadd.f32 %v663, %v652
  %v665 = vadd.f32 %v664, %v653
  %v666 = vrot.slane %v665, 4
  %v667 = vadd.f32 %v665, %v666
  %v668 = vrot.slane %v667, 2
  %v669 = vadd.f32 %v667, %v668
  %v670 = vrot.slane %v669, 1
  %v671 = vadd.f32 %v669, %v670
  %v672 = vmul.f32 %v662, %v151
  %v673 = vmul.f32 %v671, %v151
  %v674 = vsub.f32 %v646, %v672
  %v675 = vsub.f32 %v647, %v672
  %v676 = vsub.f32 %v648, %v672
  %v677 = vsub.f32 %v649, %v672
  %v678 = vsub.f32 %v650, %v673
  %v679 = vsub.f32 %v651, %v673
  %v680 = vsub.f32 %v652, %v673
  %v681 = vsub.f32 %v653, %v673
  %v682 = vmul.f32 %v674, %v674
  %v683 = vmul.f32 %v675, %v675
  %v684 = vmul.f32 %v676, %v676
  %v685 = vmul.f32 %v677, %v677
  %v686 = vmul.f32 %v678, %v678
  %v687 = vmul.f32 %v679, %v679
  %v688 = vmul.f32 %v680, %v680
  %v689 = vmul.f32 %v681, %v681
  %v690 = vadd.f32 %v682, %v683
  %v691 = vadd.f32 %v690, %v684
  %v692 = vadd.f32 %v691, %v685
  %v693 = vrot.slane %v692, 4
  %v694 = vadd.f32 %v692, %v693
  %v695 = vrot.slane %v694, 2
  %v696 = vadd.f32 %v694, %v695
  %v697 = vrot.slane %v696, 1
  %v698 = vadd.f32 %v696, %v697
  %v699 = vadd.f32 %v686, %v687
  %v700 = vadd.f32 %v699, %v688
  %v701 = vadd.f32 %v700, %v689
  %v702 = vrot.slane %v701, 4
  %v703 = vadd.f32 %v701, %v702
  %v704 = vrot.slane %v703, 2
  %v705 = vadd.f32 %v703, %v704
  %v706 = vrot.slane %v705, 1
  %v707 = vadd.f32 %v705, %v706
  %v708 = vmul.f32 %v698, %v151
  %v709 = vmul.f32 %v707, %v151
  %v710 = vadd.f32 %v708, 1e-09
  %v711 = vadd.f32 %v709, 1e-09
  %v712 = vlaneseq
  %v713 = vshrl.u32 %v712, 7
  %v714 = vsub.s32 0, %v713
  %v715 = vrot.slane %v37, %v714
  %717 = vbcast.lane.b32.xlu0 %v715, 256
  %v718 = vpop.permute.xlu0 %717
  %s720 = sor.u32 256, 8
  %721 = vbcast.lane.b32.xlu0 %v715, %s720
  %v722 = vpop.permute.xlu0 %721
  %s724 = sor.u32 256, 16
  %725 = vbcast.lane.b32.xlu0 %v715, %s724
  %v726 = vpop.permute.xlu0 %725
  %s728 = sor.u32 256, 24
  %729 = vbcast.lane.b32.xlu0 %v715, %s728
  %v730 = vpop.permute.xlu0 %729
  %v731 = vlaneseq
  %v732 = vshrl.u32 %v731, 7
  %v733 = vsub.s32 1, %v732
  %v734 = vrot.slane %v37, %v733
  %736 = vbcast.lane.b32.xlu0 %v734, 256
  %v737 = vpop.permute.xlu0 %736
  %s739 = sor.u32 256, 8
  %740 = vbcast.lane.b32.xlu0 %v734, %s739
  %v741 = vpop.permute.xlu0 %740
  %s743 = sor.u32 256, 16
  %744 = vbcast.lane.b32.xlu0 %v734, %s743
  %v745 = vpop.permute.xlu0 %744
  %s747 = sor.u32 256, 24
  %748 = vbcast.lane.b32.xlu0 %v734, %s747
  %v749 = vpop.permute.xlu0 %748
  %v750 = vrsqrt.pop %v710
  %v751 = vrsqrt.pop %v711
  %v752 = vmul.f32 %v718, %v750
  %v753 = vmul.f32 %v722, %v750
  %v754 = vmul.f32 %v726, %v750
  %v755 = vmul.f32 %v730, %v750
  %v756 = vmul.f32 %v737, %v751
  %v757 = vmul.f32 %v741, %v751
  %v758 = vmul.f32 %v745, %v751
  %v759 = vmul.f32 %v749, %v751
  %v760 = vmul.f32 %v674, %v752
  %v761 = vmul.f32 %v675, %v753
  %v762 = vmul.f32 %v676, %v754
  %v763 = vmul.f32 %v677, %v755
  %v764 = vmul.f32 %v678, %v756
  %v765 = vmul.f32 %v679, %v757
  %v766 = vmul.f32 %v680, %v758
  %v767 = vmul.f32 %v681, %v759
  %v768 = vlaneseq
  %v769 = vshrl.u32 %v768, 7
  %v770 = vsub.s32 0, %v769
  %v771 = vrot.slane %v41, %v770
  %773 = vbcast.lane.b32.xlu0 %v771, 256
  %v774 = vpop.permute.xlu0 %773
  %s776 = sor.u32 256, 8
  %777 = vbcast.lane.b32.xlu0 %v771, %s776
  %v778 = vpop.permute.xlu0 %777
  %s780 = sor.u32 256, 16
  %781 = vbcast.lane.b32.xlu0 %v771, %s780
  %v782 = vpop.permute.xlu0 %781
  %s784 = sor.u32 256, 24
  %785 = vbcast.lane.b32.xlu0 %v771, %s784
  %v786 = vpop.permute.xlu0 %785
  %v787 = vlaneseq
  %v788 = vshrl.u32 %v787, 7
  %v789 = vsub.s32 1, %v788
  %v790 = vrot.slane %v41, %v789
  %792 = vbcast.lane.b32.xlu0 %v790, 256
  %v793 = vpop.permute.xlu0 %792
  %s795 = sor.u32 256, 8
  %796 = vbcast.lane.b32.xlu0 %v790, %s795
  %v797 = vpop.permute.xlu0 %796
  %s799 = sor.u32 256, 16
  %800 = vbcast.lane.b32.xlu0 %v790, %s799
  %v801 = vpop.permute.xlu0 %800
  %s803 = sor.u32 256, 24
  %804 = vbcast.lane.b32.xlu0 %v790, %s803
  %v805 = vpop.permute.xlu0 %804
  %v806 = vadd.f32 %v760, %v774
  %v807 = vadd.f32 %v761, %v778
  %v808 = vadd.f32 %v762, %v782
  %v809 = vadd.f32 %v763, %v786
  %v810 = vadd.f32 %v764, %v793
  %v811 = vadd.f32 %v765, %v797
  %v812 = vadd.f32 %v766, %v801
  %v813 = vadd.f32 %v767, %v805
  %v814 = vlaneseq
  %v815 = vshrl.u32 %v814, 7
  %v816 = vsub.s32 0, %v815
  %v817 = vrot.slane %v45, %v816
  %819 = vbcast.lane.b32.xlu0 %v817, 256
  %v820 = vpop.permute.xlu0 %819
  %s822 = sor.u32 256, 8
  %823 = vbcast.lane.b32.xlu0 %v817, %s822
  %v824 = vpop.permute.xlu0 %823
  %s826 = sor.u32 256, 16
  %827 = vbcast.lane.b32.xlu0 %v817, %s826
  %v828 = vpop.permute.xlu0 %827
  %s830 = sor.u32 256, 24
  %831 = vbcast.lane.b32.xlu0 %v817, %s830
  %v832 = vpop.permute.xlu0 %831
  %v833 = vlaneseq
  %v834 = vshrl.u32 %v833, 7
  %v835 = vsub.s32 1, %v834
  %v836 = vrot.slane %v45, %v835
  %838 = vbcast.lane.b32.xlu0 %v836, 256
  %v839 = vpop.permute.xlu0 %838
  %s841 = sor.u32 256, 8
  %842 = vbcast.lane.b32.xlu0 %v836, %s841
  %v843 = vpop.permute.xlu0 %842
  %s845 = sor.u32 256, 16
  %846 = vbcast.lane.b32.xlu0 %v836, %s845
  %v847 = vpop.permute.xlu0 %846
  %s849 = sor.u32 256, 24
  %850 = vbcast.lane.b32.xlu0 %v836, %s849
  %v851 = vpop.permute.xlu0 %850
  %v852 = vadd.f32 %v806, %v820
  %v853 = vadd.f32 %v807, %v824
  %v854 = vadd.f32 %v808, %v828
  %v855 = vadd.f32 %v809, %v832
  %v856 = vadd.f32 %v810, %v839
  %v857 = vadd.f32 %v811, %v843
  %v858 = vadd.f32 %v812, %v847
  %v859 = vadd.f32 %v813, %v851
  %v860 = vmul.f32 %v852, %v93
  %v861 = vmul.f32 %v853, %v97
  %v862 = vmul.f32 %v854, %v101
  %v863 = vmul.f32 %v855, %v105
  %v864 = vmul.f32 %v856, %v112
  %v865 = vmul.f32 %v857, %v116
  %v866 = vmul.f32 %v858, %v120
  %v867 = vmul.f32 %v859, %v124
  %v868 = vadd.f32 %v860, %v861
  %v869 = vadd.f32 %v868, %v862
  %v870 = vadd.f32 %v869, %v863
  %v871 = vrot.slane %v870, 4
  %v872 = vadd.f32 %v870, %v871
  %v873 = vrot.slane %v872, 2
  %v874 = vadd.f32 %v872, %v873
  %v875 = vrot.slane %v874, 1
  %v876 = vadd.f32 %v874, %v875
  %v877 = vadd.f32 %v864, %v865
  %v878 = vadd.f32 %v877, %v866
  %v879 = vadd.f32 %v878, %v867
  %v880 = vrot.slane %v879, 4
  %v881 = vadd.f32 %v879, %v880
  %v882 = vrot.slane %v881, 2
  %v883 = vadd.f32 %v881, %v882
  %v884 = vrot.slane %v883, 1
  %v885 = vadd.f32 %v883, %v884
  %v886 = vadd.f32 %v876, %v356
  %v887 = vadd.f32 %v885, %v365
  %vm888 = vcmp.ge.f32.partialorder %v886, 0.0
  %vm889 = vcmp.ge.f32.partialorder %v887, 0.0
  %v890 = vmul.f32 %v886, 0.2
  %v891 = vmul.f32 %v887, 0.2
  %v892 = vsel %vm888, %v886, %v890
  %v893 = vsel %vm889, %v887, %v891
  %v894 = vmax.f32 %v612, %v892
  %v895 = vmax.f32 %v613, %v893
  %v896 = vsub.f32 %v612, %v894
  %v897 = vsub.f32 %v613, %v895
  %v898 = vmul.f32 %v896, 1.442695
  %v899 = vpow.pop %v898
  %v900 = vmul.f32 %v897, 1.442695
  %v901 = vpow.pop %v900
  %v902 = vsub.f32 %v892, %v894
  %v903 = vsub.f32 %v893, %v895
  %v904 = vmul.f32 %v902, 1.442695
  %v905 = vpow.pop %v904
  %v906 = vmul.f32 %v903, 1.442695
  %v907 = vpow.pop %v906
  %v908 = vmul.f32 %v628, %v899
  %v909 = vmul.f32 %v629, %v901
  %v910 = vadd.f32 %v908, %v905
  %v911 = vadd.f32 %v909, %v907
  %v912 = vmul.f32 %v638, %v899
  %v913 = vmul.f32 %v639, %v899
  %v914 = vmul.f32 %v640, %v899
  %v915 = vmul.f32 %v641, %v899
  %v916 = vmul.f32 %v642, %v901
  %v917 = vmul.f32 %v643, %v901
  %v918 = vmul.f32 %v644, %v901
  %v919 = vmul.f32 %v645, %v901
  %v920 = vmul.f32 %v905, %v852
  %v921 = vmul.f32 %v905, %v853
  %v922 = vmul.f32 %v905, %v854
  %v923 = vmul.f32 %v905, %v855
  %v924 = vmul.f32 %v907, %v856
  %v925 = vmul.f32 %v907, %v857
  %v926 = vmul.f32 %v907, %v858
  %v927 = vmul.f32 %v907, %v859
  %v928 = vadd.f32 %v912, %v920
  %v929 = vadd.f32 %v913, %v921
  %v930 = vadd.f32 %v914, %v922
  %v931 = vadd.f32 %v915, %v923
  %v932 = vadd.f32 %v916, %v924
  %v933 = vadd.f32 %v917, %v925
  %v934 = vadd.f32 %v918, %v926
  %v935 = vadd.f32 %v919, %v927
  %v936 = vld [vmem:[%s3] sm:$0xff]
  %v937 = vld [vmem:[%s3 + $0x8] sm:$0xff]
  %v938 = vld [vmem:[%s3 + $0x10] sm:$0xff]
  %v939 = vld [vmem:[%s3 + $0x18] sm:$0xff]
  %v940 = vld [vmem:[%s3 + $0x20] sm:$0xff]
  %v941 = vld [vmem:[%s3 + $0x28] sm:$0xff]
  %v942 = vld [vmem:[%s3 + $0x30] sm:$0xff]
  %v943 = vld [vmem:[%s3 + $0x38] sm:$0xff]
  %v944 = vadd.f32 %v936, %v937
  %v945 = vadd.f32 %v944, %v938
  %v946 = vadd.f32 %v945, %v939
  %v947 = vrot.slane %v946, 4
  %v948 = vadd.f32 %v946, %v947
  %v949 = vrot.slane %v948, 2
  %v950 = vadd.f32 %v948, %v949
  %v951 = vrot.slane %v950, 1
  %v952 = vadd.f32 %v950, %v951
  %v953 = vadd.f32 %v940, %v941
  %v954 = vadd.f32 %v953, %v942
  %v955 = vadd.f32 %v954, %v943
  %v956 = vrot.slane %v955, 4
  %v957 = vadd.f32 %v955, %v956
  %v958 = vrot.slane %v957, 2
  %v959 = vadd.f32 %v957, %v958
  %v960 = vrot.slane %v959, 1
  %v961 = vadd.f32 %v959, %v960
  %v962 = vmul.f32 %v952, %v151
  %v963 = vmul.f32 %v961, %v151
  %v964 = vsub.f32 %v936, %v962
  %v965 = vsub.f32 %v937, %v962
  %v966 = vsub.f32 %v938, %v962
  %v967 = vsub.f32 %v939, %v962
  %v968 = vsub.f32 %v940, %v963
  %v969 = vsub.f32 %v941, %v963
  %v970 = vsub.f32 %v942, %v963
  %v971 = vsub.f32 %v943, %v963
  %v972 = vmul.f32 %v964, %v964
  %v973 = vmul.f32 %v965, %v965
  %v974 = vmul.f32 %v966, %v966
  %v975 = vmul.f32 %v967, %v967
  %v976 = vmul.f32 %v968, %v968
  %v977 = vmul.f32 %v969, %v969
  %v978 = vmul.f32 %v970, %v970
  %v979 = vmul.f32 %v971, %v971
  %v980 = vadd.f32 %v972, %v973
  %v981 = vadd.f32 %v980, %v974
  %v982 = vadd.f32 %v981, %v975
  %v983 = vrot.slane %v982, 4
  %v984 = vadd.f32 %v982, %v983
  %v985 = vrot.slane %v984, 2
  %v986 = vadd.f32 %v984, %v985
  %v987 = vrot.slane %v986, 1
  %v988 = vadd.f32 %v986, %v987
  %v989 = vadd.f32 %v976, %v977
  %v990 = vadd.f32 %v989, %v978
  %v991 = vadd.f32 %v990, %v979
  %v992 = vrot.slane %v991, 4
  %v993 = vadd.f32 %v991, %v992
  %v994 = vrot.slane %v993, 2
  %v995 = vadd.f32 %v993, %v994
  %v996 = vrot.slane %v995, 1
  %v997 = vadd.f32 %v995, %v996
  %v998 = vmul.f32 %v988, %v151
  %v999 = vmul.f32 %v997, %v151
  %v1000 = vadd.f32 %v998, 1e-09
  %v1001 = vadd.f32 %v999, 1e-09
  %v1002 = vlaneseq
  %v1003 = vshrl.u32 %v1002, 7
  %v1004 = vsub.s32 0, %v1003
  %v1005 = vrot.slane %v38, %v1004
  %1007 = vbcast.lane.b32.xlu0 %v1005, 256
  %v1008 = vpop.permute.xlu0 %1007
  %s1010 = sor.u32 256, 8
  %1011 = vbcast.lane.b32.xlu0 %v1005, %s1010
  %v1012 = vpop.permute.xlu0 %1011
  %s1014 = sor.u32 256, 16
  %1015 = vbcast.lane.b32.xlu0 %v1005, %s1014
  %v1016 = vpop.permute.xlu0 %1015
  %s1018 = sor.u32 256, 24
  %1019 = vbcast.lane.b32.xlu0 %v1005, %s1018
  %v1020 = vpop.permute.xlu0 %1019
  %v1021 = vlaneseq
  %v1022 = vshrl.u32 %v1021, 7
  %v1023 = vsub.s32 1, %v1022
  %v1024 = vrot.slane %v38, %v1023
  %1026 = vbcast.lane.b32.xlu0 %v1024, 256
  %v1027 = vpop.permute.xlu0 %1026
  %s1029 = sor.u32 256, 8
  %1030 = vbcast.lane.b32.xlu0 %v1024, %s1029
  %v1031 = vpop.permute.xlu0 %1030
  %s1033 = sor.u32 256, 16
  %1034 = vbcast.lane.b32.xlu0 %v1024, %s1033
  %v1035 = vpop.permute.xlu0 %1034
  %s1037 = sor.u32 256, 24
  %1038 = vbcast.lane.b32.xlu0 %v1024, %s1037
  %v1039 = vpop.permute.xlu0 %1038
  %v1040 = vrsqrt.pop %v1000
  %v1041 = vrsqrt.pop %v1001
  %v1042 = vmul.f32 %v1008, %v1040
  %v1043 = vmul.f32 %v1012, %v1040
  %v1044 = vmul.f32 %v1016, %v1040
  %v1045 = vmul.f32 %v1020, %v1040
  %v1046 = vmul.f32 %v1027, %v1041
  %v1047 = vmul.f32 %v1031, %v1041
  %v1048 = vmul.f32 %v1035, %v1041
  %v1049 = vmul.f32 %v1039, %v1041
  %v1050 = vmul.f32 %v964, %v1042
  %v1051 = vmul.f32 %v965, %v1043
  %v1052 = vmul.f32 %v966, %v1044
  %v1053 = vmul.f32 %v967, %v1045
  %v1054 = vmul.f32 %v968, %v1046
  %v1055 = vmul.f32 %v969, %v1047
  %v1056 = vmul.f32 %v970, %v1048
  %v1057 = vmul.f32 %v971, %v1049
  %v1058 = vlaneseq
  %v1059 = vshrl.u32 %v1058, 7
  %v1060 = vsub.s32 0, %v1059
  %v1061 = vrot.slane %v42, %v1060
  %1063 = vbcast.lane.b32.xlu0 %v1061, 256
  %v1064 = vpop.permute.xlu0 %1063
  %s1066 = sor.u32 256, 8
  %1067 = vbcast.lane.b32.xlu0 %v1061, %s1066
  %v1068 = vpop.permute.xlu0 %1067
  %s1070 = sor.u32 256, 16
  %1071 = vbcast.lane.b32.xlu0 %v1061, %s1070
  %v1072 = vpop.permute.xlu0 %1071
  %s1074 = sor.u32 256, 24
  %1075 = vbcast.lane.b32.xlu0 %v1061, %s1074
  %v1076 = vpop.permute.xlu0 %1075
  %v1077 = vlaneseq
  %v1078 = vshrl.u32 %v1077, 7
  %v1079 = vsub.s32 1, %v1078
  %v1080 = vrot.slane %v42, %v1079
  %1082 = vbcast.lane.b32.xlu0 %v1080, 256
  %v1083 = vpop.permute.xlu0 %1082
  %s1085 = sor.u32 256, 8
  %1086 = vbcast.lane.b32.xlu0 %v1080, %s1085
  %v1087 = vpop.permute.xlu0 %1086
  %s1089 = sor.u32 256, 16
  %1090 = vbcast.lane.b32.xlu0 %v1080, %s1089
  %v1091 = vpop.permute.xlu0 %1090
  %s1093 = sor.u32 256, 24
  %1094 = vbcast.lane.b32.xlu0 %v1080, %s1093
  %v1095 = vpop.permute.xlu0 %1094
  %v1096 = vadd.f32 %v1050, %v1064
  %v1097 = vadd.f32 %v1051, %v1068
  %v1098 = vadd.f32 %v1052, %v1072
  %v1099 = vadd.f32 %v1053, %v1076
  %v1100 = vadd.f32 %v1054, %v1083
  %v1101 = vadd.f32 %v1055, %v1087
  %v1102 = vadd.f32 %v1056, %v1091
  %v1103 = vadd.f32 %v1057, %v1095
  %v1104 = vlaneseq
  %v1105 = vshrl.u32 %v1104, 7
  %v1106 = vsub.s32 0, %v1105
  %v1107 = vrot.slane %v46, %v1106
  %1109 = vbcast.lane.b32.xlu0 %v1107, 256
  %v1110 = vpop.permute.xlu0 %1109
  %s1112 = sor.u32 256, 8
  %1113 = vbcast.lane.b32.xlu0 %v1107, %s1112
  %v1114 = vpop.permute.xlu0 %1113
  %s1116 = sor.u32 256, 16
  %1117 = vbcast.lane.b32.xlu0 %v1107, %s1116
  %v1118 = vpop.permute.xlu0 %1117
  %s1120 = sor.u32 256, 24
  %1121 = vbcast.lane.b32.xlu0 %v1107, %s1120
  %v1122 = vpop.permute.xlu0 %1121
  %v1123 = vlaneseq
  %v1124 = vshrl.u32 %v1123, 7
  %v1125 = vsub.s32 1, %v1124
  %v1126 = vrot.slane %v46, %v1125
  %1128 = vbcast.lane.b32.xlu0 %v1126, 256
  %v1129 = vpop.permute.xlu0 %1128
  %s1131 = sor.u32 256, 8
  %1132 = vbcast.lane.b32.xlu0 %v1126, %s1131
  %v1133 = vpop.permute.xlu0 %1132
  %s1135 = sor.u32 256, 16
  %1136 = vbcast.lane.b32.xlu0 %v1126, %s1135
  %v1137 = vpop.permute.xlu0 %1136
  %s1139 = sor.u32 256, 24
  %1140 = vbcast.lane.b32.xlu0 %v1126, %s1139
  %v1141 = vpop.permute.xlu0 %1140
  %v1142 = vadd.f32 %v1096, %v1110
  %v1143 = vadd.f32 %v1097, %v1114
  %v1144 = vadd.f32 %v1098, %v1118
  %v1145 = vadd.f32 %v1099, %v1122
  %v1146 = vadd.f32 %v1100, %v1129
  %v1147 = vadd.f32 %v1101, %v1133
  %v1148 = vadd.f32 %v1102, %v1137
  %v1149 = vadd.f32 %v1103, %v1141
  %v1150 = vmul.f32 %v1142, %v93
  %v1151 = vmul.f32 %v1143, %v97
  %v1152 = vmul.f32 %v1144, %v101
  %v1153 = vmul.f32 %v1145, %v105
  %v1154 = vmul.f32 %v1146, %v112
  %v1155 = vmul.f32 %v1147, %v116
  %v1156 = vmul.f32 %v1148, %v120
  %v1157 = vmul.f32 %v1149, %v124
  %v1158 = vadd.f32 %v1150, %v1151
  %v1159 = vadd.f32 %v1158, %v1152
  %v1160 = vadd.f32 %v1159, %v1153
  %v1161 = vrot.slane %v1160, 4
  %v1162 = vadd.f32 %v1160, %v1161
  %v1163 = vrot.slane %v1162, 2
  %v1164 = vadd.f32 %v1162, %v1163
  %v1165 = vrot.slane %v1164, 1
  %v1166 = vadd.f32 %v1164, %v1165
  %v1167 = vadd.f32 %v1154, %v1155
  %v1168 = vadd.f32 %v1167, %v1156
  %v1169 = vadd.f32 %v1168, %v1157
  %v1170 = vrot.slane %v1169, 4
  %v1171 = vadd.f32 %v1169, %v1170
  %v1172 = vrot.slane %v1171, 2
  %v1173 = vadd.f32 %v1171, %v1172
  %v1174 = vrot.slane %v1173, 1
  %v1175 = vadd.f32 %v1173, %v1174
  %v1176 = vadd.f32 %v1166, %v356
  %v1177 = vadd.f32 %v1175, %v365
  %vm1178 = vcmp.ge.f32.partialorder %v1176, 0.0
  %vm1179 = vcmp.ge.f32.partialorder %v1177, 0.0
  %v1180 = vmul.f32 %v1176, 0.2
  %v1181 = vmul.f32 %v1177, 0.2
  %v1182 = vsel %vm1178, %v1176, %v1180
  %v1183 = vsel %vm1179, %v1177, %v1181
  %v1184 = vmax.f32 %v894, %v1182
  %v1185 = vmax.f32 %v895, %v1183
  %v1186 = vsub.f32 %v894, %v1184
  %v1187 = vsub.f32 %v895, %v1185
  %v1188 = vmul.f32 %v1186, 1.442695
  %v1189 = vpow.pop %v1188
  %v1190 = vmul.f32 %v1187, 1.442695
  %v1191 = vpow.pop %v1190
  %v1192 = vsub.f32 %v1182, %v1184
  %v1193 = vsub.f32 %v1183, %v1185
  %v1194 = vmul.f32 %v1192, 1.442695
  %v1195 = vpow.pop %v1194
  %v1196 = vmul.f32 %v1193, 1.442695
  %v1197 = vpow.pop %v1196
  %v1198 = vmul.f32 %v910, %v1189
  %v1199 = vmul.f32 %v911, %v1191
  %v1200 = vadd.f32 %v1198, %v1195
  %v1201 = vadd.f32 %v1199, %v1197
  %v1202 = vmul.f32 %v928, %v1189
  %v1203 = vmul.f32 %v929, %v1189
  %v1204 = vmul.f32 %v930, %v1189
  %v1205 = vmul.f32 %v931, %v1189
  %v1206 = vmul.f32 %v932, %v1191
  %v1207 = vmul.f32 %v933, %v1191
  %v1208 = vmul.f32 %v934, %v1191
  %v1209 = vmul.f32 %v935, %v1191
  %v1210 = vmul.f32 %v1195, %v1142
  %v1211 = vmul.f32 %v1195, %v1143
  %v1212 = vmul.f32 %v1195, %v1144
  %v1213 = vmul.f32 %v1195, %v1145
  %v1214 = vmul.f32 %v1197, %v1146
  %v1215 = vmul.f32 %v1197, %v1147
  %v1216 = vmul.f32 %v1197, %v1148
  %v1217 = vmul.f32 %v1197, %v1149
  %v1218 = vadd.f32 %v1202, %v1210
  %v1219 = vadd.f32 %v1203, %v1211
  %v1220 = vadd.f32 %v1204, %v1212
  %v1221 = vadd.f32 %v1205, %v1213
  %v1222 = vadd.f32 %v1206, %v1214
  %v1223 = vadd.f32 %v1207, %v1215
  %v1224 = vadd.f32 %v1208, %v1216
  %v1225 = vadd.f32 %v1209, %v1217
  %v1226 = vrcp.pop %v1200
  %v1227 = vmul.f32 1.0, %v1226
  %v1228 = vrcp.pop %v1201
  %v1229 = vmul.f32 1.0, %v1228
  %v1230 = vmul.f32 %v1218, %v1227
  %v1231 = vmul.f32 %v1219, %v1227
  %v1232 = vmul.f32 %v1220, %v1227
  %v1233 = vmul.f32 %v1221, %v1227
  %v1234 = vmul.f32 %v1222, %v1229
  %v1235 = vmul.f32 %v1223, %v1229
  %v1236 = vmul.f32 %v1224, %v1229
  %v1237 = vmul.f32 %v1225, %v1229
  %v1238 = vld [vmem:[%s4] sm:$0xff]
  %v1239 = vld [vmem:[%s4 + $0x8] sm:$0xff]
  %v1240 = vld [vmem:[%s4 + $0x10] sm:$0xff]
  %v1241 = vld [vmem:[%s4 + $0x18] sm:$0xff]
  %v1242 = vld [vmem:[%s4 + $0x20] sm:$0xff]
  %v1243 = vld [vmem:[%s4 + $0x28] sm:$0xff]
  %v1244 = vld [vmem:[%s4 + $0x30] sm:$0xff]
  %v1245 = vld [vmem:[%s4 + $0x38] sm:$0xff]
  %v1246 = vadd.f32 %v1230, %v1238
  %v1247 = vadd.f32 %v1231, %v1239
  %v1248 = vadd.f32 %v1232, %v1240
  %v1249 = vadd.f32 %v1233, %v1241
  %v1250 = vadd.f32 %v1234, %v1242
  %v1251 = vadd.f32 %v1235, %v1243
  %v1252 = vadd.f32 %v1236, %v1244
  %v1253 = vadd.f32 %v1237, %v1245
  %1254 = vst [vmem:[%s10] sm:$0xff] %v1246
  %1255 = vst [vmem:[%s10 + $0x8] sm:$0xff] %v1247
  %1256 = vst [vmem:[%s10 + $0x10] sm:$0xff] %v1248
  %1257 = vst [vmem:[%s10 + $0x18] sm:$0xff] %v1249
  %1258 = vst [vmem:[%s10 + $0x20] sm:$0xff] %v1250
  %1259 = vst [vmem:[%s10 + $0x28] sm:$0xff] %v1251
  %1260 = vst [vmem:[%s10 + $0x30] sm:$0xff] %v1252
  %1261 = vst [vmem:[%s10 + $0x38] sm:$0xff] %v1253
  // Predicated region
  $region42: #{agdn_conv_forward.9} parent=0 // pred_check
    _
  $region43: #{agdn_conv_forward.9} parent=0 // pred_check_branch
    %1263 = sbr.rel (0) target = $region45
  $region44: #{agdn_conv_forward.9} parent=0 // pred_region
    _
  $region45: #{agdn_conv_forward.9} parent=0 // pred_fallthru
    _
  // Predicated region
  $region46: #{agdn_conv_forward.9} parent=0 // pred_check
    _
  $region47: #{agdn_conv_forward.9} parent=0 // pred_check_branch
    %1265 = sbr.rel (0) target = $region49
  $region48: #{agdn_conv_forward.9} parent=0 // pred_region
    _
  $region49: #{agdn_conv_forward.9} parent=0 // pred_fallthru
    _

</llo_original>
